<compile_context>
chip_gen: v6e
topology: v6e:2x2x1
jax: 0.10.0
libtpu: 0.0.40
codegen_flags: <defaults>
</compile_context>

<pallas_src>
import functools

import jax
import jax.numpy as jnp
from jax.experimental import pallas as pl
from jax.experimental.pallas import tpu as pltpu

NEG_SLOPE = 0.01   # F.leaky_relu default
LANE = 128
EPS = 1e-12        # F.normalize default eps


def _round_up(x, m):
    return ((x + m - 1) // m) * m


def _leaky_relu(x):
    return jnp.where(x >= 0, x, NEG_SLOPE * x)


# ---------------------------------------------------------------------------
# Kernel 1: build x = normalize(cat(preference, MLP(features)))
# ---------------------------------------------------------------------------
def _build_x_kernel(pref_ref, feat_ref, mlpw_ref, mlpb_ref, x_ref, *,
                    num_user, num_nodes, tile_rows):
    i = pl.program_id(0)
    row = i * tile_rows + jax.lax.broadcasted_iota(jnp.int32, (tile_rows, 1), 0)

    # temp = MLP(features)  (bf16 x bf16 -> f32)
    temp = jnp.dot(feat_ref[...], mlpw_ref[...],
                   preferred_element_type=jnp.float32) + mlpb_ref[...]
    # cat(preference, temp) by row selection; zero the padded tail rows.
    x = jnp.where(row < num_user, pref_ref[...], temp)
    x = jnp.where(row < num_nodes, x, 0.0)

    # F.normalize(dim=1): x / max(||x||, eps)  ==  x * rsqrt(max(||x||^2, eps^2))
    nrm2 = jnp.sum(x * x, axis=1, keepdims=True)
    x = x * jax.lax.rsqrt(jnp.maximum(nrm2, EPS * EPS))
    x_ref[...] = x.astype(x_ref.dtype)


def build_x(pref_full, feat_full, mlp_w, mlp_b, *, num_user, num_nodes, tile_rows):
    n_pad, dl = pref_full.shape
    df = feat_full.shape[1]
    assert n_pad % tile_rows == 0, (n_pad, tile_rows)
    kernel = functools.partial(_build_x_kernel, num_user=num_user,
                               num_nodes=num_nodes, tile_rows=tile_rows)
    return pl.pallas_call(
        kernel,
        out_shape=jax.ShapeDtypeStruct((n_pad, dl), jnp.bfloat16),
        grid=(pl.cdiv(n_pad, tile_rows),),
        in_specs=[
            pl.BlockSpec((tile_rows, dl), lambda i: (i, 0)),   # preference rows
            pl.BlockSpec((tile_rows, df), lambda i: (i, 0)),   # feature rows (bf16)
            pl.BlockSpec((df, dl), lambda i: (0, 0)),          # MLP weight (bf16)
            pl.BlockSpec((1, dl), lambda i: (0, 0)),           # MLP bias (f32)
        ],
        out_specs=pl.BlockSpec((tile_rows, dl), lambda i: (i, 0)),
        compiler_params=pltpu.CompilerParams(dimension_semantics=("parallel",)),
    )(pref_full, feat_full, mlp_w, mlp_b)


# ---------------------------------------------------------------------------
# Kernel 2: one fused GCN layer
#   grid (i, k):  acc += A[i,k] @ (x[k] @ Wconv)
#   at k == last: x_hat = lrelu(x[i]@Wlin + b) + id[i]
#                 out   = lrelu(lrelu(acc)@Wg + bg + x_hat)
# ---------------------------------------------------------------------------
def _layer_kernel(adj_ref, xk_ref, xi_ref, convw_ref, linw_ref, linb_ref,
                  gw_ref, gb_ref, id_ref, out_ref, acc_ref):
    k = pl.program_id(1)

    @pl.when(k == 0)
    def _():
        acc_ref[...] = jnp.zeros_like(acc_ref)

    # conv message for this column-tile of A (bf16 x bf16 -> f32, back to bf16)
    xw = jnp.dot(xk_ref[...], convw_ref[...], preferred_element_type=jnp.float32)
    acc_ref[...] += jnp.dot(adj_ref[...], xw.astype(jnp.bfloat16),
                            preferred_element_type=jnp.float32)

    @pl.when(k == pl.num_programs(1) - 1)
    def _():
        # x_hat = leaky_relu(x @ Wlin + b) + id
        xh = jnp.dot(xi_ref[...], linw_ref[...], preferred_element_type=jnp.float32)
        xh = _leaky_relu(xh + linb_ref[...]) + id_ref[...]
        # x' = leaky_relu(leaky_relu(h) @ Wg + bg + x_hat)
        h = _leaky_relu(acc_ref[...]).astype(jnp.bfloat16)
        y = jnp.dot(h, gw_ref[...], preferred_element_type=jnp.float32)
        out_ref[...] = _leaky_relu(y + gb_ref[...] + xh).astype(out_ref.dtype)


def gcn_layer(adj, x, conv_w, lin_w, lin_b, g_w, g_b, id_emb, *, tile_m, tile_k):
    n_pad = adj.shape[0]
    din = x.shape[1]
    dconv = conv_w.shape[1]
    dout = lin_w.shape[1]
    assert n_pad % tile_m == 0 and n_pad % tile_k == 0, (n_pad, tile_m, tile_k)
    return pl.pallas_call(
        _layer_kernel,
        out_shape=jax.ShapeDtypeStruct((n_pad, dout), jnp.bfloat16),
        grid=(pl.cdiv(n_pad, tile_m), pl.cdiv(n_pad, tile_k)),
        in_specs=[
            pl.BlockSpec((tile_m, tile_k), lambda i, k: (i, k)),  # A tile (bf16)
            pl.BlockSpec((tile_k, din), lambda i, k: (k, 0)),     # x, conv path (bf16)
            pl.BlockSpec((tile_m, din), lambda i, k: (i, 0)),     # x, linear path (bf16)
            pl.BlockSpec((din, dconv), lambda i, k: (0, 0)),      # Wconv (bf16)
            pl.BlockSpec((din, dout), lambda i, k: (0, 0)),       # Wlin  (bf16)
            pl.BlockSpec((1, dout), lambda i, k: (0, 0)),         # blin  (f32)
            pl.BlockSpec((dconv, dout), lambda i, k: (0, 0)),     # Wg    (bf16)
            pl.BlockSpec((1, dout), lambda i, k: (0, 0)),         # bg    (f32)
            pl.BlockSpec((tile_m, dout), lambda i, k: (i, 0)),    # id    (f32)
        ],
        out_specs=pl.BlockSpec((tile_m, dout), lambda i, k: (i, 0)),
        scratch_shapes=[pltpu.VMEM((tile_m, dconv), jnp.float32)],
        compiler_params=pltpu.CompilerParams(
            dimension_semantics=("parallel", "arbitrary")),
    )(adj, x, x, conv_w, lin_w, lin_b, g_w, g_b, id_emb)


# ---------------------------------------------------------------------------
# Forward (4 pallas_calls total)
# ---------------------------------------------------------------------------
def build_forward(cfg):
    tm, tk, tx = cfg["tile_m"], cfg["tile_k"], cfg["tile_x"]
    n = cfg["num_nodes"]
    nu = cfg["num_user"]
    dim_id = cfg["dim_id"]

    def fwd(pref_full, feat_full, id_p, adj_p, P):
        x = build_x(pref_full, feat_full, P["mlp_w"], P["mlp_b"],
                    num_user=nu, num_nodes=n, tile_rows=tx)
        for l in (1, 2, 3):
            x = gcn_layer(adj_p, x,
                          P[f"conv{l}_w"], P[f"lin{l}_w"], P[f"lin{l}_b"],
                          P[f"g{l}_w"], P[f"g{l}_b"], id_p,
                          tile_m=tm, tile_k=tk)
        return x[:n, :dim_id].astype(jnp.float32)

    return fwd


# ---------------------------------------------------------------------------
# Deterministic parameters / inputs
# ---------------------------------------------------------------------------
def make_params(key, num_user, num_item, dim_feat, dim_latent, dim_id):
    keys = jax.random.split(key, 20)
    k = iter(keys)

    def xavier(key, shape):
        fan_in, fan_out = shape[1], shape[0]
        std = (2.0 / (fan_in + fan_out)) ** 0.5
        return std * jax.random.normal(key, shape, jnp.float32)

    p = {}
    p["preference"] = xavier(next(k), (num_user, dim_latent))
    # nn.Linear stores weight as (out, in); forward uses x @ W^T + b
    p["mlp_w"] = xavier(next(k), (dim_latent, dim_feat))
    p["mlp_b"] = 0.01 * jax.random.normal(next(k), (dim_latent,), jnp.float32)

    p["conv1_w"] = xavier(next(k), (dim_latent, dim_latent))   # used as x @ W
    p["lin1_w"] = xavier(next(k), (dim_id, dim_latent))
    p["lin1_b"] = 0.01 * jax.random.normal(next(k), (dim_id,), jnp.float32)
    p["g1_w"] = xavier(next(k), (dim_id, dim_latent))
    p["g1_b"] = 0.01 * jax.random.normal(next(k), (dim_id,), jnp.float32)

    for l in (2, 3):
        p[f"conv{l}_w"] = xavier(next(k), (dim_id, dim_id))
        p[f"lin{l}_w"] = xavier(next(k), (dim_id, dim_id))
        p[f"lin{l}_b"] = 0.01 * jax.random.normal(next(k), (dim_id,), jnp.float32)
        p[f"g{l}_w"] = xavier(next(k), (dim_id, dim_id))
        p[f"g{l}_b"] = 0.01 * jax.random.normal(next(k), (dim_id,), jnp.float32)
    return p


def prepare_params(p, dim_feat, dim_latent, dim_id):
    """Pre-transpose nn.Linear weights to (in,out), zero-pad lane-dense, bf16 weights."""
    Df = _round_up(dim_feat, LANE)
    Dl = _round_up(dim_latent, LANE)
    Di = _round_up(dim_id, LANE)

    def padw(w, rows, cols):
        return jnp.pad(w, ((0, rows - w.shape[0]),
                           (0, cols - w.shape[1]))).astype(jnp.bfloat16)

    def padb(b, cols):
        b2 = b.reshape(1, -1)
        return jnp.pad(b2, ((0, 0), (0, cols - b2.shape[1]))).astype(jnp.float32)

    out = {
        "mlp_w": padw(p["mlp_w"].T, Df, Dl),
        "mlp_b": padb(p["mlp_b"], Dl),
        "conv1_w": padw(p["conv1_w"], Dl, Dl),
        "lin1_w": padw(p["lin1_w"].T, Dl, Di),
        "lin1_b": padb(p["lin1_b"], Di),
        "g1_w": padw(p["g1_w"].T, Dl, Di),
        "g1_b": padb(p["g1_b"], Di),
    }
    for l in (2, 3):
        out[f"conv{l}_w"] = padw(p[f"conv{l}_w"], Di, Di)
        out[f"lin{l}_w"] = padw(p[f"lin{l}_w"].T, Di, Di)
        out[f"lin{l}_b"] = padb(p[f"lin{l}_b"], Di)
        out[f"g{l}_w"] = padw(p[f"g{l}_w"].T, Di, Di)
        out[f"g{l}_b"] = padb(p[f"g{l}_b"], Di)
    return out


def build_adjacency(num_user, num_item):
    """Deterministic bipartite user<->item edges both directions (aggr='add'):
    out[dst] = sum_src A[dst, src] * msg[src]."""
    u = jnp.arange(num_user)
    it = jnp.arange(num_item)
    mask = ((u[:, None] + it[None, :]) % 2 == 0).astype(jnp.float32)
    n = num_user + num_item
    adj = jnp.zeros((n, n), jnp.float32)
    adj = adj.at[:num_user, num_user:].set(mask)     # item -> user edges
    adj = adj.at[num_user:, :num_user].set(mask.T)   # user -> item edges
    return adj


# ---------------------------------------------------------------------------
if __name__ == "__main__":
    num_user, num_item = 64, 256
    dim_feat, dim_latent, dim_id = 64, 32, 32
    n_nodes = num_user + num_item

    key = jax.random.PRNGKey(0)
    k_param, k_feat, k_id = jax.random.split(key, 3)

    raw = make_params(k_param, num_user, num_item, dim_feat, dim_latent, dim_id)
    features = jax.random.normal(k_feat, (num_item, dim_feat), jnp.float32)
    id_embedding = jax.random.normal(k_id, (n_nodes, dim_id), jnp.float32)
    adj = build_adjacency(num_user, num_item)

    # ---- one-time padding / layout prep (exact: zero padding) -------------
    Df = _round_up(dim_feat, LANE)
    Dl = _round_up(dim_latent, LANE)
    Di = _round_up(dim_id, LANE)
    # tiles: multiples of 128 (native bf16 tiling); n_pad/TM = 2 parallel
    # i-blocks so v7x's 2 TensorCores both get work.
    TM = TK = TX = 256
    n_pad = _round_up(n_nodes, TM)              # 320 -> 512

    P = prepare_params(raw, dim_feat, dim_latent, dim_id)

    # preference in rows [0, num_user), item features in rows [num_user, n_nodes);
    # zeros elsewhere (build_x selects by row index, so no JAX concat per forward).
    pref_full = jnp.zeros((n_pad, Dl), jnp.float32)
    pref_full = pref_full.at[:num_user, :dim_latent].set(raw["preference"])
    feat_full = jnp.zeros((n_pad, Df), jnp.float32)
    feat_full = feat_full.at[num_user:num_user + num_item, :dim_feat].set(features)
    feat_full = feat_full.astype(jnp.bfloat16)

    id_p = jnp.pad(id_embedding, ((0, n_pad - n_nodes), (0, Di - dim_id)))
    adj_p = jnp.pad(adj, ((0, n_pad - n_nodes),
                          (0, n_pad - n_nodes))).astype(jnp.bfloat16)

    cfg = dict(tile_m=TM, tile_k=TK, tile_x=TX, num_nodes=n_nodes,
               num_user=num_user, dim_id=dim_id)
    fwd = jax.jit(build_forward(cfg))

    out = jax.block_until_ready(fwd(pref_full, feat_full, id_p, adj_p, P))
    assert out.shape == (n_nodes, dim_id), out.shape
    assert bool(jnp.all(jnp.isfinite(out)))
    print("KERNEL_OK")
</pallas_src>

<mosaic_0001>
module attributes {stable_mosaic.version = 11 : i64} {
  func.func @_build_x_kernel(%arg0: i32, %arg1: memref<256x128xf32, #tpu.memory_space<vmem>>, %arg2: memref<256x128xbf16, #tpu.memory_space<vmem>>, %arg3: memref<128x128xbf16, #tpu.memory_space<vmem>>, %arg4: memref<1x128xf32, #tpu.memory_space<vmem>>, %arg5: memref<256x128xbf16, #tpu.memory_space<vmem>>) attributes {dimension_semantics = [#tpu.dimension_semantics<parallel>], iteration_bounds = array<i64: 2>, scalar_prefetch = 0 : i64, scratch_operands = 0 : i64, tpu.core_type = #tpu.core_type<tc>, window_params = [{transform_indices = @transform_0, window_bounds = array<i64: 256, 128>}, {transform_indices = @transform_1, window_bounds = array<i64: 256, 128>}, {pipeline_mode = #tpu.pipeline_mode<synchronous>, transform_indices = @transform_2, window_bounds = array<i64: 128, 128>}, {pipeline_mode = #tpu.pipeline_mode<synchronous>, transform_indices = @transform_3, window_bounds = array<i64: 1, 128>}, {transform_indices = @transform_4, window_bounds = array<i64: 256, 128>}]} {
    %c256_i32 = arith.constant 256 : i32
    %0 = arith.muli %arg0, %c256_i32 : i32
    %1 = tpu.iota {dimensions = array<i32: 0>} : vector<256x1xi32>
    %2 = vector.broadcast %0 : i32 to vector<256x1xi32>
    %3 = arith.addi %2, %1 : vector<256x1xi32>
    %c0 = arith.constant 0 : index
    %c0_0 = arith.constant 0 : index
    %4 = vector.load %arg2[%c0, %c0_0] : memref<256x128xbf16, #tpu.memory_space<vmem>>, vector<256x128xbf16>
    %c0_1 = arith.constant 0 : index
    %c0_2 = arith.constant 0 : index
    %5 = vector.load %arg3[%c0_1, %c0_2] : memref<128x128xbf16, #tpu.memory_space<vmem>>, vector<128x128xbf16>
    %cst = arith.constant dense<0.000000e+00> : vector<256x128xf32>
    %6 = tpu.matmul %4, %5, %cst {dimension_numbers = #tpu.dot_dimension_numbers<[1], [0], [0], [1], [0, 0, 1, 1], [], []>} : vector<256x128xbf16>, vector<128x128xbf16>, vector<256x128xf32> -> vector<256x128xf32>
    %c0_3 = arith.constant 0 : index
    %c0_4 = arith.constant 0 : index
    %7 = vector.load %arg4[%c0_3, %c0_4] : memref<1x128xf32, #tpu.memory_space<vmem>>, vector<1x128xf32>
    %8 = vector.broadcast %7 : vector<1x128xf32> to vector<256x128xf32>
    %9 = arith.addf %6, %8 : vector<256x128xf32>
    %c64_i32 = arith.constant 64 : i32
    %10 = vector.broadcast %c64_i32 : i32 to vector<256x1xi32>
    %11 = arith.cmpi slt, %3, %10 : vector<256x1xi32>
    %c0_5 = arith.constant 0 : index
    %c0_6 = arith.constant 0 : index
    %12 = vector.load %arg1[%c0_5, %c0_6] : memref<256x128xf32, #tpu.memory_space<vmem>>, vector<256x128xf32>
    %13 = vector.shape_cast %11 : vector<256x1xi1> to vector<256x1xi1>
    %14 = vector.broadcast %13 : vector<256x1xi1> to vector<256x128xi1>
    %15 = arith.select %14, %12, %9 : vector<256x128xi1>, vector<256x128xf32>
    %c320_i32 = arith.constant 320 : i32
    %16 = vector.broadcast %c320_i32 : i32 to vector<256x1xi32>
    %17 = arith.cmpi slt, %3, %16 : vector<256x1xi32>
    %cst_7 = arith.constant 0.000000e+00 : f32
    %18 = vector.shape_cast %17 : vector<256x1xi1> to vector<256x1xi1>
    %19 = vector.broadcast %18 : vector<256x1xi1> to vector<256x128xi1>
    %20 = vector.broadcast %cst_7 : f32 to vector<256x128xf32>
    %21 = arith.select %19, %15, %20 : vector<256x128xi1>, vector<256x128xf32>
    %22 = arith.mulf %21, %21 : vector<256x128xf32>
    %cst_8 = arith.constant dense<0.000000e+00> : vector<256xf32>
    %23 = vector.multi_reduction <add>, %22, %cst_8 [1] : vector<256x128xf32> to vector<256xf32>
    %24 = vector.shape_cast %23 : vector<256xf32> to vector<256x1xf32>
    %cst_9 = arith.constant 1.000000e-24 : f32
    %25 = vector.broadcast %cst_9 : f32 to vector<256x1xf32>
    %26 = arith.maximumf %24, %25 : vector<256x1xf32>
    %27 = math.rsqrt %26 : vector<256x1xf32>
    %28 = vector.broadcast %27 : vector<256x1xf32> to vector<256x128xf32>
    %29 = arith.mulf %21, %28 : vector<256x128xf32>
    %30 = arith.truncf %29 : vector<256x128xf32> to vector<256x128xbf16>
    %c0_10 = arith.constant 0 : index
    %c0_11 = arith.constant 0 : index
    %31 = vector.load %arg5[%c0_10, %c0_11] : memref<256x128xbf16, #tpu.memory_space<vmem>>, vector<256x128xbf16>
    tpu.vector_store %arg5[%c0_10, %c0_11], %30 {strides = array<i32>} : memref<256x128xbf16, #tpu.memory_space<vmem>>, vector<256x128xbf16>,
    return
  }
  func.func @transform_0(%arg0: i32) -> (i32, i32) {
    %c0_i32 = arith.constant 0 : i32
    %c0_i32_0 = arith.constant 0 : i32
    return %arg0, %c0_i32 : i32, i32
  }
  func.func @transform_1(%arg0: i32) -> (i32, i32) {
    %c0_i32 = arith.constant 0 : i32
    %c0_i32_0 = arith.constant 0 : i32
    return %arg0, %c0_i32 : i32, i32
  }
  func.func @transform_2(%arg0: i32) -> (i32, i32) {
    %c0_i32 = arith.constant 0 : i32
    %c0_i32_0 = arith.constant 0 : i32
    %c0_i32_1 = arith.constant 0 : i32
    return %c0_i32, %c0_i32_0 : i32, i32
  }
  func.func @transform_3(%arg0: i32) -> (i32, i32) {
    %c0_i32 = arith.constant 0 : i32
    %c0_i32_0 = arith.constant 0 : i32
    %c0_i32_1 = arith.constant 0 : i32
    return %c0_i32, %c0_i32_0 : i32, i32
  }
  func.func @transform_4(%arg0: i32) -> (i32, i32) {
    %c0_i32 = arith.constant 0 : i32
    %c0_i32_0 = arith.constant 0 : i32
    return %arg0, %c0_i32 : i32, i32
  }
}

module attributes {stable_mosaic.version = 11 : i64} {
  func.func @_layer_kernel(%arg0: i32, %arg1: i32, %arg2: memref<256x256xbf16, #tpu.memory_space<vmem>>, %arg3: memref<256x128xbf16, #tpu.memory_space<vmem>>, %arg4: memref<256x128xbf16, #tpu.memory_space<vmem>>, %arg5: memref<128x128xbf16, #tpu.memory_space<vmem>>, %arg6: memref<128x128xbf16, #tpu.memory_space<vmem>>, %arg7: memref<1x128xf32, #tpu.memory_space<vmem>>, %arg8: memref<128x128xbf16, #tpu.memory_space<vmem>>, %arg9: memref<1x128xf32, #tpu.memory_space<vmem>>, %arg10: memref<256x128xf32, #tpu.memory_space<vmem>>, %arg11: memref<256x128xbf16, #tpu.memory_space<vmem>>, %arg12: memref<256x128xf32, #tpu.memory_space<vmem>>) attributes {dimension_semantics = [#tpu.dimension_semantics<parallel>, #tpu.dimension_semantics<arbitrary>], iteration_bounds = array<i64: 2, 2>, scalar_prefetch = 0 : i64, scratch_operands = 1 : i64, tpu.core_type = #tpu.core_type<tc>, window_params = [{transform_indices = @transform_0, window_bounds = array<i64: 256, 256>}, {transform_indices = @transform_1, window_bounds = array<i64: 256, 128>}, {transform_indices = @transform_2, window_bounds = array<i64: 256, 128>}, {pipeline_mode = #tpu.pipeline_mode<synchronous>, transform_indices = @transform_3, window_bounds = array<i64: 128, 128>}, {pipeline_mode = #tpu.pipeline_mode<synchronous>, transform_indices = @transform_4, window_bounds = array<i64: 128, 128>}, {pipeline_mode = #tpu.pipeline_mode<synchronous>, transform_indices = @transform_5, window_bounds = array<i64: 1, 128>}, {pipeline_mode = #tpu.pipeline_mode<synchronous>, transform_indices = @transform_6, window_bounds = array<i64: 128, 128>}, {pipeline_mode = #tpu.pipeline_mode<synchronous>, transform_indices = @transform_7, window_bounds = array<i64: 1, 128>}, {transform_indices = @transform_8, window_bounds = array<i64: 256, 128>}, {transform_indices = @transform_9, window_bounds = array<i64: 256, 128>}]} {
    %c0_i32 = arith.constant 0 : i32
    %0 = arith.cmpi eq, %arg1, %c0_i32 : i32
    %1 = arith.extui %0 : i1 to i32
    %c0_i32_0 = arith.constant 0 : i32
    %2 = arith.cmpi ne, %1, %c0_i32_0 : i32
    scf.if %2 {
      %cst_12 = arith.constant 0.000000e+00 : f32
      %15 = vector.broadcast %cst_12 : f32 to vector<256x128xf32>
      %c0_13 = arith.constant 0 : index
      %c0_14 = arith.constant 0 : index
      %16 = vector.load %arg12[%c0_13, %c0_14] : memref<256x128xf32, #tpu.memory_space<vmem>>, vector<256x128xf32>
      tpu.vector_store %arg12[%c0_13, %c0_14], %15 {strides = array<i32>} : memref<256x128xf32, #tpu.memory_space<vmem>>, vector<256x128xf32>,
    } else {
    }
    %c0 = arith.constant 0 : index
    %c0_1 = arith.constant 0 : index
    %3 = vector.load %arg3[%c0, %c0_1] : memref<256x128xbf16, #tpu.memory_space<vmem>>, vector<256x128xbf16>
    %c0_2 = arith.constant 0 : index
    %c0_3 = arith.constant 0 : index
    %4 = vector.load %arg5[%c0_2, %c0_3] : memref<128x128xbf16, #tpu.memory_space<vmem>>, vector<128x128xbf16>
    %cst = arith.constant dense<0.000000e+00> : vector<256x128xf32>
    %5 = tpu.matmul %3, %4, %cst {dimension_numbers = #tpu.dot_dimension_numbers<[1], [0], [0], [1], [0, 0, 1, 1], [], []>} : vector<256x128xbf16>, vector<128x128xbf16>, vector<256x128xf32> -> vector<256x128xf32>
    %c0_4 = arith.constant 0 : index
    %c0_5 = arith.constant 0 : index
    %6 = vector.load %arg12[%c0_4, %c0_5] : memref<256x128xf32, #tpu.memory_space<vmem>>, vector<256x128xf32>
    %c0_6 = arith.constant 0 : index
    %c0_7 = arith.constant 0 : index
    %7 = vector.load %arg2[%c0_6, %c0_7] : memref<256x256xbf16, #tpu.memory_space<vmem>>, vector<256x256xbf16>
    %8 = arith.truncf %5 : vector<256x128xf32> to vector<256x128xbf16>
    %cst_8 = arith.constant dense<0.000000e+00> : vector<256x128xf32>
    %9 = tpu.matmul %7, %8, %cst_8 {dimension_numbers = #tpu.dot_dimension_numbers<[1], [0], [0], [1], [0, 0, 1, 1], [], []>} : vector<256x256xbf16>, vector<256x128xbf16>, vector<256x128xf32> -> vector<256x128xf32>
    %10 = arith.addf %6, %9 : vector<256x128xf32>
    %c0_9 = arith.constant 0 : index
    %c0_10 = arith.constant 0 : index
    %11 = vector.load %arg12[%c0_9, %c0_10] : memref<256x128xf32, #tpu.memory_space<vmem>>, vector<256x128xf32>
    tpu.vector_store %arg12[%c0_9, %c0_10], %10 {strides = array<i32>} : memref<256x128xf32, #tpu.memory_space<vmem>>, vector<256x128xf32>,
    %c1_i32 = arith.constant 1 : i32
    %12 = arith.cmpi eq, %arg1, %c1_i32 : i32
    %13 = arith.extui %12 : i1 to i32
    %c0_i32_11 = arith.constant 0 : i32
    %14 = arith.cmpi ne, %13, %c0_i32_11 : i32
    scf.if %14 {
      %c0_12 = arith.constant 0 : index
      %c0_13 = arith.constant 0 : index
      %15 = vector.load %arg4[%c0_12, %c0_13] : memref<256x128xbf16, #tpu.memory_space<vmem>>, vector<256x128xbf16>
      %c0_14 = arith.constant 0 : index
      %c0_15 = arith.constant 0 : index
      %16 = vector.load %arg6[%c0_14, %c0_15] : memref<128x128xbf16, #tpu.memory_space<vmem>>, vector<128x128xbf16>
      %cst_16 = arith.constant dense<0.000000e+00> : vector<256x128xf32>
      %17 = tpu.matmul %15, %16, %cst_16 {dimension_numbers = #tpu.dot_dimension_numbers<[1], [0], [0], [1], [0, 0, 1, 1], [], []>} : vector<256x128xbf16>, vector<128x128xbf16>, vector<256x128xf32> -> vector<256x128xf32>
      %c0_17 = arith.constant 0 : index
      %c0_18 = arith.constant 0 : index
      %18 = vector.load %arg7[%c0_17, %c0_18] : memref<1x128xf32, #tpu.memory_space<vmem>>, vector<1x128xf32>
      %19 = vector.broadcast %18 : vector<1x128xf32> to vector<256x128xf32>
      %20 = arith.addf %17, %19 : vector<256x128xf32>
      %cst_19 = arith.constant 0.000000e+00 : f32
      %21 = vector.broadcast %cst_19 : f32 to vector<256x128xf32>
      %22 = arith.cmpf oge, %20, %21 : vector<256x128xf32>
      %cst_20 = arith.constant 0.00999999977 : f32
      %23 = vector.broadcast %cst_20 : f32 to vector<256x128xf32>
      %24 = arith.mulf %23, %20 : vector<256x128xf32>
      %25 = arith.select %22, %20, %24 : vector<256x128xi1>, vector<256x128xf32>
      %c0_21 = arith.constant 0 : index
      %c0_22 = arith.constant 0 : index
      %26 = vector.load %arg10[%c0_21, %c0_22] : memref<256x128xf32, #tpu.memory_space<vmem>>, vector<256x128xf32>
      %27 = arith.addf %25, %26 : vector<256x128xf32>
      %c0_23 = arith.constant 0 : index
      %c0_24 = arith.constant 0 : index
      %28 = vector.load %arg12[%c0_23, %c0_24] : memref<256x128xf32, #tpu.memory_space<vmem>>, vector<256x128xf32>
      %cst_25 = arith.constant 0.000000e+00 : f32
      %29 = vector.broadcast %cst_25 : f32 to vector<256x128xf32>
      %30 = arith.cmpf oge, %28, %29 : vector<256x128xf32>
      %cst_26 = arith.constant 0.00999999977 : f32
      %31 = vector.broadcast %cst_26 : f32 to vector<256x128xf32>
      %32 = arith.mulf %31, %28 : vector<256x128xf32>
      %33 = arith.select %30, %28, %32 : vector<256x128xi1>, vector<256x128xf32>
      %34 = arith.truncf %33 : vector<256x128xf32> to vector<256x128xbf16>
      %c0_27 = arith.constant 0 : index
      %c0_28 = arith.constant 0 : index
      %35 = vector.load %arg8[%c0_27, %c0_28] : memref<128x128xbf16, #tpu.memory_space<vmem>>, vector<128x128xbf16>
      %cst_29 = arith.constant dense<0.000000e+00> : vector<256x128xf32>
      %36 = tpu.matmul %34, %35, %cst_29 {dimension_numbers = #tpu.dot_dimension_numbers<[1], [0], [0], [1], [0, 0, 1, 1], [], []>} : vector<256x128xbf16>, vector<128x128xbf16>, vector<256x128xf32> -> vector<256x128xf32>
      %c0_30 = arith.constant 0 : index
      %c0_31 = arith.constant 0 : index
      %37 = vector.load %arg9[%c0_30, %c0_31] : memref<1x128xf32, #tpu.memory_space<vmem>>, vector<1x128xf32>
      %38 = vector.broadcast %37 : vector<1x128xf32> to vector<256x128xf32>
      %39 = arith.addf %36, %38 : vector<256x128xf32>
      %40 = arith.addf %39, %27 : vector<256x128xf32>
      %cst_32 = arith.constant 0.000000e+00 : f32
      %41 = vector.broadcast %cst_32 : f32 to vector<256x128xf32>
      %42 = arith.cmpf oge, %40, %41 : vector<256x128xf32>
      %cst_33 = arith.constant 0.00999999977 : f32
      %43 = vector.broadcast %cst_33 : f32 to vector<256x128xf32>
      %44 = arith.mulf %43, %40 : vector<256x128xf32>
      %45 = arith.select %42, %40, %44 : vector<256x128xi1>, vector<256x128xf32>
      %46 = arith.truncf %45 : vector<256x128xf32> to vector<256x128xbf16>
      %c0_34 = arith.constant 0 : index
      %c0_35 = arith.constant 0 : index
      %47 = vector.load %arg11[%c0_34, %c0_35] : memref<256x128xbf16, #tpu.memory_space<vmem>>, vector<256x128xbf16>
      tpu.vector_store %arg11[%c0_34, %c0_35], %46 {strides = array<i32>} : memref<256x128xbf16, #tpu.memory_space<vmem>>, vector<256x128xbf16>,
    } else {
    }
    return
  }
  func.func @transform_0(%arg0: i32, %arg1: i32) -> (i32, i32) {
    %c0_i32 = arith.constant 0 : i32
    return %arg0, %arg1 : i32, i32
  }
  func.func @transform_1(%arg0: i32, %arg1: i32) -> (i32, i32) {
    %c0_i32 = arith.constant 0 : i32
    %c0_i32_0 = arith.constant 0 : i32
    return %arg1, %c0_i32 : i32, i32
  }
  func.func @transform_2(%arg0: i32, %arg1: i32) -> (i32, i32) {
    %c0_i32 = arith.constant 0 : i32
    %c0_i32_0 = arith.constant 0 : i32
    return %arg0, %c0_i32 : i32, i32
  }
  func.func @transform_3(%arg0: i32, %arg1: i32) -> (i32, i32) {
    %c0_i32 = arith.constant 0 : i32
    %c0_i32_0 = arith.constant 0 : i32
    %c0_i32_1 = arith.constant 0 : i32
    return %c0_i32, %c0_i32_0 : i32, i32
  }
  func.func @transform_4(%arg0: i32, %arg1: i32) -> (i32, i32) {
    %c0_i32 = arith.constant 0 : i32
    %c0_i32_0 = arith.constant 0 : i32
    %c0_i32_1 = arith.constant 0 : i32
    return %c0_i32, %c0_i32_0 : i32, i32
  }
  func.func @transform_5(%arg0: i32, %arg1: i32) -> (i32, i32) {
    %c0_i32 = arith.constant 0 : i32
    %c0_i32_0 = arith.constant 0 : i32
    %c0_i32_1 = arith.constant 0 : i32
    return %c0_i32, %c0_i32_0 : i32, i32
  }
  func.func @transform_6(%arg0: i32, %arg1: i32) -> (i32, i32) {
    %c0_i32 = arith.constant 0 : i32
    %c0_i32_0 = arith.constant 0 : i32
    %c0_i32_1 = arith.constant 0 : i32
    return %c0_i32, %c0_i32_0 : i32, i32
  }
  func.func @transform_7(%arg0: i32, %arg1: i32) -> (i32, i32) {
    %c0_i32 = arith.constant 0 : i32
    %c0_i32_0 = arith.constant 0 : i32
    %c0_i32_1 = arith.constant 0 : i32
    return %c0_i32, %c0_i32_0 : i32, i32
  }
  func.func @transform_8(%arg0: i32, %arg1: i32) -> (i32, i32) {
    %c0_i32 = arith.constant 0 : i32
    %c0_i32_0 = arith.constant 0 : i32
    return %arg0, %c0_i32 : i32, i32
  }
  func.func @transform_9(%arg0: i32, %arg1: i32) -> (i32, i32) {
    %c0_i32 = arith.constant 0 : i32
    %c0_i32_0 = arith.constant 0 : i32
    return %arg0, %c0_i32 : i32, i32
  }
}

module attributes {stable_mosaic.version = 11 : i64} {
  func.func @_layer_kernel(%arg0: i32, %arg1: i32, %arg2: memref<256x256xbf16, #tpu.memory_space<vmem>>, %arg3: memref<256x128xbf16, #tpu.memory_space<vmem>>, %arg4: memref<256x128xbf16, #tpu.memory_space<vmem>>, %arg5: memref<128x128xbf16, #tpu.memory_space<vmem>>, %arg6: memref<128x128xbf16, #tpu.memory_space<vmem>>, %arg7: memref<1x128xf32, #tpu.memory_space<vmem>>, %arg8: memref<128x128xbf16, #tpu.memory_space<vmem>>, %arg9: memref<1x128xf32, #tpu.memory_space<vmem>>, %arg10: memref<256x128xf32, #tpu.memory_space<vmem>>, %arg11: memref<256x128xbf16, #tpu.memory_space<vmem>>, %arg12: memref<256x128xf32, #tpu.memory_space<vmem>>) attributes {dimension_semantics = [#tpu.dimension_semantics<parallel>, #tpu.dimension_semantics<arbitrary>], iteration_bounds = array<i64: 2, 2>, scalar_prefetch = 0 : i64, scratch_operands = 1 : i64, tpu.core_type = #tpu.core_type<tc>, window_params = [{transform_indices = @transform_0, window_bounds = array<i64: 256, 256>}, {transform_indices = @transform_1, window_bounds = array<i64: 256, 128>}, {transform_indices = @transform_2, window_bounds = array<i64: 256, 128>}, {pipeline_mode = #tpu.pipeline_mode<synchronous>, transform_indices = @transform_3, window_bounds = array<i64: 128, 128>}, {pipeline_mode = #tpu.pipeline_mode<synchronous>, transform_indices = @transform_4, window_bounds = array<i64: 128, 128>}, {pipeline_mode = #tpu.pipeline_mode<synchronous>, transform_indices = @transform_5, window_bounds = array<i64: 1, 128>}, {pipeline_mode = #tpu.pipeline_mode<synchronous>, transform_indices = @transform_6, window_bounds = array<i64: 128, 128>}, {pipeline_mode = #tpu.pipeline_mode<synchronous>, transform_indices = @transform_7, window_bounds = array<i64: 1, 128>}, {transform_indices = @transform_8, window_bounds = array<i64: 256, 128>}, {transform_indices = @transform_9, window_bounds = array<i64: 256, 128>}]} {
    %c0_i32 = arith.constant 0 : i32
    %0 = arith.cmpi eq, %arg1, %c0_i32 : i32
    %1 = arith.extui %0 : i1 to i32
    %c0_i32_0 = arith.constant 0 : i32
    %2 = arith.cmpi ne, %1, %c0_i32_0 : i32
    scf.if %2 {
      %cst_12 = arith.constant 0.000000e+00 : f32
      %15 = vector.broadcast %cst_12 : f32 to vector<256x128xf32>
      %c0_13 = arith.constant 0 : index
      %c0_14 = arith.constant 0 : index
      %16 = vector.load %arg12[%c0_13, %c0_14] : memref<256x128xf32, #tpu.memory_space<vmem>>, vector<256x128xf32>
      tpu.vector_store %arg12[%c0_13, %c0_14], %15 {strides = array<i32>} : memref<256x128xf32, #tpu.memory_space<vmem>>, vector<256x128xf32>,
    } else {
    }
    %c0 = arith.constant 0 : index
    %c0_1 = arith.constant 0 : index
    %3 = vector.load %arg3[%c0, %c0_1] : memref<256x128xbf16, #tpu.memory_space<vmem>>, vector<256x128xbf16>
    %c0_2 = arith.constant 0 : index
    %c0_3 = arith.constant 0 : index
    %4 = vector.load %arg5[%c0_2, %c0_3] : memref<128x128xbf16, #tpu.memory_space<vmem>>, vector<128x128xbf16>
    %cst = arith.constant dense<0.000000e+00> : vector<256x128xf32>
    %5 = tpu.matmul %3, %4, %cst {dimension_numbers = #tpu.dot_dimension_numbers<[1], [0], [0], [1], [0, 0, 1, 1], [], []>} : vector<256x128xbf16>, vector<128x128xbf16>, vector<256x128xf32> -> vector<256x128xf32>
    %c0_4 = arith.constant 0 : index
    %c0_5 = arith.constant 0 : index
    %6 = vector.load %arg12[%c0_4, %c0_5] : memref<256x128xf32, #tpu.memory_space<vmem>>, vector<256x128xf32>
    %c0_6 = arith.constant 0 : index
    %c0_7 = arith.constant 0 : index
    %7 = vector.load %arg2[%c0_6, %c0_7] : memref<256x256xbf16, #tpu.memory_space<vmem>>, vector<256x256xbf16>
    %8 = arith.truncf %5 : vector<256x128xf32> to vector<256x128xbf16>
    %cst_8 = arith.constant dense<0.000000e+00> : vector<256x128xf32>
    %9 = tpu.matmul %7, %8, %cst_8 {dimension_numbers = #tpu.dot_dimension_numbers<[1], [0], [0], [1], [0, 0, 1, 1], [], []>} : vector<256x256xbf16>, vector<256x128xbf16>, vector<256x128xf32> -> vector<256x128xf32>
    %10 = arith.addf %6, %9 : vector<256x128xf32>
    %c0_9 = arith.constant 0 : index
    %c0_10 = arith.constant 0 : index
    %11 = vector.load %arg12[%c0_9, %c0_10] : memref<256x128xf32, #tpu.memory_space<vmem>>, vector<256x128xf32>
    tpu.vector_store %arg12[%c0_9, %c0_10], %10 {strides = array<i32>} : memref<256x128xf32, #tpu.memory_space<vmem>>, vector<256x128xf32>,
    %c1_i32 = arith.constant 1 : i32
    %12 = arith.cmpi eq, %arg1, %c1_i32 : i32
    %13 = arith.extui %12 : i1 to i32
    %c0_i32_11 = arith.constant 0 : i32
    %14 = arith.cmpi ne, %13, %c0_i32_11 : i32
    scf.if %14 {
      %c0_12 = arith.constant 0 : index
      %c0_13 = arith.constant 0 : index
      %15 = vector.load %arg4[%c0_12, %c0_13] : memref<256x128xbf16, #tpu.memory_space<vmem>>, vector<256x128xbf16>
      %c0_14 = arith.constant 0 : index
      %c0_15 = arith.constant 0 : index
      %16 = vector.load %arg6[%c0_14, %c0_15] : memref<128x128xbf16, #tpu.memory_space<vmem>>, vector<128x128xbf16>
      %cst_16 = arith.constant dense<0.000000e+00> : vector<256x128xf32>
      %17 = tpu.matmul %15, %16, %cst_16 {dimension_numbers = #tpu.dot_dimension_numbers<[1], [0], [0], [1], [0, 0, 1, 1], [], []>} : vector<256x128xbf16>, vector<128x128xbf16>, vector<256x128xf32> -> vector<256x128xf32>
      %c0_17 = arith.constant 0 : index
      %c0_18 = arith.constant 0 : index
      %18 = vector.load %arg7[%c0_17, %c0_18] : memref<1x128xf32, #tpu.memory_space<vmem>>, vector<1x128xf32>
      %19 = vector.broadcast %18 : vector<1x128xf32> to vector<256x128xf32>
      %20 = arith.addf %17, %19 : vector<256x128xf32>
      %cst_19 = arith.constant 0.000000e+00 : f32
      %21 = vector.broadcast %cst_19 : f32 to vector<256x128xf32>
      %22 = arith.cmpf oge, %20, %21 : vector<256x128xf32>
      %cst_20 = arith.constant 0.00999999977 : f32
      %23 = vector.broadcast %cst_20 : f32 to vector<256x128xf32>
      %24 = arith.mulf %23, %20 : vector<256x128xf32>
      %25 = arith.select %22, %20, %24 : vector<256x128xi1>, vector<256x128xf32>
      %c0_21 = arith.constant 0 : index
      %c0_22 = arith.constant 0 : index
      %26 = vector.load %arg10[%c0_21, %c0_22] : memref<256x128xf32, #tpu.memory_space<vmem>>, vector<256x128xf32>
      %27 = arith.addf %25, %26 : vector<256x128xf32>
      %c0_23 = arith.constant 0 : index
      %c0_24 = arith.constant 0 : index
      %28 = vector.load %arg12[%c0_23, %c0_24] : memref<256x128xf32, #tpu.memory_space<vmem>>, vector<256x128xf32>
      %cst_25 = arith.constant 0.000000e+00 : f32
      %29 = vector.broadcast %cst_25 : f32 to vector<256x128xf32>
      %30 = arith.cmpf oge, %28, %29 : vector<256x128xf32>
      %cst_26 = arith.constant 0.00999999977 : f32
      %31 = vector.broadcast %cst_26 : f32 to vector<256x128xf32>
      %32 = arith.mulf %31, %28 : vector<256x128xf32>
      %33 = arith.select %30, %28, %32 : vector<256x128xi1>, vector<256x128xf32>
      %34 = arith.truncf %33 : vector<256x128xf32> to vector<256x128xbf16>
      %c0_27 = arith.constant 0 : index
      %c0_28 = arith.constant 0 : index
      %35 = vector.load %arg8[%c0_27, %c0_28] : memref<128x128xbf16, #tpu.memory_space<vmem>>, vector<128x128xbf16>
      %cst_29 = arith.constant dense<0.000000e+00> : vector<256x128xf32>
      %36 = tpu.matmul %34, %35, %cst_29 {dimension_numbers = #tpu.dot_dimension_numbers<[1], [0], [0], [1], [0, 0, 1, 1], [], []>} : vector<256x128xbf16>, vector<128x128xbf16>, vector<256x128xf32> -> vector<256x128xf32>
      %c0_30 = arith.constant 0 : index
      %c0_31 = arith.constant 0 : index
      %37 = vector.load %arg9[%c0_30, %c0_31] : memref<1x128xf32, #tpu.memory_space<vmem>>, vector<1x128xf32>
      %38 = vector.broadcast %37 : vector<1x128xf32> to vector<256x128xf32>
      %39 = arith.addf %36, %38 : vector<256x128xf32>
      %40 = arith.addf %39, %27 : vector<256x128xf32>
      %cst_32 = arith.constant 0.000000e+00 : f32
      %41 = vector.broadcast %cst_32 : f32 to vector<256x128xf32>
      %42 = arith.cmpf oge, %40, %41 : vector<256x128xf32>
      %cst_33 = arith.constant 0.00999999977 : f32
      %43 = vector.broadcast %cst_33 : f32 to vector<256x128xf32>
      %44 = arith.mulf %43, %40 : vector<256x128xf32>
      %45 = arith.select %42, %40, %44 : vector<256x128xi1>, vector<256x128xf32>
      %46 = arith.truncf %45 : vector<256x128xf32> to vector<256x128xbf16>
      %c0_34 = arith.constant 0 : index
      %c0_35 = arith.constant 0 : index
      %47 = vector.load %arg11[%c0_34, %c0_35] : memref<256x128xbf16, #tpu.memory_space<vmem>>, vector<256x128xbf16>
      tpu.vector_store %arg11[%c0_34, %c0_35], %46 {strides = array<i32>} : memref<256x128xbf16, #tpu.memory_space<vmem>>, vector<256x128xbf16>,
    } else {
    }
    return
  }
  func.func @transform_0(%arg0: i32, %arg1: i32) -> (i32, i32) {
    %c0_i32 = arith.constant 0 : i32
    return %arg0, %arg1 : i32, i32
  }
  func.func @transform_1(%arg0: i32, %arg1: i32) -> (i32, i32) {
    %c0_i32 = arith.constant 0 : i32
    %c0_i32_0 = arith.constant 0 : i32
    return %arg1, %c0_i32 : i32, i32
  }
  func.func @transform_2(%arg0: i32, %arg1: i32) -> (i32, i32) {
    %c0_i32 = arith.constant 0 : i32
    %c0_i32_0 = arith.constant 0 : i32
    return %arg0, %c0_i32 : i32, i32
  }
  func.func @transform_3(%arg0: i32, %arg1: i32) -> (i32, i32) {
    %c0_i32 = arith.constant 0 : i32
    %c0_i32_0 = arith.constant 0 : i32
    %c0_i32_1 = arith.constant 0 : i32
    return %c0_i32, %c0_i32_0 : i32, i32
  }
  func.func @transform_4(%arg0: i32, %arg1: i32) -> (i32, i32) {
    %c0_i32 = arith.constant 0 : i32
    %c0_i32_0 = arith.constant 0 : i32
    %c0_i32_1 = arith.constant 0 : i32
    return %c0_i32, %c0_i32_0 : i32, i32
  }
  func.func @transform_5(%arg0: i32, %arg1: i32) -> (i32, i32) {
    %c0_i32 = arith.constant 0 : i32
    %c0_i32_0 = arith.constant 0 : i32
    %c0_i32_1 = arith.constant 0 : i32
    return %c0_i32, %c0_i32_0 : i32, i32
  }
  func.func @transform_6(%arg0: i32, %arg1: i32) -> (i32, i32) {
    %c0_i32 = arith.constant 0 : i32
    %c0_i32_0 = arith.constant 0 : i32
    %c0_i32_1 = arith.constant 0 : i32
    return %c0_i32, %c0_i32_0 : i32, i32
  }
  func.func @transform_7(%arg0: i32, %arg1: i32) -> (i32, i32) {
    %c0_i32 = arith.constant 0 : i32
    %c0_i32_0 = arith.constant 0 : i32
    %c0_i32_1 = arith.constant 0 : i32
    return %c0_i32, %c0_i32_0 : i32, i32
  }
  func.func @transform_8(%arg0: i32, %arg1: i32) -> (i32, i32) {
    %c0_i32 = arith.constant 0 : i32
    %c0_i32_0 = arith.constant 0 : i32
    return %arg0, %c0_i32 : i32, i32
  }
  func.func @transform_9(%arg0: i32, %arg1: i32) -> (i32, i32) {
    %c0_i32 = arith.constant 0 : i32
    %c0_i32_0 = arith.constant 0 : i32
    return %arg0, %c0_i32 : i32, i32
  }
}

</mosaic_0001>

<llo_original>
// kernel: fwd.4
$region0: #{fwd.4}
  #allocation0 [shape = 'u32[]', space=smem, size = 0x4, offset = 0x4, fixed_abs, tag = 'smem constant byte address 0x4 - core index']
  #allocation1 [shape = 'u32[144,128]{1,0:T(1,128)}', space=vmem, size = 0x12000, scoped, tag = 'internal scratch']
  %s0 = inlined_call_operand.hbm [shape: f32[512,128], index: 0, kind: input, shape index: {}]
  %s1 = inlined_call_operand.hbm [shape: bf16[512,128], index: 1, kind: input, shape index: {}]
  %s2 = inlined_call_operand.hbm [shape: bf16[128,128], index: 2, kind: input, shape index: {}]
  %s3 = inlined_call_operand.hbm [shape: f32[1,128], index: 3, kind: input, shape index: {}]
  %s4 = inlined_call_operand.vmem [shape: bf16[512,128], index: 4, kind: output, shape index: {}]
  %s5 = sld [smem:[#allocation0]]
  $region65: #{fwd.4} parent=0
    _
  %s7 = ssub.s32 1, %s5
  %s8 = scalar_select 0, %s7, %s5
  $region1: #{fwd.4} parent=0
    #allocation2 [shape = 'u8[262144]{0}', space=vmem, size = 0x40000, scoped, tag = 'input window, operand 0']
    #allocation3 [shape = 's32[2]{0}', space=sflag, size = 0x8, scoped, tag = 'scoped memory for fwd.4']
    #allocation4 [shape = 'u8[131072]{0}', space=vmem, size = 0x20000, scoped, tag = 'input window, operand 1']
    #allocation5 [shape = 's32[2]{0}', space=sflag, size = 0x8, scoped, tag = 'scoped memory for fwd.4']
    #allocation6 [shape = 'u8[32768]{0}', space=vmem, size = 0x8000, scoped, tag = 'input window, operand 2, single buffered']
    #allocation7 [shape = 'u8[512]{0}', space=vmem, size = 0x400, scoped, tag = 'input window, operand 3, single buffered']
    #allocation8 [shape = 's32[1]{0}', space=sflag, size = 0x4, scoped, tag = 'scoped memory for fwd.4']
    %9 = vsyncpa [#allocation3], 0
    %s10 = scalar_lea.sflag [#allocation3], 1
    %11 = vsyncpa %s10, 0
    %12 = vsyncpa [#allocation5], 0
    %s13 = scalar_lea.sflag [#allocation5], 1
    %14 = vsyncpa %s13, 0
    %15 = vsyncpa [#allocation8], 0
    loop: start=0, step=1, limit=4
    $region2: #{fwd.4} parent=1 // loop_pre_header
      _
    $region3: #{fwd.4} parent=1 // loop_header
      %s17 = sphi 0, %s21
      %p18 = scmp.ge.s32.totalorder %s17, 4
      %s27 = sphi 0, %s29
      %s30 = sphi 0, %s27
      %s31 = sphi 0, %s30
      %s47 = sphi 0, %s31
      %s53 = sphi 0, %s55
      %s56 = sphi 0, %s53
      %s57 = sphi 0, %s56
      %s73 = sphi 0, %s57
      %s77 = sphi 0, %s77
      %s79 = sphi 0, %s77
      %s80 = sphi 0, %s79
      %s94 = sphi 0, %s80
      %s98 = sphi 0, %s98
      %s100 = sphi 0, %s98
      %s101 = sphi 0, %s100
      %s115 = sphi 0, %s101
      %s121 = sphi 0, %s123
      %s124 = sphi 0, %s121
      %s125 = sphi 0, %s124
      %s141 = sphi 0, %s125
    $region4: #{fwd.4} parent=1 // loop_header_branch
      %20 = sbr.rel (%p18) target = $region8
    $region5: #{fwd.4} parent=1 // loop_body
      %s22 = ssub.s32 %s17, 1
      %s23 = ssub.s32 %s17, 2
      %s24 = sadd.s32 %s17, 1
      %s25 = ssub.s32 %s17, %s24
      %p26 = scmp.eq.s32.totalorder %s25, 0
      %s28 = sadd.s32 %s27, 1
      %s29 = scalar_select %p26, %s27, %s28
      %p32 = pneg %p26
      %p33 = scmp.eq.s32.totalorder %s17, 1
      %p34 = por %p32, %p33
      %p35 = scmp.ne.s32.totalorder %s27, %s30
      %p36 = scmp.eq.s32.totalorder %s17, 0
      %p37 = por %p35, %p36
      %p38 = scmp.ne.s32.totalorder %s27, %s30
      %p39 = scmp.eq.s32.totalorder %s22, 1
      %p40 = por %p38, %p39
      %p41 = scmp.ne.s32.totalorder %s30, %s31
      %p42 = scmp.eq.s32.totalorder %s22, 0
      %p43 = por %p41, %p42
      %p44 = scmp.ne.s32.totalorder %s30, %s31
      %p45 = scmp.eq.s32.totalorder %s23, 1
      %p46 = por %p44, %p45
      %p48 = scmp.ne.s32.totalorder %s31, %s47
      %p49 = scmp.eq.s32.totalorder %s23, 0
      %p50 = por %p48, %p49
      %s51 = ssub.s32 %s17, %s24
      %p52 = scmp.eq.s32.totalorder %s51, 0
      %s54 = sadd.s32 %s53, 1
      %s55 = scalar_select %p52, %s53, %s54
      %p58 = pneg %p52
      %p59 = scmp.eq.s32.totalorder %s17, 1
      %p60 = por %p58, %p59
      %p61 = scmp.ne.s32.totalorder %s53, %s56
      %p62 = scmp.eq.s32.totalorder %s17, 0
      %p63 = por %p61, %p62
      %p64 = scmp.ne.s32.totalorder %s53, %s56
      %p65 = scmp.eq.s32.totalorder %s22, 1
      %p66 = por %p64, %p65
      %p67 = scmp.ne.s32.totalorder %s56, %s57
      %p68 = scmp.eq.s32.totalorder %s22, 0
      %p69 = por %p67, %p68
      %p70 = scmp.ne.s32.totalorder %s56, %s57
      %p71 = scmp.eq.s32.totalorder %s23, 1
      %p72 = por %p70, %p71
      %p74 = scmp.ne.s32.totalorder %s57, %s73
      %p75 = scmp.eq.s32.totalorder %s23, 0
      %p76 = por %p74, %p75
      %s78 = sadd.s32 %s77, 1
      %p81 = scmp.eq.s32.totalorder %s17, 1
      %p82 = scmp.ne.s32.totalorder %s77, %s79
      %p83 = scmp.eq.s32.totalorder %s17, 0
      %p84 = por %p82, %p83
      %p85 = scmp.ne.s32.totalorder %s77, %s79
      %p86 = scmp.eq.s32.totalorder %s22, 1
      %p87 = por %p85, %p86
      %p88 = scmp.ne.s32.totalorder %s79, %s80
      %p89 = scmp.eq.s32.totalorder %s22, 0
      %p90 = por %p88, %p89
      %p91 = scmp.ne.s32.totalorder %s79, %s80
      %p92 = scmp.eq.s32.totalorder %s23, 1
      %p93 = por %p91, %p92
      %p95 = scmp.ne.s32.totalorder %s80, %s94
      %p96 = scmp.eq.s32.totalorder %s23, 0
      %p97 = por %p95, %p96
      %s99 = sadd.s32 %s98, 1
      %p102 = scmp.eq.s32.totalorder %s17, 1
      %p103 = scmp.ne.s32.totalorder %s98, %s100
      %p104 = scmp.eq.s32.totalorder %s17, 0
      %p105 = por %p103, %p104
      %p106 = scmp.ne.s32.totalorder %s98, %s100
      %p107 = scmp.eq.s32.totalorder %s22, 1
      %p108 = por %p106, %p107
      %p109 = scmp.ne.s32.totalorder %s100, %s101
      %p110 = scmp.eq.s32.totalorder %s22, 0
      %p111 = por %p109, %p110
      %p112 = scmp.ne.s32.totalorder %s100, %s101
      %p113 = scmp.eq.s32.totalorder %s23, 1
      %p114 = por %p112, %p113
      %p116 = scmp.ne.s32.totalorder %s101, %s115
      %p117 = scmp.eq.s32.totalorder %s23, 0
      %p118 = por %p116, %p117
      %s119 = ssub.s32 %s17, %s24
      %p120 = scmp.eq.s32.totalorder %s119, 0
      %s122 = sadd.s32 %s121, 1
      %s123 = scalar_select %p120, %s121, %s122
      %p126 = pneg %p120
      %p127 = scmp.eq.s32.totalorder %s17, 1
      %p128 = por %p126, %p127
      %p129 = scmp.ne.s32.totalorder %s121, %s124
      %p130 = scmp.eq.s32.totalorder %s17, 0
      %p131 = por %p129, %p130
      %p132 = scmp.ne.s32.totalorder %s121, %s124
      %p133 = scmp.eq.s32.totalorder %s22, 1
      %p134 = por %p132, %p133
      %p135 = scmp.ne.s32.totalorder %s124, %s125
      %p136 = scmp.eq.s32.totalorder %s22, 0
      %p137 = por %p135, %p136
      %p138 = scmp.ne.s32.totalorder %s124, %s125
      %p139 = scmp.eq.s32.totalorder %s23, 1
      %p140 = por %p138, %p139
      %p142 = scmp.ne.s32.totalorder %s125, %s141
      %p143 = scmp.eq.s32.totalorder %s23, 0
      %p144 = por %p142, %p143
      %p145 = scmp.le.s32.totalorder 1, %s17
      %p146 = scmp.lt.s32.totalorder %s17, 3
      %p147 = pnand %p145, %p146
      %p148 = pneg %p147
      // Predicated region
      $region9: #{fwd.4} parent=5 // pred_check
        _
      $region10: #{fwd.4} parent=5 // pred_check_branch
        %150 = sbr.rel (%p147) target = $region12
      $region11: #{fwd.4} parent=5 // pred_region
        %s151 = ssub.s32 %s17, 1
        // Predicated region
        $region13: #{fwd.4} parent=11 // pred_check
          %p152 = pneg %p90
        $region14: #{fwd.4} parent=11 // pred_check_branch
          %154 = sbr.rel (%p152) target = $region16
        $region15: #{fwd.4} parent=11 // pred_region
          %s156 = ssub.s32 1024, 1024
          %157 = vsyncadd [#allocation5], %s156
          %s158 = sshll.u32 [#allocation6], 4
          %s159 = int_to_ptr.vmem [resolvable:$true] %s158
          %164 = dma.hbm_to_vmem [thread:$0]  %s2, 1024, %s159, [#allocation5], 64, 64, 4
        $region16: #{fwd.4} parent=11 // pred_fallthru
          _
        // Predicated region
        $region17: #{fwd.4} parent=11 // pred_check
          %p165 = pneg %p111
        $region18: #{fwd.4} parent=11 // pred_check_branch
          %167 = sbr.rel (%p165) target = $region20
        $region19: #{fwd.4} parent=11 // pred_region
          %s169 = ssub.s32 16, 16
          %170 = vsyncadd [#allocation8], %s169
          %s172 = sshll.u32 [#allocation7], 4
          %s173 = int_to_ptr.vmem [resolvable:$true] %s172
          %175 = dma.hbm_to_vmem [thread:$0]  %s3, 16, %s173, [#allocation8]
        $region20: #{fwd.4} parent=11 // pred_fallthru
          _
      $region12: #{fwd.4} parent=5 // pred_fallthru
        _
      %p176 = scmp.lt.s32.totalorder %s17, 2
      // Predicated region
      $region21: #{fwd.4} parent=5 // pred_check
        %p177 = pneg %p176
      $region22: #{fwd.4} parent=5 // pred_check_branch
        %179 = sbr.rel (%p177) target = $region24
      $region23: #{fwd.4} parent=5 // pred_region
        // Predicated region
        $region25: #{fwd.4} parent=23 // pred_check
          %p180 = pneg %p37
        $region26: #{fwd.4} parent=23 // pred_check_branch
          %182 = sbr.rel (%p180) target = $region28
        $region27: #{fwd.4} parent=23 // pred_region
          %s183 = sand.u32 %s27, 1
          %s184 = scalar_lea.sflag [#allocation3], %s183
          %s185 = sand.u32 %s27, 1
          %s186 = smul.addr %s185, 256
          %s187 = scalar_lea.vmem [#allocation2], %s186
          %s188 = smul.u32 32, %s17
          %s190 = ssub.s32 4096, 4096
          %191 = vsyncadd %s184, %s190
          %s192 = smul.addr %s188, 128
          %s193 = scalar_lea.hbm %s0, %s192
          %s194 = sshll.u32 %s187, 4
          %s195 = int_to_ptr.vmem [resolvable:$true] %s194
          %200 = dma.hbm_to_vmem [thread:$0]  %s193, 4096, %s195, %s184, 128, 128, 8
        $region28: #{fwd.4} parent=23 // pred_fallthru
          _
        // Predicated region
        $region29: #{fwd.4} parent=23 // pred_check
          %p201 = pneg %p63
        $region30: #{fwd.4} parent=23 // pred_check_branch
          %203 = sbr.rel (%p201) target = $region32
        $region31: #{fwd.4} parent=23 // pred_region
          %s204 = sand.u32 %s17, 1
          %s205 = scalar_lea.sflag [#allocation5], %s204
          %s206 = sand.u32 %s53, 1
          %s207 = smul.addr %s206, 128
          %s208 = scalar_lea.vmem [#allocation4], %s207
          %s209 = smul.u32 32, %s17
          %s211 = ssub.s32 2048, 2048
          %212 = vsyncadd %s205, %s211
          %s213 = smul.addr %s209, 64
          %s214 = scalar_lea.hbm %s1, %s213
          %s215 = sshll.u32 %s208, 4
          %s216 = int_to_ptr.vmem [resolvable:$true] %s215
          %221 = dma.hbm_to_vmem [thread:$0]  %s214, 2048, %s216, %s205, 64, 64, 4
        $region32: #{fwd.4} parent=23 // pred_fallthru
          _
      $region24: #{fwd.4} parent=5 // pred_fallthru
        _
      %p222 = scmp.le.s32.totalorder 1, %s17
      %p223 = scmp.lt.s32.totalorder %s17, 3
      %p224 = pnand %p222, %p223
      %p225 = pneg %p224
      // Predicated region
      $region33: #{fwd.4} parent=5 // pred_check
        _
      $region34: #{fwd.4} parent=5 // pred_check_branch
        %227 = sbr.rel (%p224) target = $region36
      $region35: #{fwd.4} parent=5 // pred_region
        %s228 = ssub.s32 %s17, 1
        %s229 = sand.u32 %s30, 1
        %s230 = scalar_lea.sflag [#allocation3], %s229
        %s231 = sand.u32 %s30, 1
        %s232 = smul.addr %s231, 256
        %s233 = scalar_lea.vmem [#allocation2], %s232
        // Predicated region
        $region37: #{fwd.4} parent=35 // pred_check
          %p234 = pneg %p43
        $region38: #{fwd.4} parent=35 // pred_check_branch
          %236 = sbr.rel (%p234) target = $region40
        $region39: #{fwd.4} parent=35 // pred_region
          %237 = dma.done %s230, 4096
        $region40: #{fwd.4} parent=35 // pred_fallthru
          _
        %s238 = sand.u32 %s22, 1
        %s239 = scalar_lea.sflag [#allocation5], %s238
        %s240 = sand.u32 %s56, 1
        %s241 = smul.addr %s240, 128
        %s242 = scalar_lea.vmem [#allocation4], %s241
        // Predicated region
        $region41: #{fwd.4} parent=35 // pred_check
          %p243 = pneg %p69
        $region42: #{fwd.4} parent=35 // pred_check_branch
          %245 = sbr.rel (%p243) target = $region44
        $region43: #{fwd.4} parent=35 // pred_region
          %246 = dma.done %s239, 2048
        $region44: #{fwd.4} parent=35 // pred_fallthru
          _
        // Predicated region
        $region45: #{fwd.4} parent=35 // pred_check
          %p247 = pneg %p90
        $region46: #{fwd.4} parent=35 // pred_check_branch
          %249 = sbr.rel (%p247) target = $region48
        $region47: #{fwd.4} parent=35 // pred_region
          %250 = dma.done [#allocation5], 1024
        $region48: #{fwd.4} parent=35 // pred_fallthru
          _
        // Predicated region
        $region49: #{fwd.4} parent=35 // pred_check
          %p251 = pneg %p111
        $region50: #{fwd.4} parent=35 // pred_check_branch
          %253 = sbr.rel (%p251) target = $region52
        $region51: #{fwd.4} parent=35 // pred_region
          %254 = dma.done [#allocation8], 16
        $region52: #{fwd.4} parent=35 // pred_fallthru
          _
        %s255 = sand.u32 %s30, 1
        %s256 = scalar_lea.sflag [#allocation3], %s255
        %s257 = sand.u32 %s30, 1
        %s258 = smul.addr %s257, 256
        %s259 = scalar_lea.vmem [#allocation2], %s258
        %p260 = pneg %p43
        %p261 = pneg %p40
        %s262 = sand.u32 %s22, 1
        %s263 = scalar_lea.sflag [#allocation5], %s262
        %s264 = sand.u32 %s56, 1
        %s265 = smul.addr %s264, 128
        %s266 = scalar_lea.vmem [#allocation4], %s265
        %p267 = pneg %p69
        %p268 = pneg %p66
        %p269 = pneg %p90
        %p270 = pneg %p87
        %p271 = pneg %p111
        %p272 = pneg %p108
        %p273 = pneg %p137
        %p274 = pneg %p134
        %s275 = smul.u32 32, %s22
        %p276 = scmp.lt.s32.totalorder %s275, 63
        %s277 = scalar_select %p276, %s275, 63
        %s278 = smul.addr %s277, 4
        %s279 = scalar_lea.vmem %s4, %s278
        %s280 = smul.u32 32, %s22
        %s281 = smul.u32 32, %s22
        %s282 = smul.u32 32, %s22
        %p283 = scmp.lt.s32.totalorder %s282, 63
        %s284 = scalar_select %p283, %s282, 63
        %s285 = smul.addr %s284, 4
        %s286 = scalar_lea.vmem %s4, %s285
        %s287 = smul.u32 32, %s22
        %s289 = smul.u32 %s22, 256
        %v290 = vlaneseq
        %v291 = vshrl.u32 %v290, 7
        %v292 = vadd.s32 %v291, 8
        %v293 = vadd.s32 %v291, 16
        %v294 = vadd.s32 %v291, 24
        %v295 = vadd.s32 %v291, 32
        %v296 = vadd.s32 %v291, 40
        %v297 = vadd.s32 %v291, 48
        %v298 = vadd.s32 %v291, 56
        %v299 = vadd.s32 %v291, 64
        %v300 = vadd.s32 %v291, 72
        %v301 = vadd.s32 %v291, 80
        %v302 = vadd.s32 %v291, 88
        %v303 = vadd.s32 %v291, 96
        %v304 = vadd.s32 %v291, 104
        %v305 = vadd.s32 %v291, 112
        %v306 = vadd.s32 %v291, 120
        %v307 = vadd.s32 %v291, 128
        %v308 = vadd.s32 %v291, 136
        %v309 = vadd.s32 %v291, 144
        %v310 = vadd.s32 %v291, 152
        %v311 = vadd.s32 %v291, 160
        %v312 = vadd.s32 %v291, 168
        %v313 = vadd.s32 %v291, 176
        %v314 = vadd.s32 %v291, 184
        %v315 = vadd.s32 %v291, 192
        %v316 = vadd.s32 %v291, 200
        %v317 = vadd.s32 %v291, 208
        %v318 = vadd.s32 %v291, 216
        %v319 = vadd.s32 %v291, 224
        %v320 = vadd.s32 %v291, 232
        %v321 = vadd.s32 %v291, 240
        %v322 = vadd.s32 %v291, 248
        %v323 = vstv %s289
        %v324 = vadd.s32 %v323, %v291
        %v325 = vadd.s32 %v323, %v292
        %v326 = vadd.s32 %v323, %v293
        %v327 = vadd.s32 %v323, %v294
        %v328 = vadd.s32 %v323, %v295
        %v329 = vadd.s32 %v323, %v296
        %v330 = vadd.s32 %v323, %v297
        %v331 = vadd.s32 %v323, %v298
        %v332 = vadd.s32 %v323, %v299
        %v333 = vadd.s32 %v323, %v300
        %v334 = vadd.s32 %v323, %v301
        %v335 = vadd.s32 %v323, %v302
        %v336 = vadd.s32 %v323, %v303
        %v337 = vadd.s32 %v323, %v304
        %v338 = vadd.s32 %v323, %v305
        %v339 = vadd.s32 %v323, %v306
        %v340 = vadd.s32 %v323, %v307
        %v341 = vadd.s32 %v323, %v308
        %v342 = vadd.s32 %v323, %v309
        %v343 = vadd.s32 %v323, %v310
        %v344 = vadd.s32 %v323, %v311
        %v345 = vadd.s32 %v323, %v312
        %v346 = vadd.s32 %v323, %v313
        %v347 = vadd.s32 %v323, %v314
        %v348 = vadd.s32 %v323, %v315
        %v349 = vadd.s32 %v323, %v316
        %v350 = vadd.s32 %v323, %v317
        %v351 = vadd.s32 %v323, %v318
        %v352 = vadd.s32 %v323, %v319
        %v353 = vadd.s32 %v323, %v320
        %v354 = vadd.s32 %v323, %v321
        %v355 = vadd.s32 %v323, %v322
        %v356 = vld [vmem:[%s242] sm:$0xf]
        %v357 = vld [vmem:[%s242 + $0x4] sm:$0xf]
        %v358 = vld [vmem:[%s242 + $0x8] sm:$0xf]
        %v359 = vld [vmem:[%s242 + $0xc] sm:$0xf]
        %v360 = vld [vmem:[%s242 + $0x10] sm:$0xf]
        %v361 = vld [vmem:[%s242 + $0x14] sm:$0xf]
        %v362 = vld [vmem:[%s242 + $0x18] sm:$0xf]
        %v363 = vld [vmem:[%s242 + $0x1c] sm:$0xf]
        %v364 = vld [vmem:[%s242 + $0x20] sm:$0xf]
        %v365 = vld [vmem:[%s242 + $0x24] sm:$0xf]
        %v366 = vld [vmem:[%s242 + $0x28] sm:$0xf]
        %v367 = vld [vmem:[%s242 + $0x2c] sm:$0xf]
        %v368 = vld [vmem:[%s242 + $0x30] sm:$0xf]
        %v369 = vld [vmem:[%s242 + $0x34] sm:$0xf]
        %v370 = vld [vmem:[%s242 + $0x38] sm:$0xf]
        %v371 = vld [vmem:[%s242 + $0x3c] sm:$0xf]
        %v372 = vld [vmem:[%s242 + $0x40] sm:$0xf]
        %v373 = vld [vmem:[%s242 + $0x44] sm:$0xf]
        %v374 = vld [vmem:[%s242 + $0x48] sm:$0xf]
        %v375 = vld [vmem:[%s242 + $0x4c] sm:$0xf]
        %v376 = vld [vmem:[%s242 + $0x50] sm:$0xf]
        %v377 = vld [vmem:[%s242 + $0x54] sm:$0xf]
        %v378 = vld [vmem:[%s242 + $0x58] sm:$0xf]
        %v379 = vld [vmem:[%s242 + $0x5c] sm:$0xf]
        %v380 = vld [vmem:[%s242 + $0x60] sm:$0xf]
        %v381 = vld [vmem:[%s242 + $0x64] sm:$0xf]
        %v382 = vld [vmem:[%s242 + $0x68] sm:$0xf]
        %v383 = vld [vmem:[%s242 + $0x6c] sm:$0xf]
        %v384 = vld [vmem:[%s242 + $0x70] sm:$0xf]
        %v385 = vld [vmem:[%s242 + $0x74] sm:$0xf]
        %v386 = vld [vmem:[%s242 + $0x78] sm:$0xf]
        %v387 = vld [vmem:[%s242 + $0x7c] sm:$0xf]
        %v388 = vld [vmem:[#allocation6] sm:$0xf]
        %v389 = vld [vmem:[#allocation6 + $0x4] sm:$0xf]
        %v390 = vld [vmem:[#allocation6 + $0x8] sm:$0xf]
        %v391 = vld [vmem:[#allocation6 + $0xc] sm:$0xf]
        %v392 = vld [vmem:[#allocation6 + $0x10] sm:$0xf]
        %v393 = vld [vmem:[#allocation6 + $0x14] sm:$0xf]
        %v394 = vld [vmem:[#allocation6 + $0x18] sm:$0xf]
        %v395 = vld [vmem:[#allocation6 + $0x1c] sm:$0xf]
        %v396 = vld [vmem:[#allocation6 + $0x20] sm:$0xf]
        %v397 = vld [vmem:[#allocation6 + $0x24] sm:$0xf]
        %v398 = vld [vmem:[#allocation6 + $0x28] sm:$0xf]
        %v399 = vld [vmem:[#allocation6 + $0x2c] sm:$0xf]
        %v400 = vld [vmem:[#allocation6 + $0x30] sm:$0xf]
        %v401 = vld [vmem:[#allocation6 + $0x34] sm:$0xf]
        %v402 = vld [vmem:[#allocation6 + $0x38] sm:$0xf]
        %v403 = vld [vmem:[#allocation6 + $0x3c] sm:$0xf]
        %v404 = vld [vmem:[#allocation7] sm:$0x1]
        %v406 = vlaneseq
        %v407 = vshrl.u32 %v406, 7
        %v408 = vsub.s32 0, %v407
        %v409 = vrot.slane %v404, %v408
        %v443 = vunpack.c.l.b16 %v356
        %v444 = vunpack.c.l.b16 %v357
        %v445 = vunpack.c.l.b16 %v358
        %v446 = vunpack.c.l.b16 %v359
        %v447 = vunpack.c.l.b16 %v360
        %v448 = vunpack.c.l.b16 %v361
        %v449 = vunpack.c.l.b16 %v362
        %v450 = vunpack.c.l.b16 %v363
        %v451 = vunpack.c.l.b16 %v364
        %v452 = vunpack.c.l.b16 %v365
        %v453 = vunpack.c.l.b16 %v366
        %v454 = vunpack.c.l.b16 %v367
        %v455 = vunpack.c.l.b16 %v368
        %v456 = vunpack.c.l.b16 %v369
        %v457 = vunpack.c.l.b16 %v370
        %v458 = vunpack.c.l.b16 %v371
        %v459 = vunpack.c.l.b16 %v372
        %v460 = vunpack.c.l.b16 %v373
        %v461 = vunpack.c.l.b16 %v374
        %v462 = vunpack.c.l.b16 %v375
        %v463 = vunpack.c.l.b16 %v376
        %v464 = vunpack.c.l.b16 %v377
        %v465 = vunpack.c.l.b16 %v378
        %v466 = vunpack.c.l.b16 %v379
        %v467 = vunpack.c.l.b16 %v380
        %v468 = vunpack.c.l.b16 %v381
        %v469 = vunpack.c.l.b16 %v382
        %v470 = vunpack.c.l.b16 %v383
        %v471 = vunpack.c.l.b16 %v384
        %v472 = vunpack.c.l.b16 %v385
        %v473 = vunpack.c.l.b16 %v386
        %v474 = vunpack.c.l.b16 %v387
        %v475 = vpack.c.b16 %v444, %v443
        %v476 = vpack.c.b16 %v446, %v445
        %v477 = vpack.c.b16 %v448, %v447
        %v478 = vpack.c.b16 %v450, %v449
        %v479 = vpack.c.b16 %v452, %v451
        %v480 = vpack.c.b16 %v454, %v453
        %v481 = vpack.c.b16 %v456, %v455
        %v482 = vpack.c.b16 %v458, %v457
        %v483 = vpack.c.b16 %v460, %v459
        %v484 = vpack.c.b16 %v462, %v461
        %v485 = vpack.c.b16 %v464, %v463
        %v486 = vpack.c.b16 %v466, %v465
        %v487 = vpack.c.b16 %v468, %v467
        %v488 = vpack.c.b16 %v470, %v469
        %v489 = vpack.c.b16 %v472, %v471
        %v490 = vpack.c.b16 %v474, %v473
        %v523 = vunpack.c.l.b16 %v388
        %v524 = vunpack.c.l.b16 %v389
        %v525 = vunpack.c.l.b16 %v390
        %v526 = vunpack.c.l.b16 %v391
        %v527 = vunpack.c.l.b16 %v392
        %v528 = vunpack.c.l.b16 %v393
        %v529 = vunpack.c.l.b16 %v394
        %v530 = vunpack.c.l.b16 %v395
        %v531 = vunpack.c.l.b16 %v396
        %v532 = vunpack.c.l.b16 %v397
        %v533 = vunpack.c.l.b16 %v398
        %v534 = vunpack.c.l.b16 %v399
        %v535 = vunpack.c.l.b16 %v400
        %v536 = vunpack.c.l.b16 %v401
        %v537 = vunpack.c.l.b16 %v402
        %v538 = vunpack.c.l.b16 %v403
        %v539 = vpack.c.b16 %v524, %v523
        %v540 = vpack.c.b16 %v526, %v525
        %v541 = vpack.c.b16 %v528, %v527
        %v542 = vpack.c.b16 %v530, %v529
        %v543 = vpack.c.b16 %v532, %v531
        %v544 = vpack.c.b16 %v534, %v533
        %v545 = vpack.c.b16 %v536, %v535
        %v546 = vpack.c.b16 %v538, %v537
        %555 = vmatprep.subr.bf16.mxu0 0
        %556 = vmatpush1.bf16.msra.mxu0 %v546
        %557 = vmatprep.subr.bf16.mxu0 0
        %558 = vmatpush1.bf16.msra.mxu0 %v545
        %559 = vmatprep.subr.bf16.mxu0 0
        %560 = vmatpush1.bf16.msra.mxu0 %v544
        %561 = vmatprep.subr.bf16.mxu0 0
        %562 = vmatpush1.bf16.msra.mxu0 %v543
        %563 = vmatprep.subr.bf16.mxu0 0
        %564 = vmatpush1.bf16.msra.mxu0 %v542
        %565 = vmatprep.subr.bf16.mxu0 0
        %566 = vmatpush1.bf16.msra.mxu0 %v541
        %567 = vmatprep.subr.bf16.mxu0 0
        %568 = vmatpush1.bf16.msra.mxu0 %v540
        %569 = vmatprep.subr.bf16.mxu0 0
        %570 = vmatpush1.bf16.msra.mxu0 %v539
        %571 = vmatprep.subr.bf16.mxu0 0
        %572 = vmatpush2.bf16.msra.mxu0 0
        %573 = vmatprep.subr.bf16.mxu0 0
        %574 = vmatpush2.bf16.msra.mxu0 0
        %575 = vmatprep.subr.bf16.mxu0 0
        %576 = vmatpush2.bf16.msra.mxu0 0
        %577 = vmatprep.subr.bf16.mxu0 0
        %578 = vmatpush2.bf16.msra.mxu0 0
        %579 = vmatprep.subr.bf16.mxu0 0
        %580 = vmatpush2.bf16.msra.mxu0 0
        %581 = vmatprep.subr.bf16.mxu0 0
        %582 = vmatpush2.bf16.msra.mxu0 0
        %583 = vmatprep.subr.bf16.mxu0 0
        %584 = vmatpush2.bf16.msra.mxu0 0
        %585 = vmatprep.subr.bf16.mxu0 0
        %586 = vmatpush2.bf16.msra.mxu0 0
        %587 = vmatprep.mubr.bf16.mxu0 0
        %588 = vmatmul.mubr.bf16.gmra.mxu0 %v475
        %v589 = vpop.f32.mrf.mxu0
        %v590 = vadd.f32 %v409, %v589
        %v591 = vpop.f32.mrf.mxu0
        %v592 = vpop.f32.mrf.mxu0
        %v593 = vadd.f32 %v409, %v592
        %v594 = vpop.f32.mrf.mxu0
        %595 = vmatprep.mubr.bf16.mxu0 0
        %596 = vmatmul.mubr.bf16.gmra.mxu0 %v476
        %v597 = vpop.f32.mrf.mxu0
        %v598 = vadd.f32 %v409, %v597
        %v599 = vpop.f32.mrf.mxu0
        %v600 = vpop.f32.mrf.mxu0
        %v601 = vadd.f32 %v409, %v600
        %v602 = vpop.f32.mrf.mxu0
        %603 = vmatprep.mubr.bf16.mxu0 0
        %604 = vmatmul.mubr.bf16.gmra.mxu0 %v477
        %v605 = vpop.f32.mrf.mxu0
        %v606 = vadd.f32 %v409, %v605
        %v607 = vpop.f32.mrf.mxu0
        %v608 = vpop.f32.mrf.mxu0
        %v609 = vadd.f32 %v409, %v608
        %v610 = vpop.f32.mrf.mxu0
        %611 = vmatprep.mubr.bf16.mxu0 0
        %612 = vmatmul.mubr.bf16.gmra.mxu0 %v478
        %v613 = vpop.f32.mrf.mxu0
        %v614 = vadd.f32 %v409, %v613
        %v615 = vpop.f32.mrf.mxu0
        %v616 = vpop.f32.mrf.mxu0
        %v617 = vadd.f32 %v409, %v616
        %v618 = vpop.f32.mrf.mxu0
        %619 = vmatprep.mubr.bf16.mxu0 0
        %620 = vmatmul.mubr.bf16.gmra.mxu0 %v479
        %v621 = vpop.f32.mrf.mxu0
        %v622 = vadd.f32 %v409, %v621
        %v623 = vpop.f32.mrf.mxu0
        %v624 = vpop.f32.mrf.mxu0
        %v625 = vadd.f32 %v409, %v624
        %v626 = vpop.f32.mrf.mxu0
        %627 = vmatprep.mubr.bf16.mxu0 0
        %628 = vmatmul.mubr.bf16.gmra.mxu0 %v480
        %v629 = vpop.f32.mrf.mxu0
        %v630 = vadd.f32 %v409, %v629
        %v631 = vpop.f32.mrf.mxu0
        %v632 = vpop.f32.mrf.mxu0
        %v633 = vadd.f32 %v409, %v632
        %v634 = vpop.f32.mrf.mxu0
        %635 = vmatprep.mubr.bf16.mxu0 0
        %636 = vmatmul.mubr.bf16.gmra.mxu0 %v481
        %v637 = vpop.f32.mrf.mxu0
        %v638 = vadd.f32 %v409, %v637
        %v639 = vpop.f32.mrf.mxu0
        %v640 = vpop.f32.mrf.mxu0
        %v641 = vadd.f32 %v409, %v640
        %v642 = vpop.f32.mrf.mxu0
        %643 = vmatprep.mubr.bf16.mxu0 0
        %644 = vmatmul.mubr.bf16.gmra.mxu0 %v482
        %v645 = vpop.f32.mrf.mxu0
        %v646 = vadd.f32 %v409, %v645
        %v647 = vpop.f32.mrf.mxu0
        %v648 = vpop.f32.mrf.mxu0
        %v649 = vadd.f32 %v409, %v648
        %v650 = vpop.f32.mrf.mxu0
        %651 = vmatprep.mubr.bf16.mxu0 0
        %652 = vmatmul.mubr.bf16.gmra.mxu0 %v483
        %v653 = vpop.f32.mrf.mxu0
        %v654 = vadd.f32 %v409, %v653
        %v655 = vpop.f32.mrf.mxu0
        %v656 = vpop.f32.mrf.mxu0
        %v657 = vadd.f32 %v409, %v656
        %v658 = vpop.f32.mrf.mxu0
        %659 = vmatprep.mubr.bf16.mxu0 0
        %660 = vmatmul.mubr.bf16.gmra.mxu0 %v484
        %v661 = vpop.f32.mrf.mxu0
        %v662 = vadd.f32 %v409, %v661
        %v663 = vpop.f32.mrf.mxu0
        %v664 = vpop.f32.mrf.mxu0
        %v665 = vadd.f32 %v409, %v664
        %v666 = vpop.f32.mrf.mxu0
        %667 = vmatprep.mubr.bf16.mxu0 0
        %668 = vmatmul.mubr.bf16.gmra.mxu0 %v485
        %v669 = vpop.f32.mrf.mxu0
        %v670 = vadd.f32 %v409, %v669
        %v671 = vpop.f32.mrf.mxu0
        %v672 = vpop.f32.mrf.mxu0
        %v673 = vadd.f32 %v409, %v672
        %v674 = vpop.f32.mrf.mxu0
        %675 = vmatprep.mubr.bf16.mxu0 0
        %676 = vmatmul.mubr.bf16.gmra.mxu0 %v486
        %v677 = vpop.f32.mrf.mxu0
        %v678 = vadd.f32 %v409, %v677
        %v679 = vpop.f32.mrf.mxu0
        %v680 = vpop.f32.mrf.mxu0
        %v681 = vadd.f32 %v409, %v680
        %v682 = vpop.f32.mrf.mxu0
        %683 = vmatprep.mubr.bf16.mxu0 0
        %684 = vmatmul.mubr.bf16.gmra.mxu0 %v487
        %v685 = vpop.f32.mrf.mxu0
        %v686 = vadd.f32 %v409, %v685
        %v687 = vpop.f32.mrf.mxu0
        %v688 = vpop.f32.mrf.mxu0
        %v689 = vadd.f32 %v409, %v688
        %v690 = vpop.f32.mrf.mxu0
        %691 = vmatprep.mubr.bf16.mxu0 0
        %692 = vmatmul.mubr.bf16.gmra.mxu0 %v488
        %v693 = vpop.f32.mrf.mxu0
        %v694 = vadd.f32 %v409, %v693
        %v695 = vpop.f32.mrf.mxu0
        %v696 = vpop.f32.mrf.mxu0
        %v697 = vadd.f32 %v409, %v696
        %v698 = vpop.f32.mrf.mxu0
        %699 = vmatprep.mubr.bf16.mxu0 0
        %700 = vmatmul.mubr.bf16.gmra.mxu0 %v489
        %v701 = vpop.f32.mrf.mxu0
        %v702 = vadd.f32 %v409, %v701
        %v703 = vpop.f32.mrf.mxu0
        %v704 = vpop.f32.mrf.mxu0
        %v705 = vadd.f32 %v409, %v704
        %v706 = vpop.f32.mrf.mxu0
        %707 = vmatprep.mubr.bf16.mxu0 0
        %708 = vmatmul.mubr.bf16.gmra.mxu0 %v490
        %v709 = vpop.f32.mrf.mxu0
        %v710 = vadd.f32 %v409, %v709
        %v711 = vpop.f32.mrf.mxu0
        %v712 = vpop.f32.mrf.mxu0
        %v713 = vadd.f32 %v409, %v712
        %v714 = vpop.f32.mrf.mxu0
        %715 = vdwg.mxu0
        %vm716 = vcmp.lt.s32.totalorder %v324, 64
        %vm717 = vcmp.lt.s32.totalorder %v325, 64
        %vm718 = vcmp.lt.s32.totalorder %v326, 64
        %vm719 = vcmp.lt.s32.totalorder %v327, 64
        %vm720 = vcmp.lt.s32.totalorder %v328, 64
        %vm721 = vcmp.lt.s32.totalorder %v329, 64
        %vm722 = vcmp.lt.s32.totalorder %v330, 64
        %vm723 = vcmp.lt.s32.totalorder %v331, 64
        %vm724 = vcmp.lt.s32.totalorder %v332, 64
        %vm725 = vcmp.lt.s32.totalorder %v333, 64
        %vm726 = vcmp.lt.s32.totalorder %v334, 64
        %vm727 = vcmp.lt.s32.totalorder %v335, 64
        %vm728 = vcmp.lt.s32.totalorder %v336, 64
        %vm729 = vcmp.lt.s32.totalorder %v337, 64
        %vm730 = vcmp.lt.s32.totalorder %v338, 64
        %vm731 = vcmp.lt.s32.totalorder %v339, 64
        %vm732 = vcmp.lt.s32.totalorder %v340, 64
        %vm733 = vcmp.lt.s32.totalorder %v341, 64
        %vm734 = vcmp.lt.s32.totalorder %v342, 64
        %vm735 = vcmp.lt.s32.totalorder %v343, 64
        %vm736 = vcmp.lt.s32.totalorder %v344, 64
        %vm737 = vcmp.lt.s32.totalorder %v345, 64
        %vm738 = vcmp.lt.s32.totalorder %v346, 64
        %vm739 = vcmp.lt.s32.totalorder %v347, 64
        %vm740 = vcmp.lt.s32.totalorder %v348, 64
        %vm741 = vcmp.lt.s32.totalorder %v349, 64
        %vm742 = vcmp.lt.s32.totalorder %v350, 64
        %vm743 = vcmp.lt.s32.totalorder %v351, 64
        %vm744 = vcmp.lt.s32.totalorder %v352, 64
        %vm745 = vcmp.lt.s32.totalorder %v353, 64
        %vm746 = vcmp.lt.s32.totalorder %v354, 64
        %vm747 = vcmp.lt.s32.totalorder %v355, 64
        %v748 = vld [vmem:[%s233] sm:$0xff]
        %v749 = vld [vmem:[%s233 + $0x8] sm:$0xff]
        %v750 = vld [vmem:[%s233 + $0x10] sm:$0xff]
        %v751 = vld [vmem:[%s233 + $0x18] sm:$0xff]
        %v752 = vld [vmem:[%s233 + $0x20] sm:$0xff]
        %v753 = vld [vmem:[%s233 + $0x28] sm:$0xff]
        %v754 = vld [vmem:[%s233 + $0x30] sm:$0xff]
        %v755 = vld [vmem:[%s233 + $0x38] sm:$0xff]
        %v756 = vld [vmem:[%s233 + $0x40] sm:$0xff]
        %v757 = vld [vmem:[%s233 + $0x48] sm:$0xff]
        %v758 = vld [vmem:[%s233 + $0x50] sm:$0xff]
        %v759 = vld [vmem:[%s233 + $0x58] sm:$0xff]
        %v760 = vld [vmem:[%s233 + $0x60] sm:$0xff]
        %v761 = vld [vmem:[%s233 + $0x68] sm:$0xff]
        %v762 = vld [vmem:[%s233 + $0x70] sm:$0xff]
        %v763 = vld [vmem:[%s233 + $0x78] sm:$0xff]
        %v764 = vld [vmem:[%s233 + $0x80] sm:$0xff]
        %v765 = vld [vmem:[%s233 + $0x88] sm:$0xff]
        %v766 = vld [vmem:[%s233 + $0x90] sm:$0xff]
        %v767 = vld [vmem:[%s233 + $0x98] sm:$0xff]
        %v768 = vld [vmem:[%s233 + $0xa0] sm:$0xff]
        %v769 = vld [vmem:[%s233 + $0xa8] sm:$0xff]
        %v770 = vld [vmem:[%s233 + $0xb0] sm:$0xff]
        %v771 = vld [vmem:[%s233 + $0xb8] sm:$0xff]
        %v772 = vld [vmem:[%s233 + $0xc0] sm:$0xff]
        %v773 = vld [vmem:[%s233 + $0xc8] sm:$0xff]
        %v774 = vld [vmem:[%s233 + $0xd0] sm:$0xff]
        %v775 = vld [vmem:[%s233 + $0xd8] sm:$0xff]
        %v776 = vld [vmem:[%s233 + $0xe0] sm:$0xff]
        %v777 = vld [vmem:[%s233 + $0xe8] sm:$0xff]
        %v778 = vld [vmem:[%s233 + $0xf0] sm:$0xff]
        %v779 = vld [vmem:[%s233 + $0xf8] sm:$0xff]
        %v780 = vsel %vm716, 1, 0
        %v781 = vsel %vm717, 1, 0
        %v782 = vsel %vm718, 1, 0
        %v783 = vsel %vm719, 1, 0
        %v784 = vsel %vm720, 1, 0
        %v785 = vsel %vm721, 1, 0
        %v786 = vsel %vm722, 1, 0
        %v787 = vsel %vm723, 1, 0
        %v788 = vsel %vm724, 1, 0
        %v789 = vsel %vm725, 1, 0
        %v790 = vsel %vm726, 1, 0
        %v791 = vsel %vm727, 1, 0
        %v792 = vsel %vm728, 1, 0
        %v793 = vsel %vm729, 1, 0
        %v794 = vsel %vm730, 1, 0
        %v795 = vsel %vm731, 1, 0
        %v796 = vsel %vm732, 1, 0
        %v797 = vsel %vm733, 1, 0
        %v798 = vsel %vm734, 1, 0
        %v799 = vsel %vm735, 1, 0
        %v800 = vsel %vm736, 1, 0
        %v801 = vsel %vm737, 1, 0
        %v802 = vsel %vm738, 1, 0
        %v803 = vsel %vm739, 1, 0
        %v804 = vsel %vm740, 1, 0
        %v805 = vsel %vm741, 1, 0
        %v806 = vsel %vm742, 1, 0
        %v807 = vsel %vm743, 1, 0
        %v808 = vsel %vm744, 1, 0
        %v809 = vsel %vm745, 1, 0
        %v810 = vsel %vm746, 1, 0
        %v811 = vsel %vm747, 1, 0
        %vm812 = vcmp.eq.s32.totalorder %v780, 1
        %vm813 = vcmp.eq.s32.totalorder %v781, 1
        %vm814 = vcmp.eq.s32.totalorder %v782, 1
        %vm815 = vcmp.eq.s32.totalorder %v783, 1
        %vm816 = vcmp.eq.s32.totalorder %v784, 1
        %vm817 = vcmp.eq.s32.totalorder %v785, 1
        %vm818 = vcmp.eq.s32.totalorder %v786, 1
        %vm819 = vcmp.eq.s32.totalorder %v787, 1
        %vm820 = vcmp.eq.s32.totalorder %v788, 1
        %vm821 = vcmp.eq.s32.totalorder %v789, 1
        %vm822 = vcmp.eq.s32.totalorder %v790, 1
        %vm823 = vcmp.eq.s32.totalorder %v791, 1
        %vm824 = vcmp.eq.s32.totalorder %v792, 1
        %vm825 = vcmp.eq.s32.totalorder %v793, 1
        %vm826 = vcmp.eq.s32.totalorder %v794, 1
        %vm827 = vcmp.eq.s32.totalorder %v795, 1
        %vm828 = vcmp.eq.s32.totalorder %v796, 1
        %vm829 = vcmp.eq.s32.totalorder %v797, 1
        %vm830 = vcmp.eq.s32.totalorder %v798, 1
        %vm831 = vcmp.eq.s32.totalorder %v799, 1
        %vm832 = vcmp.eq.s32.totalorder %v800, 1
        %vm833 = vcmp.eq.s32.totalorder %v801, 1
        %vm834 = vcmp.eq.s32.totalorder %v802, 1
        %vm835 = vcmp.eq.s32.totalorder %v803, 1
        %vm836 = vcmp.eq.s32.totalorder %v804, 1
        %vm837 = vcmp.eq.s32.totalorder %v805, 1
        %vm838 = vcmp.eq.s32.totalorder %v806, 1
        %vm839 = vcmp.eq.s32.totalorder %v807, 1
        %vm840 = vcmp.eq.s32.totalorder %v808, 1
        %vm841 = vcmp.eq.s32.totalorder %v809, 1
        %vm842 = vcmp.eq.s32.totalorder %v810, 1
        %vm843 = vcmp.eq.s32.totalorder %v811, 1
        %v844 = vsel %vm812, %v748, %v590
        %v845 = vsel %vm813, %v749, %v593
        %v846 = vsel %vm814, %v750, %v598
        %v847 = vsel %vm815, %v751, %v601
        %v848 = vsel %vm816, %v752, %v606
        %v849 = vsel %vm817, %v753, %v609
        %v850 = vsel %vm818, %v754, %v614
        %v851 = vsel %vm819, %v755, %v617
        %v852 = vsel %vm820, %v756, %v622
        %v853 = vsel %vm821, %v757, %v625
        %v854 = vsel %vm822, %v758, %v630
        %v855 = vsel %vm823, %v759, %v633
        %v856 = vsel %vm824, %v760, %v638
        %v857 = vsel %vm825, %v761, %v641
        %v858 = vsel %vm826, %v762, %v646
        %v859 = vsel %vm827, %v763, %v649
        %v860 = vsel %vm828, %v764, %v654
        %v861 = vsel %vm829, %v765, %v657
        %v862 = vsel %vm830, %v766, %v662
        %v863 = vsel %vm831, %v767, %v665
        %v864 = vsel %vm832, %v768, %v670
        %v865 = vsel %vm833, %v769, %v673
        %v866 = vsel %vm834, %v770, %v678
        %v867 = vsel %vm835, %v771, %v681
        %v868 = vsel %vm836, %v772, %v686
        %v869 = vsel %vm837, %v773, %v689
        %v870 = vsel %vm838, %v774, %v694
        %v871 = vsel %vm839, %v775, %v697
        %v872 = vsel %vm840, %v776, %v702
        %v873 = vsel %vm841, %v777, %v705
        %v874 = vsel %vm842, %v778, %v710
        %v875 = vsel %vm843, %v779, %v713
        %vm876 = vcmp.lt.s32.totalorder %v324, 320
        %vm877 = vcmp.lt.s32.totalorder %v325, 320
        %vm878 = vcmp.lt.s32.totalorder %v326, 320
        %vm879 = vcmp.lt.s32.totalorder %v327, 320
        %vm880 = vcmp.lt.s32.totalorder %v328, 320
        %vm881 = vcmp.lt.s32.totalorder %v329, 320
        %vm882 = vcmp.lt.s32.totalorder %v330, 320
        %vm883 = vcmp.lt.s32.totalorder %v331, 320
        %vm884 = vcmp.lt.s32.totalorder %v332, 320
        %vm885 = vcmp.lt.s32.totalorder %v333, 320
        %vm886 = vcmp.lt.s32.totalorder %v334, 320
        %vm887 = vcmp.lt.s32.totalorder %v335, 320
        %vm888 = vcmp.lt.s32.totalorder %v336, 320
        %vm889 = vcmp.lt.s32.totalorder %v337, 320
        %vm890 = vcmp.lt.s32.totalorder %v338, 320
        %vm891 = vcmp.lt.s32.totalorder %v339, 320
        %vm892 = vcmp.lt.s32.totalorder %v340, 320
        %vm893 = vcmp.lt.s32.totalorder %v341, 320
        %vm894 = vcmp.lt.s32.totalorder %v342, 320
        %vm895 = vcmp.lt.s32.totalorder %v343, 320
        %vm896 = vcmp.lt.s32.totalorder %v344, 320
        %vm897 = vcmp.lt.s32.totalorder %v345, 320
        %vm898 = vcmp.lt.s32.totalorder %v346, 320
        %vm899 = vcmp.lt.s32.totalorder %v347, 320
        %vm900 = vcmp.lt.s32.totalorder %v348, 320
        %vm901 = vcmp.lt.s32.totalorder %v349, 320
        %vm902 = vcmp.lt.s32.totalorder %v350, 320
        %vm903 = vcmp.lt.s32.totalorder %v351, 320
        %vm904 = vcmp.lt.s32.totalorder %v352, 320
        %vm905 = vcmp.lt.s32.totalorder %v353, 320
        %vm906 = vcmp.lt.s32.totalorder %v354, 320
        %vm907 = vcmp.lt.s32.totalorder %v355, 320
        %v908 = vsel %vm876, 1, 0
        %v909 = vsel %vm877, 1, 0
        %v910 = vsel %vm878, 1, 0
        %v911 = vsel %vm879, 1, 0
        %v912 = vsel %vm880, 1, 0
        %v913 = vsel %vm881, 1, 0
        %v914 = vsel %vm882, 1, 0
        %v915 = vsel %vm883, 1, 0
        %v916 = vsel %vm884, 1, 0
        %v917 = vsel %vm885, 1, 0
        %v918 = vsel %vm886, 1, 0
        %v919 = vsel %vm887, 1, 0
        %v920 = vsel %vm888, 1, 0
        %v921 = vsel %vm889, 1, 0
        %v922 = vsel %vm890, 1, 0
        %v923 = vsel %vm891, 1, 0
        %v924 = vsel %vm892, 1, 0
        %v925 = vsel %vm893, 1, 0
        %v926 = vsel %vm894, 1, 0
        %v927 = vsel %vm895, 1, 0
        %v928 = vsel %vm896, 1, 0
        %v929 = vsel %vm897, 1, 0
        %v930 = vsel %vm898, 1, 0
        %v931 = vsel %vm899, 1, 0
        %v932 = vsel %vm900, 1, 0
        %v933 = vsel %vm901, 1, 0
        %v934 = vsel %vm902, 1, 0
        %v935 = vsel %vm903, 1, 0
        %v936 = vsel %vm904, 1, 0
        %v937 = vsel %vm905, 1, 0
        %v938 = vsel %vm906, 1, 0
        %v939 = vsel %vm907, 1, 0
        %vm940 = vcmp.eq.s32.totalorder %v908, 1
        %vm941 = vcmp.eq.s32.totalorder %v909, 1
        %vm942 = vcmp.eq.s32.totalorder %v910, 1
        %vm943 = vcmp.eq.s32.totalorder %v911, 1
        %vm944 = vcmp.eq.s32.totalorder %v912, 1
        %vm945 = vcmp.eq.s32.totalorder %v913, 1
        %vm946 = vcmp.eq.s32.totalorder %v914, 1
        %vm947 = vcmp.eq.s32.totalorder %v915, 1
        %vm948 = vcmp.eq.s32.totalorder %v916, 1
        %vm949 = vcmp.eq.s32.totalorder %v917, 1
        %vm950 = vcmp.eq.s32.totalorder %v918, 1
        %vm951 = vcmp.eq.s32.totalorder %v919, 1
        %vm952 = vcmp.eq.s32.totalorder %v920, 1
        %vm953 = vcmp.eq.s32.totalorder %v921, 1
        %vm954 = vcmp.eq.s32.totalorder %v922, 1
        %vm955 = vcmp.eq.s32.totalorder %v923, 1
        %vm956 = vcmp.eq.s32.totalorder %v924, 1
        %vm957 = vcmp.eq.s32.totalorder %v925, 1
        %vm958 = vcmp.eq.s32.totalorder %v926, 1
        %vm959 = vcmp.eq.s32.totalorder %v927, 1
        %vm960 = vcmp.eq.s32.totalorder %v928, 1
        %vm961 = vcmp.eq.s32.totalorder %v929, 1
        %vm962 = vcmp.eq.s32.totalorder %v930, 1
        %vm963 = vcmp.eq.s32.totalorder %v931, 1
        %vm964 = vcmp.eq.s32.totalorder %v932, 1
        %vm965 = vcmp.eq.s32.totalorder %v933, 1
        %vm966 = vcmp.eq.s32.totalorder %v934, 1
        %vm967 = vcmp.eq.s32.totalorder %v935, 1
        %vm968 = vcmp.eq.s32.totalorder %v936, 1
        %vm969 = vcmp.eq.s32.totalorder %v937, 1
        %vm970 = vcmp.eq.s32.totalorder %v938, 1
        %vm971 = vcmp.eq.s32.totalorder %v939, 1
        %v972 = vsel %vm940, %v844, 0.0
        %v973 = vsel %vm941, %v845, 0.0
        %v974 = vsel %vm942, %v846, 0.0
        %v975 = vsel %vm943, %v847, 0.0
        %v976 = vsel %vm944, %v848, 0.0
        %v977 = vsel %vm945, %v849, 0.0
        %v978 = vsel %vm946, %v850, 0.0
        %v979 = vsel %vm947, %v851, 0.0
        %v980 = vsel %vm948, %v852, 0.0
        %v981 = vsel %vm949, %v853, 0.0
        %v982 = vsel %vm950, %v854, 0.0
        %v983 = vsel %vm951, %v855, 0.0
        %v984 = vsel %vm952, %v856, 0.0
        %v985 = vsel %vm953, %v857, 0.0
        %v986 = vsel %vm954, %v858, 0.0
        %v987 = vsel %vm955, %v859, 0.0
        %v988 = vsel %vm956, %v860, 0.0
        %v989 = vsel %vm957, %v861, 0.0
        %v990 = vsel %vm958, %v862, 0.0
        %v991 = vsel %vm959, %v863, 0.0
        %v992 = vsel %vm960, %v864, 0.0
        %v993 = vsel %vm961, %v865, 0.0
        %v994 = vsel %vm962, %v866, 0.0
        %v995 = vsel %vm963, %v867, 0.0
        %v996 = vsel %vm964, %v868, 0.0
        %v997 = vsel %vm965, %v869, 0.0
        %v998 = vsel %vm966, %v870, 0.0
        %v999 = vsel %vm967, %v871, 0.0
        %v1000 = vsel %vm968, %v872, 0.0
        %v1001 = vsel %vm969, %v873, 0.0
        %v1002 = vsel %vm970, %v874, 0.0
        %v1003 = vsel %vm971, %v875, 0.0
        %v1004 = vmul.f32 %v972, %v972
        %v1005 = vmul.f32 %v973, %v973
        %v1006 = vmul.f32 %v974, %v974
        %v1007 = vmul.f32 %v975, %v975
        %v1008 = vmul.f32 %v976, %v976
        %v1009 = vmul.f32 %v977, %v977
        %v1010 = vmul.f32 %v978, %v978
        %v1011 = vmul.f32 %v979, %v979
        %v1012 = vmul.f32 %v980, %v980
        %v1013 = vmul.f32 %v981, %v981
        %v1014 = vmul.f32 %v982, %v982
        %v1015 = vmul.f32 %v983, %v983
        %v1016 = vmul.f32 %v984, %v984
        %v1017 = vmul.f32 %v985, %v985
        %v1018 = vmul.f32 %v986, %v986
        %v1019 = vmul.f32 %v987, %v987
        %v1020 = vmul.f32 %v988, %v988
        %v1021 = vmul.f32 %v989, %v989
        %v1022 = vmul.f32 %v990, %v990
        %v1023 = vmul.f32 %v991, %v991
        %v1024 = vmul.f32 %v992, %v992
        %v1025 = vmul.f32 %v993, %v993
        %v1026 = vmul.f32 %v994, %v994
        %v1027 = vmul.f32 %v995, %v995
        %v1028 = vmul.f32 %v996, %v996
        %v1029 = vmul.f32 %v997, %v997
        %v1030 = vmul.f32 %v998, %v998
        %v1031 = vmul.f32 %v999, %v999
        %v1032 = vmul.f32 %v1000, %v1000
        %v1033 = vmul.f32 %v1001, %v1001
        %v1034 = vmul.f32 %v1002, %v1002
        %v1035 = vmul.f32 %v1003, %v1003
        %1036 = vadd.xlane.f32.xlu0 %v1004
        %v1037 = vpop.xlane.xlu0 %1036
        %1038 = vadd.xlane.f32.xlu0 %v1005
        %v1039 = vpop.xlane.xlu0 %1038
        %1040 = vadd.xlane.f32.xlu0 %v1006
        %v1041 = vpop.xlane.xlu0 %1040
        %1042 = vadd.xlane.f32.xlu0 %v1007
        %v1043 = vpop.xlane.xlu0 %1042
        %1044 = vadd.xlane.f32.xlu0 %v1008
        %v1045 = vpop.xlane.xlu0 %1044
        %1046 = vadd.xlane.f32.xlu0 %v1009
        %v1047 = vpop.xlane.xlu0 %1046
        %1048 = vadd.xlane.f32.xlu0 %v1010
        %v1049 = vpop.xlane.xlu0 %1048
        %1050 = vadd.xlane.f32.xlu0 %v1011
        %v1051 = vpop.xlane.xlu0 %1050
        %1052 = vadd.xlane.f32.xlu0 %v1012
        %v1053 = vpop.xlane.xlu0 %1052
        %1054 = vadd.xlane.f32.xlu0 %v1013
        %v1055 = vpop.xlane.xlu0 %1054
        %1056 = vadd.xlane.f32.xlu0 %v1014
        %v1057 = vpop.xlane.xlu0 %1056
        %1058 = vadd.xlane.f32.xlu0 %v1015
        %v1059 = vpop.xlane.xlu0 %1058
        %1060 = vadd.xlane.f32.xlu0 %v1016
        %v1061 = vpop.xlane.xlu0 %1060
        %1062 = vadd.xlane.f32.xlu0 %v1017
        %v1063 = vpop.xlane.xlu0 %1062
        %1064 = vadd.xlane.f32.xlu0 %v1018
        %v1065 = vpop.xlane.xlu0 %1064
        %1066 = vadd.xlane.f32.xlu0 %v1019
        %v1067 = vpop.xlane.xlu0 %1066
        %1068 = vadd.xlane.f32.xlu0 %v1020
        %v1069 = vpop.xlane.xlu0 %1068
        %1070 = vadd.xlane.f32.xlu0 %v1021
        %v1071 = vpop.xlane.xlu0 %1070
        %1072 = vadd.xlane.f32.xlu0 %v1022
        %v1073 = vpop.xlane.xlu0 %1072
        %1074 = vadd.xlane.f32.xlu0 %v1023
        %v1075 = vpop.xlane.xlu0 %1074
        %1076 = vadd.xlane.f32.xlu0 %v1024
        %v1077 = vpop.xlane.xlu0 %1076
        %1078 = vadd.xlane.f32.xlu0 %v1025
        %v1079 = vpop.xlane.xlu0 %1078
        %1080 = vadd.xlane.f32.xlu0 %v1026
        %v1081 = vpop.xlane.xlu0 %1080
        %1082 = vadd.xlane.f32.xlu0 %v1027
        %v1083 = vpop.xlane.xlu0 %1082
        %1084 = vadd.xlane.f32.xlu0 %v1028
        %v1085 = vpop.xlane.xlu0 %1084
        %1086 = vadd.xlane.f32.xlu0 %v1029
        %v1087 = vpop.xlane.xlu0 %1086
        %1088 = vadd.xlane.f32.xlu0 %v1030
        %v1089 = vpop.xlane.xlu0 %1088
        %1090 = vadd.xlane.f32.xlu0 %v1031
        %v1091 = vpop.xlane.xlu0 %1090
        %1092 = vadd.xlane.f32.xlu0 %v1032
        %v1093 = vpop.xlane.xlu0 %1092
        %1094 = vadd.xlane.f32.xlu0 %v1033
        %v1095 = vpop.xlane.xlu0 %1094
        %1096 = vadd.xlane.f32.xlu0 %v1034
        %v1097 = vpop.xlane.xlu0 %1096
        %1098 = vadd.xlane.f32.xlu0 %v1035
        %v1099 = vpop.xlane.xlu0 %1098
        %v1100 = vmax.f32 %v1037, 1e-24
        %v1101 = vmax.f32 %v1039, 1e-24
        %v1102 = vmax.f32 %v1041, 1e-24
        %v1103 = vmax.f32 %v1043, 1e-24
        %v1104 = vmax.f32 %v1045, 1e-24
        %v1105 = vmax.f32 %v1047, 1e-24
        %v1106 = vmax.f32 %v1049, 1e-24
        %v1107 = vmax.f32 %v1051, 1e-24
        %v1108 = vmax.f32 %v1053, 1e-24
        %v1109 = vmax.f32 %v1055, 1e-24
        %v1110 = vmax.f32 %v1057, 1e-24
        %v1111 = vmax.f32 %v1059, 1e-24
        %v1112 = vmax.f32 %v1061, 1e-24
        %v1113 = vmax.f32 %v1063, 1e-24
        %v1114 = vmax.f32 %v1065, 1e-24
        %v1115 = vmax.f32 %v1067, 1e-24
        %v1116 = vmax.f32 %v1069, 1e-24
        %v1117 = vmax.f32 %v1071, 1e-24
        %v1118 = vmax.f32 %v1073, 1e-24
        %v1119 = vmax.f32 %v1075, 1e-24
        %v1120 = vmax.f32 %v1077, 1e-24
        %v1121 = vmax.f32 %v1079, 1e-24
        %v1122 = vmax.f32 %v1081, 1e-24
        %v1123 = vmax.f32 %v1083, 1e-24
        %v1124 = vmax.f32 %v1085, 1e-24
        %v1125 = vmax.f32 %v1087, 1e-24
        %v1126 = vmax.f32 %v1089, 1e-24
        %v1127 = vmax.f32 %v1091, 1e-24
        %v1128 = vmax.f32 %v1093, 1e-24
        %v1129 = vmax.f32 %v1095, 1e-24
        %v1130 = vmax.f32 %v1097, 1e-24
        %v1131 = vmax.f32 %v1099, 1e-24
        %v1132 = vrsqrt.pop %v1100
        %v1133 = vrsqrt.pop %v1101
        %v1134 = vrsqrt.pop %v1102
        %v1135 = vrsqrt.pop %v1103
        %v1136 = vrsqrt.pop %v1104
        %v1137 = vrsqrt.pop %v1105
        %v1138 = vrsqrt.pop %v1106
        %v1139 = vrsqrt.pop %v1107
        %v1140 = vrsqrt.pop %v1108
        %v1141 = vrsqrt.pop %v1109
        %v1142 = vrsqrt.pop %v1110
        %v1143 = vrsqrt.pop %v1111
        %v1144 = vrsqrt.pop %v1112
        %v1145 = vrsqrt.pop %v1113
        %v1146 = vrsqrt.pop %v1114
        %v1147 = vrsqrt.pop %v1115
        %v1148 = vrsqrt.pop %v1116
        %v1149 = vrsqrt.pop %v1117
        %v1150 = vrsqrt.pop %v1118
        %v1151 = vrsqrt.pop %v1119
        %v1152 = vrsqrt.pop %v1120
        %v1153 = vrsqrt.pop %v1121
        %v1154 = vrsqrt.pop %v1122
        %v1155 = vrsqrt.pop %v1123
        %v1156 = vrsqrt.pop %v1124
        %v1157 = vrsqrt.pop %v1125
        %v1158 = vrsqrt.pop %v1126
        %v1159 = vrsqrt.pop %v1127
        %v1160 = vrsqrt.pop %v1128
        %v1161 = vrsqrt.pop %v1129
        %v1162 = vrsqrt.pop %v1130
        %v1163 = vrsqrt.pop %v1131
        %v1164 = vmul.f32 %v972, %v1132
        %v1165 = vmul.f32 %v973, %v1133
        %v1166 = vmul.f32 %v974, %v1134
        %v1167 = vmul.f32 %v975, %v1135
        %v1168 = vmul.f32 %v976, %v1136
        %v1169 = vmul.f32 %v977, %v1137
        %v1170 = vmul.f32 %v978, %v1138
        %v1171 = vmul.f32 %v979, %v1139
        %v1172 = vmul.f32 %v980, %v1140
        %v1173 = vmul.f32 %v981, %v1141
        %v1174 = vmul.f32 %v982, %v1142
        %v1175 = vmul.f32 %v983, %v1143
        %v1176 = vmul.f32 %v984, %v1144
        %v1177 = vmul.f32 %v985, %v1145
        %v1178 = vmul.f32 %v986, %v1146
        %v1179 = vmul.f32 %v987, %v1147
        %v1180 = vmul.f32 %v988, %v1148
        %v1181 = vmul.f32 %v989, %v1149
        %v1182 = vmul.f32 %v990, %v1150
        %v1183 = vmul.f32 %v991, %v1151
        %v1184 = vmul.f32 %v992, %v1152
        %v1185 = vmul.f32 %v993, %v1153
        %v1186 = vmul.f32 %v994, %v1154
        %v1187 = vmul.f32 %v995, %v1155
        %v1188 = vmul.f32 %v996, %v1156
        %v1189 = vmul.f32 %v997, %v1157
        %v1190 = vmul.f32 %v998, %v1158
        %v1191 = vmul.f32 %v999, %v1159
        %v1192 = vmul.f32 %v1000, %v1160
        %v1193 = vmul.f32 %v1001, %v1161
        %v1194 = vmul.f32 %v1002, %v1162
        %v1195 = vmul.f32 %v1003, %v1163
        %v1196 = vpack.c.bf16 %v1165, %v1164
        %v1197 = vpack.c.bf16 %v1167, %v1166
        %v1198 = vpack.c.bf16 %v1169, %v1168
        %v1199 = vpack.c.bf16 %v1171, %v1170
        %v1200 = vpack.c.bf16 %v1173, %v1172
        %v1201 = vpack.c.bf16 %v1175, %v1174
        %v1202 = vpack.c.bf16 %v1177, %v1176
        %v1203 = vpack.c.bf16 %v1179, %v1178
        %v1204 = vpack.c.bf16 %v1181, %v1180
        %v1205 = vpack.c.bf16 %v1183, %v1182
        %v1206 = vpack.c.bf16 %v1185, %v1184
        %v1207 = vpack.c.bf16 %v1187, %v1186
        %v1208 = vpack.c.bf16 %v1189, %v1188
        %v1209 = vpack.c.bf16 %v1191, %v1190
        %v1210 = vpack.c.bf16 %v1193, %v1192
        %v1211 = vpack.c.bf16 %v1195, %v1194
        %v1228 = vunpack.c.l.b16 %v1196
        %v1229 = vunpack.c.h.b16 %v1196
        %v1230 = vunpack.c.l.b16 %v1197
        %v1231 = vunpack.c.h.b16 %v1197
        %v1232 = vunpack.c.l.b16 %v1198
        %v1233 = vunpack.c.h.b16 %v1198
        %v1234 = vunpack.c.l.b16 %v1199
        %v1235 = vunpack.c.h.b16 %v1199
        %v1236 = vunpack.c.l.b16 %v1200
        %v1237 = vunpack.c.h.b16 %v1200
        %v1238 = vunpack.c.l.b16 %v1201
        %v1239 = vunpack.c.h.b16 %v1201
        %v1240 = vunpack.c.l.b16 %v1202
        %v1241 = vunpack.c.h.b16 %v1202
        %v1242 = vunpack.c.l.b16 %v1203
        %v1243 = vunpack.c.h.b16 %v1203
        %v1244 = vunpack.c.l.b16 %v1204
        %v1245 = vunpack.c.h.b16 %v1204
        %v1246 = vunpack.c.l.b16 %v1205
        %v1247 = vunpack.c.h.b16 %v1205
        %v1248 = vunpack.c.l.b16 %v1206
        %v1249 = vunpack.c.h.b16 %v1206
        %v1250 = vunpack.c.l.b16 %v1207
        %v1251 = vunpack.c.h.b16 %v1207
        %v1252 = vunpack.c.l.b16 %v1208
        %v1253 = vunpack.c.h.b16 %v1208
        %v1254 = vunpack.c.l.b16 %v1209
        %v1255 = vunpack.c.h.b16 %v1209
        %v1256 = vunpack.c.l.b16 %v1210
        %v1257 = vunpack.c.h.b16 %v1210
        %v1258 = vunpack.c.l.b16 %v1211
        %v1259 = vunpack.c.h.b16 %v1211
        %v1260 = vpack.c.b16 %v1228, %v1228
        %v1261 = vpack.c.b16 %v1229, %v1229
        %v1262 = vpack.c.b16 %v1230, %v1230
        %v1263 = vpack.c.b16 %v1231, %v1231
        %v1264 = vpack.c.b16 %v1232, %v1232
        %v1265 = vpack.c.b16 %v1233, %v1233
        %v1266 = vpack.c.b16 %v1234, %v1234
        %v1267 = vpack.c.b16 %v1235, %v1235
        %v1268 = vpack.c.b16 %v1236, %v1236
        %v1269 = vpack.c.b16 %v1237, %v1237
        %v1270 = vpack.c.b16 %v1238, %v1238
        %v1271 = vpack.c.b16 %v1239, %v1239
        %v1272 = vpack.c.b16 %v1240, %v1240
        %v1273 = vpack.c.b16 %v1241, %v1241
        %v1274 = vpack.c.b16 %v1242, %v1242
        %v1275 = vpack.c.b16 %v1243, %v1243
        %v1276 = vpack.c.b16 %v1244, %v1244
        %v1277 = vpack.c.b16 %v1245, %v1245
        %v1278 = vpack.c.b16 %v1246, %v1246
        %v1279 = vpack.c.b16 %v1247, %v1247
        %v1280 = vpack.c.b16 %v1248, %v1248
        %v1281 = vpack.c.b16 %v1249, %v1249
        %v1282 = vpack.c.b16 %v1250, %v1250
        %v1283 = vpack.c.b16 %v1251, %v1251
        %v1284 = vpack.c.b16 %v1252, %v1252
        %v1285 = vpack.c.b16 %v1253, %v1253
        %v1286 = vpack.c.b16 %v1254, %v1254
        %v1287 = vpack.c.b16 %v1255, %v1255
        %v1288 = vpack.c.b16 %v1256, %v1256
        %v1289 = vpack.c.b16 %v1257, %v1257
        %v1290 = vpack.c.b16 %v1258, %v1258
        %v1291 = vpack.c.b16 %v1259, %v1259
        %1324 = vst [vmem:[%s286] sm:$0xf] %v1260
        %1325 = vst [vmem:[%s286 + $0x4] sm:$0xf] %v1261
        %1326 = vst [vmem:[%s286 + $0x8] sm:$0xf] %v1262
        %1327 = vst [vmem:[%s286 + $0xc] sm:$0xf] %v1263
        %1328 = vst [vmem:[%s286 + $0x10] sm:$0xf] %v1264
        %1329 = vst [vmem:[%s286 + $0x14] sm:$0xf] %v1265
        %1330 = vst [vmem:[%s286 + $0x18] sm:$0xf] %v1266
        %1331 = vst [vmem:[%s286 + $0x1c] sm:$0xf] %v1267
        %1332 = vst [vmem:[%s286 + $0x20] sm:$0xf] %v1268
        %1333 = vst [vmem:[%s286 + $0x24] sm:$0xf] %v1269
        %1334 = vst [vmem:[%s286 + $0x28] sm:$0xf] %v1270
        %1335 = vst [vmem:[%s286 + $0x2c] sm:$0xf] %v1271
        %1336 = vst [vmem:[%s286 + $0x30] sm:$0xf] %v1272
        %1337 = vst [vmem:[%s286 + $0x34] sm:$0xf] %v1273
        %1338 = vst [vmem:[%s286 + $0x38] sm:$0xf] %v1274
        %1339 = vst [vmem:[%s286 + $0x3c] sm:$0xf] %v1275
        %1340 = vst [vmem:[%s286 + $0x40] sm:$0xf] %v1276
        %1341 = vst [vmem:[%s286 + $0x44] sm:$0xf] %v1277
        %1342 = vst [vmem:[%s286 + $0x48] sm:$0xf] %v1278
        %1343 = vst [vmem:[%s286 + $0x4c] sm:$0xf] %v1279
        %1344 = vst [vmem:[%s286 + $0x50] sm:$0xf] %v1280
        %1345 = vst [vmem:[%s286 + $0x54] sm:$0xf] %v1281
        %1346 = vst [vmem:[%s286 + $0x58] sm:$0xf] %v1282
        %1347 = vst [vmem:[%s286 + $0x5c] sm:$0xf] %v1283
        %1348 = vst [vmem:[%s286 + $0x60] sm:$0xf] %v1284
        %1349 = vst [vmem:[%s286 + $0x64] sm:$0xf] %v1285
        %1350 = vst [vmem:[%s286 + $0x68] sm:$0xf] %v1286
        %1351 = vst [vmem:[%s286 + $0x6c] sm:$0xf] %v1287
        %1352 = vst [vmem:[%s286 + $0x70] sm:$0xf] %v1288
        %1353 = vst [vmem:[%s286 + $0x74] sm:$0xf] %v1289
        %1354 = vst [vmem:[%s286 + $0x78] sm:$0xf] %v1290
        %1355 = vst [vmem:[%s286 + $0x7c] sm:$0xf] %v1291
        %s1356 = smul.u32 32, %s22
        %p1357 = scmp.lt.s32.totalorder %s1356, 63
        %s1358 = scalar_select %p1357, %s1356, 63
        %s1359 = smul.addr %s1358, 4
        %s1360 = scalar_lea.vmem %s4, %s1359
        // Predicated region
        $region53: #{fwd.4} parent=35 // pred_check
          %p1361 = pneg %p134
        $region54: #{fwd.4} parent=35 // pred_check_branch
          %1363 = sbr.rel (%p1361) target = $region56
        $region55: #{fwd.4} parent=35 // pred_region
          %s1364 = smul.u32 32, %s22
        $region56: #{fwd.4} parent=35 // pred_fallthru
          _
      $region36: #{fwd.4} parent=5 // pred_fallthru
        _
      %p1365 = scmp.le.s32.totalorder 2, %s17
      // Predicated region
      $region57: #{fwd.4} parent=5 // pred_check
        %p1366 = pneg %p1365
      $region58: #{fwd.4} parent=5 // pred_check_branch
        %1368 = sbr.rel (%p1366) target = $region60
      $region59: #{fwd.4} parent=5 // pred_region
        %s1369 = ssub.s32 %s17, 2
        // Predicated region
        $region61: #{fwd.4} parent=59 // pred_check
          %p1370 = pneg %p140
        $region62: #{fwd.4} parent=59 // pred_check_branch
          %1372 = sbr.rel (%p1370) target = $region64
        $region63: #{fwd.4} parent=59 // pred_region
          %s1373 = smul.u32 32, %s23
          %p1374 = scmp.lt.s32.totalorder %s1373, 63
          %s1375 = scalar_select %p1374, %s1373, 63
          %s1376 = smul.addr %s1375, 4
          %s1377 = scalar_lea.vmem %s4, %s1376
        $region64: #{fwd.4} parent=59 // pred_fallthru
          _
      $region60: #{fwd.4} parent=5 // pred_fallthru
        _
    $region6: #{fwd.4} parent=1 // loop_footer
      %s21 = sadd.s32 1, %s17
    $region7: #{fwd.4} parent=1 // loop_footer_branch
      %16 = sbr.rel target = $region3
    $region8: #{fwd.4} parent=1 // loop_exit
      _
    %1378 = vsyncpa [#allocation3], 1
    %s1379 = scalar_lea.sflag [#allocation3], 1
    %1380 = vsyncpa %s1379, 1
    %1381 = vsyncpa [#allocation5], 1
    %s1382 = scalar_lea.sflag [#allocation5], 1
    %1383 = vsyncpa %s1382, 1
    %1384 = vsyncpa [#allocation8], 1

// kernel: fwd.5
$region0: #{fwd.5}
  #allocation0 [shape = 'u32[]', space=smem, size = 0x4, offset = 0x4, fixed_abs, tag = 'smem constant byte address 0x4 - core index']
  #allocation1 [shape = 'u32[144,128]{1,0:T(1,128)}', space=vmem, size = 0x12000, scoped, tag = 'internal scratch']
  #allocation2 [shape = 'f32[256,128]{1,0:T(8,128)}', space=vmem, size = 0x20000, scoped, tag = 'scratch operand']
  %s0 = inlined_call_operand.vmem [shape: bf16[512,512], index: 0, kind: input, shape index: {}]
  %s1 = inlined_call_operand.vmem [shape: bf16[512,128], index: 1, kind: input, shape index: {}, may-alias: {1,2}]
  %s2 = inlined_call_operand.vmem [shape: bf16[512,128], index: 2, kind: input, shape index: {}, may-alias: {1,2}]
  %s3 = inlined_call_operand.vmem [shape: bf16[128,128], index: 3, kind: input, shape index: {}]
  %s4 = inlined_call_operand.hbm [shape: bf16[128,128], index: 4, kind: input, shape index: {}]
  %s5 = inlined_call_operand.vmem [shape: f32[1,128], index: 5, kind: input, shape index: {}]
  %s6 = inlined_call_operand.hbm [shape: bf16[128,128], index: 6, kind: input, shape index: {}]
  %s7 = inlined_call_operand.vmem [shape: f32[1,128], index: 7, kind: input, shape index: {}]
  %s8 = inlined_call_operand.hbm [shape: f32[512,128], index: 8, kind: input, shape index: {}]
  %s9 = inlined_call_operand.vmem [shape: bf16[512,128], index: 9, kind: output, shape index: {}]
  %s10 = sld [smem:[#allocation0]]
  $region127: #{fwd.5} parent=0
    _
  %s12 = ssub.s32 1, %s10
  %s13 = scalar_select 0, %s12, %s10
  $region1: #{fwd.5} parent=0
    #allocation3 [shape = 'u8[262144]{0}', space=vmem, size = 0x40000, scoped, tag = 'input window, operand 0']
    #allocation4 [shape = 'u8[32768]{0}', space=vmem, size = 0x8000, scoped, tag = 'input window, operand 4, single buffered']
    #allocation5 [shape = 's32[2]{0}', space=sflag, size = 0x8, scoped, tag = 'scoped memory for fwd.5']
    #allocation6 [shape = 'u8[32768]{0}', space=vmem, size = 0x8000, scoped, tag = 'input window, operand 6, single buffered']
    #allocation7 [shape = 's32[1]{0}', space=sflag, size = 0x4, scoped, tag = 'scoped memory for fwd.5']
    #allocation8 [shape = 'u8[262144]{0}', space=vmem, size = 0x40000, scoped, tag = 'input window, operand 8']
    %14 = vsyncpa [#allocation5], 0
    %15 = vsyncpa [#allocation7], 0
    loop: start=0, step=1, limit=6
    $region2: #{fwd.5} parent=1 // loop_pre_header
      _
    $region3: #{fwd.5} parent=1 // loop_header
      %s17 = sphi 0, %s21
      %p18 = scmp.ge.s32.totalorder %s17, 6
      %s24 = sphi 0, %s36
      %s25 = sphi 0, %s32
      %s26 = sphi 0, %s24
      %s27 = sphi 0, %s25
      %s28 = sphi 0, %s26
      %s29 = sphi 0, %s27
      %s41 = sphi 0, %s43
      %s44 = sphi 0, %s41
      %s45 = sphi 0, %s44
      %s61 = sphi 0, %s45
      %s67 = sphi 0, %s69
      %s70 = sphi 0, %s67
      %s71 = sphi 0, %s70
      %s87 = sphi 0, %s71
      %s93 = sphi 0, %s95
      %s96 = sphi 0, %s93
      %s97 = sphi 0, %s96
      %s113 = sphi 0, %s97
      %s117 = sphi 0, %s117
      %s119 = sphi 0, %s117
      %s120 = sphi 0, %s119
      %s134 = sphi 0, %s120
      %s138 = sphi 0, %s138
      %s140 = sphi 0, %s138
      %s141 = sphi 0, %s140
      %s155 = sphi 0, %s141
      %s159 = sphi 0, %s159
      %s161 = sphi 0, %s159
      %s162 = sphi 0, %s161
      %s176 = sphi 0, %s162
      %s180 = sphi 0, %s180
      %s182 = sphi 0, %s180
      %s183 = sphi 0, %s182
      %s197 = sphi 0, %s183
      %s201 = sphi 0, %s201
      %s203 = sphi 0, %s201
      %s204 = sphi 0, %s203
      %s218 = sphi 0, %s204
      %s224 = sphi 0, %s226
      %s227 = sphi 0, %s224
      %s228 = sphi 0, %s227
      %s244 = sphi 0, %s228
      %s250 = sphi 0, %s252
      %s253 = sphi 0, %s250
      %s254 = sphi 0, %s253
      %s270 = sphi 0, %s254
    $region4: #{fwd.5} parent=1 // loop_header_branch
      %20 = sbr.rel (%p18) target = $region8
    $region5: #{fwd.5} parent=1 // loop_body
      %s22 = ssub.s32 %s17, 1
      %s23 = ssub.s32 %s17, 2
      %s30 = sadd.s32 1, %s25
      %p31 = scmp.ge.s32.totalorder %s30, 2
      %s32 = scalar_select %p31, 0, %s30
      %s33 = sadd.s32 1, %s24
      %s34 = scalar_select %p31, %s33, %s24
      %p35 = scmp.ge.s32.totalorder %s34, 2
      %s36 = scalar_select %p35, 0, %s34
      %s37 = ssub.s32 %s24, %s36
      %s38 = ssub.s32 %s25, %s32
      %s39 = sor.u32 %s37, %s38
      %p40 = scmp.eq.s32.totalorder %s39, 0
      %s42 = sadd.s32 %s41, 1
      %s43 = scalar_select %p40, %s41, %s42
      %p46 = pneg %p40
      %p47 = scmp.eq.s32.totalorder %s17, 3
      %p48 = por %p46, %p47
      %p49 = scmp.ne.s32.totalorder %s41, %s44
      %p50 = scmp.eq.s32.totalorder %s17, 0
      %p51 = por %p49, %p50
      %p52 = scmp.ne.s32.totalorder %s41, %s44
      %p53 = scmp.eq.s32.totalorder %s22, 3
      %p54 = por %p52, %p53
      %p55 = scmp.ne.s32.totalorder %s44, %s45
      %p56 = scmp.eq.s32.totalorder %s22, 0
      %p57 = por %p55, %p56
      %p58 = scmp.ne.s32.totalorder %s44, %s45
      %p59 = scmp.eq.s32.totalorder %s23, 3
      %p60 = por %p58, %p59
      %p62 = scmp.ne.s32.totalorder %s45, %s61
      %p63 = scmp.eq.s32.totalorder %s23, 0
      %p64 = por %p62, %p63
      %s65 = ssub.s32 %s25, %s32
      %p66 = scmp.eq.s32.totalorder %s65, 0
      %s68 = sadd.s32 %s67, 1
      %s69 = scalar_select %p66, %s67, %s68
      %p72 = pneg %p66
      %p73 = scmp.eq.s32.totalorder %s17, 3
      %p74 = por %p72, %p73
      %p75 = scmp.ne.s32.totalorder %s67, %s70
      %p76 = scmp.eq.s32.totalorder %s17, 0
      %p77 = por %p75, %p76
      %p78 = scmp.ne.s32.totalorder %s67, %s70
      %p79 = scmp.eq.s32.totalorder %s22, 3
      %p80 = por %p78, %p79
      %p81 = scmp.ne.s32.totalorder %s70, %s71
      %p82 = scmp.eq.s32.totalorder %s22, 0
      %p83 = por %p81, %p82
      %p84 = scmp.ne.s32.totalorder %s70, %s71
      %p85 = scmp.eq.s32.totalorder %s23, 3
      %p86 = por %p84, %p85
      %p88 = scmp.ne.s32.totalorder %s71, %s87
      %p89 = scmp.eq.s32.totalorder %s23, 0
      %p90 = por %p88, %p89
      %s91 = ssub.s32 %s24, %s36
      %p92 = scmp.eq.s32.totalorder %s91, 0
      %s94 = sadd.s32 %s93, 1
      %s95 = scalar_select %p92, %s93, %s94
      %p98 = pneg %p92
      %p99 = scmp.eq.s32.totalorder %s17, 3
      %p100 = por %p98, %p99
      %p101 = scmp.ne.s32.totalorder %s93, %s96
      %p102 = scmp.eq.s32.totalorder %s17, 0
      %p103 = por %p101, %p102
      %p104 = scmp.ne.s32.totalorder %s93, %s96
      %p105 = scmp.eq.s32.totalorder %s22, 3
      %p106 = por %p104, %p105
      %p107 = scmp.ne.s32.totalorder %s96, %s97
      %p108 = scmp.eq.s32.totalorder %s22, 0
      %p109 = por %p107, %p108
      %p110 = scmp.ne.s32.totalorder %s96, %s97
      %p111 = scmp.eq.s32.totalorder %s23, 3
      %p112 = por %p110, %p111
      %p114 = scmp.ne.s32.totalorder %s97, %s113
      %p115 = scmp.eq.s32.totalorder %s23, 0
      %p116 = por %p114, %p115
      %s118 = sadd.s32 %s117, 1
      %p121 = scmp.eq.s32.totalorder %s17, 3
      %p122 = scmp.ne.s32.totalorder %s117, %s119
      %p123 = scmp.eq.s32.totalorder %s17, 0
      %p124 = por %p122, %p123
      %p125 = scmp.ne.s32.totalorder %s117, %s119
      %p126 = scmp.eq.s32.totalorder %s22, 3
      %p127 = por %p125, %p126
      %p128 = scmp.ne.s32.totalorder %s119, %s120
      %p129 = scmp.eq.s32.totalorder %s22, 0
      %p130 = por %p128, %p129
      %p131 = scmp.ne.s32.totalorder %s119, %s120
      %p132 = scmp.eq.s32.totalorder %s23, 3
      %p133 = por %p131, %p132
      %p135 = scmp.ne.s32.totalorder %s120, %s134
      %p136 = scmp.eq.s32.totalorder %s23, 0
      %p137 = por %p135, %p136
      %s139 = sadd.s32 %s138, 1
      %p142 = scmp.eq.s32.totalorder %s17, 3
      %p143 = scmp.ne.s32.totalorder %s138, %s140
      %p144 = scmp.eq.s32.totalorder %s17, 0
      %p145 = por %p143, %p144
      %p146 = scmp.ne.s32.totalorder %s138, %s140
      %p147 = scmp.eq.s32.totalorder %s22, 3
      %p148 = por %p146, %p147
      %p149 = scmp.ne.s32.totalorder %s140, %s141
      %p150 = scmp.eq.s32.totalorder %s22, 0
      %p151 = por %p149, %p150
      %p152 = scmp.ne.s32.totalorder %s140, %s141
      %p153 = scmp.eq.s32.totalorder %s23, 3
      %p154 = por %p152, %p153
      %p156 = scmp.ne.s32.totalorder %s141, %s155
      %p157 = scmp.eq.s32.totalorder %s23, 0
      %p158 = por %p156, %p157
      %s160 = sadd.s32 %s159, 1
      %p163 = scmp.eq.s32.totalorder %s17, 3
      %p164 = scmp.ne.s32.totalorder %s159, %s161
      %p165 = scmp.eq.s32.totalorder %s17, 0
      %p166 = por %p164, %p165
      %p167 = scmp.ne.s32.totalorder %s159, %s161
      %p168 = scmp.eq.s32.totalorder %s22, 3
      %p169 = por %p167, %p168
      %p170 = scmp.ne.s32.totalorder %s161, %s162
      %p171 = scmp.eq.s32.totalorder %s22, 0
      %p172 = por %p170, %p171
      %p173 = scmp.ne.s32.totalorder %s161, %s162
      %p174 = scmp.eq.s32.totalorder %s23, 3
      %p175 = por %p173, %p174
      %p177 = scmp.ne.s32.totalorder %s162, %s176
      %p178 = scmp.eq.s32.totalorder %s23, 0
      %p179 = por %p177, %p178
      %s181 = sadd.s32 %s180, 1
      %p184 = scmp.eq.s32.totalorder %s17, 3
      %p185 = scmp.ne.s32.totalorder %s180, %s182
      %p186 = scmp.eq.s32.totalorder %s17, 0
      %p187 = por %p185, %p186
      %p188 = scmp.ne.s32.totalorder %s180, %s182
      %p189 = scmp.eq.s32.totalorder %s22, 3
      %p190 = por %p188, %p189
      %p191 = scmp.ne.s32.totalorder %s182, %s183
      %p192 = scmp.eq.s32.totalorder %s22, 0
      %p193 = por %p191, %p192
      %p194 = scmp.ne.s32.totalorder %s182, %s183
      %p195 = scmp.eq.s32.totalorder %s23, 3
      %p196 = por %p194, %p195
      %p198 = scmp.ne.s32.totalorder %s183, %s197
      %p199 = scmp.eq.s32.totalorder %s23, 0
      %p200 = por %p198, %p199
      %s202 = sadd.s32 %s201, 1
      %p205 = scmp.eq.s32.totalorder %s17, 3
      %p206 = scmp.ne.s32.totalorder %s201, %s203
      %p207 = scmp.eq.s32.totalorder %s17, 0
      %p208 = por %p206, %p207
      %p209 = scmp.ne.s32.totalorder %s201, %s203
      %p210 = scmp.eq.s32.totalorder %s22, 3
      %p211 = por %p209, %p210
      %p212 = scmp.ne.s32.totalorder %s203, %s204
      %p213 = scmp.eq.s32.totalorder %s22, 0
      %p214 = por %p212, %p213
      %p215 = scmp.ne.s32.totalorder %s203, %s204
      %p216 = scmp.eq.s32.totalorder %s23, 3
      %p217 = por %p215, %p216
      %p219 = scmp.ne.s32.totalorder %s204, %s218
      %p220 = scmp.eq.s32.totalorder %s23, 0
      %p221 = por %p219, %p220
      %s222 = ssub.s32 %s24, %s36
      %p223 = scmp.eq.s32.totalorder %s222, 0
      %s225 = sadd.s32 %s224, 1
      %s226 = scalar_select %p223, %s224, %s225
      %p229 = pneg %p223
      %p230 = scmp.eq.s32.totalorder %s17, 3
      %p231 = por %p229, %p230
      %p232 = scmp.ne.s32.totalorder %s224, %s227
      %p233 = scmp.eq.s32.totalorder %s17, 0
      %p234 = por %p232, %p233
      %p235 = scmp.ne.s32.totalorder %s224, %s227
      %p236 = scmp.eq.s32.totalorder %s22, 3
      %p237 = por %p235, %p236
      %p238 = scmp.ne.s32.totalorder %s227, %s228
      %p239 = scmp.eq.s32.totalorder %s22, 0
      %p240 = por %p238, %p239
      %p241 = scmp.ne.s32.totalorder %s227, %s228
      %p242 = scmp.eq.s32.totalorder %s23, 3
      %p243 = por %p241, %p242
      %p245 = scmp.ne.s32.totalorder %s228, %s244
      %p246 = scmp.eq.s32.totalorder %s23, 0
      %p247 = por %p245, %p246
      %s248 = ssub.s32 %s24, %s36
      %p249 = scmp.eq.s32.totalorder %s248, 0
      %s251 = sadd.s32 %s250, 1
      %s252 = scalar_select %p249, %s250, %s251
      %p255 = pneg %p249
      %p256 = scmp.eq.s32.totalorder %s17, 3
      %p257 = por %p255, %p256
      %p258 = scmp.ne.s32.totalorder %s250, %s253
      %p259 = scmp.eq.s32.totalorder %s17, 0
      %p260 = por %p258, %p259
      %p261 = scmp.ne.s32.totalorder %s250, %s253
      %p262 = scmp.eq.s32.totalorder %s22, 3
      %p263 = por %p261, %p262
      %p264 = scmp.ne.s32.totalorder %s253, %s254
      %p265 = scmp.eq.s32.totalorder %s22, 0
      %p266 = por %p264, %p265
      %p267 = scmp.ne.s32.totalorder %s253, %s254
      %p268 = scmp.eq.s32.totalorder %s23, 3
      %p269 = por %p267, %p268
      %p271 = scmp.ne.s32.totalorder %s254, %s270
      %p272 = scmp.eq.s32.totalorder %s23, 0
      %p273 = por %p271, %p272
      %p274 = scmp.le.s32.totalorder 1, %s17
      %p275 = scmp.lt.s32.totalorder %s17, 5
      %p276 = pnand %p274, %p275
      %p277 = pneg %p276
      // Predicated region
      $region9: #{fwd.5} parent=5 // pred_check
        _
      $region10: #{fwd.5} parent=5 // pred_check_branch
        %279 = sbr.rel (%p276) target = $region12
      $region11: #{fwd.5} parent=5 // pred_region
        %s280 = ssub.s32 %s17, 1
        // Predicated region
        $region13: #{fwd.5} parent=11 // pred_check
          %p281 = pneg %p130
        $region14: #{fwd.5} parent=11 // pred_check_branch
          %283 = sbr.rel (%p281) target = $region16
        $region15: #{fwd.5} parent=11 // pred_region
          _
        $region16: #{fwd.5} parent=11 // pred_fallthru
          _
        // Predicated region
        $region17: #{fwd.5} parent=11 // pred_check
          %p284 = pneg %p151
        $region18: #{fwd.5} parent=11 // pred_check_branch
          %286 = sbr.rel (%p284) target = $region20
        $region19: #{fwd.5} parent=11 // pred_region
          %s288 = ssub.s32 1024, 1024
          %289 = vsyncadd [#allocation5], %s288
          %s290 = sshll.u32 [#allocation4], 4
          %s291 = int_to_ptr.vmem [resolvable:$true] %s290
          %296 = dma.hbm_to_vmem [thread:$0]  %s4, 1024, %s291, [#allocation5], 64, 64, 4
        $region20: #{fwd.5} parent=11 // pred_fallthru
          _
        // Predicated region
        $region21: #{fwd.5} parent=11 // pred_check
          %p297 = pneg %p172
        $region22: #{fwd.5} parent=11 // pred_check_branch
          %299 = sbr.rel (%p297) target = $region24
        $region23: #{fwd.5} parent=11 // pred_region
          _
        $region24: #{fwd.5} parent=11 // pred_fallthru
          _
        // Predicated region
        $region25: #{fwd.5} parent=11 // pred_check
          %p300 = pneg %p193
        $region26: #{fwd.5} parent=11 // pred_check_branch
          %302 = sbr.rel (%p300) target = $region28
        $region27: #{fwd.5} parent=11 // pred_region
          %s304 = ssub.s32 1024, 1024
          %305 = vsyncadd [#allocation7], %s304
          %s306 = sshll.u32 [#allocation6], 4
          %s307 = int_to_ptr.vmem [resolvable:$true] %s306
          %312 = dma.hbm_to_vmem [thread:$0]  %s6, 1024, %s307, [#allocation7], 64, 64, 4
        $region28: #{fwd.5} parent=11 // pred_fallthru
          _
        // Predicated region
        $region29: #{fwd.5} parent=11 // pred_check
          %p313 = pneg %p214
        $region30: #{fwd.5} parent=11 // pred_check_branch
          %315 = sbr.rel (%p313) target = $region32
        $region31: #{fwd.5} parent=11 // pred_region
          _
        $region32: #{fwd.5} parent=11 // pred_fallthru
          _
      $region12: #{fwd.5} parent=5 // pred_fallthru
        _
      %p316 = scmp.lt.s32.totalorder %s17, 4
      // Predicated region
      $region33: #{fwd.5} parent=5 // pred_check
        %p317 = pneg %p316
      $region34: #{fwd.5} parent=5 // pred_check_branch
        %319 = sbr.rel (%p317) target = $region36
      $region35: #{fwd.5} parent=5 // pred_region
        // Predicated region
        $region37: #{fwd.5} parent=35 // pred_check
          %p320 = pneg %p51
        $region38: #{fwd.5} parent=35 // pred_check_branch
          %322 = sbr.rel (%p320) target = $region40
        $region39: #{fwd.5} parent=35 // pred_region
          %s323 = sand.u32 %s41, 1
          %s324 = sand.u32 %s41, 1
          %s325 = smul.addr %s324, 256
          %s326 = scalar_lea.vmem [#allocation3], %s325
          %s327 = smul.u32 32, %s24
          %s328 = smul.u32 2, %s25
          %s329 = smul.addr %s327, 4
          %s330 = sadd.s32 %s328, %s329
          %s331 = smul.addr %s330, 4
          %s332 = scalar_lea.vmem %s0, %s331
          // Predicated region
          $region41: #{fwd.5} parent=39 // pred_check
            _
          $region42: #{fwd.5} parent=39 // pred_check_branch
            %334 = sbr.rel (0) target = $region44
          $region43: #{fwd.5} parent=39 // pred_region
            // Predicated region
            $region45: #{fwd.5} parent=43 // pred_check
              _
            $region46: #{fwd.5} parent=43 // pred_check_branch
              %336 = sbr.rel (0) target = $region48
            $region47: #{fwd.5} parent=43 // pred_region
              // Predicated region
              $region60: #{fwd.5} parent=47 // pred_check
                _
              $region61: #{fwd.5} parent=47 // pred_check_branch
                %414 = sbr.rel (0) target = $region63
              $region62: #{fwd.5} parent=47 // pred_region
                loop: start=0, step=1, limit=1
                $region64: #{fwd.5} parent=62 // loop_pre_header
                  _
                $region65: #{fwd.5} parent=62 // loop_header
                  %s416 = sphi 0, %s420
                  %p417 = scmp.ge.s32.totalorder %s416, 1
                  %s421 = sphi %s332, %s332
                  %s422 = sphi %s326, %s326
                $region66: #{fwd.5} parent=62 // loop_header_branch
                  %419 = sbr.rel (%p417) target = $region70
                $region67: #{fwd.5} parent=62 // loop_body
                  %v423 = vld [vmem:[%s421] sm:$0xff]
                  %424 = vst [vmem:[%s422] sm:$0xff] %v423
                  %v425 = vld [vmem:[%s421 + $0x10] sm:$0xff]
                  %426 = vst [vmem:[%s422 + $0x8] sm:$0xff] %v425
                  %v427 = vld [vmem:[%s421 + $0x20] sm:$0xff]
                  %428 = vst [vmem:[%s422 + $0x10] sm:$0xff] %v427
                  %v429 = vld [vmem:[%s421 + $0x30] sm:$0xff]
                  %430 = vst [vmem:[%s422 + $0x18] sm:$0xff] %v429
                  %v431 = vld [vmem:[%s421 + $0x40] sm:$0xff]
                  %432 = vst [vmem:[%s422 + $0x20] sm:$0xff] %v431
                  %v433 = vld [vmem:[%s421 + $0x50] sm:$0xff]
                  %434 = vst [vmem:[%s422 + $0x28] sm:$0xff] %v433
                  %v435 = vld [vmem:[%s421 + $0x60] sm:$0xff]
                  %436 = vst [vmem:[%s422 + $0x30] sm:$0xff] %v435
                  %v437 = vld [vmem:[%s421 + $0x70] sm:$0xff]
                  %438 = vst [vmem:[%s422 + $0x38] sm:$0xff] %v437
                  %v439 = vld [vmem:[%s421 + $0x80] sm:$0xff]
                  %440 = vst [vmem:[%s422 + $0x40] sm:$0xff] %v439
                  %v441 = vld [vmem:[%s421 + $0x90] sm:$0xff]
                  %442 = vst [vmem:[%s422 + $0x48] sm:$0xff] %v441
                  %v443 = vld [vmem:[%s421 + $0xa0] sm:$0xff]
                  %444 = vst [vmem:[%s422 + $0x50] sm:$0xff] %v443
                  %v445 = vld [vmem:[%s421 + $0xb0] sm:$0xff]
                  %446 = vst [vmem:[%s422 + $0x58] sm:$0xff] %v445
                  %v447 = vld [vmem:[%s421 + $0xc0] sm:$0xff]
                  %448 = vst [vmem:[%s422 + $0x60] sm:$0xff] %v447
                  %v449 = vld [vmem:[%s421 + $0xd0] sm:$0xff]
                  %450 = vst [vmem:[%s422 + $0x68] sm:$0xff] %v449
                  %v451 = vld [vmem:[%s421 + $0xe0] sm:$0xff]
                  %452 = vst [vmem:[%s422 + $0x70] sm:$0xff] %v451
                  %v453 = vld [vmem:[%s421 + $0xf0] sm:$0xff]
                  %454 = vst [vmem:[%s422 + $0x78] sm:$0xff] %v453
                  %v455 = vld [vmem:[%s421 + $0x100] sm:$0xff]
                  %456 = vst [vmem:[%s422 + $0x80] sm:$0xff] %v455
                  %v457 = vld [vmem:[%s421 + $0x110] sm:$0xff]
                  %458 = vst [vmem:[%s422 + $0x88] sm:$0xff] %v457
                  %v459 = vld [vmem:[%s421 + $0x120] sm:$0xff]
                  %460 = vst [vmem:[%s422 + $0x90] sm:$0xff] %v459
                  %v461 = vld [vmem:[%s421 + $0x130] sm:$0xff]
                  %462 = vst [vmem:[%s422 + $0x98] sm:$0xff] %v461
                  %v463 = vld [vmem:[%s421 + $0x140] sm:$0xff]
                  %464 = vst [vmem:[%s422 + $0xa0] sm:$0xff] %v463
                  %v465 = vld [vmem:[%s421 + $0x150] sm:$0xff]
                  %466 = vst [vmem:[%s422 + $0xa8] sm:$0xff] %v465
                  %v467 = vld [vmem:[%s421 + $0x160] sm:$0xff]
                  %468 = vst [vmem:[%s422 + $0xb0] sm:$0xff] %v467
                  %v469 = vld [vmem:[%s421 + $0x170] sm:$0xff]
                  %470 = vst [vmem:[%s422 + $0xb8] sm:$0xff] %v469
                  %v471 = vld [vmem:[%s421 + $0x180] sm:$0xff]
                  %472 = vst [vmem:[%s422 + $0xc0] sm:$0xff] %v471
                  %v473 = vld [vmem:[%s421 + $0x190] sm:$0xff]
                  %474 = vst [vmem:[%s422 + $0xc8] sm:$0xff] %v473
                  %v475 = vld [vmem:[%s421 + $0x1a0] sm:$0xff]
                  %476 = vst [vmem:[%s422 + $0xd0] sm:$0xff] %v475
                  %v477 = vld [vmem:[%s421 + $0x1b0] sm:$0xff]
                  %478 = vst [vmem:[%s422 + $0xd8] sm:$0xff] %v477
                  %v479 = vld [vmem:[%s421 + $0x1c0] sm:$0xff]
                  %480 = vst [vmem:[%s422 + $0xe0] sm:$0xff] %v479
                  %v481 = vld [vmem:[%s421 + $0x1d0] sm:$0xff]
                  %482 = vst [vmem:[%s422 + $0xe8] sm:$0xff] %v481
                  %v483 = vld [vmem:[%s421 + $0x1e0] sm:$0xff]
                  %484 = vst [vmem:[%s422 + $0xf0] sm:$0xff] %v483
                  %v485 = vld [vmem:[%s421 + $0x1f0] sm:$0xff]
                  %486 = vst [vmem:[%s422 + $0xf8] sm:$0xff] %v485
                $region68: #{fwd.5} parent=62 // loop_footer
                  %s420 = sadd.s32 1, %s416
                $region69: #{fwd.5} parent=62 // loop_footer_branch
                  %415 = sbr.rel target = $region65
                $region70: #{fwd.5} parent=62 // loop_exit
                  _
              $region63: #{fwd.5} parent=47 // pred_fallthru
                _
              // Predicated region
              $region71: #{fwd.5} parent=47 // pred_check
                _
              $region72: #{fwd.5} parent=47 // pred_check_branch
                %488 = sbr.rel target = $region74
              $region73: #{fwd.5} parent=47 // pred_region
                _
              $region74: #{fwd.5} parent=47 // pred_fallthru
                _
            $region48: #{fwd.5} parent=43 // pred_fallthru
              _
            // Predicated region
            $region49: #{fwd.5} parent=43 // pred_check
              _
            $region50: #{fwd.5} parent=43 // pred_check_branch
              %338 = sbr.rel target = $region52
            $region51: #{fwd.5} parent=43 // pred_region
              %s340 = ssub.s32 256, 1
              loop: start=0, step=1, limit=1
              $region53: #{fwd.5} parent=51 // loop_pre_header
                _
              $region54: #{fwd.5} parent=51 // loop_header
                %s342 = sphi 0, %s346
                %p343 = scmp.ge.s32.totalorder %s342, 1
                %s347 = sphi %s332, %s332
                %s348 = sphi %s326, %s326
              $region55: #{fwd.5} parent=51 // loop_header_branch
                %345 = sbr.rel (%p343) target = $region59
              $region56: #{fwd.5} parent=51 // loop_body
                %v349 = vld [vmem:[%s347] sm:%s340]
                %350 = vst [vmem:[%s348] sm:%s340] %v349
                %v351 = vld [vmem:[%s347 + $0x10] sm:%s340]
                %352 = vst [vmem:[%s348 + $0x8] sm:%s340] %v351
                %v353 = vld [vmem:[%s347 + $0x20] sm:%s340]
                %354 = vst [vmem:[%s348 + $0x10] sm:%s340] %v353
                %v355 = vld [vmem:[%s347 + $0x30] sm:%s340]
                %356 = vst [vmem:[%s348 + $0x18] sm:%s340] %v355
                %v357 = vld [vmem:[%s347 + $0x40] sm:%s340]
                %358 = vst [vmem:[%s348 + $0x20] sm:%s340] %v357
                %v359 = vld [vmem:[%s347 + $0x50] sm:%s340]
                %360 = vst [vmem:[%s348 + $0x28] sm:%s340] %v359
                %v361 = vld [vmem:[%s347 + $0x60] sm:%s340]
                %362 = vst [vmem:[%s348 + $0x30] sm:%s340] %v361
                %v363 = vld [vmem:[%s347 + $0x70] sm:%s340]
                %364 = vst [vmem:[%s348 + $0x38] sm:%s340] %v363
                %v365 = vld [vmem:[%s347 + $0x80] sm:%s340]
                %366 = vst [vmem:[%s348 + $0x40] sm:%s340] %v365
                %v367 = vld [vmem:[%s347 + $0x90] sm:%s340]
                %368 = vst [vmem:[%s348 + $0x48] sm:%s340] %v367
                %v369 = vld [vmem:[%s347 + $0xa0] sm:%s340]
                %370 = vst [vmem:[%s348 + $0x50] sm:%s340] %v369
                %v371 = vld [vmem:[%s347 + $0xb0] sm:%s340]
                %372 = vst [vmem:[%s348 + $0x58] sm:%s340] %v371
                %v373 = vld [vmem:[%s347 + $0xc0] sm:%s340]
                %374 = vst [vmem:[%s348 + $0x60] sm:%s340] %v373
                %v375 = vld [vmem:[%s347 + $0xd0] sm:%s340]
                %376 = vst [vmem:[%s348 + $0x68] sm:%s340] %v375
                %v377 = vld [vmem:[%s347 + $0xe0] sm:%s340]
                %378 = vst [vmem:[%s348 + $0x70] sm:%s340] %v377
                %v379 = vld [vmem:[%s347 + $0xf0] sm:%s340]
                %380 = vst [vmem:[%s348 + $0x78] sm:%s340] %v379
                %v381 = vld [vmem:[%s347 + $0x100] sm:%s340]
                %382 = vst [vmem:[%s348 + $0x80] sm:%s340] %v381
                %v383 = vld [vmem:[%s347 + $0x110] sm:%s340]
                %384 = vst [vmem:[%s348 + $0x88] sm:%s340] %v383
                %v385 = vld [vmem:[%s347 + $0x120] sm:%s340]
                %386 = vst [vmem:[%s348 + $0x90] sm:%s340] %v385
                %v387 = vld [vmem:[%s347 + $0x130] sm:%s340]
                %388 = vst [vmem:[%s348 + $0x98] sm:%s340] %v387
                %v389 = vld [vmem:[%s347 + $0x140] sm:%s340]
                %390 = vst [vmem:[%s348 + $0xa0] sm:%s340] %v389
                %v391 = vld [vmem:[%s347 + $0x150] sm:%s340]
                %392 = vst [vmem:[%s348 + $0xa8] sm:%s340] %v391
                %v393 = vld [vmem:[%s347 + $0x160] sm:%s340]
                %394 = vst [vmem:[%s348 + $0xb0] sm:%s340] %v393
                %v395 = vld [vmem:[%s347 + $0x170] sm:%s340]
                %396 = vst [vmem:[%s348 + $0xb8] sm:%s340] %v395
                %v397 = vld [vmem:[%s347 + $0x180] sm:%s340]
                %398 = vst [vmem:[%s348 + $0xc0] sm:%s340] %v397
                %v399 = vld [vmem:[%s347 + $0x190] sm:%s340]
                %400 = vst [vmem:[%s348 + $0xc8] sm:%s340] %v399
                %v401 = vld [vmem:[%s347 + $0x1a0] sm:%s340]
                %402 = vst [vmem:[%s348 + $0xd0] sm:%s340] %v401
                %v403 = vld [vmem:[%s347 + $0x1b0] sm:%s340]
                %404 = vst [vmem:[%s348 + $0xd8] sm:%s340] %v403
                %v405 = vld [vmem:[%s347 + $0x1c0] sm:%s340]
                %406 = vst [vmem:[%s348 + $0xe0] sm:%s340] %v405
                %v407 = vld [vmem:[%s347 + $0x1d0] sm:%s340]
                %408 = vst [vmem:[%s348 + $0xe8] sm:%s340] %v407
                %v409 = vld [vmem:[%s347 + $0x1e0] sm:%s340]
                %410 = vst [vmem:[%s348 + $0xf0] sm:%s340] %v409
                %v411 = vld [vmem:[%s347 + $0x1f0] sm:%s340]
                %412 = vst [vmem:[%s348 + $0xf8] sm:%s340] %v411
              $region57: #{fwd.5} parent=51 // loop_footer
                %s346 = sadd.s32 1, %s342
              $region58: #{fwd.5} parent=51 // loop_footer_branch
                %341 = sbr.rel target = $region54
              $region59: #{fwd.5} parent=51 // loop_exit
                _
            $region52: #{fwd.5} parent=43 // pred_fallthru
              _
          $region44: #{fwd.5} parent=39 // pred_fallthru
            _
          %489 = vnop
        $region40: #{fwd.5} parent=35 // pred_fallthru
          _
        // Predicated region
        $region75: #{fwd.5} parent=35 // pred_check
          %p490 = pneg %p77
        $region76: #{fwd.5} parent=35 // pred_check_branch
          %492 = sbr.rel (%p490) target = $region78
        $region77: #{fwd.5} parent=35 // pred_region
          %s493 = smul.u32 32, %s25
          %p494 = scmp.lt.s32.totalorder %s493, 63
          %s495 = scalar_select %p494, %s493, 63
          %s496 = smul.addr %s495, 4
          %s497 = scalar_lea.vmem %s1, %s496
          %s498 = smul.u32 32, %s25
        $region78: #{fwd.5} parent=35 // pred_fallthru
          _
        // Predicated region
        $region79: #{fwd.5} parent=35 // pred_check
          %p499 = pneg %p103
        $region80: #{fwd.5} parent=35 // pred_check_branch
          %501 = sbr.rel (%p499) target = $region82
        $region81: #{fwd.5} parent=35 // pred_region
          %s502 = smul.u32 32, %s24
          %p503 = scmp.lt.s32.totalorder %s502, 63
          %s504 = scalar_select %p503, %s502, 63
          %s505 = smul.addr %s504, 4
          %s506 = scalar_lea.vmem %s2, %s505
          %s507 = smul.u32 32, %s24
        $region82: #{fwd.5} parent=35 // pred_fallthru
          _
        // Predicated region
        $region83: #{fwd.5} parent=35 // pred_check
          %p508 = pneg %p234
        $region84: #{fwd.5} parent=35 // pred_check_branch
          %510 = sbr.rel (%p508) target = $region86
        $region85: #{fwd.5} parent=35 // pred_region
          %s511 = sand.u32 %s17, 1
          %s512 = scalar_lea.sflag [#allocation5], %s511
          %s513 = sand.u32 %s224, 1
          %s514 = smul.addr %s513, 256
          %s515 = scalar_lea.vmem [#allocation8], %s514
          %s516 = smul.u32 32, %s24
          %s518 = ssub.s32 4096, 4096
          %519 = vsyncadd %s512, %s518
          %s520 = smul.addr %s516, 128
          %s521 = scalar_lea.hbm %s8, %s520
          %s522 = sshll.u32 %s515, 4
          %s523 = int_to_ptr.vmem [resolvable:$true] %s522
          %528 = dma.hbm_to_vmem [thread:$0]  %s521, 4096, %s523, %s512, 128, 128, 8
        $region86: #{fwd.5} parent=35 // pred_fallthru
          _
      $region36: #{fwd.5} parent=5 // pred_fallthru
        _
      %p529 = scmp.le.s32.totalorder 1, %s17
      %p530 = scmp.lt.s32.totalorder %s17, 5
      %p531 = pnand %p529, %p530
      %p532 = pneg %p531
      // Predicated region
      $region87: #{fwd.5} parent=5 // pred_check
        _
      $region88: #{fwd.5} parent=5 // pred_check_branch
        %534 = sbr.rel (%p531) target = $region90
      $region89: #{fwd.5} parent=5 // pred_region
        %s535 = ssub.s32 %s17, 1
        %s536 = sand.u32 %s44, 1
        %s537 = sand.u32 %s44, 1
        %s538 = smul.addr %s537, 256
        %s539 = scalar_lea.vmem [#allocation3], %s538
        // Predicated region
        $region91: #{fwd.5} parent=89 // pred_check
          %p540 = pneg %p57
        $region92: #{fwd.5} parent=89 // pred_check_branch
          %542 = sbr.rel (%p540) target = $region94
        $region93: #{fwd.5} parent=89 // pred_region
          _
        $region94: #{fwd.5} parent=89 // pred_fallthru
          _
        // Predicated region
        $region95: #{fwd.5} parent=89 // pred_check
          %p543 = pneg %p151
        $region96: #{fwd.5} parent=89 // pred_check_branch
          %545 = sbr.rel (%p543) target = $region98
        $region97: #{fwd.5} parent=89 // pred_region
          %546 = dma.done [#allocation5], 1024
        $region98: #{fwd.5} parent=89 // pred_fallthru
          _
        // Predicated region
        $region99: #{fwd.5} parent=89 // pred_check
          %p547 = pneg %p193
        $region100: #{fwd.5} parent=89 // pred_check_branch
          %549 = sbr.rel (%p547) target = $region102
        $region101: #{fwd.5} parent=89 // pred_region
          %550 = dma.done [#allocation7], 1024
        $region102: #{fwd.5} parent=89 // pred_fallthru
          _
        %s551 = sand.u32 %s22, 1
        %s552 = scalar_lea.sflag [#allocation5], %s551
        %s553 = sand.u32 %s227, 1
        %s554 = smul.addr %s553, 256
        %s555 = scalar_lea.vmem [#allocation8], %s554
        // Predicated region
        $region103: #{fwd.5} parent=89 // pred_check
          %p556 = pneg %p240
        $region104: #{fwd.5} parent=89 // pred_check_branch
          %558 = sbr.rel (%p556) target = $region106
        $region105: #{fwd.5} parent=89 // pred_region
          %559 = dma.done %s552, 4096
        $region106: #{fwd.5} parent=89 // pred_fallthru
          _
        %s560 = sand.u32 %s44, 1
        %s561 = sand.u32 %s44, 1
        %s562 = smul.addr %s561, 256
        %s563 = scalar_lea.vmem [#allocation3], %s562
        %p564 = pneg %p57
        %p565 = pneg %p54
        %s566 = smul.u32 32, %s27
        %p567 = scmp.lt.s32.totalorder %s566, 63
        %s568 = scalar_select %p567, %s566, 63
        %s569 = smul.addr %s568, 4
        %s570 = scalar_lea.vmem %s1, %s569
        %p571 = pneg %p83
        %p572 = pneg %p80
        %s573 = smul.u32 32, %s26
        %p574 = scmp.lt.s32.totalorder %s573, 63
        %s575 = scalar_select %p574, %s573, 63
        %s576 = smul.addr %s575, 4
        %s577 = scalar_lea.vmem %s2, %s576
        %p578 = pneg %p109
        %p579 = pneg %p106
        %p580 = pneg %p130
        %p581 = pneg %p127
        %p582 = pneg %p151
        %p583 = pneg %p148
        %p584 = pneg %p172
        %p585 = pneg %p169
        %p586 = pneg %p193
        %p587 = pneg %p190
        %p588 = pneg %p214
        %p589 = pneg %p211
        %s590 = sand.u32 %s22, 1
        %s591 = scalar_lea.sflag [#allocation5], %s590
        %s592 = sand.u32 %s227, 1
        %s593 = smul.addr %s592, 256
        %s594 = scalar_lea.vmem [#allocation8], %s593
        %p595 = pneg %p240
        %p596 = pneg %p237
        %p597 = pneg %p266
        %p598 = pneg %p263
        %s599 = smul.u32 32, %s26
        %p600 = scmp.lt.s32.totalorder %s599, 63
        %s601 = scalar_select %p600, %s599, 63
        %s602 = smul.addr %s601, 4
        %s603 = scalar_lea.vmem %s9, %s602
        %s604 = smul.u32 32, %s26
        %s605 = smul.u32 2, %s27
        %s606 = smul.u32 32, %s27
        %p607 = scmp.lt.s32.totalorder %s606, 63
        %s608 = scalar_select %p607, %s606, 63
        %s609 = smul.addr %s608, 4
        %s610 = scalar_lea.vmem %s1, %s609
        %s611 = smul.u32 32, %s27
        %s612 = smul.u32 32, %s26
        %p613 = scmp.lt.s32.totalorder %s612, 63
        %s614 = scalar_select %p613, %s612, 63
        %s615 = smul.addr %s614, 4
        %s616 = scalar_lea.vmem %s2, %s615
        %s617 = smul.u32 32, %s26
        %s618 = smul.u32 32, %s26
        %s619 = smul.u32 32, %s26
        %p620 = scmp.lt.s32.totalorder %s619, 63
        %s621 = scalar_select %p620, %s619, 63
        %s622 = smul.addr %s621, 4
        %s623 = scalar_lea.vmem %s9, %s622
        %s624 = smul.u32 32, %s26
        %p626 = scmp.eq.s32.totalorder %s27, 0
        // Predicated region
        $region107: #{fwd.5} parent=89 // pred_check
          %p627 = pneg %p626
        $region108: #{fwd.5} parent=89 // pred_check_branch
          %629 = sbr.rel (%p627) target = $region110
        $region109: #{fwd.5} parent=89 // pred_region
          %630 = vst [vmem:[#allocation2] sm:$0xff] 0.0
          %631 = vst [vmem:[#allocation2 + $0x8] sm:$0xff] 0.0
          %632 = vst [vmem:[#allocation2 + $0x10] sm:$0xff] 0.0
          %633 = vst [vmem:[#allocation2 + $0x18] sm:$0xff] 0.0
          %634 = vst [vmem:[#allocation2 + $0x20] sm:$0xff] 0.0
          %635 = vst [vmem:[#allocation2 + $0x28] sm:$0xff] 0.0
          %636 = vst [vmem:[#allocation2 + $0x30] sm:$0xff] 0.0
          %637 = vst [vmem:[#allocation2 + $0x38] sm:$0xff] 0.0
          %638 = vst [vmem:[#allocation2 + $0x40] sm:$0xff] 0.0
          %639 = vst [vmem:[#allocation2 + $0x48] sm:$0xff] 0.0
          %640 = vst [vmem:[#allocation2 + $0x50] sm:$0xff] 0.0
          %641 = vst [vmem:[#allocation2 + $0x58] sm:$0xff] 0.0
          %642 = vst [vmem:[#allocation2 + $0x60] sm:$0xff] 0.0
          %643 = vst [vmem:[#allocation2 + $0x68] sm:$0xff] 0.0
          %644 = vst [vmem:[#allocation2 + $0x70] sm:$0xff] 0.0
          %645 = vst [vmem:[#allocation2 + $0x78] sm:$0xff] 0.0
          %646 = vst [vmem:[#allocation2 + $0x80] sm:$0xff] 0.0
          %647 = vst [vmem:[#allocation2 + $0x88] sm:$0xff] 0.0
          %648 = vst [vmem:[#allocation2 + $0x90] sm:$0xff] 0.0
          %649 = vst [vmem:[#allocation2 + $0x98] sm:$0xff] 0.0
          %650 = vst [vmem:[#allocation2 + $0xa0] sm:$0xff] 0.0
          %651 = vst [vmem:[#allocation2 + $0xa8] sm:$0xff] 0.0
          %652 = vst [vmem:[#allocation2 + $0xb0] sm:$0xff] 0.0
          %653 = vst [vmem:[#allocation2 + $0xb8] sm:$0xff] 0.0
          %654 = vst [vmem:[#allocation2 + $0xc0] sm:$0xff] 0.0
          %655 = vst [vmem:[#allocation2 + $0xc8] sm:$0xff] 0.0
          %656 = vst [vmem:[#allocation2 + $0xd0] sm:$0xff] 0.0
          %657 = vst [vmem:[#allocation2 + $0xd8] sm:$0xff] 0.0
          %658 = vst [vmem:[#allocation2 + $0xe0] sm:$0xff] 0.0
          %659 = vst [vmem:[#allocation2 + $0xe8] sm:$0xff] 0.0
          %660 = vst [vmem:[#allocation2 + $0xf0] sm:$0xff] 0.0
          %661 = vst [vmem:[#allocation2 + $0xf8] sm:$0xff] 0.0
        $region110: #{fwd.5} parent=89 // pred_fallthru
          _
        %v662 = vld [vmem:[%s610] sm:$0xf]
        %v663 = vld [vmem:[%s610 + $0x4] sm:$0xf]
        %v664 = vld [vmem:[%s610 + $0x8] sm:$0xf]
        %v665 = vld [vmem:[%s610 + $0xc] sm:$0xf]
        %v666 = vld [vmem:[%s610 + $0x10] sm:$0xf]
        %v667 = vld [vmem:[%s610 + $0x14] sm:$0xf]
        %v668 = vld [vmem:[%s610 + $0x18] sm:$0xf]
        %v669 = vld [vmem:[%s610 + $0x1c] sm:$0xf]
        %v670 = vld [vmem:[%s610 + $0x20] sm:$0xf]
        %v671 = vld [vmem:[%s610 + $0x24] sm:$0xf]
        %v672 = vld [vmem:[%s610 + $0x28] sm:$0xf]
        %v673 = vld [vmem:[%s610 + $0x2c] sm:$0xf]
        %v674 = vld [vmem:[%s610 + $0x30] sm:$0xf]
        %v675 = vld [vmem:[%s610 + $0x34] sm:$0xf]
        %v676 = vld [vmem:[%s610 + $0x38] sm:$0xf]
        %v677 = vld [vmem:[%s610 + $0x3c] sm:$0xf]
        %v678 = vld [vmem:[%s610 + $0x40] sm:$0xf]
        %v679 = vld [vmem:[%s610 + $0x44] sm:$0xf]
        %v680 = vld [vmem:[%s610 + $0x48] sm:$0xf]
        %v681 = vld [vmem:[%s610 + $0x4c] sm:$0xf]
        %v682 = vld [vmem:[%s610 + $0x50] sm:$0xf]
        %v683 = vld [vmem:[%s610 + $0x54] sm:$0xf]
        %v684 = vld [vmem:[%s610 + $0x58] sm:$0xf]
        %v685 = vld [vmem:[%s610 + $0x5c] sm:$0xf]
        %v686 = vld [vmem:[%s610 + $0x60] sm:$0xf]
        %v687 = vld [vmem:[%s610 + $0x64] sm:$0xf]
        %v688 = vld [vmem:[%s610 + $0x68] sm:$0xf]
        %v689 = vld [vmem:[%s610 + $0x6c] sm:$0xf]
        %v690 = vld [vmem:[%s610 + $0x70] sm:$0xf]
        %v691 = vld [vmem:[%s610 + $0x74] sm:$0xf]
        %v692 = vld [vmem:[%s610 + $0x78] sm:$0xf]
        %v693 = vld [vmem:[%s610 + $0x7c] sm:$0xf]
        %v694 = vld [vmem:[%s3] sm:$0xf]
        %v695 = vld [vmem:[%s3 + $0x4] sm:$0xf]
        %v696 = vld [vmem:[%s3 + $0x8] sm:$0xf]
        %v697 = vld [vmem:[%s3 + $0xc] sm:$0xf]
        %v698 = vld [vmem:[%s3 + $0x10] sm:$0xf]
        %v699 = vld [vmem:[%s3 + $0x14] sm:$0xf]
        %v700 = vld [vmem:[%s3 + $0x18] sm:$0xf]
        %v701 = vld [vmem:[%s3 + $0x1c] sm:$0xf]
        %v702 = vld [vmem:[%s3 + $0x20] sm:$0xf]
        %v703 = vld [vmem:[%s3 + $0x24] sm:$0xf]
        %v704 = vld [vmem:[%s3 + $0x28] sm:$0xf]
        %v705 = vld [vmem:[%s3 + $0x2c] sm:$0xf]
        %v706 = vld [vmem:[%s3 + $0x30] sm:$0xf]
        %v707 = vld [vmem:[%s3 + $0x34] sm:$0xf]
        %v708 = vld [vmem:[%s3 + $0x38] sm:$0xf]
        %v709 = vld [vmem:[%s3 + $0x3c] sm:$0xf]
        %v742 = vunpack.c.l.b16 %v662
        %v743 = vunpack.c.l.b16 %v663
        %v744 = vunpack.c.l.b16 %v664
        %v745 = vunpack.c.l.b16 %v665
        %v746 = vunpack.c.l.b16 %v666
        %v747 = vunpack.c.l.b16 %v667
        %v748 = vunpack.c.l.b16 %v668
        %v749 = vunpack.c.l.b16 %v669
        %v750 = vunpack.c.l.b16 %v670
        %v751 = vunpack.c.l.b16 %v671
        %v752 = vunpack.c.l.b16 %v672
        %v753 = vunpack.c.l.b16 %v673
        %v754 = vunpack.c.l.b16 %v674
        %v755 = vunpack.c.l.b16 %v675
        %v756 = vunpack.c.l.b16 %v676
        %v757 = vunpack.c.l.b16 %v677
        %v758 = vunpack.c.l.b16 %v678
        %v759 = vunpack.c.l.b16 %v679
        %v760 = vunpack.c.l.b16 %v680
        %v761 = vunpack.c.l.b16 %v681
        %v762 = vunpack.c.l.b16 %v682
        %v763 = vunpack.c.l.b16 %v683
        %v764 = vunpack.c.l.b16 %v684
        %v765 = vunpack.c.l.b16 %v685
        %v766 = vunpack.c.l.b16 %v686
        %v767 = vunpack.c.l.b16 %v687
        %v768 = vunpack.c.l.b16 %v688
        %v769 = vunpack.c.l.b16 %v689
        %v770 = vunpack.c.l.b16 %v690
        %v771 = vunpack.c.l.b16 %v691
        %v772 = vunpack.c.l.b16 %v692
        %v773 = vunpack.c.l.b16 %v693
        %v774 = vpack.c.b16 %v743, %v742
        %v775 = vpack.c.b16 %v745, %v744
        %v776 = vpack.c.b16 %v747, %v746
        %v777 = vpack.c.b16 %v749, %v748
        %v778 = vpack.c.b16 %v751, %v750
        %v779 = vpack.c.b16 %v753, %v752
        %v780 = vpack.c.b16 %v755, %v754
        %v781 = vpack.c.b16 %v757, %v756
        %v782 = vpack.c.b16 %v759, %v758
        %v783 = vpack.c.b16 %v761, %v760
        %v784 = vpack.c.b16 %v763, %v762
        %v785 = vpack.c.b16 %v765, %v764
        %v786 = vpack.c.b16 %v767, %v766
        %v787 = vpack.c.b16 %v769, %v768
        %v788 = vpack.c.b16 %v771, %v770
        %v789 = vpack.c.b16 %v773, %v772
        %v822 = vunpack.c.l.b16 %v694
        %v823 = vunpack.c.l.b16 %v695
        %v824 = vunpack.c.l.b16 %v696
        %v825 = vunpack.c.l.b16 %v697
        %v826 = vunpack.c.l.b16 %v698
        %v827 = vunpack.c.l.b16 %v699
        %v828 = vunpack.c.l.b16 %v700
        %v829 = vunpack.c.l.b16 %v701
        %v830 = vunpack.c.l.b16 %v702
        %v831 = vunpack.c.l.b16 %v703
        %v832 = vunpack.c.l.b16 %v704
        %v833 = vunpack.c.l.b16 %v705
        %v834 = vunpack.c.l.b16 %v706
        %v835 = vunpack.c.l.b16 %v707
        %v836 = vunpack.c.l.b16 %v708
        %v837 = vunpack.c.l.b16 %v709
        %v838 = vpack.c.b16 %v823, %v822
        %v839 = vpack.c.b16 %v825, %v824
        %v840 = vpack.c.b16 %v827, %v826
        %v841 = vpack.c.b16 %v829, %v828
        %v842 = vpack.c.b16 %v831, %v830
        %v843 = vpack.c.b16 %v833, %v832
        %v844 = vpack.c.b16 %v835, %v834
        %v845 = vpack.c.b16 %v837, %v836
        %854 = vmatprep.subr.bf16.mxu0 0
        %855 = vmatpush1.bf16.msra.mxu0 %v845
        %856 = vmatprep.subr.bf16.mxu0 0
        %857 = vmatpush1.bf16.msra.mxu0 %v844
        %858 = vmatprep.subr.bf16.mxu0 0
        %859 = vmatpush1.bf16.msra.mxu0 %v843
        %860 = vmatprep.subr.bf16.mxu0 0
        %861 = vmatpush1.bf16.msra.mxu0 %v842
        %862 = vmatprep.subr.bf16.mxu0 0
        %863 = vmatpush1.bf16.msra.mxu0 %v841
        %864 = vmatprep.subr.bf16.mxu0 0
        %865 = vmatpush1.bf16.msra.mxu0 %v840
        %866 = vmatprep.subr.bf16.mxu0 0
        %867 = vmatpush1.bf16.msra.mxu0 %v839
        %868 = vmatprep.subr.bf16.mxu0 0
        %869 = vmatpush1.bf16.msra.mxu0 %v838
        %870 = vmatprep.subr.bf16.mxu0 0
        %871 = vmatpush2.bf16.msra.mxu0 0
        %872 = vmatprep.subr.bf16.mxu0 0
        %873 = vmatpush2.bf16.msra.mxu0 0
        %874 = vmatprep.subr.bf16.mxu0 0
        %875 = vmatpush2.bf16.msra.mxu0 0
        %876 = vmatprep.subr.bf16.mxu0 0
        %877 = vmatpush2.bf16.msra.mxu0 0
        %878 = vmatprep.subr.bf16.mxu0 0
        %879 = vmatpush2.bf16.msra.mxu0 0
        %880 = vmatprep.subr.bf16.mxu0 0
        %881 = vmatpush2.bf16.msra.mxu0 0
        %882 = vmatprep.subr.bf16.mxu0 0
        %883 = vmatpush2.bf16.msra.mxu0 0
        %884 = vmatprep.subr.bf16.mxu0 0
        %885 = vmatpush2.bf16.msra.mxu0 0
        %886 = vmatprep.mubr.bf16.mxu0 0
        %887 = vmatmul.mubr.bf16.gmra.mxu0 %v774
        %v888 = vpop.f32.mrf.mxu0
        %v889 = vadd.f32 0.0, %v888
        %v890 = vpop.f32.mrf.mxu0
        %v891 = vpop.f32.mrf.mxu0
        %v892 = vadd.f32 0.0, %v891
        %v893 = vpop.f32.mrf.mxu0
        %894 = vmatprep.mubr.bf16.mxu0 0
        %895 = vmatmul.mubr.bf16.gmra.mxu0 %v775
        %v896 = vpop.f32.mrf.mxu0
        %v897 = vadd.f32 0.0, %v896
        %v898 = vpop.f32.mrf.mxu0
        %v899 = vpop.f32.mrf.mxu0
        %v900 = vadd.f32 0.0, %v899
        %v901 = vpop.f32.mrf.mxu0
        %902 = vmatprep.mubr.bf16.mxu0 0
        %903 = vmatmul.mubr.bf16.gmra.mxu0 %v776
        %v904 = vpop.f32.mrf.mxu0
        %v905 = vadd.f32 0.0, %v904
        %v906 = vpop.f32.mrf.mxu0
        %v907 = vpop.f32.mrf.mxu0
        %v908 = vadd.f32 0.0, %v907
        %v909 = vpop.f32.mrf.mxu0
        %910 = vmatprep.mubr.bf16.mxu0 0
        %911 = vmatmul.mubr.bf16.gmra.mxu0 %v777
        %v912 = vpop.f32.mrf.mxu0
        %v913 = vadd.f32 0.0, %v912
        %v914 = vpop.f32.mrf.mxu0
        %v915 = vpop.f32.mrf.mxu0
        %v916 = vadd.f32 0.0, %v915
        %v917 = vpop.f32.mrf.mxu0
        %918 = vmatprep.mubr.bf16.mxu0 0
        %919 = vmatmul.mubr.bf16.gmra.mxu0 %v778
        %v920 = vpop.f32.mrf.mxu0
        %v921 = vadd.f32 0.0, %v920
        %v922 = vpop.f32.mrf.mxu0
        %v923 = vpop.f32.mrf.mxu0
        %v924 = vadd.f32 0.0, %v923
        %v925 = vpop.f32.mrf.mxu0
        %926 = vmatprep.mubr.bf16.mxu0 0
        %927 = vmatmul.mubr.bf16.gmra.mxu0 %v779
        %v928 = vpop.f32.mrf.mxu0
        %v929 = vadd.f32 0.0, %v928
        %v930 = vpop.f32.mrf.mxu0
        %v931 = vpop.f32.mrf.mxu0
        %v932 = vadd.f32 0.0, %v931
        %v933 = vpop.f32.mrf.mxu0
        %934 = vmatprep.mubr.bf16.mxu0 0
        %935 = vmatmul.mubr.bf16.gmra.mxu0 %v780
        %v936 = vpop.f32.mrf.mxu0
        %v937 = vadd.f32 0.0, %v936
        %v938 = vpop.f32.mrf.mxu0
        %v939 = vpop.f32.mrf.mxu0
        %v940 = vadd.f32 0.0, %v939
        %v941 = vpop.f32.mrf.mxu0
        %942 = vmatprep.mubr.bf16.mxu0 0
        %943 = vmatmul.mubr.bf16.gmra.mxu0 %v781
        %v944 = vpop.f32.mrf.mxu0
        %v945 = vadd.f32 0.0, %v944
        %v946 = vpop.f32.mrf.mxu0
        %v947 = vpop.f32.mrf.mxu0
        %v948 = vadd.f32 0.0, %v947
        %v949 = vpop.f32.mrf.mxu0
        %950 = vmatprep.mubr.bf16.mxu0 0
        %951 = vmatmul.mubr.bf16.gmra.mxu0 %v782
        %v952 = vpop.f32.mrf.mxu0
        %v953 = vadd.f32 0.0, %v952
        %v954 = vpop.f32.mrf.mxu0
        %v955 = vpop.f32.mrf.mxu0
        %v956 = vadd.f32 0.0, %v955
        %v957 = vpop.f32.mrf.mxu0
        %958 = vmatprep.mubr.bf16.mxu0 0
        %959 = vmatmul.mubr.bf16.gmra.mxu0 %v783
        %v960 = vpop.f32.mrf.mxu0
        %v961 = vadd.f32 0.0, %v960
        %v962 = vpop.f32.mrf.mxu0
        %v963 = vpop.f32.mrf.mxu0
        %v964 = vadd.f32 0.0, %v963
        %v965 = vpop.f32.mrf.mxu0
        %966 = vmatprep.mubr.bf16.mxu0 0
        %967 = vmatmul.mubr.bf16.gmra.mxu0 %v784
        %v968 = vpop.f32.mrf.mxu0
        %v969 = vadd.f32 0.0, %v968
        %v970 = vpop.f32.mrf.mxu0
        %v971 = vpop.f32.mrf.mxu0
        %v972 = vadd.f32 0.0, %v971
        %v973 = vpop.f32.mrf.mxu0
        %974 = vmatprep.mubr.bf16.mxu0 0
        %975 = vmatmul.mubr.bf16.gmra.mxu0 %v785
        %v976 = vpop.f32.mrf.mxu0
        %v977 = vadd.f32 0.0, %v976
        %v978 = vpop.f32.mrf.mxu0
        %v979 = vpop.f32.mrf.mxu0
        %v980 = vadd.f32 0.0, %v979
        %v981 = vpop.f32.mrf.mxu0
        %982 = vmatprep.mubr.bf16.mxu0 0
        %983 = vmatmul.mubr.bf16.gmra.mxu0 %v786
        %v984 = vpop.f32.mrf.mxu0
        %v985 = vadd.f32 0.0, %v984
        %v986 = vpop.f32.mrf.mxu0
        %v987 = vpop.f32.mrf.mxu0
        %v988 = vadd.f32 0.0, %v987
        %v989 = vpop.f32.mrf.mxu0
        %990 = vmatprep.mubr.bf16.mxu0 0
        %991 = vmatmul.mubr.bf16.gmra.mxu0 %v787
        %v992 = vpop.f32.mrf.mxu0
        %v993 = vadd.f32 0.0, %v992
        %v994 = vpop.f32.mrf.mxu0
        %v995 = vpop.f32.mrf.mxu0
        %v996 = vadd.f32 0.0, %v995
        %v997 = vpop.f32.mrf.mxu0
        %998 = vmatprep.mubr.bf16.mxu0 0
        %999 = vmatmul.mubr.bf16.gmra.mxu0 %v788
        %v1000 = vpop.f32.mrf.mxu0
        %v1001 = vadd.f32 0.0, %v1000
        %v1002 = vpop.f32.mrf.mxu0
        %v1003 = vpop.f32.mrf.mxu0
        %v1004 = vadd.f32 0.0, %v1003
        %v1005 = vpop.f32.mrf.mxu0
        %1006 = vmatprep.mubr.bf16.mxu0 0
        %1007 = vmatmul.mubr.bf16.gmra.mxu0 %v789
        %v1008 = vpop.f32.mrf.mxu0
        %v1009 = vadd.f32 0.0, %v1008
        %v1010 = vpop.f32.mrf.mxu0
        %v1011 = vpop.f32.mrf.mxu0
        %v1012 = vadd.f32 0.0, %v1011
        %v1013 = vpop.f32.mrf.mxu0
        %1014 = vdwg.mxu0
        %v1015 = vld [vmem:[#allocation2] sm:$0xff]
        %v1016 = vld [vmem:[#allocation2 + $0x8] sm:$0xff]
        %v1017 = vld [vmem:[#allocation2 + $0x10] sm:$0xff]
        %v1018 = vld [vmem:[#allocation2 + $0x18] sm:$0xff]
        %v1019 = vld [vmem:[#allocation2 + $0x20] sm:$0xff]
        %v1020 = vld [vmem:[#allocation2 + $0x28] sm:$0xff]
        %v1021 = vld [vmem:[#allocation2 + $0x30] sm:$0xff]
        %v1022 = vld [vmem:[#allocation2 + $0x38] sm:$0xff]
        %v1023 = vld [vmem:[#allocation2 + $0x40] sm:$0xff]
        %v1024 = vld [vmem:[#allocation2 + $0x48] sm:$0xff]
        %v1025 = vld [vmem:[#allocation2 + $0x50] sm:$0xff]
        %v1026 = vld [vmem:[#allocation2 + $0x58] sm:$0xff]
        %v1027 = vld [vmem:[#allocation2 + $0x60] sm:$0xff]
        %v1028 = vld [vmem:[#allocation2 + $0x68] sm:$0xff]
        %v1029 = vld [vmem:[#allocation2 + $0x70] sm:$0xff]
        %v1030 = vld [vmem:[#allocation2 + $0x78] sm:$0xff]
        %v1031 = vld [vmem:[#allocation2 + $0x80] sm:$0xff]
        %v1032 = vld [vmem:[#allocation2 + $0x88] sm:$0xff]
        %v1033 = vld [vmem:[#allocation2 + $0x90] sm:$0xff]
        %v1034 = vld [vmem:[#allocation2 + $0x98] sm:$0xff]
        %v1035 = vld [vmem:[#allocation2 + $0xa0] sm:$0xff]
        %v1036 = vld [vmem:[#allocation2 + $0xa8] sm:$0xff]
        %v1037 = vld [vmem:[#allocation2 + $0xb0] sm:$0xff]
        %v1038 = vld [vmem:[#allocation2 + $0xb8] sm:$0xff]
        %v1039 = vld [vmem:[#allocation2 + $0xc0] sm:$0xff]
        %v1040 = vld [vmem:[#allocation2 + $0xc8] sm:$0xff]
        %v1041 = vld [vmem:[#allocation2 + $0xd0] sm:$0xff]
        %v1042 = vld [vmem:[#allocation2 + $0xd8] sm:$0xff]
        %v1043 = vld [vmem:[#allocation2 + $0xe0] sm:$0xff]
        %v1044 = vld [vmem:[#allocation2 + $0xe8] sm:$0xff]
        %v1045 = vld [vmem:[#allocation2 + $0xf0] sm:$0xff]
        %v1046 = vld [vmem:[#allocation2 + $0xf8] sm:$0xff]
        %v1047 = vld [vmem:[%s539] sm:$0xff]
        %v1048 = vld [vmem:[%s539 + $0x8] sm:$0xff]
        %v1049 = vld [vmem:[%s539 + $0x10] sm:$0xff]
        %v1050 = vld [vmem:[%s539 + $0x18] sm:$0xff]
        %v1051 = vld [vmem:[%s539 + $0x20] sm:$0xff]
        %v1052 = vld [vmem:[%s539 + $0x28] sm:$0xff]
        %v1053 = vld [vmem:[%s539 + $0x30] sm:$0xff]
        %v1054 = vld [vmem:[%s539 + $0x38] sm:$0xff]
        %v1055 = vld [vmem:[%s539 + $0x40] sm:$0xff]
        %v1056 = vld [vmem:[%s539 + $0x48] sm:$0xff]
        %v1057 = vld [vmem:[%s539 + $0x50] sm:$0xff]
        %v1058 = vld [vmem:[%s539 + $0x58] sm:$0xff]
        %v1059 = vld [vmem:[%s539 + $0x60] sm:$0xff]
        %v1060 = vld [vmem:[%s539 + $0x68] sm:$0xff]
        %v1061 = vld [vmem:[%s539 + $0x70] sm:$0xff]
        %v1062 = vld [vmem:[%s539 + $0x78] sm:$0xff]
        %v1063 = vld [vmem:[%s539 + $0x80] sm:$0xff]
        %v1064 = vld [vmem:[%s539 + $0x88] sm:$0xff]
        %v1065 = vld [vmem:[%s539 + $0x90] sm:$0xff]
        %v1066 = vld [vmem:[%s539 + $0x98] sm:$0xff]
        %v1067 = vld [vmem:[%s539 + $0xa0] sm:$0xff]
        %v1068 = vld [vmem:[%s539 + $0xa8] sm:$0xff]
        %v1069 = vld [vmem:[%s539 + $0xb0] sm:$0xff]
        %v1070 = vld [vmem:[%s539 + $0xb8] sm:$0xff]
        %v1071 = vld [vmem:[%s539 + $0xc0] sm:$0xff]
        %v1072 = vld [vmem:[%s539 + $0xc8] sm:$0xff]
        %v1073 = vld [vmem:[%s539 + $0xd0] sm:$0xff]
        %v1074 = vld [vmem:[%s539 + $0xd8] sm:$0xff]
        %v1075 = vld [vmem:[%s539 + $0xe0] sm:$0xff]
        %v1076 = vld [vmem:[%s539 + $0xe8] sm:$0xff]
        %v1077 = vld [vmem:[%s539 + $0xf0] sm:$0xff]
        %v1078 = vld [vmem:[%s539 + $0xf8] sm:$0xff]
        %v1079 = vpack.c.bf16 %v892, %v889
        %v1080 = vpack.c.bf16 %v900, %v897
        %v1081 = vpack.c.bf16 %v908, %v905
        %v1082 = vpack.c.bf16 %v916, %v913
        %v1083 = vpack.c.bf16 %v924, %v921
        %v1084 = vpack.c.bf16 %v932, %v929
        %v1085 = vpack.c.bf16 %v940, %v937
        %v1086 = vpack.c.bf16 %v948, %v945
        %v1087 = vpack.c.bf16 %v956, %v953
        %v1088 = vpack.c.bf16 %v964, %v961
        %v1089 = vpack.c.bf16 %v972, %v969
        %v1090 = vpack.c.bf16 %v980, %v977
        %v1091 = vpack.c.bf16 %v988, %v985
        %v1092 = vpack.c.bf16 %v996, %v993
        %v1093 = vpack.c.bf16 %v1004, %v1001
        %v1094 = vpack.c.bf16 %v1012, %v1009
        %v1127 = vunpack.c.l.b16 %v1047
        %v1128 = vunpack.c.h.b16 %v1047
        %v1129 = vunpack.c.l.b16 %v1048
        %v1130 = vunpack.c.h.b16 %v1048
        %v1131 = vunpack.c.l.b16 %v1049
        %v1132 = vunpack.c.h.b16 %v1049
        %v1133 = vunpack.c.l.b16 %v1050
        %v1134 = vunpack.c.h.b16 %v1050
        %v1135 = vunpack.c.l.b16 %v1051
        %v1136 = vunpack.c.h.b16 %v1051
        %v1137 = vunpack.c.l.b16 %v1052
        %v1138 = vunpack.c.h.b16 %v1052
        %v1139 = vunpack.c.l.b16 %v1053
        %v1140 = vunpack.c.h.b16 %v1053
        %v1141 = vunpack.c.l.b16 %v1054
        %v1142 = vunpack.c.h.b16 %v1054
        %v1143 = vunpack.c.l.b16 %v1055
        %v1144 = vunpack.c.h.b16 %v1055
        %v1145 = vunpack.c.l.b16 %v1056
        %v1146 = vunpack.c.h.b16 %v1056
        %v1147 = vunpack.c.l.b16 %v1057
        %v1148 = vunpack.c.h.b16 %v1057
        %v1149 = vunpack.c.l.b16 %v1058
        %v1150 = vunpack.c.h.b16 %v1058
        %v1151 = vunpack.c.l.b16 %v1059
        %v1152 = vunpack.c.h.b16 %v1059
        %v1153 = vunpack.c.l.b16 %v1060
        %v1154 = vunpack.c.h.b16 %v1060
        %v1155 = vunpack.c.l.b16 %v1061
        %v1156 = vunpack.c.h.b16 %v1061
        %v1157 = vunpack.c.l.b16 %v1062
        %v1158 = vunpack.c.h.b16 %v1062
        %v1159 = vunpack.c.l.b16 %v1063
        %v1160 = vunpack.c.h.b16 %v1063
        %v1161 = vunpack.c.l.b16 %v1064
        %v1162 = vunpack.c.h.b16 %v1064
        %v1163 = vunpack.c.l.b16 %v1065
        %v1164 = vunpack.c.h.b16 %v1065
        %v1165 = vunpack.c.l.b16 %v1066
        %v1166 = vunpack.c.h.b16 %v1066
        %v1167 = vunpack.c.l.b16 %v1067
        %v1168 = vunpack.c.h.b16 %v1067
        %v1169 = vunpack.c.l.b16 %v1068
        %v1170 = vunpack.c.h.b16 %v1068
        %v1171 = vunpack.c.l.b16 %v1069
        %v1172 = vunpack.c.h.b16 %v1069
        %v1173 = vunpack.c.l.b16 %v1070
        %v1174 = vunpack.c.h.b16 %v1070
        %v1175 = vunpack.c.l.b16 %v1071
        %v1176 = vunpack.c.h.b16 %v1071
        %v1177 = vunpack.c.l.b16 %v1072
        %v1178 = vunpack.c.h.b16 %v1072
        %v1179 = vunpack.c.l.b16 %v1073
        %v1180 = vunpack.c.h.b16 %v1073
        %v1181 = vunpack.c.l.b16 %v1074
        %v1182 = vunpack.c.h.b16 %v1074
        %v1183 = vunpack.c.l.b16 %v1075
        %v1184 = vunpack.c.h.b16 %v1075
        %v1185 = vunpack.c.l.b16 %v1076
        %v1186 = vunpack.c.h.b16 %v1076
        %v1187 = vunpack.c.l.b16 %v1077
        %v1188 = vunpack.c.h.b16 %v1077
        %v1189 = vunpack.c.l.b16 %v1078
        %v1190 = vunpack.c.h.b16 %v1078
        %v1191 = vpack.c.b16 %v1129, %v1127
        %v1192 = vpack.c.b16 %v1130, %v1128
        %v1193 = vpack.c.b16 %v1133, %v1131
        %v1194 = vpack.c.b16 %v1134, %v1132
        %v1195 = vpack.c.b16 %v1137, %v1135
        %v1196 = vpack.c.b16 %v1138, %v1136
        %v1197 = vpack.c.b16 %v1141, %v1139
        %v1198 = vpack.c.b16 %v1142, %v1140
        %v1199 = vpack.c.b16 %v1145, %v1143
        %v1200 = vpack.c.b16 %v1146, %v1144
        %v1201 = vpack.c.b16 %v1149, %v1147
        %v1202 = vpack.c.b16 %v1150, %v1148
        %v1203 = vpack.c.b16 %v1153, %v1151
        %v1204 = vpack.c.b16 %v1154, %v1152
        %v1205 = vpack.c.b16 %v1157, %v1155
        %v1206 = vpack.c.b16 %v1158, %v1156
        %v1207 = vpack.c.b16 %v1161, %v1159
        %v1208 = vpack.c.b16 %v1162, %v1160
        %v1209 = vpack.c.b16 %v1165, %v1163
        %v1210 = vpack.c.b16 %v1166, %v1164
        %v1211 = vpack.c.b16 %v1169, %v1167
        %v1212 = vpack.c.b16 %v1170, %v1168
        %v1213 = vpack.c.b16 %v1173, %v1171
        %v1214 = vpack.c.b16 %v1174, %v1172
        %v1215 = vpack.c.b16 %v1177, %v1175
        %v1216 = vpack.c.b16 %v1178, %v1176
        %v1217 = vpack.c.b16 %v1181, %v1179
        %v1218 = vpack.c.b16 %v1182, %v1180
        %v1219 = vpack.c.b16 %v1185, %v1183
        %v1220 = vpack.c.b16 %v1186, %v1184
        %v1221 = vpack.c.b16 %v1189, %v1187
        %v1222 = vpack.c.b16 %v1190, %v1188
        %1255 = vmatprep.subr.bf16.mxu0 0
        %1256 = vmatpush1.bf16.msra.mxu0 %v1086
        %1257 = vmatprep.subr.bf16.mxu0 0
        %1258 = vmatpush1.bf16.msra.mxu0 %v1085
        %1259 = vmatprep.subr.bf16.mxu0 0
        %1260 = vmatpush1.bf16.msra.mxu0 %v1084
        %1261 = vmatprep.subr.bf16.mxu0 0
        %1262 = vmatpush1.bf16.msra.mxu0 %v1083
        %1263 = vmatprep.subr.bf16.mxu0 0
        %1264 = vmatpush1.bf16.msra.mxu0 %v1082
        %1265 = vmatprep.subr.bf16.mxu0 0
        %1266 = vmatpush1.bf16.msra.mxu0 %v1081
        %1267 = vmatprep.subr.bf16.mxu0 0
        %1268 = vmatpush1.bf16.msra.mxu0 %v1080
        %1269 = vmatprep.subr.bf16.mxu0 0
        %1270 = vmatpush1.bf16.msra.mxu0 %v1079
        %1271 = vmatprep.subr.bf16.mxu0 0
        %1272 = vmatpush2.bf16.msra.mxu0 %v1094
        %1273 = vmatprep.subr.bf16.mxu0 0
        %1274 = vmatpush2.bf16.msra.mxu0 %v1093
        %1275 = vmatprep.subr.bf16.mxu0 0
        %1276 = vmatpush2.bf16.msra.mxu0 %v1092
        %1277 = vmatprep.subr.bf16.mxu0 0
        %1278 = vmatpush2.bf16.msra.mxu0 %v1091
        %1279 = vmatprep.subr.bf16.mxu0 0
        %1280 = vmatpush2.bf16.msra.mxu0 %v1090
        %1281 = vmatprep.subr.bf16.mxu0 0
        %1282 = vmatpush2.bf16.msra.mxu0 %v1089
        %1283 = vmatprep.subr.bf16.mxu0 0
        %1284 = vmatpush2.bf16.msra.mxu0 %v1088
        %1285 = vmatprep.subr.bf16.mxu0 0
        %1286 = vmatpush2.bf16.msra.mxu0 %v1087
        %1287 = vmatprep.mubr.bf16.mxu0 %v1192
        %1288 = vmatmul.mubr.bf16.gmra.mxu0 %v1191
        %v1289 = vpop.f32.mrf.mxu0
        %v1290 = vadd.f32 0.0, %v1289
        %v1291 = vpop.f32.mrf.mxu0
        %v1292 = vpop.f32.mrf.mxu0
        %v1293 = vadd.f32 0.0, %v1292
        %v1294 = vpop.f32.mrf.mxu0
        %1295 = vmatprep.mubr.bf16.mxu0 %v1194
        %1296 = vmatmul.mubr.bf16.gmra.mxu0 %v1193
        %v1297 = vpop.f32.mrf.mxu0
        %v1298 = vadd.f32 0.0, %v1297
        %v1299 = vpop.f32.mrf.mxu0
        %v1300 = vpop.f32.mrf.mxu0
        %v1301 = vadd.f32 0.0, %v1300
        %v1302 = vpop.f32.mrf.mxu0
        %1303 = vmatprep.mubr.bf16.mxu0 %v1196
        %1304 = vmatmul.mubr.bf16.gmra.mxu0 %v1195
        %v1305 = vpop.f32.mrf.mxu0
        %v1306 = vadd.f32 0.0, %v1305
        %v1307 = vpop.f32.mrf.mxu0
        %v1308 = vpop.f32.mrf.mxu0
        %v1309 = vadd.f32 0.0, %v1308
        %v1310 = vpop.f32.mrf.mxu0
        %1311 = vmatprep.mubr.bf16.mxu0 %v1198
        %1312 = vmatmul.mubr.bf16.gmra.mxu0 %v1197
        %v1313 = vpop.f32.mrf.mxu0
        %v1314 = vadd.f32 0.0, %v1313
        %v1315 = vpop.f32.mrf.mxu0
        %v1316 = vpop.f32.mrf.mxu0
        %v1317 = vadd.f32 0.0, %v1316
        %v1318 = vpop.f32.mrf.mxu0
        %1319 = vmatprep.mubr.bf16.mxu0 %v1200
        %1320 = vmatmul.mubr.bf16.gmra.mxu0 %v1199
        %v1321 = vpop.f32.mrf.mxu0
        %v1322 = vadd.f32 0.0, %v1321
        %v1323 = vpop.f32.mrf.mxu0
        %v1324 = vpop.f32.mrf.mxu0
        %v1325 = vadd.f32 0.0, %v1324
        %v1326 = vpop.f32.mrf.mxu0
        %1327 = vmatprep.mubr.bf16.mxu0 %v1202
        %1328 = vmatmul.mubr.bf16.gmra.mxu0 %v1201
        %v1329 = vpop.f32.mrf.mxu0
        %v1330 = vadd.f32 0.0, %v1329
        %v1331 = vpop.f32.mrf.mxu0
        %v1332 = vpop.f32.mrf.mxu0
        %v1333 = vadd.f32 0.0, %v1332
        %v1334 = vpop.f32.mrf.mxu0
        %1335 = vmatprep.mubr.bf16.mxu0 %v1204
        %1336 = vmatmul.mubr.bf16.gmra.mxu0 %v1203
        %v1337 = vpop.f32.mrf.mxu0
        %v1338 = vadd.f32 0.0, %v1337
        %v1339 = vpop.f32.mrf.mxu0
        %v1340 = vpop.f32.mrf.mxu0
        %v1341 = vadd.f32 0.0, %v1340
        %v1342 = vpop.f32.mrf.mxu0
        %1343 = vmatprep.mubr.bf16.mxu0 %v1206
        %1344 = vmatmul.mubr.bf16.gmra.mxu0 %v1205
        %v1345 = vpop.f32.mrf.mxu0
        %v1346 = vadd.f32 0.0, %v1345
        %v1347 = vpop.f32.mrf.mxu0
        %v1348 = vpop.f32.mrf.mxu0
        %v1349 = vadd.f32 0.0, %v1348
        %v1350 = vpop.f32.mrf.mxu0
        %1351 = vmatprep.mubr.bf16.mxu0 %v1208
        %1352 = vmatmul.mubr.bf16.gmra.mxu0 %v1207
        %v1353 = vpop.f32.mrf.mxu0
        %v1354 = vadd.f32 0.0, %v1353
        %v1355 = vpop.f32.mrf.mxu0
        %v1356 = vpop.f32.mrf.mxu0
        %v1357 = vadd.f32 0.0, %v1356
        %v1358 = vpop.f32.mrf.mxu0
        %1359 = vmatprep.mubr.bf16.mxu0 %v1210
        %1360 = vmatmul.mubr.bf16.gmra.mxu0 %v1209
        %v1361 = vpop.f32.mrf.mxu0
        %v1362 = vadd.f32 0.0, %v1361
        %v1363 = vpop.f32.mrf.mxu0
        %v1364 = vpop.f32.mrf.mxu0
        %v1365 = vadd.f32 0.0, %v1364
        %v1366 = vpop.f32.mrf.mxu0
        %1367 = vmatprep.mubr.bf16.mxu0 %v1212
        %1368 = vmatmul.mubr.bf16.gmra.mxu0 %v1211
        %v1369 = vpop.f32.mrf.mxu0
        %v1370 = vadd.f32 0.0, %v1369
        %v1371 = vpop.f32.mrf.mxu0
        %v1372 = vpop.f32.mrf.mxu0
        %v1373 = vadd.f32 0.0, %v1372
        %v1374 = vpop.f32.mrf.mxu0
        %1375 = vmatprep.mubr.bf16.mxu0 %v1214
        %1376 = vmatmul.mubr.bf16.gmra.mxu0 %v1213
        %v1377 = vpop.f32.mrf.mxu0
        %v1378 = vadd.f32 0.0, %v1377
        %v1379 = vpop.f32.mrf.mxu0
        %v1380 = vpop.f32.mrf.mxu0
        %v1381 = vadd.f32 0.0, %v1380
        %v1382 = vpop.f32.mrf.mxu0
        %1383 = vmatprep.mubr.bf16.mxu0 %v1216
        %1384 = vmatmul.mubr.bf16.gmra.mxu0 %v1215
        %v1385 = vpop.f32.mrf.mxu0
        %v1386 = vadd.f32 0.0, %v1385
        %v1387 = vpop.f32.mrf.mxu0
        %v1388 = vpop.f32.mrf.mxu0
        %v1389 = vadd.f32 0.0, %v1388
        %v1390 = vpop.f32.mrf.mxu0
        %1391 = vmatprep.mubr.bf16.mxu0 %v1218
        %1392 = vmatmul.mubr.bf16.gmra.mxu0 %v1217
        %v1393 = vpop.f32.mrf.mxu0
        %v1394 = vadd.f32 0.0, %v1393
        %v1395 = vpop.f32.mrf.mxu0
        %v1396 = vpop.f32.mrf.mxu0
        %v1397 = vadd.f32 0.0, %v1396
        %v1398 = vpop.f32.mrf.mxu0
        %1399 = vmatprep.mubr.bf16.mxu0 %v1220
        %1400 = vmatmul.mubr.bf16.gmra.mxu0 %v1219
        %v1401 = vpop.f32.mrf.mxu0
        %v1402 = vadd.f32 0.0, %v1401
        %v1403 = vpop.f32.mrf.mxu0
        %v1404 = vpop.f32.mrf.mxu0
        %v1405 = vadd.f32 0.0, %v1404
        %v1406 = vpop.f32.mrf.mxu0
        %1407 = vmatprep.mubr.bf16.mxu0 %v1222
        %1408 = vmatmul.mubr.bf16.gmra.mxu0 %v1221
        %v1409 = vpop.f32.mrf.mxu0
        %v1410 = vadd.f32 0.0, %v1409
        %v1411 = vpop.f32.mrf.mxu0
        %v1412 = vpop.f32.mrf.mxu0
        %v1413 = vadd.f32 0.0, %v1412
        %v1414 = vpop.f32.mrf.mxu0
        %1415 = vdwg.mxu0
        %v1416 = vadd.f32 %v1015, %v1290
        %v1417 = vadd.f32 %v1016, %v1293
        %v1418 = vadd.f32 %v1017, %v1298
        %v1419 = vadd.f32 %v1018, %v1301
        %v1420 = vadd.f32 %v1019, %v1306
        %v1421 = vadd.f32 %v1020, %v1309
        %v1422 = vadd.f32 %v1021, %v1314
        %v1423 = vadd.f32 %v1022, %v1317
        %v1424 = vadd.f32 %v1023, %v1322
        %v1425 = vadd.f32 %v1024, %v1325
        %v1426 = vadd.f32 %v1025, %v1330
        %v1427 = vadd.f32 %v1026, %v1333
        %v1428 = vadd.f32 %v1027, %v1338
        %v1429 = vadd.f32 %v1028, %v1341
        %v1430 = vadd.f32 %v1029, %v1346
        %v1431 = vadd.f32 %v1030, %v1349
        %v1432 = vadd.f32 %v1031, %v1354
        %v1433 = vadd.f32 %v1032, %v1357
        %v1434 = vadd.f32 %v1033, %v1362
        %v1435 = vadd.f32 %v1034, %v1365
        %v1436 = vadd.f32 %v1035, %v1370
        %v1437 = vadd.f32 %v1036, %v1373
        %v1438 = vadd.f32 %v1037, %v1378
        %v1439 = vadd.f32 %v1038, %v1381
        %v1440 = vadd.f32 %v1039, %v1386
        %v1441 = vadd.f32 %v1040, %v1389
        %v1442 = vadd.f32 %v1041, %v1394
        %v1443 = vadd.f32 %v1042, %v1397
        %v1444 = vadd.f32 %v1043, %v1402
        %v1445 = vadd.f32 %v1044, %v1405
        %v1446 = vadd.f32 %v1045, %v1410
        %v1447 = vadd.f32 %v1046, %v1413
        %1448 = vst [vmem:[#allocation2] sm:$0xff] %v1416
        %1449 = vst [vmem:[#allocation2 + $0x8] sm:$0xff] %v1417
        %1450 = vst [vmem:[#allocation2 + $0x10] sm:$0xff] %v1418
        %1451 = vst [vmem:[#allocation2 + $0x18] sm:$0xff] %v1419
        %1452 = vst [vmem:[#allocation2 + $0x20] sm:$0xff] %v1420
        %1453 = vst [vmem:[#allocation2 + $0x28] sm:$0xff] %v1421
        %1454 = vst [vmem:[#allocation2 + $0x30] sm:$0xff] %v1422
        %1455 = vst [vmem:[#allocation2 + $0x38] sm:$0xff] %v1423
        %1456 = vst [vmem:[#allocation2 + $0x40] sm:$0xff] %v1424
        %1457 = vst [vmem:[#allocation2 + $0x48] sm:$0xff] %v1425
        %1458 = vst [vmem:[#allocation2 + $0x50] sm:$0xff] %v1426
        %1459 = vst [vmem:[#allocation2 + $0x58] sm:$0xff] %v1427
        %1460 = vst [vmem:[#allocation2 + $0x60] sm:$0xff] %v1428
        %1461 = vst [vmem:[#allocation2 + $0x68] sm:$0xff] %v1429
        %1462 = vst [vmem:[#allocation2 + $0x70] sm:$0xff] %v1430
        %1463 = vst [vmem:[#allocation2 + $0x78] sm:$0xff] %v1431
        %1464 = vst [vmem:[#allocation2 + $0x80] sm:$0xff] %v1432
        %1465 = vst [vmem:[#allocation2 + $0x88] sm:$0xff] %v1433
        %1466 = vst [vmem:[#allocation2 + $0x90] sm:$0xff] %v1434
        %1467 = vst [vmem:[#allocation2 + $0x98] sm:$0xff] %v1435
        %1468 = vst [vmem:[#allocation2 + $0xa0] sm:$0xff] %v1436
        %1469 = vst [vmem:[#allocation2 + $0xa8] sm:$0xff] %v1437
        %1470 = vst [vmem:[#allocation2 + $0xb0] sm:$0xff] %v1438
        %1471 = vst [vmem:[#allocation2 + $0xb8] sm:$0xff] %v1439
        %1472 = vst [vmem:[#allocation2 + $0xc0] sm:$0xff] %v1440
        %1473 = vst [vmem:[#allocation2 + $0xc8] sm:$0xff] %v1441
        %1474 = vst [vmem:[#allocation2 + $0xd0] sm:$0xff] %v1442
        %1475 = vst [vmem:[#allocation2 + $0xd8] sm:$0xff] %v1443
        %1476 = vst [vmem:[#allocation2 + $0xe0] sm:$0xff] %v1444
        %1477 = vst [vmem:[#allocation2 + $0xe8] sm:$0xff] %v1445
        %1478 = vst [vmem:[#allocation2 + $0xf0] sm:$0xff] %v1446
        %1479 = vst [vmem:[#allocation2 + $0xf8] sm:$0xff] %v1447
        %p1480 = scmp.eq.s32.totalorder %s27, 1
        // Predicated region
        $region111: #{fwd.5} parent=89 // pred_check
          %p1481 = pneg %p1480
        $region112: #{fwd.5} parent=89 // pred_check_branch
          %1483 = sbr.rel (%p1481) target = $region114
        $region113: #{fwd.5} parent=89 // pred_region
          %v1484 = vld [vmem:[%s616] sm:$0xf]
          %v1485 = vld [vmem:[%s616 + $0x4] sm:$0xf]
          %v1486 = vld [vmem:[%s616 + $0x8] sm:$0xf]
          %v1487 = vld [vmem:[%s616 + $0xc] sm:$0xf]
          %v1488 = vld [vmem:[%s616 + $0x10] sm:$0xf]
          %v1489 = vld [vmem:[%s616 + $0x14] sm:$0xf]
          %v1490 = vld [vmem:[%s616 + $0x18] sm:$0xf]
          %v1491 = vld [vmem:[%s616 + $0x1c] sm:$0xf]
          %v1492 = vld [vmem:[%s616 + $0x20] sm:$0xf]
          %v1493 = vld [vmem:[%s616 + $0x24] sm:$0xf]
          %v1494 = vld [vmem:[%s616 + $0x28] sm:$0xf]
          %v1495 = vld [vmem:[%s616 + $0x2c] sm:$0xf]
          %v1496 = vld [vmem:[%s616 + $0x30] sm:$0xf]
          %v1497 = vld [vmem:[%s616 + $0x34] sm:$0xf]
          %v1498 = vld [vmem:[%s616 + $0x38] sm:$0xf]
          %v1499 = vld [vmem:[%s616 + $0x3c] sm:$0xf]
          %v1500 = vld [vmem:[%s616 + $0x40] sm:$0xf]
          %v1501 = vld [vmem:[%s616 + $0x44] sm:$0xf]
          %v1502 = vld [vmem:[%s616 + $0x48] sm:$0xf]
          %v1503 = vld [vmem:[%s616 + $0x4c] sm:$0xf]
          %v1504 = vld [vmem:[%s616 + $0x50] sm:$0xf]
          %v1505 = vld [vmem:[%s616 + $0x54] sm:$0xf]
          %v1506 = vld [vmem:[%s616 + $0x58] sm:$0xf]
          %v1507 = vld [vmem:[%s616 + $0x5c] sm:$0xf]
          %v1508 = vld [vmem:[%s616 + $0x60] sm:$0xf]
          %v1509 = vld [vmem:[%s616 + $0x64] sm:$0xf]
          %v1510 = vld [vmem:[%s616 + $0x68] sm:$0xf]
          %v1511 = vld [vmem:[%s616 + $0x6c] sm:$0xf]
          %v1512 = vld [vmem:[%s616 + $0x70] sm:$0xf]
          %v1513 = vld [vmem:[%s616 + $0x74] sm:$0xf]
          %v1514 = vld [vmem:[%s616 + $0x78] sm:$0xf]
          %v1515 = vld [vmem:[%s616 + $0x7c] sm:$0xf]
          %v1516 = vld [vmem:[#allocation4] sm:$0xf]
          %v1517 = vld [vmem:[#allocation4 + $0x4] sm:$0xf]
          %v1518 = vld [vmem:[#allocation4 + $0x8] sm:$0xf]
          %v1519 = vld [vmem:[#allocation4 + $0xc] sm:$0xf]
          %v1520 = vld [vmem:[#allocation4 + $0x10] sm:$0xf]
          %v1521 = vld [vmem:[#allocation4 + $0x14] sm:$0xf]
          %v1522 = vld [vmem:[#allocation4 + $0x18] sm:$0xf]
          %v1523 = vld [vmem:[#allocation4 + $0x1c] sm:$0xf]
          %v1524 = vld [vmem:[#allocation4 + $0x20] sm:$0xf]
          %v1525 = vld [vmem:[#allocation4 + $0x24] sm:$0xf]
          %v1526 = vld [vmem:[#allocation4 + $0x28] sm:$0xf]
          %v1527 = vld [vmem:[#allocation4 + $0x2c] sm:$0xf]
          %v1528 = vld [vmem:[#allocation4 + $0x30] sm:$0xf]
          %v1529 = vld [vmem:[#allocation4 + $0x34] sm:$0xf]
          %v1530 = vld [vmem:[#allocation4 + $0x38] sm:$0xf]
          %v1531 = vld [vmem:[#allocation4 + $0x3c] sm:$0xf]
          %v1532 = vld [vmem:[%s5] sm:$0x1]
          %v1534 = vlaneseq
          %v1535 = vshrl.u32 %v1534, 7
          %v1536 = vsub.s32 0, %v1535
          %v1537 = vrot.slane %v1532, %v1536
          %v1571 = vunpack.c.l.b16 %v1484
          %v1572 = vunpack.c.l.b16 %v1485
          %v1573 = vunpack.c.l.b16 %v1486
          %v1574 = vunpack.c.l.b16 %v1487
          %v1575 = vunpack.c.l.b16 %v1488
          %v1576 = vunpack.c.l.b16 %v1489
          %v1577 = vunpack.c.l.b16 %v1490
          %v1578 = vunpack.c.l.b16 %v1491
          %v1579 = vunpack.c.l.b16 %v1492
          %v1580 = vunpack.c.l.b16 %v1493
          %v1581 = vunpack.c.l.b16 %v1494
          %v1582 = vunpack.c.l.b16 %v1495
          %v1583 = vunpack.c.l.b16 %v1496
          %v1584 = vunpack.c.l.b16 %v1497
          %v1585 = vunpack.c.l.b16 %v1498
          %v1586 = vunpack.c.l.b16 %v1499
          %v1587 = vunpack.c.l.b16 %v1500
          %v1588 = vunpack.c.l.b16 %v1501
          %v1589 = vunpack.c.l.b16 %v1502
          %v1590 = vunpack.c.l.b16 %v1503
          %v1591 = vunpack.c.l.b16 %v1504
          %v1592 = vunpack.c.l.b16 %v1505
          %v1593 = vunpack.c.l.b16 %v1506
          %v1594 = vunpack.c.l.b16 %v1507
          %v1595 = vunpack.c.l.b16 %v1508
          %v1596 = vunpack.c.l.b16 %v1509
          %v1597 = vunpack.c.l.b16 %v1510
          %v1598 = vunpack.c.l.b16 %v1511
          %v1599 = vunpack.c.l.b16 %v1512
          %v1600 = vunpack.c.l.b16 %v1513
          %v1601 = vunpack.c.l.b16 %v1514
          %v1602 = vunpack.c.l.b16 %v1515
          %v1603 = vpack.c.b16 %v1572, %v1571
          %v1604 = vpack.c.b16 %v1574, %v1573
          %v1605 = vpack.c.b16 %v1576, %v1575
          %v1606 = vpack.c.b16 %v1578, %v1577
          %v1607 = vpack.c.b16 %v1580, %v1579
          %v1608 = vpack.c.b16 %v1582, %v1581
          %v1609 = vpack.c.b16 %v1584, %v1583
          %v1610 = vpack.c.b16 %v1586, %v1585
          %v1611 = vpack.c.b16 %v1588, %v1587
          %v1612 = vpack.c.b16 %v1590, %v1589
          %v1613 = vpack.c.b16 %v1592, %v1591
          %v1614 = vpack.c.b16 %v1594, %v1593
          %v1615 = vpack.c.b16 %v1596, %v1595
          %v1616 = vpack.c.b16 %v1598, %v1597
          %v1617 = vpack.c.b16 %v1600, %v1599
          %v1618 = vpack.c.b16 %v1602, %v1601
          %v1651 = vunpack.c.l.b16 %v1516
          %v1652 = vunpack.c.l.b16 %v1517
          %v1653 = vunpack.c.l.b16 %v1518
          %v1654 = vunpack.c.l.b16 %v1519
          %v1655 = vunpack.c.l.b16 %v1520
          %v1656 = vunpack.c.l.b16 %v1521
          %v1657 = vunpack.c.l.b16 %v1522
          %v1658 = vunpack.c.l.b16 %v1523
          %v1659 = vunpack.c.l.b16 %v1524
          %v1660 = vunpack.c.l.b16 %v1525
          %v1661 = vunpack.c.l.b16 %v1526
          %v1662 = vunpack.c.l.b16 %v1527
          %v1663 = vunpack.c.l.b16 %v1528
          %v1664 = vunpack.c.l.b16 %v1529
          %v1665 = vunpack.c.l.b16 %v1530
          %v1666 = vunpack.c.l.b16 %v1531
          %v1667 = vpack.c.b16 %v1652, %v1651
          %v1668 = vpack.c.b16 %v1654, %v1653
          %v1669 = vpack.c.b16 %v1656, %v1655
          %v1670 = vpack.c.b16 %v1658, %v1657
          %v1671 = vpack.c.b16 %v1660, %v1659
          %v1672 = vpack.c.b16 %v1662, %v1661
          %v1673 = vpack.c.b16 %v1664, %v1663
          %v1674 = vpack.c.b16 %v1666, %v1665
          %1683 = vmatprep.subr.bf16.mxu0 0
          %1684 = vmatpush1.bf16.msra.mxu0 %v1674
          %1685 = vmatprep.subr.bf16.mxu0 0
          %1686 = vmatpush1.bf16.msra.mxu0 %v1673
          %1687 = vmatprep.subr.bf16.mxu0 0
          %1688 = vmatpush1.bf16.msra.mxu0 %v1672
          %1689 = vmatprep.subr.bf16.mxu0 0
          %1690 = vmatpush1.bf16.msra.mxu0 %v1671
          %1691 = vmatprep.subr.bf16.mxu0 0
          %1692 = vmatpush1.bf16.msra.mxu0 %v1670
          %1693 = vmatprep.subr.bf16.mxu0 0
          %1694 = vmatpush1.bf16.msra.mxu0 %v1669
          %1695 = vmatprep.subr.bf16.mxu0 0
          %1696 = vmatpush1.bf16.msra.mxu0 %v1668
          %1697 = vmatprep.subr.bf16.mxu0 0
          %1698 = vmatpush1.bf16.msra.mxu0 %v1667
          %1699 = vmatprep.subr.bf16.mxu0 0
          %1700 = vmatpush2.bf16.msra.mxu0 0
          %1701 = vmatprep.subr.bf16.mxu0 0
          %1702 = vmatpush2.bf16.msra.mxu0 0
          %1703 = vmatprep.subr.bf16.mxu0 0
          %1704 = vmatpush2.bf16.msra.mxu0 0
          %1705 = vmatprep.subr.bf16.mxu0 0
          %1706 = vmatpush2.bf16.msra.mxu0 0
          %1707 = vmatprep.subr.bf16.mxu0 0
          %1708 = vmatpush2.bf16.msra.mxu0 0
          %1709 = vmatprep.subr.bf16.mxu0 0
          %1710 = vmatpush2.bf16.msra.mxu0 0
          %1711 = vmatprep.subr.bf16.mxu0 0
          %1712 = vmatpush2.bf16.msra.mxu0 0
          %1713 = vmatprep.subr.bf16.mxu0 0
          %1714 = vmatpush2.bf16.msra.mxu0 0
          %1715 = vmatprep.mubr.bf16.mxu0 0
          %1716 = vmatmul.mubr.bf16.gmra.mxu0 %v1603
          %v1717 = vpop.f32.mrf.mxu0
          %v1718 = vadd.f32 %v1537, %v1717
          %v1719 = vpop.f32.mrf.mxu0
          %v1720 = vpop.f32.mrf.mxu0
          %v1721 = vadd.f32 %v1537, %v1720
          %v1722 = vpop.f32.mrf.mxu0
          %1723 = vmatprep.mubr.bf16.mxu0 0
          %1724 = vmatmul.mubr.bf16.gmra.mxu0 %v1604
          %v1725 = vpop.f32.mrf.mxu0
          %v1726 = vadd.f32 %v1537, %v1725
          %v1727 = vpop.f32.mrf.mxu0
          %v1728 = vpop.f32.mrf.mxu0
          %v1729 = vadd.f32 %v1537, %v1728
          %v1730 = vpop.f32.mrf.mxu0
          %1731 = vmatprep.mubr.bf16.mxu0 0
          %1732 = vmatmul.mubr.bf16.gmra.mxu0 %v1605
          %v1733 = vpop.f32.mrf.mxu0
          %v1734 = vadd.f32 %v1537, %v1733
          %v1735 = vpop.f32.mrf.mxu0
          %v1736 = vpop.f32.mrf.mxu0
          %v1737 = vadd.f32 %v1537, %v1736
          %v1738 = vpop.f32.mrf.mxu0
          %1739 = vmatprep.mubr.bf16.mxu0 0
          %1740 = vmatmul.mubr.bf16.gmra.mxu0 %v1606
          %v1741 = vpop.f32.mrf.mxu0
          %v1742 = vadd.f32 %v1537, %v1741
          %v1743 = vpop.f32.mrf.mxu0
          %v1744 = vpop.f32.mrf.mxu0
          %v1745 = vadd.f32 %v1537, %v1744
          %v1746 = vpop.f32.mrf.mxu0
          %1747 = vmatprep.mubr.bf16.mxu0 0
          %1748 = vmatmul.mubr.bf16.gmra.mxu0 %v1607
          %v1749 = vpop.f32.mrf.mxu0
          %v1750 = vadd.f32 %v1537, %v1749
          %v1751 = vpop.f32.mrf.mxu0
          %v1752 = vpop.f32.mrf.mxu0
          %v1753 = vadd.f32 %v1537, %v1752
          %v1754 = vpop.f32.mrf.mxu0
          %1755 = vmatprep.mubr.bf16.mxu0 0
          %1756 = vmatmul.mubr.bf16.gmra.mxu0 %v1608
          %v1757 = vpop.f32.mrf.mxu0
          %v1758 = vadd.f32 %v1537, %v1757
          %v1759 = vpop.f32.mrf.mxu0
          %v1760 = vpop.f32.mrf.mxu0
          %v1761 = vadd.f32 %v1537, %v1760
          %v1762 = vpop.f32.mrf.mxu0
          %1763 = vmatprep.mubr.bf16.mxu0 0
          %1764 = vmatmul.mubr.bf16.gmra.mxu0 %v1609
          %v1765 = vpop.f32.mrf.mxu0
          %v1766 = vadd.f32 %v1537, %v1765
          %v1767 = vpop.f32.mrf.mxu0
          %v1768 = vpop.f32.mrf.mxu0
          %v1769 = vadd.f32 %v1537, %v1768
          %v1770 = vpop.f32.mrf.mxu0
          %1771 = vmatprep.mubr.bf16.mxu0 0
          %1772 = vmatmul.mubr.bf16.gmra.mxu0 %v1610
          %v1773 = vpop.f32.mrf.mxu0
          %v1774 = vadd.f32 %v1537, %v1773
          %v1775 = vpop.f32.mrf.mxu0
          %v1776 = vpop.f32.mrf.mxu0
          %v1777 = vadd.f32 %v1537, %v1776
          %v1778 = vpop.f32.mrf.mxu0
          %1779 = vmatprep.mubr.bf16.mxu0 0
          %1780 = vmatmul.mubr.bf16.gmra.mxu0 %v1611
          %v1781 = vpop.f32.mrf.mxu0
          %v1782 = vadd.f32 %v1537, %v1781
          %v1783 = vpop.f32.mrf.mxu0
          %v1784 = vpop.f32.mrf.mxu0
          %v1785 = vadd.f32 %v1537, %v1784
          %v1786 = vpop.f32.mrf.mxu0
          %1787 = vmatprep.mubr.bf16.mxu0 0
          %1788 = vmatmul.mubr.bf16.gmra.mxu0 %v1612
          %v1789 = vpop.f32.mrf.mxu0
          %v1790 = vadd.f32 %v1537, %v1789
          %v1791 = vpop.f32.mrf.mxu0
          %v1792 = vpop.f32.mrf.mxu0
          %v1793 = vadd.f32 %v1537, %v1792
          %v1794 = vpop.f32.mrf.mxu0
          %1795 = vmatprep.mubr.bf16.mxu0 0
          %1796 = vmatmul.mubr.bf16.gmra.mxu0 %v1613
          %v1797 = vpop.f32.mrf.mxu0
          %v1798 = vadd.f32 %v1537, %v1797
          %v1799 = vpop.f32.mrf.mxu0
          %v1800 = vpop.f32.mrf.mxu0
          %v1801 = vadd.f32 %v1537, %v1800
          %v1802 = vpop.f32.mrf.mxu0
          %1803 = vmatprep.mubr.bf16.mxu0 0
          %1804 = vmatmul.mubr.bf16.gmra.mxu0 %v1614
          %v1805 = vpop.f32.mrf.mxu0
          %v1806 = vadd.f32 %v1537, %v1805
          %v1807 = vpop.f32.mrf.mxu0
          %v1808 = vpop.f32.mrf.mxu0
          %v1809 = vadd.f32 %v1537, %v1808
          %v1810 = vpop.f32.mrf.mxu0
          %1811 = vmatprep.mubr.bf16.mxu0 0
          %1812 = vmatmul.mubr.bf16.gmra.mxu0 %v1615
          %v1813 = vpop.f32.mrf.mxu0
          %v1814 = vadd.f32 %v1537, %v1813
          %v1815 = vpop.f32.mrf.mxu0
          %v1816 = vpop.f32.mrf.mxu0
          %v1817 = vadd.f32 %v1537, %v1816
          %v1818 = vpop.f32.mrf.mxu0
          %1819 = vmatprep.mubr.bf16.mxu0 0
          %1820 = vmatmul.mubr.bf16.gmra.mxu0 %v1616
          %v1821 = vpop.f32.mrf.mxu0
          %v1822 = vadd.f32 %v1537, %v1821
          %v1823 = vpop.f32.mrf.mxu0
          %v1824 = vpop.f32.mrf.mxu0
          %v1825 = vadd.f32 %v1537, %v1824
          %v1826 = vpop.f32.mrf.mxu0
          %1827 = vmatprep.mubr.bf16.mxu0 0
          %1828 = vmatmul.mubr.bf16.gmra.mxu0 %v1617
          %v1829 = vpop.f32.mrf.mxu0
          %v1830 = vadd.f32 %v1537, %v1829
          %v1831 = vpop.f32.mrf.mxu0
          %v1832 = vpop.f32.mrf.mxu0
          %v1833 = vadd.f32 %v1537, %v1832
          %v1834 = vpop.f32.mrf.mxu0
          %1835 = vmatprep.mubr.bf16.mxu0 0
          %1836 = vmatmul.mubr.bf16.gmra.mxu0 %v1618
          %v1837 = vpop.f32.mrf.mxu0
          %v1838 = vadd.f32 %v1537, %v1837
          %v1839 = vpop.f32.mrf.mxu0
          %v1840 = vpop.f32.mrf.mxu0
          %v1841 = vadd.f32 %v1537, %v1840
          %v1842 = vpop.f32.mrf.mxu0
          %1843 = vdwg.mxu0
          %vm1844 = vcmp.ge.f32.partialorder %v1718, 0.0
          %vm1845 = vcmp.ge.f32.partialorder %v1721, 0.0
          %vm1846 = vcmp.ge.f32.partialorder %v1726, 0.0
          %vm1847 = vcmp.ge.f32.partialorder %v1729, 0.0
          %vm1848 = vcmp.ge.f32.partialorder %v1734, 0.0
          %vm1849 = vcmp.ge.f32.partialorder %v1737, 0.0
          %vm1850 = vcmp.ge.f32.partialorder %v1742, 0.0
          %vm1851 = vcmp.ge.f32.partialorder %v1745, 0.0
          %vm1852 = vcmp.ge.f32.partialorder %v1750, 0.0
          %vm1853 = vcmp.ge.f32.partialorder %v1753, 0.0
          %vm1854 = vcmp.ge.f32.partialorder %v1758, 0.0
          %vm1855 = vcmp.ge.f32.partialorder %v1761, 0.0
          %vm1856 = vcmp.ge.f32.partialorder %v1766, 0.0
          %vm1857 = vcmp.ge.f32.partialorder %v1769, 0.0
          %vm1858 = vcmp.ge.f32.partialorder %v1774, 0.0
          %vm1859 = vcmp.ge.f32.partialorder %v1777, 0.0
          %vm1860 = vcmp.ge.f32.partialorder %v1782, 0.0
          %vm1861 = vcmp.ge.f32.partialorder %v1785, 0.0
          %vm1862 = vcmp.ge.f32.partialorder %v1790, 0.0
          %vm1863 = vcmp.ge.f32.partialorder %v1793, 0.0
          %vm1864 = vcmp.ge.f32.partialorder %v1798, 0.0
          %vm1865 = vcmp.ge.f32.partialorder %v1801, 0.0
          %vm1866 = vcmp.ge.f32.partialorder %v1806, 0.0
          %vm1867 = vcmp.ge.f32.partialorder %v1809, 0.0
          %vm1868 = vcmp.ge.f32.partialorder %v1814, 0.0
          %vm1869 = vcmp.ge.f32.partialorder %v1817, 0.0
          %vm1870 = vcmp.ge.f32.partialorder %v1822, 0.0
          %vm1871 = vcmp.ge.f32.partialorder %v1825, 0.0
          %vm1872 = vcmp.ge.f32.partialorder %v1830, 0.0
          %vm1873 = vcmp.ge.f32.partialorder %v1833, 0.0
          %vm1874 = vcmp.ge.f32.partialorder %v1838, 0.0
          %vm1875 = vcmp.ge.f32.partialorder %v1841, 0.0
          %v1876 = vmul.f32 %v1718, 0.01
          %v1877 = vmul.f32 %v1721, 0.01
          %v1878 = vmul.f32 %v1726, 0.01
          %v1879 = vmul.f32 %v1729, 0.01
          %v1880 = vmul.f32 %v1734, 0.01
          %v1881 = vmul.f32 %v1737, 0.01
          %v1882 = vmul.f32 %v1742, 0.01
          %v1883 = vmul.f32 %v1745, 0.01
          %v1884 = vmul.f32 %v1750, 0.01
          %v1885 = vmul.f32 %v1753, 0.01
          %v1886 = vmul.f32 %v1758, 0.01
          %v1887 = vmul.f32 %v1761, 0.01
          %v1888 = vmul.f32 %v1766, 0.01
          %v1889 = vmul.f32 %v1769, 0.01
          %v1890 = vmul.f32 %v1774, 0.01
          %v1891 = vmul.f32 %v1777, 0.01
          %v1892 = vmul.f32 %v1782, 0.01
          %v1893 = vmul.f32 %v1785, 0.01
          %v1894 = vmul.f32 %v1790, 0.01
          %v1895 = vmul.f32 %v1793, 0.01
          %v1896 = vmul.f32 %v1798, 0.01
          %v1897 = vmul.f32 %v1801, 0.01
          %v1898 = vmul.f32 %v1806, 0.01
          %v1899 = vmul.f32 %v1809, 0.01
          %v1900 = vmul.f32 %v1814, 0.01
          %v1901 = vmul.f32 %v1817, 0.01
          %v1902 = vmul.f32 %v1822, 0.01
          %v1903 = vmul.f32 %v1825, 0.01
          %v1904 = vmul.f32 %v1830, 0.01
          %v1905 = vmul.f32 %v1833, 0.01
          %v1906 = vmul.f32 %v1838, 0.01
          %v1907 = vmul.f32 %v1841, 0.01
          %v1908 = vsel %vm1844, %v1718, %v1876
          %v1909 = vsel %vm1845, %v1721, %v1877
          %v1910 = vsel %vm1846, %v1726, %v1878
          %v1911 = vsel %vm1847, %v1729, %v1879
          %v1912 = vsel %vm1848, %v1734, %v1880
          %v1913 = vsel %vm1849, %v1737, %v1881
          %v1914 = vsel %vm1850, %v1742, %v1882
          %v1915 = vsel %vm1851, %v1745, %v1883
          %v1916 = vsel %vm1852, %v1750, %v1884
          %v1917 = vsel %vm1853, %v1753, %v1885
          %v1918 = vsel %vm1854, %v1758, %v1886
          %v1919 = vsel %vm1855, %v1761, %v1887
          %v1920 = vsel %vm1856, %v1766, %v1888
          %v1921 = vsel %vm1857, %v1769, %v1889
          %v1922 = vsel %vm1858, %v1774, %v1890
          %v1923 = vsel %vm1859, %v1777, %v1891
          %v1924 = vsel %vm1860, %v1782, %v1892
          %v1925 = vsel %vm1861, %v1785, %v1893
          %v1926 = vsel %vm1862, %v1790, %v1894
          %v1927 = vsel %vm1863, %v1793, %v1895
          %v1928 = vsel %vm1864, %v1798, %v1896
          %v1929 = vsel %vm1865, %v1801, %v1897
          %v1930 = vsel %vm1866, %v1806, %v1898
          %v1931 = vsel %vm1867, %v1809, %v1899
          %v1932 = vsel %vm1868, %v1814, %v1900
          %v1933 = vsel %vm1869, %v1817, %v1901
          %v1934 = vsel %vm1870, %v1822, %v1902
          %v1935 = vsel %vm1871, %v1825, %v1903
          %v1936 = vsel %vm1872, %v1830, %v1904
          %v1937 = vsel %vm1873, %v1833, %v1905
          %v1938 = vsel %vm1874, %v1838, %v1906
          %v1939 = vsel %vm1875, %v1841, %v1907
          %v1940 = vld [vmem:[%s555] sm:$0xff]
          %v1941 = vld [vmem:[%s555 + $0x8] sm:$0xff]
          %v1942 = vld [vmem:[%s555 + $0x10] sm:$0xff]
          %v1943 = vld [vmem:[%s555 + $0x18] sm:$0xff]
          %v1944 = vld [vmem:[%s555 + $0x20] sm:$0xff]
          %v1945 = vld [vmem:[%s555 + $0x28] sm:$0xff]
          %v1946 = vld [vmem:[%s555 + $0x30] sm:$0xff]
          %v1947 = vld [vmem:[%s555 + $0x38] sm:$0xff]
          %v1948 = vld [vmem:[%s555 + $0x40] sm:$0xff]
          %v1949 = vld [vmem:[%s555 + $0x48] sm:$0xff]
          %v1950 = vld [vmem:[%s555 + $0x50] sm:$0xff]
          %v1951 = vld [vmem:[%s555 + $0x58] sm:$0xff]
          %v1952 = vld [vmem:[%s555 + $0x60] sm:$0xff]
          %v1953 = vld [vmem:[%s555 + $0x68] sm:$0xff]
          %v1954 = vld [vmem:[%s555 + $0x70] sm:$0xff]
          %v1955 = vld [vmem:[%s555 + $0x78] sm:$0xff]
          %v1956 = vld [vmem:[%s555 + $0x80] sm:$0xff]
          %v1957 = vld [vmem:[%s555 + $0x88] sm:$0xff]
          %v1958 = vld [vmem:[%s555 + $0x90] sm:$0xff]
          %v1959 = vld [vmem:[%s555 + $0x98] sm:$0xff]
          %v1960 = vld [vmem:[%s555 + $0xa0] sm:$0xff]
          %v1961 = vld [vmem:[%s555 + $0xa8] sm:$0xff]
          %v1962 = vld [vmem:[%s555 + $0xb0] sm:$0xff]
          %v1963 = vld [vmem:[%s555 + $0xb8] sm:$0xff]
          %v1964 = vld [vmem:[%s555 + $0xc0] sm:$0xff]
          %v1965 = vld [vmem:[%s555 + $0xc8] sm:$0xff]
          %v1966 = vld [vmem:[%s555 + $0xd0] sm:$0xff]
          %v1967 = vld [vmem:[%s555 + $0xd8] sm:$0xff]
          %v1968 = vld [vmem:[%s555 + $0xe0] sm:$0xff]
          %v1969 = vld [vmem:[%s555 + $0xe8] sm:$0xff]
          %v1970 = vld [vmem:[%s555 + $0xf0] sm:$0xff]
          %v1971 = vld [vmem:[%s555 + $0xf8] sm:$0xff]
          %v1972 = vadd.f32 %v1908, %v1940
          %v1973 = vadd.f32 %v1909, %v1941
          %v1974 = vadd.f32 %v1910, %v1942
          %v1975 = vadd.f32 %v1911, %v1943
          %v1976 = vadd.f32 %v1912, %v1944
          %v1977 = vadd.f32 %v1913, %v1945
          %v1978 = vadd.f32 %v1914, %v1946
          %v1979 = vadd.f32 %v1915, %v1947
          %v1980 = vadd.f32 %v1916, %v1948
          %v1981 = vadd.f32 %v1917, %v1949
          %v1982 = vadd.f32 %v1918, %v1950
          %v1983 = vadd.f32 %v1919, %v1951
          %v1984 = vadd.f32 %v1920, %v1952
          %v1985 = vadd.f32 %v1921, %v1953
          %v1986 = vadd.f32 %v1922, %v1954
          %v1987 = vadd.f32 %v1923, %v1955
          %v1988 = vadd.f32 %v1924, %v1956
          %v1989 = vadd.f32 %v1925, %v1957
          %v1990 = vadd.f32 %v1926, %v1958
          %v1991 = vadd.f32 %v1927, %v1959
          %v1992 = vadd.f32 %v1928, %v1960
          %v1993 = vadd.f32 %v1929, %v1961
          %v1994 = vadd.f32 %v1930, %v1962
          %v1995 = vadd.f32 %v1931, %v1963
          %v1996 = vadd.f32 %v1932, %v1964
          %v1997 = vadd.f32 %v1933, %v1965
          %v1998 = vadd.f32 %v1934, %v1966
          %v1999 = vadd.f32 %v1935, %v1967
          %v2000 = vadd.f32 %v1936, %v1968
          %v2001 = vadd.f32 %v1937, %v1969
          %v2002 = vadd.f32 %v1938, %v1970
          %v2003 = vadd.f32 %v1939, %v1971
          %v2004 = vld [vmem:[#allocation2] sm:$0xff]
          %v2005 = vld [vmem:[#allocation2 + $0x8] sm:$0xff]
          %v2006 = vld [vmem:[#allocation2 + $0x10] sm:$0xff]
          %v2007 = vld [vmem:[#allocation2 + $0x18] sm:$0xff]
          %v2008 = vld [vmem:[#allocation2 + $0x20] sm:$0xff]
          %v2009 = vld [vmem:[#allocation2 + $0x28] sm:$0xff]
          %v2010 = vld [vmem:[#allocation2 + $0x30] sm:$0xff]
          %v2011 = vld [vmem:[#allocation2 + $0x38] sm:$0xff]
          %v2012 = vld [vmem:[#allocation2 + $0x40] sm:$0xff]
          %v2013 = vld [vmem:[#allocation2 + $0x48] sm:$0xff]
          %v2014 = vld [vmem:[#allocation2 + $0x50] sm:$0xff]
          %v2015 = vld [vmem:[#allocation2 + $0x58] sm:$0xff]
          %v2016 = vld [vmem:[#allocation2 + $0x60] sm:$0xff]
          %v2017 = vld [vmem:[#allocation2 + $0x68] sm:$0xff]
          %v2018 = vld [vmem:[#allocation2 + $0x70] sm:$0xff]
          %v2019 = vld [vmem:[#allocation2 + $0x78] sm:$0xff]
          %v2020 = vld [vmem:[#allocation2 + $0x80] sm:$0xff]
          %v2021 = vld [vmem:[#allocation2 + $0x88] sm:$0xff]
          %v2022 = vld [vmem:[#allocation2 + $0x90] sm:$0xff]
          %v2023 = vld [vmem:[#allocation2 + $0x98] sm:$0xff]
          %v2024 = vld [vmem:[#allocation2 + $0xa0] sm:$0xff]
          %v2025 = vld [vmem:[#allocation2 + $0xa8] sm:$0xff]
          %v2026 = vld [vmem:[#allocation2 + $0xb0] sm:$0xff]
          %v2027 = vld [vmem:[#allocation2 + $0xb8] sm:$0xff]
          %v2028 = vld [vmem:[#allocation2 + $0xc0] sm:$0xff]
          %v2029 = vld [vmem:[#allocation2 + $0xc8] sm:$0xff]
          %v2030 = vld [vmem:[#allocation2 + $0xd0] sm:$0xff]
          %v2031 = vld [vmem:[#allocation2 + $0xd8] sm:$0xff]
          %v2032 = vld [vmem:[#allocation2 + $0xe0] sm:$0xff]
          %v2033 = vld [vmem:[#allocation2 + $0xe8] sm:$0xff]
          %v2034 = vld [vmem:[#allocation2 + $0xf0] sm:$0xff]
          %v2035 = vld [vmem:[#allocation2 + $0xf8] sm:$0xff]
          %vm2036 = vcmp.ge.f32.partialorder %v2004, 0.0
          %vm2037 = vcmp.ge.f32.partialorder %v2005, 0.0
          %vm2038 = vcmp.ge.f32.partialorder %v2006, 0.0
          %vm2039 = vcmp.ge.f32.partialorder %v2007, 0.0
          %vm2040 = vcmp.ge.f32.partialorder %v2008, 0.0
          %vm2041 = vcmp.ge.f32.partialorder %v2009, 0.0
          %vm2042 = vcmp.ge.f32.partialorder %v2010, 0.0
          %vm2043 = vcmp.ge.f32.partialorder %v2011, 0.0
          %vm2044 = vcmp.ge.f32.partialorder %v2012, 0.0
          %vm2045 = vcmp.ge.f32.partialorder %v2013, 0.0
          %vm2046 = vcmp.ge.f32.partialorder %v2014, 0.0
          %vm2047 = vcmp.ge.f32.partialorder %v2015, 0.0
          %vm2048 = vcmp.ge.f32.partialorder %v2016, 0.0
          %vm2049 = vcmp.ge.f32.partialorder %v2017, 0.0
          %vm2050 = vcmp.ge.f32.partialorder %v2018, 0.0
          %vm2051 = vcmp.ge.f32.partialorder %v2019, 0.0
          %vm2052 = vcmp.ge.f32.partialorder %v2020, 0.0
          %vm2053 = vcmp.ge.f32.partialorder %v2021, 0.0
          %vm2054 = vcmp.ge.f32.partialorder %v2022, 0.0
          %vm2055 = vcmp.ge.f32.partialorder %v2023, 0.0
          %vm2056 = vcmp.ge.f32.partialorder %v2024, 0.0
          %vm2057 = vcmp.ge.f32.partialorder %v2025, 0.0
          %vm2058 = vcmp.ge.f32.partialorder %v2026, 0.0
          %vm2059 = vcmp.ge.f32.partialorder %v2027, 0.0
          %vm2060 = vcmp.ge.f32.partialorder %v2028, 0.0
          %vm2061 = vcmp.ge.f32.partialorder %v2029, 0.0
          %vm2062 = vcmp.ge.f32.partialorder %v2030, 0.0
          %vm2063 = vcmp.ge.f32.partialorder %v2031, 0.0
          %vm2064 = vcmp.ge.f32.partialorder %v2032, 0.0
          %vm2065 = vcmp.ge.f32.partialorder %v2033, 0.0
          %vm2066 = vcmp.ge.f32.partialorder %v2034, 0.0
          %vm2067 = vcmp.ge.f32.partialorder %v2035, 0.0
          %v2068 = vmul.f32 %v2004, 0.01
          %v2069 = vmul.f32 %v2005, 0.01
          %v2070 = vmul.f32 %v2006, 0.01
          %v2071 = vmul.f32 %v2007, 0.01
          %v2072 = vmul.f32 %v2008, 0.01
          %v2073 = vmul.f32 %v2009, 0.01
          %v2074 = vmul.f32 %v2010, 0.01
          %v2075 = vmul.f32 %v2011, 0.01
          %v2076 = vmul.f32 %v2012, 0.01
          %v2077 = vmul.f32 %v2013, 0.01
          %v2078 = vmul.f32 %v2014, 0.01
          %v2079 = vmul.f32 %v2015, 0.01
          %v2080 = vmul.f32 %v2016, 0.01
          %v2081 = vmul.f32 %v2017, 0.01
          %v2082 = vmul.f32 %v2018, 0.01
          %v2083 = vmul.f32 %v2019, 0.01
          %v2084 = vmul.f32 %v2020, 0.01
          %v2085 = vmul.f32 %v2021, 0.01
          %v2086 = vmul.f32 %v2022, 0.01
          %v2087 = vmul.f32 %v2023, 0.01
          %v2088 = vmul.f32 %v2024, 0.01
          %v2089 = vmul.f32 %v2025, 0.01
          %v2090 = vmul.f32 %v2026, 0.01
          %v2091 = vmul.f32 %v2027, 0.01
          %v2092 = vmul.f32 %v2028, 0.01
          %v2093 = vmul.f32 %v2029, 0.01
          %v2094 = vmul.f32 %v2030, 0.01
          %v2095 = vmul.f32 %v2031, 0.01
          %v2096 = vmul.f32 %v2032, 0.01
          %v2097 = vmul.f32 %v2033, 0.01
          %v2098 = vmul.f32 %v2034, 0.01
          %v2099 = vmul.f32 %v2035, 0.01
          %v2100 = vsel %vm2036, %v2004, %v2068
          %v2101 = vsel %vm2037, %v2005, %v2069
          %v2102 = vsel %vm2038, %v2006, %v2070
          %v2103 = vsel %vm2039, %v2007, %v2071
          %v2104 = vsel %vm2040, %v2008, %v2072
          %v2105 = vsel %vm2041, %v2009, %v2073
          %v2106 = vsel %vm2042, %v2010, %v2074
          %v2107 = vsel %vm2043, %v2011, %v2075
          %v2108 = vsel %vm2044, %v2012, %v2076
          %v2109 = vsel %vm2045, %v2013, %v2077
          %v2110 = vsel %vm2046, %v2014, %v2078
          %v2111 = vsel %vm2047, %v2015, %v2079
          %v2112 = vsel %vm2048, %v2016, %v2080
          %v2113 = vsel %vm2049, %v2017, %v2081
          %v2114 = vsel %vm2050, %v2018, %v2082
          %v2115 = vsel %vm2051, %v2019, %v2083
          %v2116 = vsel %vm2052, %v2020, %v2084
          %v2117 = vsel %vm2053, %v2021, %v2085
          %v2118 = vsel %vm2054, %v2022, %v2086
          %v2119 = vsel %vm2055, %v2023, %v2087
          %v2120 = vsel %vm2056, %v2024, %v2088
          %v2121 = vsel %vm2057, %v2025, %v2089
          %v2122 = vsel %vm2058, %v2026, %v2090
          %v2123 = vsel %vm2059, %v2027, %v2091
          %v2124 = vsel %vm2060, %v2028, %v2092
          %v2125 = vsel %vm2061, %v2029, %v2093
          %v2126 = vsel %vm2062, %v2030, %v2094
          %v2127 = vsel %vm2063, %v2031, %v2095
          %v2128 = vsel %vm2064, %v2032, %v2096
          %v2129 = vsel %vm2065, %v2033, %v2097
          %v2130 = vsel %vm2066, %v2034, %v2098
          %v2131 = vsel %vm2067, %v2035, %v2099
          %v2132 = vpack.c.bf16 %v2101, %v2100
          %v2133 = vpack.c.bf16 %v2103, %v2102
          %v2134 = vpack.c.bf16 %v2105, %v2104
          %v2135 = vpack.c.bf16 %v2107, %v2106
          %v2136 = vpack.c.bf16 %v2109, %v2108
          %v2137 = vpack.c.bf16 %v2111, %v2110
          %v2138 = vpack.c.bf16 %v2113, %v2112
          %v2139 = vpack.c.bf16 %v2115, %v2114
          %v2140 = vpack.c.bf16 %v2117, %v2116
          %v2141 = vpack.c.bf16 %v2119, %v2118
          %v2142 = vpack.c.bf16 %v2121, %v2120
          %v2143 = vpack.c.bf16 %v2123, %v2122
          %v2144 = vpack.c.bf16 %v2125, %v2124
          %v2145 = vpack.c.bf16 %v2127, %v2126
          %v2146 = vpack.c.bf16 %v2129, %v2128
          %v2147 = vpack.c.bf16 %v2131, %v2130
          %v2148 = vld [vmem:[#allocation6] sm:$0xf]
          %v2149 = vld [vmem:[#allocation6 + $0x4] sm:$0xf]
          %v2150 = vld [vmem:[#allocation6 + $0x8] sm:$0xf]
          %v2151 = vld [vmem:[#allocation6 + $0xc] sm:$0xf]
          %v2152 = vld [vmem:[#allocation6 + $0x10] sm:$0xf]
          %v2153 = vld [vmem:[#allocation6 + $0x14] sm:$0xf]
          %v2154 = vld [vmem:[#allocation6 + $0x18] sm:$0xf]
          %v2155 = vld [vmem:[#allocation6 + $0x1c] sm:$0xf]
          %v2156 = vld [vmem:[#allocation6 + $0x20] sm:$0xf]
          %v2157 = vld [vmem:[#allocation6 + $0x24] sm:$0xf]
          %v2158 = vld [vmem:[#allocation6 + $0x28] sm:$0xf]
          %v2159 = vld [vmem:[#allocation6 + $0x2c] sm:$0xf]
          %v2160 = vld [vmem:[#allocation6 + $0x30] sm:$0xf]
          %v2161 = vld [vmem:[#allocation6 + $0x34] sm:$0xf]
          %v2162 = vld [vmem:[#allocation6 + $0x38] sm:$0xf]
          %v2163 = vld [vmem:[#allocation6 + $0x3c] sm:$0xf]
          %v2164 = vld [vmem:[%s7] sm:$0x1]
          %v2166 = vlaneseq
          %v2167 = vshrl.u32 %v2166, 7
          %v2168 = vsub.s32 0, %v2167
          %v2169 = vrot.slane %v2164, %v2168
          %v2187 = vunpack.c.l.b16 %v2148
          %v2188 = vunpack.c.l.b16 %v2149
          %v2189 = vunpack.c.l.b16 %v2150
          %v2190 = vunpack.c.l.b16 %v2151
          %v2191 = vunpack.c.l.b16 %v2152
          %v2192 = vunpack.c.l.b16 %v2153
          %v2193 = vunpack.c.l.b16 %v2154
          %v2194 = vunpack.c.l.b16 %v2155
          %v2195 = vunpack.c.l.b16 %v2156
          %v2196 = vunpack.c.l.b16 %v2157
          %v2197 = vunpack.c.l.b16 %v2158
          %v2198 = vunpack.c.l.b16 %v2159
          %v2199 = vunpack.c.l.b16 %v2160
          %v2200 = vunpack.c.l.b16 %v2161
          %v2201 = vunpack.c.l.b16 %v2162
          %v2202 = vunpack.c.l.b16 %v2163
          %v2203 = vpack.c.b16 %v2188, %v2187
          %v2204 = vpack.c.b16 %v2190, %v2189
          %v2205 = vpack.c.b16 %v2192, %v2191
          %v2206 = vpack.c.b16 %v2194, %v2193
          %v2207 = vpack.c.b16 %v2196, %v2195
          %v2208 = vpack.c.b16 %v2198, %v2197
          %v2209 = vpack.c.b16 %v2200, %v2199
          %v2210 = vpack.c.b16 %v2202, %v2201
          %2219 = vmatprep.subr.bf16.mxu0 0
          %2220 = vmatpush1.bf16.msra.mxu0 %v2210
          %2221 = vmatprep.subr.bf16.mxu0 0
          %2222 = vmatpush1.bf16.msra.mxu0 %v2209
          %2223 = vmatprep.subr.bf16.mxu0 0
          %2224 = vmatpush1.bf16.msra.mxu0 %v2208
          %2225 = vmatprep.subr.bf16.mxu0 0
          %2226 = vmatpush1.bf16.msra.mxu0 %v2207
          %2227 = vmatprep.subr.bf16.mxu0 0
          %2228 = vmatpush1.bf16.msra.mxu0 %v2206
          %2229 = vmatprep.subr.bf16.mxu0 0
          %2230 = vmatpush1.bf16.msra.mxu0 %v2205
          %2231 = vmatprep.subr.bf16.mxu0 0
          %2232 = vmatpush1.bf16.msra.mxu0 %v2204
          %2233 = vmatprep.subr.bf16.mxu0 0
          %2234 = vmatpush1.bf16.msra.mxu0 %v2203
          %2235 = vmatprep.subr.bf16.mxu0 0
          %2236 = vmatpush2.bf16.msra.mxu0 0
          %2237 = vmatprep.subr.bf16.mxu0 0
          %2238 = vmatpush2.bf16.msra.mxu0 0
          %2239 = vmatprep.subr.bf16.mxu0 0
          %2240 = vmatpush2.bf16.msra.mxu0 0
          %2241 = vmatprep.subr.bf16.mxu0 0
          %2242 = vmatpush2.bf16.msra.mxu0 0
          %2243 = vmatprep.subr.bf16.mxu0 0
          %2244 = vmatpush2.bf16.msra.mxu0 0
          %2245 = vmatprep.subr.bf16.mxu0 0
          %2246 = vmatpush2.bf16.msra.mxu0 0
          %2247 = vmatprep.subr.bf16.mxu0 0
          %2248 = vmatpush2.bf16.msra.mxu0 0
          %2249 = vmatprep.subr.bf16.mxu0 0
          %2250 = vmatpush2.bf16.msra.mxu0 0
          %2251 = vmatprep.mubr.bf16.mxu0 0
          %2252 = vmatmul.mubr.bf16.gmra.mxu0 %v2132
          %v2253 = vpop.f32.mrf.mxu0
          %v2254 = vadd.f32 %v2169, %v2253
          %v2255 = vpop.f32.mrf.mxu0
          %v2256 = vpop.f32.mrf.mxu0
          %v2257 = vadd.f32 %v2169, %v2256
          %v2258 = vpop.f32.mrf.mxu0
          %2259 = vmatprep.mubr.bf16.mxu0 0
          %2260 = vmatmul.mubr.bf16.gmra.mxu0 %v2133
          %v2261 = vpop.f32.mrf.mxu0
          %v2262 = vadd.f32 %v2169, %v2261
          %v2263 = vpop.f32.mrf.mxu0
          %v2264 = vpop.f32.mrf.mxu0
          %v2265 = vadd.f32 %v2169, %v2264
          %v2266 = vpop.f32.mrf.mxu0
          %2267 = vmatprep.mubr.bf16.mxu0 0
          %2268 = vmatmul.mubr.bf16.gmra.mxu0 %v2134
          %v2269 = vpop.f32.mrf.mxu0
          %v2270 = vadd.f32 %v2169, %v2269
          %v2271 = vpop.f32.mrf.mxu0
          %v2272 = vpop.f32.mrf.mxu0
          %v2273 = vadd.f32 %v2169, %v2272
          %v2274 = vpop.f32.mrf.mxu0
          %2275 = vmatprep.mubr.bf16.mxu0 0
          %2276 = vmatmul.mubr.bf16.gmra.mxu0 %v2135
          %v2277 = vpop.f32.mrf.mxu0
          %v2278 = vadd.f32 %v2169, %v2277
          %v2279 = vpop.f32.mrf.mxu0
          %v2280 = vpop.f32.mrf.mxu0
          %v2281 = vadd.f32 %v2169, %v2280
          %v2282 = vpop.f32.mrf.mxu0
          %2283 = vmatprep.mubr.bf16.mxu0 0
          %2284 = vmatmul.mubr.bf16.gmra.mxu0 %v2136
          %v2285 = vpop.f32.mrf.mxu0
          %v2286 = vadd.f32 %v2169, %v2285
          %v2287 = vpop.f32.mrf.mxu0
          %v2288 = vpop.f32.mrf.mxu0
          %v2289 = vadd.f32 %v2169, %v2288
          %v2290 = vpop.f32.mrf.mxu0
          %2291 = vmatprep.mubr.bf16.mxu0 0
          %2292 = vmatmul.mubr.bf16.gmra.mxu0 %v2137
          %v2293 = vpop.f32.mrf.mxu0
          %v2294 = vadd.f32 %v2169, %v2293
          %v2295 = vpop.f32.mrf.mxu0
          %v2296 = vpop.f32.mrf.mxu0
          %v2297 = vadd.f32 %v2169, %v2296
          %v2298 = vpop.f32.mrf.mxu0
          %2299 = vmatprep.mubr.bf16.mxu0 0
          %2300 = vmatmul.mubr.bf16.gmra.mxu0 %v2138
          %v2301 = vpop.f32.mrf.mxu0
          %v2302 = vadd.f32 %v2169, %v2301
          %v2303 = vpop.f32.mrf.mxu0
          %v2304 = vpop.f32.mrf.mxu0
          %v2305 = vadd.f32 %v2169, %v2304
          %v2306 = vpop.f32.mrf.mxu0
          %2307 = vmatprep.mubr.bf16.mxu0 0
          %2308 = vmatmul.mubr.bf16.gmra.mxu0 %v2139
          %v2309 = vpop.f32.mrf.mxu0
          %v2310 = vadd.f32 %v2169, %v2309
          %v2311 = vpop.f32.mrf.mxu0
          %v2312 = vpop.f32.mrf.mxu0
          %v2313 = vadd.f32 %v2169, %v2312
          %v2314 = vpop.f32.mrf.mxu0
          %2315 = vmatprep.mubr.bf16.mxu0 0
          %2316 = vmatmul.mubr.bf16.gmra.mxu0 %v2140
          %v2317 = vpop.f32.mrf.mxu0
          %v2318 = vadd.f32 %v2169, %v2317
          %v2319 = vpop.f32.mrf.mxu0
          %v2320 = vpop.f32.mrf.mxu0
          %v2321 = vadd.f32 %v2169, %v2320
          %v2322 = vpop.f32.mrf.mxu0
          %2323 = vmatprep.mubr.bf16.mxu0 0
          %2324 = vmatmul.mubr.bf16.gmra.mxu0 %v2141
          %v2325 = vpop.f32.mrf.mxu0
          %v2326 = vadd.f32 %v2169, %v2325
          %v2327 = vpop.f32.mrf.mxu0
          %v2328 = vpop.f32.mrf.mxu0
          %v2329 = vadd.f32 %v2169, %v2328
          %v2330 = vpop.f32.mrf.mxu0
          %2331 = vmatprep.mubr.bf16.mxu0 0
          %2332 = vmatmul.mubr.bf16.gmra.mxu0 %v2142
          %v2333 = vpop.f32.mrf.mxu0
          %v2334 = vadd.f32 %v2169, %v2333
          %v2335 = vpop.f32.mrf.mxu0
          %v2336 = vpop.f32.mrf.mxu0
          %v2337 = vadd.f32 %v2169, %v2336
          %v2338 = vpop.f32.mrf.mxu0
          %2339 = vmatprep.mubr.bf16.mxu0 0
          %2340 = vmatmul.mubr.bf16.gmra.mxu0 %v2143
          %v2341 = vpop.f32.mrf.mxu0
          %v2342 = vadd.f32 %v2169, %v2341
          %v2343 = vpop.f32.mrf.mxu0
          %v2344 = vpop.f32.mrf.mxu0
          %v2345 = vadd.f32 %v2169, %v2344
          %v2346 = vpop.f32.mrf.mxu0
          %2347 = vmatprep.mubr.bf16.mxu0 0
          %2348 = vmatmul.mubr.bf16.gmra.mxu0 %v2144
          %v2349 = vpop.f32.mrf.mxu0
          %v2350 = vadd.f32 %v2169, %v2349
          %v2351 = vpop.f32.mrf.mxu0
          %v2352 = vpop.f32.mrf.mxu0
          %v2353 = vadd.f32 %v2169, %v2352
          %v2354 = vpop.f32.mrf.mxu0
          %2355 = vmatprep.mubr.bf16.mxu0 0
          %2356 = vmatmul.mubr.bf16.gmra.mxu0 %v2145
          %v2357 = vpop.f32.mrf.mxu0
          %v2358 = vadd.f32 %v2169, %v2357
          %v2359 = vpop.f32.mrf.mxu0
          %v2360 = vpop.f32.mrf.mxu0
          %v2361 = vadd.f32 %v2169, %v2360
          %v2362 = vpop.f32.mrf.mxu0
          %2363 = vmatprep.mubr.bf16.mxu0 0
          %2364 = vmatmul.mubr.bf16.gmra.mxu0 %v2146
          %v2365 = vpop.f32.mrf.mxu0
          %v2366 = vadd.f32 %v2169, %v2365
          %v2367 = vpop.f32.mrf.mxu0
          %v2368 = vpop.f32.mrf.mxu0
          %v2369 = vadd.f32 %v2169, %v2368
          %v2370 = vpop.f32.mrf.mxu0
          %2371 = vmatprep.mubr.bf16.mxu0 0
          %2372 = vmatmul.mubr.bf16.gmra.mxu0 %v2147
          %v2373 = vpop.f32.mrf.mxu0
          %v2374 = vadd.f32 %v2169, %v2373
          %v2375 = vpop.f32.mrf.mxu0
          %v2376 = vpop.f32.mrf.mxu0
          %v2377 = vadd.f32 %v2169, %v2376
          %v2378 = vpop.f32.mrf.mxu0
          %2379 = vdwg.mxu0
          %v2380 = vadd.f32 %v2254, %v1972
          %v2381 = vadd.f32 %v2257, %v1973
          %v2382 = vadd.f32 %v2262, %v1974
          %v2383 = vadd.f32 %v2265, %v1975
          %v2384 = vadd.f32 %v2270, %v1976
          %v2385 = vadd.f32 %v2273, %v1977
          %v2386 = vadd.f32 %v2278, %v1978
          %v2387 = vadd.f32 %v2281, %v1979
          %v2388 = vadd.f32 %v2286, %v1980
          %v2389 = vadd.f32 %v2289, %v1981
          %v2390 = vadd.f32 %v2294, %v1982
          %v2391 = vadd.f32 %v2297, %v1983
          %v2392 = vadd.f32 %v2302, %v1984
          %v2393 = vadd.f32 %v2305, %v1985
          %v2394 = vadd.f32 %v2310, %v1986
          %v2395 = vadd.f32 %v2313, %v1987
          %v2396 = vadd.f32 %v2318, %v1988
          %v2397 = vadd.f32 %v2321, %v1989
          %v2398 = vadd.f32 %v2326, %v1990
          %v2399 = vadd.f32 %v2329, %v1991
          %v2400 = vadd.f32 %v2334, %v1992
          %v2401 = vadd.f32 %v2337, %v1993
          %v2402 = vadd.f32 %v2342, %v1994
          %v2403 = vadd.f32 %v2345, %v1995
          %v2404 = vadd.f32 %v2350, %v1996
          %v2405 = vadd.f32 %v2353, %v1997
          %v2406 = vadd.f32 %v2358, %v1998
          %v2407 = vadd.f32 %v2361, %v1999
          %v2408 = vadd.f32 %v2366, %v2000
          %v2409 = vadd.f32 %v2369, %v2001
          %v2410 = vadd.f32 %v2374, %v2002
          %v2411 = vadd.f32 %v2377, %v2003
          %vm2412 = vcmp.ge.f32.partialorder %v2380, 0.0
          %vm2413 = vcmp.ge.f32.partialorder %v2381, 0.0
          %vm2414 = vcmp.ge.f32.partialorder %v2382, 0.0
          %vm2415 = vcmp.ge.f32.partialorder %v2383, 0.0
          %vm2416 = vcmp.ge.f32.partialorder %v2384, 0.0
          %vm2417 = vcmp.ge.f32.partialorder %v2385, 0.0
          %vm2418 = vcmp.ge.f32.partialorder %v2386, 0.0
          %vm2419 = vcmp.ge.f32.partialorder %v2387, 0.0
          %vm2420 = vcmp.ge.f32.partialorder %v2388, 0.0
          %vm2421 = vcmp.ge.f32.partialorder %v2389, 0.0
          %vm2422 = vcmp.ge.f32.partialorder %v2390, 0.0
          %vm2423 = vcmp.ge.f32.partialorder %v2391, 0.0
          %vm2424 = vcmp.ge.f32.partialorder %v2392, 0.0
          %vm2425 = vcmp.ge.f32.partialorder %v2393, 0.0
          %vm2426 = vcmp.ge.f32.partialorder %v2394, 0.0
          %vm2427 = vcmp.ge.f32.partialorder %v2395, 0.0
          %vm2428 = vcmp.ge.f32.partialorder %v2396, 0.0
          %vm2429 = vcmp.ge.f32.partialorder %v2397, 0.0
          %vm2430 = vcmp.ge.f32.partialorder %v2398, 0.0
          %vm2431 = vcmp.ge.f32.partialorder %v2399, 0.0
          %vm2432 = vcmp.ge.f32.partialorder %v2400, 0.0
          %vm2433 = vcmp.ge.f32.partialorder %v2401, 0.0
          %vm2434 = vcmp.ge.f32.partialorder %v2402, 0.0
          %vm2435 = vcmp.ge.f32.partialorder %v2403, 0.0
          %vm2436 = vcmp.ge.f32.partialorder %v2404, 0.0
          %vm2437 = vcmp.ge.f32.partialorder %v2405, 0.0
          %vm2438 = vcmp.ge.f32.partialorder %v2406, 0.0
          %vm2439 = vcmp.ge.f32.partialorder %v2407, 0.0
          %vm2440 = vcmp.ge.f32.partialorder %v2408, 0.0
          %vm2441 = vcmp.ge.f32.partialorder %v2409, 0.0
          %vm2442 = vcmp.ge.f32.partialorder %v2410, 0.0
          %vm2443 = vcmp.ge.f32.partialorder %v2411, 0.0
          %v2444 = vmul.f32 %v2380, 0.01
          %v2445 = vmul.f32 %v2381, 0.01
          %v2446 = vmul.f32 %v2382, 0.01
          %v2447 = vmul.f32 %v2383, 0.01
          %v2448 = vmul.f32 %v2384, 0.01
          %v2449 = vmul.f32 %v2385, 0.01
          %v2450 = vmul.f32 %v2386, 0.01
          %v2451 = vmul.f32 %v2387, 0.01
          %v2452 = vmul.f32 %v2388, 0.01
          %v2453 = vmul.f32 %v2389, 0.01
          %v2454 = vmul.f32 %v2390, 0.01
          %v2455 = vmul.f32 %v2391, 0.01
          %v2456 = vmul.f32 %v2392, 0.01
          %v2457 = vmul.f32 %v2393, 0.01
          %v2458 = vmul.f32 %v2394, 0.01
          %v2459 = vmul.f32 %v2395, 0.01
          %v2460 = vmul.f32 %v2396, 0.01
          %v2461 = vmul.f32 %v2397, 0.01
          %v2462 = vmul.f32 %v2398, 0.01
          %v2463 = vmul.f32 %v2399, 0.01
          %v2464 = vmul.f32 %v2400, 0.01
          %v2465 = vmul.f32 %v2401, 0.01
          %v2466 = vmul.f32 %v2402, 0.01
          %v2467 = vmul.f32 %v2403, 0.01
          %v2468 = vmul.f32 %v2404, 0.01
          %v2469 = vmul.f32 %v2405, 0.01
          %v2470 = vmul.f32 %v2406, 0.01
          %v2471 = vmul.f32 %v2407, 0.01
          %v2472 = vmul.f32 %v2408, 0.01
          %v2473 = vmul.f32 %v2409, 0.01
          %v2474 = vmul.f32 %v2410, 0.01
          %v2475 = vmul.f32 %v2411, 0.01
          %v2476 = vsel %vm2412, %v2380, %v2444
          %v2477 = vsel %vm2413, %v2381, %v2445
          %v2478 = vsel %vm2414, %v2382, %v2446
          %v2479 = vsel %vm2415, %v2383, %v2447
          %v2480 = vsel %vm2416, %v2384, %v2448
          %v2481 = vsel %vm2417, %v2385, %v2449
          %v2482 = vsel %vm2418, %v2386, %v2450
          %v2483 = vsel %vm2419, %v2387, %v2451
          %v2484 = vsel %vm2420, %v2388, %v2452
          %v2485 = vsel %vm2421, %v2389, %v2453
          %v2486 = vsel %vm2422, %v2390, %v2454
          %v2487 = vsel %vm2423, %v2391, %v2455
          %v2488 = vsel %vm2424, %v2392, %v2456
          %v2489 = vsel %vm2425, %v2393, %v2457
          %v2490 = vsel %vm2426, %v2394, %v2458
          %v2491 = vsel %vm2427, %v2395, %v2459
          %v2492 = vsel %vm2428, %v2396, %v2460
          %v2493 = vsel %vm2429, %v2397, %v2461
          %v2494 = vsel %vm2430, %v2398, %v2462
          %v2495 = vsel %vm2431, %v2399, %v2463
          %v2496 = vsel %vm2432, %v2400, %v2464
          %v2497 = vsel %vm2433, %v2401, %v2465
          %v2498 = vsel %vm2434, %v2402, %v2466
          %v2499 = vsel %vm2435, %v2403, %v2467
          %v2500 = vsel %vm2436, %v2404, %v2468
          %v2501 = vsel %vm2437, %v2405, %v2469
          %v2502 = vsel %vm2438, %v2406, %v2470
          %v2503 = vsel %vm2439, %v2407, %v2471
          %v2504 = vsel %vm2440, %v2408, %v2472
          %v2505 = vsel %vm2441, %v2409, %v2473
          %v2506 = vsel %vm2442, %v2410, %v2474
          %v2507 = vsel %vm2443, %v2411, %v2475
          %v2508 = vpack.c.bf16 %v2477, %v2476
          %v2509 = vpack.c.bf16 %v2479, %v2478
          %v2510 = vpack.c.bf16 %v2481, %v2480
          %v2511 = vpack.c.bf16 %v2483, %v2482
          %v2512 = vpack.c.bf16 %v2485, %v2484
          %v2513 = vpack.c.bf16 %v2487, %v2486
          %v2514 = vpack.c.bf16 %v2489, %v2488
          %v2515 = vpack.c.bf16 %v2491, %v2490
          %v2516 = vpack.c.bf16 %v2493, %v2492
          %v2517 = vpack.c.bf16 %v2495, %v2494
          %v2518 = vpack.c.bf16 %v2497, %v2496
          %v2519 = vpack.c.bf16 %v2499, %v2498
          %v2520 = vpack.c.bf16 %v2501, %v2500
          %v2521 = vpack.c.bf16 %v2503, %v2502
          %v2522 = vpack.c.bf16 %v2505, %v2504
          %v2523 = vpack.c.bf16 %v2507, %v2506
          %v2540 = vunpack.c.l.b16 %v2508
          %v2541 = vunpack.c.h.b16 %v2508
          %v2542 = vunpack.c.l.b16 %v2509
          %v2543 = vunpack.c.h.b16 %v2509
          %v2544 = vunpack.c.l.b16 %v2510
          %v2545 = vunpack.c.h.b16 %v2510
          %v2546 = vunpack.c.l.b16 %v2511
          %v2547 = vunpack.c.h.b16 %v2511
          %v2548 = vunpack.c.l.b16 %v2512
          %v2549 = vunpack.c.h.b16 %v2512
          %v2550 = vunpack.c.l.b16 %v2513
          %v2551 = vunpack.c.h.b16 %v2513
          %v2552 = vunpack.c.l.b16 %v2514
          %v2553 = vunpack.c.h.b16 %v2514
          %v2554 = vunpack.c.l.b16 %v2515
          %v2555 = vunpack.c.h.b16 %v2515
          %v2556 = vunpack.c.l.b16 %v2516
          %v2557 = vunpack.c.h.b16 %v2516
          %v2558 = vunpack.c.l.b16 %v2517
          %v2559 = vunpack.c.h.b16 %v2517
          %v2560 = vunpack.c.l.b16 %v2518
          %v2561 = vunpack.c.h.b16 %v2518
          %v2562 = vunpack.c.l.b16 %v2519
          %v2563 = vunpack.c.h.b16 %v2519
          %v2564 = vunpack.c.l.b16 %v2520
          %v2565 = vunpack.c.h.b16 %v2520
          %v2566 = vunpack.c.l.b16 %v2521
          %v2567 = vunpack.c.h.b16 %v2521
          %v2568 = vunpack.c.l.b16 %v2522
          %v2569 = vunpack.c.h.b16 %v2522
          %v2570 = vunpack.c.l.b16 %v2523
          %v2571 = vunpack.c.h.b16 %v2523
          %v2572 = vpack.c.b16 %v2540, %v2540
          %v2573 = vpack.c.b16 %v2541, %v2541
          %v2574 = vpack.c.b16 %v2542, %v2542
          %v2575 = vpack.c.b16 %v2543, %v2543
          %v2576 = vpack.c.b16 %v2544, %v2544
          %v2577 = vpack.c.b16 %v2545, %v2545
          %v2578 = vpack.c.b16 %v2546, %v2546
          %v2579 = vpack.c.b16 %v2547, %v2547
          %v2580 = vpack.c.b16 %v2548, %v2548
          %v2581 = vpack.c.b16 %v2549, %v2549
          %v2582 = vpack.c.b16 %v2550, %v2550
          %v2583 = vpack.c.b16 %v2551, %v2551
          %v2584 = vpack.c.b16 %v2552, %v2552
          %v2585 = vpack.c.b16 %v2553, %v2553
          %v2586 = vpack.c.b16 %v2554, %v2554
          %v2587 = vpack.c.b16 %v2555, %v2555
          %v2588 = vpack.c.b16 %v2556, %v2556
          %v2589 = vpack.c.b16 %v2557, %v2557
          %v2590 = vpack.c.b16 %v2558, %v2558
          %v2591 = vpack.c.b16 %v2559, %v2559
          %v2592 = vpack.c.b16 %v2560, %v2560
          %v2593 = vpack.c.b16 %v2561, %v2561
          %v2594 = vpack.c.b16 %v2562, %v2562
          %v2595 = vpack.c.b16 %v2563, %v2563
          %v2596 = vpack.c.b16 %v2564, %v2564
          %v2597 = vpack.c.b16 %v2565, %v2565
          %v2598 = vpack.c.b16 %v2566, %v2566
          %v2599 = vpack.c.b16 %v2567, %v2567
          %v2600 = vpack.c.b16 %v2568, %v2568
          %v2601 = vpack.c.b16 %v2569, %v2569
          %v2602 = vpack.c.b16 %v2570, %v2570
          %v2603 = vpack.c.b16 %v2571, %v2571
          %2636 = vst [vmem:[%s623] sm:$0xf] %v2572
          %2637 = vst [vmem:[%s623 + $0x4] sm:$0xf] %v2573
          %2638 = vst [vmem:[%s623 + $0x8] sm:$0xf] %v2574
          %2639 = vst [vmem:[%s623 + $0xc] sm:$0xf] %v2575
          %2640 = vst [vmem:[%s623 + $0x10] sm:$0xf] %v2576
          %2641 = vst [vmem:[%s623 + $0x14] sm:$0xf] %v2577
          %2642 = vst [vmem:[%s623 + $0x18] sm:$0xf] %v2578
          %2643 = vst [vmem:[%s623 + $0x1c] sm:$0xf] %v2579
          %2644 = vst [vmem:[%s623 + $0x20] sm:$0xf] %v2580
          %2645 = vst [vmem:[%s623 + $0x24] sm:$0xf] %v2581
          %2646 = vst [vmem:[%s623 + $0x28] sm:$0xf] %v2582
          %2647 = vst [vmem:[%s623 + $0x2c] sm:$0xf] %v2583
          %2648 = vst [vmem:[%s623 + $0x30] sm:$0xf] %v2584
          %2649 = vst [vmem:[%s623 + $0x34] sm:$0xf] %v2585
          %2650 = vst [vmem:[%s623 + $0x38] sm:$0xf] %v2586
          %2651 = vst [vmem:[%s623 + $0x3c] sm:$0xf] %v2587
          %2652 = vst [vmem:[%s623 + $0x40] sm:$0xf] %v2588
          %2653 = vst [vmem:[%s623 + $0x44] sm:$0xf] %v2589
          %2654 = vst [vmem:[%s623 + $0x48] sm:$0xf] %v2590
          %2655 = vst [vmem:[%s623 + $0x4c] sm:$0xf] %v2591
          %2656 = vst [vmem:[%s623 + $0x50] sm:$0xf] %v2592
          %2657 = vst [vmem:[%s623 + $0x54] sm:$0xf] %v2593
          %2658 = vst [vmem:[%s623 + $0x58] sm:$0xf] %v2594
          %2659 = vst [vmem:[%s623 + $0x5c] sm:$0xf] %v2595
          %2660 = vst [vmem:[%s623 + $0x60] sm:$0xf] %v2596
          %2661 = vst [vmem:[%s623 + $0x64] sm:$0xf] %v2597
          %2662 = vst [vmem:[%s623 + $0x68] sm:$0xf] %v2598
          %2663 = vst [vmem:[%s623 + $0x6c] sm:$0xf] %v2599
          %2664 = vst [vmem:[%s623 + $0x70] sm:$0xf] %v2600
          %2665 = vst [vmem:[%s623 + $0x74] sm:$0xf] %v2601
          %2666 = vst [vmem:[%s623 + $0x78] sm:$0xf] %v2602
          %2667 = vst [vmem:[%s623 + $0x7c] sm:$0xf] %v2603
        $region114: #{fwd.5} parent=89 // pred_fallthru
          _
        %s2668 = smul.u32 32, %s26
        %p2669 = scmp.lt.s32.totalorder %s2668, 63
        %s2670 = scalar_select %p2669, %s2668, 63
        %s2671 = smul.addr %s2670, 4
        %s2672 = scalar_lea.vmem %s9, %s2671
        // Predicated region
        $region115: #{fwd.5} parent=89 // pred_check
          %p2673 = pneg %p263
        $region116: #{fwd.5} parent=89 // pred_check_branch
          %2675 = sbr.rel (%p2673) target = $region118
        $region117: #{fwd.5} parent=89 // pred_region
          %s2676 = smul.u32 32, %s26
        $region118: #{fwd.5} parent=89 // pred_fallthru
          _
      $region90: #{fwd.5} parent=5 // pred_fallthru
        _
      %p2677 = scmp.le.s32.totalorder 2, %s17
      // Predicated region
      $region119: #{fwd.5} parent=5 // pred_check
        %p2678 = pneg %p2677
      $region120: #{fwd.5} parent=5 // pred_check_branch
        %2680 = sbr.rel (%p2678) target = $region122
      $region121: #{fwd.5} parent=5 // pred_region
        %s2681 = ssub.s32 %s17, 2
        // Predicated region
        $region123: #{fwd.5} parent=121 // pred_check
          %p2682 = pneg %p269
        $region124: #{fwd.5} parent=121 // pred_check_branch
          %2684 = sbr.rel (%p2682) target = $region126
        $region125: #{fwd.5} parent=121 // pred_region
          %s2685 = smul.u32 32, %s28
          %p2686 = scmp.lt.s32.totalorder %s2685, 63
          %s2687 = scalar_select %p2686, %s2685, 63
          %s2688 = smul.addr %s2687, 4
          %s2689 = scalar_lea.vmem %s9, %s2688
        $region126: #{fwd.5} parent=121 // pred_fallthru
          _
      $region122: #{fwd.5} parent=5 // pred_fallthru
        _
    $region6: #{fwd.5} parent=1 // loop_footer
      %s21 = sadd.s32 1, %s17
    $region7: #{fwd.5} parent=1 // loop_footer_branch
      %16 = sbr.rel target = $region3
    $region8: #{fwd.5} parent=1 // loop_exit
      _
    %2690 = vsyncpa [#allocation5], 1
    %s2691 = scalar_lea.sflag [#allocation5], 1
    %2692 = vsyncpa %s2691, 1
    %2693 = vsyncpa [#allocation7], 1

// kernel: fwd.6
$region0: #{fwd.6}
  #allocation0 [shape = 'u32[]', space=smem, size = 0x4, offset = 0x4, fixed_abs, tag = 'smem constant byte address 0x4 - core index']
  #allocation1 [shape = 'u32[144,128]{1,0:T(1,128)}', space=vmem, size = 0x12000, scoped, tag = 'internal scratch']
  #allocation2 [shape = 'f32[256,128]{1,0:T(8,128)}', space=vmem, size = 0x20000, scoped, tag = 'scratch operand']
  %s0 = inlined_call_operand.vmem [shape: bf16[512,512], index: 0, kind: input, shape index: {}]
  %s1 = inlined_call_operand.vmem [shape: bf16[512,128], index: 1, kind: input, shape index: {}, may-alias: {1,2}]
  %s2 = inlined_call_operand.vmem [shape: bf16[512,128], index: 2, kind: input, shape index: {}, may-alias: {1,2}]
  %s3 = inlined_call_operand.vmem [shape: bf16[128,128], index: 3, kind: input, shape index: {}]
  %s4 = inlined_call_operand.vmem [shape: bf16[128,128], index: 4, kind: input, shape index: {}]
  %s5 = inlined_call_operand.vmem [shape: f32[1,128], index: 5, kind: input, shape index: {}]
  %s6 = inlined_call_operand.vmem [shape: bf16[128,128], index: 6, kind: input, shape index: {}]
  %s7 = inlined_call_operand.vmem [shape: f32[1,128], index: 7, kind: input, shape index: {}]
  %s8 = inlined_call_operand.vmem [shape: f32[512,128], index: 8, kind: input, shape index: {}]
  %s9 = inlined_call_operand.vmem [shape: bf16[512,128], index: 9, kind: output, shape index: {}]
  %s10 = sld [smem:[#allocation0]]
  $region115: #{fwd.6} parent=0
    _
  %s12 = ssub.s32 1, %s10
  %s13 = scalar_select 0, %s12, %s10
  $region1: #{fwd.6} parent=0
    #allocation3 [shape = 'u8[262144]{0}', space=vmem, size = 0x40000, scoped, tag = 'input window, operand 0']
    loop: start=0, step=1, limit=6
    $region2: #{fwd.6} parent=1 // loop_pre_header
      _
    $region3: #{fwd.6} parent=1 // loop_header
      %s15 = sphi 0, %s19
      %p16 = scmp.ge.s32.totalorder %s15, 6
      %s22 = sphi 0, %s34
      %s23 = sphi 0, %s30
      %s24 = sphi 0, %s22
      %s25 = sphi 0, %s23
      %s26 = sphi 0, %s24
      %s27 = sphi 0, %s25
      %s39 = sphi 0, %s41
      %s42 = sphi 0, %s39
      %s43 = sphi 0, %s42
      %s59 = sphi 0, %s43
      %s65 = sphi 0, %s67
      %s68 = sphi 0, %s65
      %s69 = sphi 0, %s68
      %s85 = sphi 0, %s69
      %s91 = sphi 0, %s93
      %s94 = sphi 0, %s91
      %s95 = sphi 0, %s94
      %s111 = sphi 0, %s95
      %s115 = sphi 0, %s115
      %s117 = sphi 0, %s115
      %s118 = sphi 0, %s117
      %s132 = sphi 0, %s118
      %s136 = sphi 0, %s136
      %s138 = sphi 0, %s136
      %s139 = sphi 0, %s138
      %s153 = sphi 0, %s139
      %s157 = sphi 0, %s157
      %s159 = sphi 0, %s157
      %s160 = sphi 0, %s159
      %s174 = sphi 0, %s160
      %s178 = sphi 0, %s178
      %s180 = sphi 0, %s178
      %s181 = sphi 0, %s180
      %s195 = sphi 0, %s181
      %s199 = sphi 0, %s199
      %s201 = sphi 0, %s199
      %s202 = sphi 0, %s201
      %s216 = sphi 0, %s202
      %s222 = sphi 0, %s224
      %s225 = sphi 0, %s222
      %s226 = sphi 0, %s225
      %s242 = sphi 0, %s226
      %s248 = sphi 0, %s250
      %s251 = sphi 0, %s248
      %s252 = sphi 0, %s251
      %s268 = sphi 0, %s252
    $region4: #{fwd.6} parent=1 // loop_header_branch
      %18 = sbr.rel (%p16) target = $region8
    $region5: #{fwd.6} parent=1 // loop_body
      %s20 = ssub.s32 %s15, 1
      %s21 = ssub.s32 %s15, 2
      %s28 = sadd.s32 1, %s23
      %p29 = scmp.ge.s32.totalorder %s28, 2
      %s30 = scalar_select %p29, 0, %s28
      %s31 = sadd.s32 1, %s22
      %s32 = scalar_select %p29, %s31, %s22
      %p33 = scmp.ge.s32.totalorder %s32, 2
      %s34 = scalar_select %p33, 0, %s32
      %s35 = ssub.s32 %s22, %s34
      %s36 = ssub.s32 %s23, %s30
      %s37 = sor.u32 %s35, %s36
      %p38 = scmp.eq.s32.totalorder %s37, 0
      %s40 = sadd.s32 %s39, 1
      %s41 = scalar_select %p38, %s39, %s40
      %p44 = pneg %p38
      %p45 = scmp.eq.s32.totalorder %s15, 3
      %p46 = por %p44, %p45
      %p47 = scmp.ne.s32.totalorder %s39, %s42
      %p48 = scmp.eq.s32.totalorder %s15, 0
      %p49 = por %p47, %p48
      %p50 = scmp.ne.s32.totalorder %s39, %s42
      %p51 = scmp.eq.s32.totalorder %s20, 3
      %p52 = por %p50, %p51
      %p53 = scmp.ne.s32.totalorder %s42, %s43
      %p54 = scmp.eq.s32.totalorder %s20, 0
      %p55 = por %p53, %p54
      %p56 = scmp.ne.s32.totalorder %s42, %s43
      %p57 = scmp.eq.s32.totalorder %s21, 3
      %p58 = por %p56, %p57
      %p60 = scmp.ne.s32.totalorder %s43, %s59
      %p61 = scmp.eq.s32.totalorder %s21, 0
      %p62 = por %p60, %p61
      %s63 = ssub.s32 %s23, %s30
      %p64 = scmp.eq.s32.totalorder %s63, 0
      %s66 = sadd.s32 %s65, 1
      %s67 = scalar_select %p64, %s65, %s66
      %p70 = pneg %p64
      %p71 = scmp.eq.s32.totalorder %s15, 3
      %p72 = por %p70, %p71
      %p73 = scmp.ne.s32.totalorder %s65, %s68
      %p74 = scmp.eq.s32.totalorder %s15, 0
      %p75 = por %p73, %p74
      %p76 = scmp.ne.s32.totalorder %s65, %s68
      %p77 = scmp.eq.s32.totalorder %s20, 3
      %p78 = por %p76, %p77
      %p79 = scmp.ne.s32.totalorder %s68, %s69
      %p80 = scmp.eq.s32.totalorder %s20, 0
      %p81 = por %p79, %p80
      %p82 = scmp.ne.s32.totalorder %s68, %s69
      %p83 = scmp.eq.s32.totalorder %s21, 3
      %p84 = por %p82, %p83
      %p86 = scmp.ne.s32.totalorder %s69, %s85
      %p87 = scmp.eq.s32.totalorder %s21, 0
      %p88 = por %p86, %p87
      %s89 = ssub.s32 %s22, %s34
      %p90 = scmp.eq.s32.totalorder %s89, 0
      %s92 = sadd.s32 %s91, 1
      %s93 = scalar_select %p90, %s91, %s92
      %p96 = pneg %p90
      %p97 = scmp.eq.s32.totalorder %s15, 3
      %p98 = por %p96, %p97
      %p99 = scmp.ne.s32.totalorder %s91, %s94
      %p100 = scmp.eq.s32.totalorder %s15, 0
      %p101 = por %p99, %p100
      %p102 = scmp.ne.s32.totalorder %s91, %s94
      %p103 = scmp.eq.s32.totalorder %s20, 3
      %p104 = por %p102, %p103
      %p105 = scmp.ne.s32.totalorder %s94, %s95
      %p106 = scmp.eq.s32.totalorder %s20, 0
      %p107 = por %p105, %p106
      %p108 = scmp.ne.s32.totalorder %s94, %s95
      %p109 = scmp.eq.s32.totalorder %s21, 3
      %p110 = por %p108, %p109
      %p112 = scmp.ne.s32.totalorder %s95, %s111
      %p113 = scmp.eq.s32.totalorder %s21, 0
      %p114 = por %p112, %p113
      %s116 = sadd.s32 %s115, 1
      %p119 = scmp.eq.s32.totalorder %s15, 3
      %p120 = scmp.ne.s32.totalorder %s115, %s117
      %p121 = scmp.eq.s32.totalorder %s15, 0
      %p122 = por %p120, %p121
      %p123 = scmp.ne.s32.totalorder %s115, %s117
      %p124 = scmp.eq.s32.totalorder %s20, 3
      %p125 = por %p123, %p124
      %p126 = scmp.ne.s32.totalorder %s117, %s118
      %p127 = scmp.eq.s32.totalorder %s20, 0
      %p128 = por %p126, %p127
      %p129 = scmp.ne.s32.totalorder %s117, %s118
      %p130 = scmp.eq.s32.totalorder %s21, 3
      %p131 = por %p129, %p130
      %p133 = scmp.ne.s32.totalorder %s118, %s132
      %p134 = scmp.eq.s32.totalorder %s21, 0
      %p135 = por %p133, %p134
      %s137 = sadd.s32 %s136, 1
      %p140 = scmp.eq.s32.totalorder %s15, 3
      %p141 = scmp.ne.s32.totalorder %s136, %s138
      %p142 = scmp.eq.s32.totalorder %s15, 0
      %p143 = por %p141, %p142
      %p144 = scmp.ne.s32.totalorder %s136, %s138
      %p145 = scmp.eq.s32.totalorder %s20, 3
      %p146 = por %p144, %p145
      %p147 = scmp.ne.s32.totalorder %s138, %s139
      %p148 = scmp.eq.s32.totalorder %s20, 0
      %p149 = por %p147, %p148
      %p150 = scmp.ne.s32.totalorder %s138, %s139
      %p151 = scmp.eq.s32.totalorder %s21, 3
      %p152 = por %p150, %p151
      %p154 = scmp.ne.s32.totalorder %s139, %s153
      %p155 = scmp.eq.s32.totalorder %s21, 0
      %p156 = por %p154, %p155
      %s158 = sadd.s32 %s157, 1
      %p161 = scmp.eq.s32.totalorder %s15, 3
      %p162 = scmp.ne.s32.totalorder %s157, %s159
      %p163 = scmp.eq.s32.totalorder %s15, 0
      %p164 = por %p162, %p163
      %p165 = scmp.ne.s32.totalorder %s157, %s159
      %p166 = scmp.eq.s32.totalorder %s20, 3
      %p167 = por %p165, %p166
      %p168 = scmp.ne.s32.totalorder %s159, %s160
      %p169 = scmp.eq.s32.totalorder %s20, 0
      %p170 = por %p168, %p169
      %p171 = scmp.ne.s32.totalorder %s159, %s160
      %p172 = scmp.eq.s32.totalorder %s21, 3
      %p173 = por %p171, %p172
      %p175 = scmp.ne.s32.totalorder %s160, %s174
      %p176 = scmp.eq.s32.totalorder %s21, 0
      %p177 = por %p175, %p176
      %s179 = sadd.s32 %s178, 1
      %p182 = scmp.eq.s32.totalorder %s15, 3
      %p183 = scmp.ne.s32.totalorder %s178, %s180
      %p184 = scmp.eq.s32.totalorder %s15, 0
      %p185 = por %p183, %p184
      %p186 = scmp.ne.s32.totalorder %s178, %s180
      %p187 = scmp.eq.s32.totalorder %s20, 3
      %p188 = por %p186, %p187
      %p189 = scmp.ne.s32.totalorder %s180, %s181
      %p190 = scmp.eq.s32.totalorder %s20, 0
      %p191 = por %p189, %p190
      %p192 = scmp.ne.s32.totalorder %s180, %s181
      %p193 = scmp.eq.s32.totalorder %s21, 3
      %p194 = por %p192, %p193
      %p196 = scmp.ne.s32.totalorder %s181, %s195
      %p197 = scmp.eq.s32.totalorder %s21, 0
      %p198 = por %p196, %p197
      %s200 = sadd.s32 %s199, 1
      %p203 = scmp.eq.s32.totalorder %s15, 3
      %p204 = scmp.ne.s32.totalorder %s199, %s201
      %p205 = scmp.eq.s32.totalorder %s15, 0
      %p206 = por %p204, %p205
      %p207 = scmp.ne.s32.totalorder %s199, %s201
      %p208 = scmp.eq.s32.totalorder %s20, 3
      %p209 = por %p207, %p208
      %p210 = scmp.ne.s32.totalorder %s201, %s202
      %p211 = scmp.eq.s32.totalorder %s20, 0
      %p212 = por %p210, %p211
      %p213 = scmp.ne.s32.totalorder %s201, %s202
      %p214 = scmp.eq.s32.totalorder %s21, 3
      %p215 = por %p213, %p214
      %p217 = scmp.ne.s32.totalorder %s202, %s216
      %p218 = scmp.eq.s32.totalorder %s21, 0
      %p219 = por %p217, %p218
      %s220 = ssub.s32 %s22, %s34
      %p221 = scmp.eq.s32.totalorder %s220, 0
      %s223 = sadd.s32 %s222, 1
      %s224 = scalar_select %p221, %s222, %s223
      %p227 = pneg %p221
      %p228 = scmp.eq.s32.totalorder %s15, 3
      %p229 = por %p227, %p228
      %p230 = scmp.ne.s32.totalorder %s222, %s225
      %p231 = scmp.eq.s32.totalorder %s15, 0
      %p232 = por %p230, %p231
      %p233 = scmp.ne.s32.totalorder %s222, %s225
      %p234 = scmp.eq.s32.totalorder %s20, 3
      %p235 = por %p233, %p234
      %p236 = scmp.ne.s32.totalorder %s225, %s226
      %p237 = scmp.eq.s32.totalorder %s20, 0
      %p238 = por %p236, %p237
      %p239 = scmp.ne.s32.totalorder %s225, %s226
      %p240 = scmp.eq.s32.totalorder %s21, 3
      %p241 = por %p239, %p240
      %p243 = scmp.ne.s32.totalorder %s226, %s242
      %p244 = scmp.eq.s32.totalorder %s21, 0
      %p245 = por %p243, %p244
      %s246 = ssub.s32 %s22, %s34
      %p247 = scmp.eq.s32.totalorder %s246, 0
      %s249 = sadd.s32 %s248, 1
      %s250 = scalar_select %p247, %s248, %s249
      %p253 = pneg %p247
      %p254 = scmp.eq.s32.totalorder %s15, 3
      %p255 = por %p253, %p254
      %p256 = scmp.ne.s32.totalorder %s248, %s251
      %p257 = scmp.eq.s32.totalorder %s15, 0
      %p258 = por %p256, %p257
      %p259 = scmp.ne.s32.totalorder %s248, %s251
      %p260 = scmp.eq.s32.totalorder %s20, 3
      %p261 = por %p259, %p260
      %p262 = scmp.ne.s32.totalorder %s251, %s252
      %p263 = scmp.eq.s32.totalorder %s20, 0
      %p264 = por %p262, %p263
      %p265 = scmp.ne.s32.totalorder %s251, %s252
      %p266 = scmp.eq.s32.totalorder %s21, 3
      %p267 = por %p265, %p266
      %p269 = scmp.ne.s32.totalorder %s252, %s268
      %p270 = scmp.eq.s32.totalorder %s21, 0
      %p271 = por %p269, %p270
      %p272 = scmp.le.s32.totalorder 1, %s15
      %p273 = scmp.lt.s32.totalorder %s15, 5
      %p274 = pnand %p272, %p273
      %p275 = pneg %p274
      // Predicated region
      $region9: #{fwd.6} parent=5 // pred_check
        _
      $region10: #{fwd.6} parent=5 // pred_check_branch
        %277 = sbr.rel (%p274) target = $region12
      $region11: #{fwd.6} parent=5 // pred_region
        %s278 = ssub.s32 %s15, 1
        // Predicated region
        $region13: #{fwd.6} parent=11 // pred_check
          %p279 = pneg %p128
        $region14: #{fwd.6} parent=11 // pred_check_branch
          %281 = sbr.rel (%p279) target = $region16
        $region15: #{fwd.6} parent=11 // pred_region
          _
        $region16: #{fwd.6} parent=11 // pred_fallthru
          _
        // Predicated region
        $region17: #{fwd.6} parent=11 // pred_check
          %p282 = pneg %p149
        $region18: #{fwd.6} parent=11 // pred_check_branch
          %284 = sbr.rel (%p282) target = $region20
        $region19: #{fwd.6} parent=11 // pred_region
          _
        $region20: #{fwd.6} parent=11 // pred_fallthru
          _
        // Predicated region
        $region21: #{fwd.6} parent=11 // pred_check
          %p285 = pneg %p170
        $region22: #{fwd.6} parent=11 // pred_check_branch
          %287 = sbr.rel (%p285) target = $region24
        $region23: #{fwd.6} parent=11 // pred_region
          _
        $region24: #{fwd.6} parent=11 // pred_fallthru
          _
        // Predicated region
        $region25: #{fwd.6} parent=11 // pred_check
          %p288 = pneg %p191
        $region26: #{fwd.6} parent=11 // pred_check_branch
          %290 = sbr.rel (%p288) target = $region28
        $region27: #{fwd.6} parent=11 // pred_region
          _
        $region28: #{fwd.6} parent=11 // pred_fallthru
          _
        // Predicated region
        $region29: #{fwd.6} parent=11 // pred_check
          %p291 = pneg %p212
        $region30: #{fwd.6} parent=11 // pred_check_branch
          %293 = sbr.rel (%p291) target = $region32
        $region31: #{fwd.6} parent=11 // pred_region
          _
        $region32: #{fwd.6} parent=11 // pred_fallthru
          _
      $region12: #{fwd.6} parent=5 // pred_fallthru
        _
      %p294 = scmp.lt.s32.totalorder %s15, 4
      // Predicated region
      $region33: #{fwd.6} parent=5 // pred_check
        %p295 = pneg %p294
      $region34: #{fwd.6} parent=5 // pred_check_branch
        %297 = sbr.rel (%p295) target = $region36
      $region35: #{fwd.6} parent=5 // pred_region
        // Predicated region
        $region37: #{fwd.6} parent=35 // pred_check
          %p298 = pneg %p49
        $region38: #{fwd.6} parent=35 // pred_check_branch
          %300 = sbr.rel (%p298) target = $region40
        $region39: #{fwd.6} parent=35 // pred_region
          %s301 = sand.u32 %s39, 1
          %s302 = sand.u32 %s39, 1
          %s303 = smul.addr %s302, 256
          %s304 = scalar_lea.vmem [#allocation3], %s303
          %s305 = smul.u32 32, %s22
          %s306 = smul.u32 2, %s23
          %s307 = smul.addr %s305, 4
          %s308 = sadd.s32 %s306, %s307
          %s309 = smul.addr %s308, 4
          %s310 = scalar_lea.vmem %s0, %s309
          // Predicated region
          $region41: #{fwd.6} parent=39 // pred_check
            _
          $region42: #{fwd.6} parent=39 // pred_check_branch
            %312 = sbr.rel (0) target = $region44
          $region43: #{fwd.6} parent=39 // pred_region
            // Predicated region
            $region45: #{fwd.6} parent=43 // pred_check
              _
            $region46: #{fwd.6} parent=43 // pred_check_branch
              %314 = sbr.rel (0) target = $region48
            $region47: #{fwd.6} parent=43 // pred_region
              // Predicated region
              $region60: #{fwd.6} parent=47 // pred_check
                _
              $region61: #{fwd.6} parent=47 // pred_check_branch
                %392 = sbr.rel (0) target = $region63
              $region62: #{fwd.6} parent=47 // pred_region
                loop: start=0, step=1, limit=1
                $region64: #{fwd.6} parent=62 // loop_pre_header
                  _
                $region65: #{fwd.6} parent=62 // loop_header
                  %s394 = sphi 0, %s398
                  %p395 = scmp.ge.s32.totalorder %s394, 1
                  %s399 = sphi %s310, %s310
                  %s400 = sphi %s304, %s304
                $region66: #{fwd.6} parent=62 // loop_header_branch
                  %397 = sbr.rel (%p395) target = $region70
                $region67: #{fwd.6} parent=62 // loop_body
                  %v401 = vld [vmem:[%s399] sm:$0xff]
                  %402 = vst [vmem:[%s400] sm:$0xff] %v401
                  %v403 = vld [vmem:[%s399 + $0x10] sm:$0xff]
                  %404 = vst [vmem:[%s400 + $0x8] sm:$0xff] %v403
                  %v405 = vld [vmem:[%s399 + $0x20] sm:$0xff]
                  %406 = vst [vmem:[%s400 + $0x10] sm:$0xff] %v405
                  %v407 = vld [vmem:[%s399 + $0x30] sm:$0xff]
                  %408 = vst [vmem:[%s400 + $0x18] sm:$0xff] %v407
                  %v409 = vld [vmem:[%s399 + $0x40] sm:$0xff]
                  %410 = vst [vmem:[%s400 + $0x20] sm:$0xff] %v409
                  %v411 = vld [vmem:[%s399 + $0x50] sm:$0xff]
                  %412 = vst [vmem:[%s400 + $0x28] sm:$0xff] %v411
                  %v413 = vld [vmem:[%s399 + $0x60] sm:$0xff]
                  %414 = vst [vmem:[%s400 + $0x30] sm:$0xff] %v413
                  %v415 = vld [vmem:[%s399 + $0x70] sm:$0xff]
                  %416 = vst [vmem:[%s400 + $0x38] sm:$0xff] %v415
                  %v417 = vld [vmem:[%s399 + $0x80] sm:$0xff]
                  %418 = vst [vmem:[%s400 + $0x40] sm:$0xff] %v417
                  %v419 = vld [vmem:[%s399 + $0x90] sm:$0xff]
                  %420 = vst [vmem:[%s400 + $0x48] sm:$0xff] %v419
                  %v421 = vld [vmem:[%s399 + $0xa0] sm:$0xff]
                  %422 = vst [vmem:[%s400 + $0x50] sm:$0xff] %v421
                  %v423 = vld [vmem:[%s399 + $0xb0] sm:$0xff]
                  %424 = vst [vmem:[%s400 + $0x58] sm:$0xff] %v423
                  %v425 = vld [vmem:[%s399 + $0xc0] sm:$0xff]
                  %426 = vst [vmem:[%s400 + $0x60] sm:$0xff] %v425
                  %v427 = vld [vmem:[%s399 + $0xd0] sm:$0xff]
                  %428 = vst [vmem:[%s400 + $0x68] sm:$0xff] %v427
                  %v429 = vld [vmem:[%s399 + $0xe0] sm:$0xff]
                  %430 = vst [vmem:[%s400 + $0x70] sm:$0xff] %v429
                  %v431 = vld [vmem:[%s399 + $0xf0] sm:$0xff]
                  %432 = vst [vmem:[%s400 + $0x78] sm:$0xff] %v431
                  %v433 = vld [vmem:[%s399 + $0x100] sm:$0xff]
                  %434 = vst [vmem:[%s400 + $0x80] sm:$0xff] %v433
                  %v435 = vld [vmem:[%s399 + $0x110] sm:$0xff]
                  %436 = vst [vmem:[%s400 + $0x88] sm:$0xff] %v435
                  %v437 = vld [vmem:[%s399 + $0x120] sm:$0xff]
                  %438 = vst [vmem:[%s400 + $0x90] sm:$0xff] %v437
                  %v439 = vld [vmem:[%s399 + $0x130] sm:$0xff]
                  %440 = vst [vmem:[%s400 + $0x98] sm:$0xff] %v439
                  %v441 = vld [vmem:[%s399 + $0x140] sm:$0xff]
                  %442 = vst [vmem:[%s400 + $0xa0] sm:$0xff] %v441
                  %v443 = vld [vmem:[%s399 + $0x150] sm:$0xff]
                  %444 = vst [vmem:[%s400 + $0xa8] sm:$0xff] %v443
                  %v445 = vld [vmem:[%s399 + $0x160] sm:$0xff]
                  %446 = vst [vmem:[%s400 + $0xb0] sm:$0xff] %v445
                  %v447 = vld [vmem:[%s399 + $0x170] sm:$0xff]
                  %448 = vst [vmem:[%s400 + $0xb8] sm:$0xff] %v447
                  %v449 = vld [vmem:[%s399 + $0x180] sm:$0xff]
                  %450 = vst [vmem:[%s400 + $0xc0] sm:$0xff] %v449
                  %v451 = vld [vmem:[%s399 + $0x190] sm:$0xff]
                  %452 = vst [vmem:[%s400 + $0xc8] sm:$0xff] %v451
                  %v453 = vld [vmem:[%s399 + $0x1a0] sm:$0xff]
                  %454 = vst [vmem:[%s400 + $0xd0] sm:$0xff] %v453
                  %v455 = vld [vmem:[%s399 + $0x1b0] sm:$0xff]
                  %456 = vst [vmem:[%s400 + $0xd8] sm:$0xff] %v455
                  %v457 = vld [vmem:[%s399 + $0x1c0] sm:$0xff]
                  %458 = vst [vmem:[%s400 + $0xe0] sm:$0xff] %v457
                  %v459 = vld [vmem:[%s399 + $0x1d0] sm:$0xff]
                  %460 = vst [vmem:[%s400 + $0xe8] sm:$0xff] %v459
                  %v461 = vld [vmem:[%s399 + $0x1e0] sm:$0xff]
                  %462 = vst [vmem:[%s400 + $0xf0] sm:$0xff] %v461
                  %v463 = vld [vmem:[%s399 + $0x1f0] sm:$0xff]
                  %464 = vst [vmem:[%s400 + $0xf8] sm:$0xff] %v463
                $region68: #{fwd.6} parent=62 // loop_footer
                  %s398 = sadd.s32 1, %s394
                $region69: #{fwd.6} parent=62 // loop_footer_branch
                  %393 = sbr.rel target = $region65
                $region70: #{fwd.6} parent=62 // loop_exit
                  _
              $region63: #{fwd.6} parent=47 // pred_fallthru
                _
              // Predicated region
              $region71: #{fwd.6} parent=47 // pred_check
                _
              $region72: #{fwd.6} parent=47 // pred_check_branch
                %466 = sbr.rel target = $region74
              $region73: #{fwd.6} parent=47 // pred_region
                _
              $region74: #{fwd.6} parent=47 // pred_fallthru
                _
            $region48: #{fwd.6} parent=43 // pred_fallthru
              _
            // Predicated region
            $region49: #{fwd.6} parent=43 // pred_check
              _
            $region50: #{fwd.6} parent=43 // pred_check_branch
              %316 = sbr.rel target = $region52
            $region51: #{fwd.6} parent=43 // pred_region
              %s318 = ssub.s32 256, 1
              loop: start=0, step=1, limit=1
              $region53: #{fwd.6} parent=51 // loop_pre_header
                _
              $region54: #{fwd.6} parent=51 // loop_header
                %s320 = sphi 0, %s324
                %p321 = scmp.ge.s32.totalorder %s320, 1
                %s325 = sphi %s310, %s310
                %s326 = sphi %s304, %s304
              $region55: #{fwd.6} parent=51 // loop_header_branch
                %323 = sbr.rel (%p321) target = $region59
              $region56: #{fwd.6} parent=51 // loop_body
                %v327 = vld [vmem:[%s325] sm:%s318]
                %328 = vst [vmem:[%s326] sm:%s318] %v327
                %v329 = vld [vmem:[%s325 + $0x10] sm:%s318]
                %330 = vst [vmem:[%s326 + $0x8] sm:%s318] %v329
                %v331 = vld [vmem:[%s325 + $0x20] sm:%s318]
                %332 = vst [vmem:[%s326 + $0x10] sm:%s318] %v331
                %v333 = vld [vmem:[%s325 + $0x30] sm:%s318]
                %334 = vst [vmem:[%s326 + $0x18] sm:%s318] %v333
                %v335 = vld [vmem:[%s325 + $0x40] sm:%s318]
                %336 = vst [vmem:[%s326 + $0x20] sm:%s318] %v335
                %v337 = vld [vmem:[%s325 + $0x50] sm:%s318]
                %338 = vst [vmem:[%s326 + $0x28] sm:%s318] %v337
                %v339 = vld [vmem:[%s325 + $0x60] sm:%s318]
                %340 = vst [vmem:[%s326 + $0x30] sm:%s318] %v339
                %v341 = vld [vmem:[%s325 + $0x70] sm:%s318]
                %342 = vst [vmem:[%s326 + $0x38] sm:%s318] %v341
                %v343 = vld [vmem:[%s325 + $0x80] sm:%s318]
                %344 = vst [vmem:[%s326 + $0x40] sm:%s318] %v343
                %v345 = vld [vmem:[%s325 + $0x90] sm:%s318]
                %346 = vst [vmem:[%s326 + $0x48] sm:%s318] %v345
                %v347 = vld [vmem:[%s325 + $0xa0] sm:%s318]
                %348 = vst [vmem:[%s326 + $0x50] sm:%s318] %v347
                %v349 = vld [vmem:[%s325 + $0xb0] sm:%s318]
                %350 = vst [vmem:[%s326 + $0x58] sm:%s318] %v349
                %v351 = vld [vmem:[%s325 + $0xc0] sm:%s318]
                %352 = vst [vmem:[%s326 + $0x60] sm:%s318] %v351
                %v353 = vld [vmem:[%s325 + $0xd0] sm:%s318]
                %354 = vst [vmem:[%s326 + $0x68] sm:%s318] %v353
                %v355 = vld [vmem:[%s325 + $0xe0] sm:%s318]
                %356 = vst [vmem:[%s326 + $0x70] sm:%s318] %v355
                %v357 = vld [vmem:[%s325 + $0xf0] sm:%s318]
                %358 = vst [vmem:[%s326 + $0x78] sm:%s318] %v357
                %v359 = vld [vmem:[%s325 + $0x100] sm:%s318]
                %360 = vst [vmem:[%s326 + $0x80] sm:%s318] %v359
                %v361 = vld [vmem:[%s325 + $0x110] sm:%s318]
                %362 = vst [vmem:[%s326 + $0x88] sm:%s318] %v361
                %v363 = vld [vmem:[%s325 + $0x120] sm:%s318]
                %364 = vst [vmem:[%s326 + $0x90] sm:%s318] %v363
                %v365 = vld [vmem:[%s325 + $0x130] sm:%s318]
                %366 = vst [vmem:[%s326 + $0x98] sm:%s318] %v365
                %v367 = vld [vmem:[%s325 + $0x140] sm:%s318]
                %368 = vst [vmem:[%s326 + $0xa0] sm:%s318] %v367
                %v369 = vld [vmem:[%s325 + $0x150] sm:%s318]
                %370 = vst [vmem:[%s326 + $0xa8] sm:%s318] %v369
                %v371 = vld [vmem:[%s325 + $0x160] sm:%s318]
                %372 = vst [vmem:[%s326 + $0xb0] sm:%s318] %v371
                %v373 = vld [vmem:[%s325 + $0x170] sm:%s318]
                %374 = vst [vmem:[%s326 + $0xb8] sm:%s318] %v373
                %v375 = vld [vmem:[%s325 + $0x180] sm:%s318]
                %376 = vst [vmem:[%s326 + $0xc0] sm:%s318] %v375
                %v377 = vld [vmem:[%s325 + $0x190] sm:%s318]
                %378 = vst [vmem:[%s326 + $0xc8] sm:%s318] %v377
                %v379 = vld [vmem:[%s325 + $0x1a0] sm:%s318]
                %380 = vst [vmem:[%s326 + $0xd0] sm:%s318] %v379
                %v381 = vld [vmem:[%s325 + $0x1b0] sm:%s318]
                %382 = vst [vmem:[%s326 + $0xd8] sm:%s318] %v381
                %v383 = vld [vmem:[%s325 + $0x1c0] sm:%s318]
                %384 = vst [vmem:[%s326 + $0xe0] sm:%s318] %v383
                %v385 = vld [vmem:[%s325 + $0x1d0] sm:%s318]
                %386 = vst [vmem:[%s326 + $0xe8] sm:%s318] %v385
                %v387 = vld [vmem:[%s325 + $0x1e0] sm:%s318]
                %388 = vst [vmem:[%s326 + $0xf0] sm:%s318] %v387
                %v389 = vld [vmem:[%s325 + $0x1f0] sm:%s318]
                %390 = vst [vmem:[%s326 + $0xf8] sm:%s318] %v389
              $region57: #{fwd.6} parent=51 // loop_footer
                %s324 = sadd.s32 1, %s320
              $region58: #{fwd.6} parent=51 // loop_footer_branch
                %319 = sbr.rel target = $region54
              $region59: #{fwd.6} parent=51 // loop_exit
                _
            $region52: #{fwd.6} parent=43 // pred_fallthru
              _
          $region44: #{fwd.6} parent=39 // pred_fallthru
            _
          %467 = vnop
        $region40: #{fwd.6} parent=35 // pred_fallthru
          _
        // Predicated region
        $region75: #{fwd.6} parent=35 // pred_check
          %p468 = pneg %p75
        $region76: #{fwd.6} parent=35 // pred_check_branch
          %470 = sbr.rel (%p468) target = $region78
        $region77: #{fwd.6} parent=35 // pred_region
          %s471 = smul.u32 32, %s23
          %p472 = scmp.lt.s32.totalorder %s471, 63
          %s473 = scalar_select %p472, %s471, 63
          %s474 = smul.addr %s473, 4
          %s475 = scalar_lea.vmem %s1, %s474
          %s476 = smul.u32 32, %s23
        $region78: #{fwd.6} parent=35 // pred_fallthru
          _
        // Predicated region
        $region79: #{fwd.6} parent=35 // pred_check
          %p477 = pneg %p101
        $region80: #{fwd.6} parent=35 // pred_check_branch
          %479 = sbr.rel (%p477) target = $region82
        $region81: #{fwd.6} parent=35 // pred_region
          %s480 = smul.u32 32, %s22
          %p481 = scmp.lt.s32.totalorder %s480, 63
          %s482 = scalar_select %p481, %s480, 63
          %s483 = smul.addr %s482, 4
          %s484 = scalar_lea.vmem %s2, %s483
          %s485 = smul.u32 32, %s22
        $region82: #{fwd.6} parent=35 // pred_fallthru
          _
        // Predicated region
        $region83: #{fwd.6} parent=35 // pred_check
          %p486 = pneg %p232
        $region84: #{fwd.6} parent=35 // pred_check_branch
          %488 = sbr.rel (%p486) target = $region86
        $region85: #{fwd.6} parent=35 // pred_region
          %s489 = smul.u32 32, %s22
          %p490 = scmp.lt.s32.totalorder %s489, 63
          %s491 = scalar_select %p490, %s489, 63
          %s492 = smul.addr %s491, 8
          %s493 = scalar_lea.vmem %s8, %s492
          %s494 = smul.u32 32, %s22
        $region86: #{fwd.6} parent=35 // pred_fallthru
          _
      $region36: #{fwd.6} parent=5 // pred_fallthru
        _
      %p495 = scmp.le.s32.totalorder 1, %s15
      %p496 = scmp.lt.s32.totalorder %s15, 5
      %p497 = pnand %p495, %p496
      %p498 = pneg %p497
      // Predicated region
      $region87: #{fwd.6} parent=5 // pred_check
        _
      $region88: #{fwd.6} parent=5 // pred_check_branch
        %500 = sbr.rel (%p497) target = $region90
      $region89: #{fwd.6} parent=5 // pred_region
        %s501 = ssub.s32 %s15, 1
        %s502 = sand.u32 %s42, 1
        %s503 = sand.u32 %s42, 1
        %s504 = smul.addr %s503, 256
        %s505 = scalar_lea.vmem [#allocation3], %s504
        // Predicated region
        $region91: #{fwd.6} parent=89 // pred_check
          %p506 = pneg %p55
        $region92: #{fwd.6} parent=89 // pred_check_branch
          %508 = sbr.rel (%p506) target = $region94
        $region93: #{fwd.6} parent=89 // pred_region
          _
        $region94: #{fwd.6} parent=89 // pred_fallthru
          _
        %s509 = sand.u32 %s42, 1
        %s510 = sand.u32 %s42, 1
        %s511 = smul.addr %s510, 256
        %s512 = scalar_lea.vmem [#allocation3], %s511
        %p513 = pneg %p55
        %p514 = pneg %p52
        %s515 = smul.u32 32, %s25
        %p516 = scmp.lt.s32.totalorder %s515, 63
        %s517 = scalar_select %p516, %s515, 63
        %s518 = smul.addr %s517, 4
        %s519 = scalar_lea.vmem %s1, %s518
        %p520 = pneg %p81
        %p521 = pneg %p78
        %s522 = smul.u32 32, %s24
        %p523 = scmp.lt.s32.totalorder %s522, 63
        %s524 = scalar_select %p523, %s522, 63
        %s525 = smul.addr %s524, 4
        %s526 = scalar_lea.vmem %s2, %s525
        %p527 = pneg %p107
        %p528 = pneg %p104
        %p529 = pneg %p128
        %p530 = pneg %p125
        %p531 = pneg %p149
        %p532 = pneg %p146
        %p533 = pneg %p170
        %p534 = pneg %p167
        %p535 = pneg %p191
        %p536 = pneg %p188
        %p537 = pneg %p212
        %p538 = pneg %p209
        %s539 = smul.u32 32, %s24
        %p540 = scmp.lt.s32.totalorder %s539, 63
        %s541 = scalar_select %p540, %s539, 63
        %s542 = smul.addr %s541, 8
        %s543 = scalar_lea.vmem %s8, %s542
        %p544 = pneg %p238
        %p545 = pneg %p235
        %p546 = pneg %p264
        %p547 = pneg %p261
        %s548 = smul.u32 32, %s24
        %p549 = scmp.lt.s32.totalorder %s548, 63
        %s550 = scalar_select %p549, %s548, 63
        %s551 = smul.addr %s550, 4
        %s552 = scalar_lea.vmem %s9, %s551
        %s553 = smul.u32 32, %s24
        %s554 = smul.u32 2, %s25
        %s555 = smul.u32 32, %s25
        %p556 = scmp.lt.s32.totalorder %s555, 63
        %s557 = scalar_select %p556, %s555, 63
        %s558 = smul.addr %s557, 4
        %s559 = scalar_lea.vmem %s1, %s558
        %s560 = smul.u32 32, %s25
        %s561 = smul.u32 32, %s24
        %p562 = scmp.lt.s32.totalorder %s561, 63
        %s563 = scalar_select %p562, %s561, 63
        %s564 = smul.addr %s563, 4
        %s565 = scalar_lea.vmem %s2, %s564
        %s566 = smul.u32 32, %s24
        %s567 = smul.u32 32, %s24
        %p568 = scmp.lt.s32.totalorder %s567, 63
        %s569 = scalar_select %p568, %s567, 63
        %s570 = smul.addr %s569, 8
        %s571 = scalar_lea.vmem %s8, %s570
        %s572 = smul.u32 32, %s24
        %s573 = smul.u32 32, %s24
        %p574 = scmp.lt.s32.totalorder %s573, 63
        %s575 = scalar_select %p574, %s573, 63
        %s576 = smul.addr %s575, 4
        %s577 = scalar_lea.vmem %s9, %s576
        %s578 = smul.u32 32, %s24
        %p580 = scmp.eq.s32.totalorder %s25, 0
        // Predicated region
        $region95: #{fwd.6} parent=89 // pred_check
          %p581 = pneg %p580
        $region96: #{fwd.6} parent=89 // pred_check_branch
          %583 = sbr.rel (%p581) target = $region98
        $region97: #{fwd.6} parent=89 // pred_region
          %584 = vst [vmem:[#allocation2] sm:$0xff] 0.0
          %585 = vst [vmem:[#allocation2 + $0x8] sm:$0xff] 0.0
          %586 = vst [vmem:[#allocation2 + $0x10] sm:$0xff] 0.0
          %587 = vst [vmem:[#allocation2 + $0x18] sm:$0xff] 0.0
          %588 = vst [vmem:[#allocation2 + $0x20] sm:$0xff] 0.0
          %589 = vst [vmem:[#allocation2 + $0x28] sm:$0xff] 0.0
          %590 = vst [vmem:[#allocation2 + $0x30] sm:$0xff] 0.0
          %591 = vst [vmem:[#allocation2 + $0x38] sm:$0xff] 0.0
          %592 = vst [vmem:[#allocation2 + $0x40] sm:$0xff] 0.0
          %593 = vst [vmem:[#allocation2 + $0x48] sm:$0xff] 0.0
          %594 = vst [vmem:[#allocation2 + $0x50] sm:$0xff] 0.0
          %595 = vst [vmem:[#allocation2 + $0x58] sm:$0xff] 0.0
          %596 = vst [vmem:[#allocation2 + $0x60] sm:$0xff] 0.0
          %597 = vst [vmem:[#allocation2 + $0x68] sm:$0xff] 0.0
          %598 = vst [vmem:[#allocation2 + $0x70] sm:$0xff] 0.0
          %599 = vst [vmem:[#allocation2 + $0x78] sm:$0xff] 0.0
          %600 = vst [vmem:[#allocation2 + $0x80] sm:$0xff] 0.0
          %601 = vst [vmem:[#allocation2 + $0x88] sm:$0xff] 0.0
          %602 = vst [vmem:[#allocation2 + $0x90] sm:$0xff] 0.0
          %603 = vst [vmem:[#allocation2 + $0x98] sm:$0xff] 0.0
          %604 = vst [vmem:[#allocation2 + $0xa0] sm:$0xff] 0.0
          %605 = vst [vmem:[#allocation2 + $0xa8] sm:$0xff] 0.0
          %606 = vst [vmem:[#allocation2 + $0xb0] sm:$0xff] 0.0
          %607 = vst [vmem:[#allocation2 + $0xb8] sm:$0xff] 0.0
          %608 = vst [vmem:[#allocation2 + $0xc0] sm:$0xff] 0.0
          %609 = vst [vmem:[#allocation2 + $0xc8] sm:$0xff] 0.0
          %610 = vst [vmem:[#allocation2 + $0xd0] sm:$0xff] 0.0
          %611 = vst [vmem:[#allocation2 + $0xd8] sm:$0xff] 0.0
          %612 = vst [vmem:[#allocation2 + $0xe0] sm:$0xff] 0.0
          %613 = vst [vmem:[#allocation2 + $0xe8] sm:$0xff] 0.0
          %614 = vst [vmem:[#allocation2 + $0xf0] sm:$0xff] 0.0
          %615 = vst [vmem:[#allocation2 + $0xf8] sm:$0xff] 0.0
        $region98: #{fwd.6} parent=89 // pred_fallthru
          _
        %v616 = vld [vmem:[%s559] sm:$0xf]
        %v617 = vld [vmem:[%s559 + $0x4] sm:$0xf]
        %v618 = vld [vmem:[%s559 + $0x8] sm:$0xf]
        %v619 = vld [vmem:[%s559 + $0xc] sm:$0xf]
        %v620 = vld [vmem:[%s559 + $0x10] sm:$0xf]
        %v621 = vld [vmem:[%s559 + $0x14] sm:$0xf]
        %v622 = vld [vmem:[%s559 + $0x18] sm:$0xf]
        %v623 = vld [vmem:[%s559 + $0x1c] sm:$0xf]
        %v624 = vld [vmem:[%s559 + $0x20] sm:$0xf]
        %v625 = vld [vmem:[%s559 + $0x24] sm:$0xf]
        %v626 = vld [vmem:[%s559 + $0x28] sm:$0xf]
        %v627 = vld [vmem:[%s559 + $0x2c] sm:$0xf]
        %v628 = vld [vmem:[%s559 + $0x30] sm:$0xf]
        %v629 = vld [vmem:[%s559 + $0x34] sm:$0xf]
        %v630 = vld [vmem:[%s559 + $0x38] sm:$0xf]
        %v631 = vld [vmem:[%s559 + $0x3c] sm:$0xf]
        %v632 = vld [vmem:[%s559 + $0x40] sm:$0xf]
        %v633 = vld [vmem:[%s559 + $0x44] sm:$0xf]
        %v634 = vld [vmem:[%s559 + $0x48] sm:$0xf]
        %v635 = vld [vmem:[%s559 + $0x4c] sm:$0xf]
        %v636 = vld [vmem:[%s559 + $0x50] sm:$0xf]
        %v637 = vld [vmem:[%s559 + $0x54] sm:$0xf]
        %v638 = vld [vmem:[%s559 + $0x58] sm:$0xf]
        %v639 = vld [vmem:[%s559 + $0x5c] sm:$0xf]
        %v640 = vld [vmem:[%s559 + $0x60] sm:$0xf]
        %v641 = vld [vmem:[%s559 + $0x64] sm:$0xf]
        %v642 = vld [vmem:[%s559 + $0x68] sm:$0xf]
        %v643 = vld [vmem:[%s559 + $0x6c] sm:$0xf]
        %v644 = vld [vmem:[%s559 + $0x70] sm:$0xf]
        %v645 = vld [vmem:[%s559 + $0x74] sm:$0xf]
        %v646 = vld [vmem:[%s559 + $0x78] sm:$0xf]
        %v647 = vld [vmem:[%s559 + $0x7c] sm:$0xf]
        %v648 = vld [vmem:[%s3] sm:$0xf]
        %v649 = vld [vmem:[%s3 + $0x4] sm:$0xf]
        %v650 = vld [vmem:[%s3 + $0x8] sm:$0xf]
        %v651 = vld [vmem:[%s3 + $0xc] sm:$0xf]
        %v652 = vld [vmem:[%s3 + $0x10] sm:$0xf]
        %v653 = vld [vmem:[%s3 + $0x14] sm:$0xf]
        %v654 = vld [vmem:[%s3 + $0x18] sm:$0xf]
        %v655 = vld [vmem:[%s3 + $0x1c] sm:$0xf]
        %v656 = vld [vmem:[%s3 + $0x20] sm:$0xf]
        %v657 = vld [vmem:[%s3 + $0x24] sm:$0xf]
        %v658 = vld [vmem:[%s3 + $0x28] sm:$0xf]
        %v659 = vld [vmem:[%s3 + $0x2c] sm:$0xf]
        %v660 = vld [vmem:[%s3 + $0x30] sm:$0xf]
        %v661 = vld [vmem:[%s3 + $0x34] sm:$0xf]
        %v662 = vld [vmem:[%s3 + $0x38] sm:$0xf]
        %v663 = vld [vmem:[%s3 + $0x3c] sm:$0xf]
        %v696 = vunpack.c.l.b16 %v616
        %v697 = vunpack.c.l.b16 %v617
        %v698 = vunpack.c.l.b16 %v618
        %v699 = vunpack.c.l.b16 %v619
        %v700 = vunpack.c.l.b16 %v620
        %v701 = vunpack.c.l.b16 %v621
        %v702 = vunpack.c.l.b16 %v622
        %v703 = vunpack.c.l.b16 %v623
        %v704 = vunpack.c.l.b16 %v624
        %v705 = vunpack.c.l.b16 %v625
        %v706 = vunpack.c.l.b16 %v626
        %v707 = vunpack.c.l.b16 %v627
        %v708 = vunpack.c.l.b16 %v628
        %v709 = vunpack.c.l.b16 %v629
        %v710 = vunpack.c.l.b16 %v630
        %v711 = vunpack.c.l.b16 %v631
        %v712 = vunpack.c.l.b16 %v632
        %v713 = vunpack.c.l.b16 %v633
        %v714 = vunpack.c.l.b16 %v634
        %v715 = vunpack.c.l.b16 %v635
        %v716 = vunpack.c.l.b16 %v636
        %v717 = vunpack.c.l.b16 %v637
        %v718 = vunpack.c.l.b16 %v638
        %v719 = vunpack.c.l.b16 %v639
        %v720 = vunpack.c.l.b16 %v640
        %v721 = vunpack.c.l.b16 %v641
        %v722 = vunpack.c.l.b16 %v642
        %v723 = vunpack.c.l.b16 %v643
        %v724 = vunpack.c.l.b16 %v644
        %v725 = vunpack.c.l.b16 %v645
        %v726 = vunpack.c.l.b16 %v646
        %v727 = vunpack.c.l.b16 %v647
        %v728 = vpack.c.b16 %v697, %v696
        %v729 = vpack.c.b16 %v699, %v698
        %v730 = vpack.c.b16 %v701, %v700
        %v731 = vpack.c.b16 %v703, %v702
        %v732 = vpack.c.b16 %v705, %v704
        %v733 = vpack.c.b16 %v707, %v706
        %v734 = vpack.c.b16 %v709, %v708
        %v735 = vpack.c.b16 %v711, %v710
        %v736 = vpack.c.b16 %v713, %v712
        %v737 = vpack.c.b16 %v715, %v714
        %v738 = vpack.c.b16 %v717, %v716
        %v739 = vpack.c.b16 %v719, %v718
        %v740 = vpack.c.b16 %v721, %v720
        %v741 = vpack.c.b16 %v723, %v722
        %v742 = vpack.c.b16 %v725, %v724
        %v743 = vpack.c.b16 %v727, %v726
        %v776 = vunpack.c.l.b16 %v648
        %v777 = vunpack.c.l.b16 %v649
        %v778 = vunpack.c.l.b16 %v650
        %v779 = vunpack.c.l.b16 %v651
        %v780 = vunpack.c.l.b16 %v652
        %v781 = vunpack.c.l.b16 %v653
        %v782 = vunpack.c.l.b16 %v654
        %v783 = vunpack.c.l.b16 %v655
        %v784 = vunpack.c.l.b16 %v656
        %v785 = vunpack.c.l.b16 %v657
        %v786 = vunpack.c.l.b16 %v658
        %v787 = vunpack.c.l.b16 %v659
        %v788 = vunpack.c.l.b16 %v660
        %v789 = vunpack.c.l.b16 %v661
        %v790 = vunpack.c.l.b16 %v662
        %v791 = vunpack.c.l.b16 %v663
        %v792 = vpack.c.b16 %v777, %v776
        %v793 = vpack.c.b16 %v779, %v778
        %v794 = vpack.c.b16 %v781, %v780
        %v795 = vpack.c.b16 %v783, %v782
        %v796 = vpack.c.b16 %v785, %v784
        %v797 = vpack.c.b16 %v787, %v786
        %v798 = vpack.c.b16 %v789, %v788
        %v799 = vpack.c.b16 %v791, %v790
        %808 = vmatprep.subr.bf16.mxu0 0
        %809 = vmatpush1.bf16.msra.mxu0 %v799
        %810 = vmatprep.subr.bf16.mxu0 0
        %811 = vmatpush1.bf16.msra.mxu0 %v798
        %812 = vmatprep.subr.bf16.mxu0 0
        %813 = vmatpush1.bf16.msra.mxu0 %v797
        %814 = vmatprep.subr.bf16.mxu0 0
        %815 = vmatpush1.bf16.msra.mxu0 %v796
        %816 = vmatprep.subr.bf16.mxu0 0
        %817 = vmatpush1.bf16.msra.mxu0 %v795
        %818 = vmatprep.subr.bf16.mxu0 0
        %819 = vmatpush1.bf16.msra.mxu0 %v794
        %820 = vmatprep.subr.bf16.mxu0 0
        %821 = vmatpush1.bf16.msra.mxu0 %v793
        %822 = vmatprep.subr.bf16.mxu0 0
        %823 = vmatpush1.bf16.msra.mxu0 %v792
        %824 = vmatprep.subr.bf16.mxu0 0
        %825 = vmatpush2.bf16.msra.mxu0 0
        %826 = vmatprep.subr.bf16.mxu0 0
        %827 = vmatpush2.bf16.msra.mxu0 0
        %828 = vmatprep.subr.bf16.mxu0 0
        %829 = vmatpush2.bf16.msra.mxu0 0
        %830 = vmatprep.subr.bf16.mxu0 0
        %831 = vmatpush2.bf16.msra.mxu0 0
        %832 = vmatprep.subr.bf16.mxu0 0
        %833 = vmatpush2.bf16.msra.mxu0 0
        %834 = vmatprep.subr.bf16.mxu0 0
        %835 = vmatpush2.bf16.msra.mxu0 0
        %836 = vmatprep.subr.bf16.mxu0 0
        %837 = vmatpush2.bf16.msra.mxu0 0
        %838 = vmatprep.subr.bf16.mxu0 0
        %839 = vmatpush2.bf16.msra.mxu0 0
        %840 = vmatprep.mubr.bf16.mxu0 0
        %841 = vmatmul.mubr.bf16.gmra.mxu0 %v728
        %v842 = vpop.f32.mrf.mxu0
        %v843 = vadd.f32 0.0, %v842
        %v844 = vpop.f32.mrf.mxu0
        %v845 = vpop.f32.mrf.mxu0
        %v846 = vadd.f32 0.0, %v845
        %v847 = vpop.f32.mrf.mxu0
        %848 = vmatprep.mubr.bf16.mxu0 0
        %849 = vmatmul.mubr.bf16.gmra.mxu0 %v729
        %v850 = vpop.f32.mrf.mxu0
        %v851 = vadd.f32 0.0, %v850
        %v852 = vpop.f32.mrf.mxu0
        %v853 = vpop.f32.mrf.mxu0
        %v854 = vadd.f32 0.0, %v853
        %v855 = vpop.f32.mrf.mxu0
        %856 = vmatprep.mubr.bf16.mxu0 0
        %857 = vmatmul.mubr.bf16.gmra.mxu0 %v730
        %v858 = vpop.f32.mrf.mxu0
        %v859 = vadd.f32 0.0, %v858
        %v860 = vpop.f32.mrf.mxu0
        %v861 = vpop.f32.mrf.mxu0
        %v862 = vadd.f32 0.0, %v861
        %v863 = vpop.f32.mrf.mxu0
        %864 = vmatprep.mubr.bf16.mxu0 0
        %865 = vmatmul.mubr.bf16.gmra.mxu0 %v731
        %v866 = vpop.f32.mrf.mxu0
        %v867 = vadd.f32 0.0, %v866
        %v868 = vpop.f32.mrf.mxu0
        %v869 = vpop.f32.mrf.mxu0
        %v870 = vadd.f32 0.0, %v869
        %v871 = vpop.f32.mrf.mxu0
        %872 = vmatprep.mubr.bf16.mxu0 0
        %873 = vmatmul.mubr.bf16.gmra.mxu0 %v732
        %v874 = vpop.f32.mrf.mxu0
        %v875 = vadd.f32 0.0, %v874
        %v876 = vpop.f32.mrf.mxu0
        %v877 = vpop.f32.mrf.mxu0
        %v878 = vadd.f32 0.0, %v877
        %v879 = vpop.f32.mrf.mxu0
        %880 = vmatprep.mubr.bf16.mxu0 0
        %881 = vmatmul.mubr.bf16.gmra.mxu0 %v733
        %v882 = vpop.f32.mrf.mxu0
        %v883 = vadd.f32 0.0, %v882
        %v884 = vpop.f32.mrf.mxu0
        %v885 = vpop.f32.mrf.mxu0
        %v886 = vadd.f32 0.0, %v885
        %v887 = vpop.f32.mrf.mxu0
        %888 = vmatprep.mubr.bf16.mxu0 0
        %889 = vmatmul.mubr.bf16.gmra.mxu0 %v734
        %v890 = vpop.f32.mrf.mxu0
        %v891 = vadd.f32 0.0, %v890
        %v892 = vpop.f32.mrf.mxu0
        %v893 = vpop.f32.mrf.mxu0
        %v894 = vadd.f32 0.0, %v893
        %v895 = vpop.f32.mrf.mxu0
        %896 = vmatprep.mubr.bf16.mxu0 0
        %897 = vmatmul.mubr.bf16.gmra.mxu0 %v735
        %v898 = vpop.f32.mrf.mxu0
        %v899 = vadd.f32 0.0, %v898
        %v900 = vpop.f32.mrf.mxu0
        %v901 = vpop.f32.mrf.mxu0
        %v902 = vadd.f32 0.0, %v901
        %v903 = vpop.f32.mrf.mxu0
        %904 = vmatprep.mubr.bf16.mxu0 0
        %905 = vmatmul.mubr.bf16.gmra.mxu0 %v736
        %v906 = vpop.f32.mrf.mxu0
        %v907 = vadd.f32 0.0, %v906
        %v908 = vpop.f32.mrf.mxu0
        %v909 = vpop.f32.mrf.mxu0
        %v910 = vadd.f32 0.0, %v909
        %v911 = vpop.f32.mrf.mxu0
        %912 = vmatprep.mubr.bf16.mxu0 0
        %913 = vmatmul.mubr.bf16.gmra.mxu0 %v737
        %v914 = vpop.f32.mrf.mxu0
        %v915 = vadd.f32 0.0, %v914
        %v916 = vpop.f32.mrf.mxu0
        %v917 = vpop.f32.mrf.mxu0
        %v918 = vadd.f32 0.0, %v917
        %v919 = vpop.f32.mrf.mxu0
        %920 = vmatprep.mubr.bf16.mxu0 0
        %921 = vmatmul.mubr.bf16.gmra.mxu0 %v738
        %v922 = vpop.f32.mrf.mxu0
        %v923 = vadd.f32 0.0, %v922
        %v924 = vpop.f32.mrf.mxu0
        %v925 = vpop.f32.mrf.mxu0
        %v926 = vadd.f32 0.0, %v925
        %v927 = vpop.f32.mrf.mxu0
        %928 = vmatprep.mubr.bf16.mxu0 0
        %929 = vmatmul.mubr.bf16.gmra.mxu0 %v739
        %v930 = vpop.f32.mrf.mxu0
        %v931 = vadd.f32 0.0, %v930
        %v932 = vpop.f32.mrf.mxu0
        %v933 = vpop.f32.mrf.mxu0
        %v934 = vadd.f32 0.0, %v933
        %v935 = vpop.f32.mrf.mxu0
        %936 = vmatprep.mubr.bf16.mxu0 0
        %937 = vmatmul.mubr.bf16.gmra.mxu0 %v740
        %v938 = vpop.f32.mrf.mxu0
        %v939 = vadd.f32 0.0, %v938
        %v940 = vpop.f32.mrf.mxu0
        %v941 = vpop.f32.mrf.mxu0
        %v942 = vadd.f32 0.0, %v941
        %v943 = vpop.f32.mrf.mxu0
        %944 = vmatprep.mubr.bf16.mxu0 0
        %945 = vmatmul.mubr.bf16.gmra.mxu0 %v741
        %v946 = vpop.f32.mrf.mxu0
        %v947 = vadd.f32 0.0, %v946
        %v948 = vpop.f32.mrf.mxu0
        %v949 = vpop.f32.mrf.mxu0
        %v950 = vadd.f32 0.0, %v949
        %v951 = vpop.f32.mrf.mxu0
        %952 = vmatprep.mubr.bf16.mxu0 0
        %953 = vmatmul.mubr.bf16.gmra.mxu0 %v742
        %v954 = vpop.f32.mrf.mxu0
        %v955 = vadd.f32 0.0, %v954
        %v956 = vpop.f32.mrf.mxu0
        %v957 = vpop.f32.mrf.mxu0
        %v958 = vadd.f32 0.0, %v957
        %v959 = vpop.f32.mrf.mxu0
        %960 = vmatprep.mubr.bf16.mxu0 0
        %961 = vmatmul.mubr.bf16.gmra.mxu0 %v743
        %v962 = vpop.f32.mrf.mxu0
        %v963 = vadd.f32 0.0, %v962
        %v964 = vpop.f32.mrf.mxu0
        %v965 = vpop.f32.mrf.mxu0
        %v966 = vadd.f32 0.0, %v965
        %v967 = vpop.f32.mrf.mxu0
        %968 = vdwg.mxu0
        %v969 = vld [vmem:[#allocation2] sm:$0xff]
        %v970 = vld [vmem:[#allocation2 + $0x8] sm:$0xff]
        %v971 = vld [vmem:[#allocation2 + $0x10] sm:$0xff]
        %v972 = vld [vmem:[#allocation2 + $0x18] sm:$0xff]
        %v973 = vld [vmem:[#allocation2 + $0x20] sm:$0xff]
        %v974 = vld [vmem:[#allocation2 + $0x28] sm:$0xff]
        %v975 = vld [vmem:[#allocation2 + $0x30] sm:$0xff]
        %v976 = vld [vmem:[#allocation2 + $0x38] sm:$0xff]
        %v977 = vld [vmem:[#allocation2 + $0x40] sm:$0xff]
        %v978 = vld [vmem:[#allocation2 + $0x48] sm:$0xff]
        %v979 = vld [vmem:[#allocation2 + $0x50] sm:$0xff]
        %v980 = vld [vmem:[#allocation2 + $0x58] sm:$0xff]
        %v981 = vld [vmem:[#allocation2 + $0x60] sm:$0xff]
        %v982 = vld [vmem:[#allocation2 + $0x68] sm:$0xff]
        %v983 = vld [vmem:[#allocation2 + $0x70] sm:$0xff]
        %v984 = vld [vmem:[#allocation2 + $0x78] sm:$0xff]
        %v985 = vld [vmem:[#allocation2 + $0x80] sm:$0xff]
        %v986 = vld [vmem:[#allocation2 + $0x88] sm:$0xff]
        %v987 = vld [vmem:[#allocation2 + $0x90] sm:$0xff]
        %v988 = vld [vmem:[#allocation2 + $0x98] sm:$0xff]
        %v989 = vld [vmem:[#allocation2 + $0xa0] sm:$0xff]
        %v990 = vld [vmem:[#allocation2 + $0xa8] sm:$0xff]
        %v991 = vld [vmem:[#allocation2 + $0xb0] sm:$0xff]
        %v992 = vld [vmem:[#allocation2 + $0xb8] sm:$0xff]
        %v993 = vld [vmem:[#allocation2 + $0xc0] sm:$0xff]
        %v994 = vld [vmem:[#allocation2 + $0xc8] sm:$0xff]
        %v995 = vld [vmem:[#allocation2 + $0xd0] sm:$0xff]
        %v996 = vld [vmem:[#allocation2 + $0xd8] sm:$0xff]
        %v997 = vld [vmem:[#allocation2 + $0xe0] sm:$0xff]
        %v998 = vld [vmem:[#allocation2 + $0xe8] sm:$0xff]
        %v999 = vld [vmem:[#allocation2 + $0xf0] sm:$0xff]
        %v1000 = vld [vmem:[#allocation2 + $0xf8] sm:$0xff]
        %v1001 = vld [vmem:[%s505] sm:$0xff]
        %v1002 = vld [vmem:[%s505 + $0x8] sm:$0xff]
        %v1003 = vld [vmem:[%s505 + $0x10] sm:$0xff]
        %v1004 = vld [vmem:[%s505 + $0x18] sm:$0xff]
        %v1005 = vld [vmem:[%s505 + $0x20] sm:$0xff]
        %v1006 = vld [vmem:[%s505 + $0x28] sm:$0xff]
        %v1007 = vld [vmem:[%s505 + $0x30] sm:$0xff]
        %v1008 = vld [vmem:[%s505 + $0x38] sm:$0xff]
        %v1009 = vld [vmem:[%s505 + $0x40] sm:$0xff]
        %v1010 = vld [vmem:[%s505 + $0x48] sm:$0xff]
        %v1011 = vld [vmem:[%s505 + $0x50] sm:$0xff]
        %v1012 = vld [vmem:[%s505 + $0x58] sm:$0xff]
        %v1013 = vld [vmem:[%s505 + $0x60] sm:$0xff]
        %v1014 = vld [vmem:[%s505 + $0x68] sm:$0xff]
        %v1015 = vld [vmem:[%s505 + $0x70] sm:$0xff]
        %v1016 = vld [vmem:[%s505 + $0x78] sm:$0xff]
        %v1017 = vld [vmem:[%s505 + $0x80] sm:$0xff]
        %v1018 = vld [vmem:[%s505 + $0x88] sm:$0xff]
        %v1019 = vld [vmem:[%s505 + $0x90] sm:$0xff]
        %v1020 = vld [vmem:[%s505 + $0x98] sm:$0xff]
        %v1021 = vld [vmem:[%s505 + $0xa0] sm:$0xff]
        %v1022 = vld [vmem:[%s505 + $0xa8] sm:$0xff]
        %v1023 = vld [vmem:[%s505 + $0xb0] sm:$0xff]
        %v1024 = vld [vmem:[%s505 + $0xb8] sm:$0xff]
        %v1025 = vld [vmem:[%s505 + $0xc0] sm:$0xff]
        %v1026 = vld [vmem:[%s505 + $0xc8] sm:$0xff]
        %v1027 = vld [vmem:[%s505 + $0xd0] sm:$0xff]
        %v1028 = vld [vmem:[%s505 + $0xd8] sm:$0xff]
        %v1029 = vld [vmem:[%s505 + $0xe0] sm:$0xff]
        %v1030 = vld [vmem:[%s505 + $0xe8] sm:$0xff]
        %v1031 = vld [vmem:[%s505 + $0xf0] sm:$0xff]
        %v1032 = vld [vmem:[%s505 + $0xf8] sm:$0xff]
        %v1033 = vpack.c.bf16 %v846, %v843
        %v1034 = vpack.c.bf16 %v854, %v851
        %v1035 = vpack.c.bf16 %v862, %v859
        %v1036 = vpack.c.bf16 %v870, %v867
        %v1037 = vpack.c.bf16 %v878, %v875
        %v1038 = vpack.c.bf16 %v886, %v883
        %v1039 = vpack.c.bf16 %v894, %v891
        %v1040 = vpack.c.bf16 %v902, %v899
        %v1041 = vpack.c.bf16 %v910, %v907
        %v1042 = vpack.c.bf16 %v918, %v915
        %v1043 = vpack.c.bf16 %v926, %v923
        %v1044 = vpack.c.bf16 %v934, %v931
        %v1045 = vpack.c.bf16 %v942, %v939
        %v1046 = vpack.c.bf16 %v950, %v947
        %v1047 = vpack.c.bf16 %v958, %v955
        %v1048 = vpack.c.bf16 %v966, %v963
        %v1081 = vunpack.c.l.b16 %v1001
        %v1082 = vunpack.c.h.b16 %v1001
        %v1083 = vunpack.c.l.b16 %v1002
        %v1084 = vunpack.c.h.b16 %v1002
        %v1085 = vunpack.c.l.b16 %v1003
        %v1086 = vunpack.c.h.b16 %v1003
        %v1087 = vunpack.c.l.b16 %v1004
        %v1088 = vunpack.c.h.b16 %v1004
        %v1089 = vunpack.c.l.b16 %v1005
        %v1090 = vunpack.c.h.b16 %v1005
        %v1091 = vunpack.c.l.b16 %v1006
        %v1092 = vunpack.c.h.b16 %v1006
        %v1093 = vunpack.c.l.b16 %v1007
        %v1094 = vunpack.c.h.b16 %v1007
        %v1095 = vunpack.c.l.b16 %v1008
        %v1096 = vunpack.c.h.b16 %v1008
        %v1097 = vunpack.c.l.b16 %v1009
        %v1098 = vunpack.c.h.b16 %v1009
        %v1099 = vunpack.c.l.b16 %v1010
        %v1100 = vunpack.c.h.b16 %v1010
        %v1101 = vunpack.c.l.b16 %v1011
        %v1102 = vunpack.c.h.b16 %v1011
        %v1103 = vunpack.c.l.b16 %v1012
        %v1104 = vunpack.c.h.b16 %v1012
        %v1105 = vunpack.c.l.b16 %v1013
        %v1106 = vunpack.c.h.b16 %v1013
        %v1107 = vunpack.c.l.b16 %v1014
        %v1108 = vunpack.c.h.b16 %v1014
        %v1109 = vunpack.c.l.b16 %v1015
        %v1110 = vunpack.c.h.b16 %v1015
        %v1111 = vunpack.c.l.b16 %v1016
        %v1112 = vunpack.c.h.b16 %v1016
        %v1113 = vunpack.c.l.b16 %v1017
        %v1114 = vunpack.c.h.b16 %v1017
        %v1115 = vunpack.c.l.b16 %v1018
        %v1116 = vunpack.c.h.b16 %v1018
        %v1117 = vunpack.c.l.b16 %v1019
        %v1118 = vunpack.c.h.b16 %v1019
        %v1119 = vunpack.c.l.b16 %v1020
        %v1120 = vunpack.c.h.b16 %v1020
        %v1121 = vunpack.c.l.b16 %v1021
        %v1122 = vunpack.c.h.b16 %v1021
        %v1123 = vunpack.c.l.b16 %v1022
        %v1124 = vunpack.c.h.b16 %v1022
        %v1125 = vunpack.c.l.b16 %v1023
        %v1126 = vunpack.c.h.b16 %v1023
        %v1127 = vunpack.c.l.b16 %v1024
        %v1128 = vunpack.c.h.b16 %v1024
        %v1129 = vunpack.c.l.b16 %v1025
        %v1130 = vunpack.c.h.b16 %v1025
        %v1131 = vunpack.c.l.b16 %v1026
        %v1132 = vunpack.c.h.b16 %v1026
        %v1133 = vunpack.c.l.b16 %v1027
        %v1134 = vunpack.c.h.b16 %v1027
        %v1135 = vunpack.c.l.b16 %v1028
        %v1136 = vunpack.c.h.b16 %v1028
        %v1137 = vunpack.c.l.b16 %v1029
        %v1138 = vunpack.c.h.b16 %v1029
        %v1139 = vunpack.c.l.b16 %v1030
        %v1140 = vunpack.c.h.b16 %v1030
        %v1141 = vunpack.c.l.b16 %v1031
        %v1142 = vunpack.c.h.b16 %v1031
        %v1143 = vunpack.c.l.b16 %v1032
        %v1144 = vunpack.c.h.b16 %v1032
        %v1145 = vpack.c.b16 %v1083, %v1081
        %v1146 = vpack.c.b16 %v1084, %v1082
        %v1147 = vpack.c.b16 %v1087, %v1085
        %v1148 = vpack.c.b16 %v1088, %v1086
        %v1149 = vpack.c.b16 %v1091, %v1089
        %v1150 = vpack.c.b16 %v1092, %v1090
        %v1151 = vpack.c.b16 %v1095, %v1093
        %v1152 = vpack.c.b16 %v1096, %v1094
        %v1153 = vpack.c.b16 %v1099, %v1097
        %v1154 = vpack.c.b16 %v1100, %v1098
        %v1155 = vpack.c.b16 %v1103, %v1101
        %v1156 = vpack.c.b16 %v1104, %v1102
        %v1157 = vpack.c.b16 %v1107, %v1105
        %v1158 = vpack.c.b16 %v1108, %v1106
        %v1159 = vpack.c.b16 %v1111, %v1109
        %v1160 = vpack.c.b16 %v1112, %v1110
        %v1161 = vpack.c.b16 %v1115, %v1113
        %v1162 = vpack.c.b16 %v1116, %v1114
        %v1163 = vpack.c.b16 %v1119, %v1117
        %v1164 = vpack.c.b16 %v1120, %v1118
        %v1165 = vpack.c.b16 %v1123, %v1121
        %v1166 = vpack.c.b16 %v1124, %v1122
        %v1167 = vpack.c.b16 %v1127, %v1125
        %v1168 = vpack.c.b16 %v1128, %v1126
        %v1169 = vpack.c.b16 %v1131, %v1129
        %v1170 = vpack.c.b16 %v1132, %v1130
        %v1171 = vpack.c.b16 %v1135, %v1133
        %v1172 = vpack.c.b16 %v1136, %v1134
        %v1173 = vpack.c.b16 %v1139, %v1137
        %v1174 = vpack.c.b16 %v1140, %v1138
        %v1175 = vpack.c.b16 %v1143, %v1141
        %v1176 = vpack.c.b16 %v1144, %v1142
        %1209 = vmatprep.subr.bf16.mxu0 0
        %1210 = vmatpush1.bf16.msra.mxu0 %v1040
        %1211 = vmatprep.subr.bf16.mxu0 0
        %1212 = vmatpush1.bf16.msra.mxu0 %v1039
        %1213 = vmatprep.subr.bf16.mxu0 0
        %1214 = vmatpush1.bf16.msra.mxu0 %v1038
        %1215 = vmatprep.subr.bf16.mxu0 0
        %1216 = vmatpush1.bf16.msra.mxu0 %v1037
        %1217 = vmatprep.subr.bf16.mxu0 0
        %1218 = vmatpush1.bf16.msra.mxu0 %v1036
        %1219 = vmatprep.subr.bf16.mxu0 0
        %1220 = vmatpush1.bf16.msra.mxu0 %v1035
        %1221 = vmatprep.subr.bf16.mxu0 0
        %1222 = vmatpush1.bf16.msra.mxu0 %v1034
        %1223 = vmatprep.subr.bf16.mxu0 0
        %1224 = vmatpush1.bf16.msra.mxu0 %v1033
        %1225 = vmatprep.subr.bf16.mxu0 0
        %1226 = vmatpush2.bf16.msra.mxu0 %v1048
        %1227 = vmatprep.subr.bf16.mxu0 0
        %1228 = vmatpush2.bf16.msra.mxu0 %v1047
        %1229 = vmatprep.subr.bf16.mxu0 0
        %1230 = vmatpush2.bf16.msra.mxu0 %v1046
        %1231 = vmatprep.subr.bf16.mxu0 0
        %1232 = vmatpush2.bf16.msra.mxu0 %v1045
        %1233 = vmatprep.subr.bf16.mxu0 0
        %1234 = vmatpush2.bf16.msra.mxu0 %v1044
        %1235 = vmatprep.subr.bf16.mxu0 0
        %1236 = vmatpush2.bf16.msra.mxu0 %v1043
        %1237 = vmatprep.subr.bf16.mxu0 0
        %1238 = vmatpush2.bf16.msra.mxu0 %v1042
        %1239 = vmatprep.subr.bf16.mxu0 0
        %1240 = vmatpush2.bf16.msra.mxu0 %v1041
        %1241 = vmatprep.mubr.bf16.mxu0 %v1146
        %1242 = vmatmul.mubr.bf16.gmra.mxu0 %v1145
        %v1243 = vpop.f32.mrf.mxu0
        %v1244 = vadd.f32 0.0, %v1243
        %v1245 = vpop.f32.mrf.mxu0
        %v1246 = vpop.f32.mrf.mxu0
        %v1247 = vadd.f32 0.0, %v1246
        %v1248 = vpop.f32.mrf.mxu0
        %1249 = vmatprep.mubr.bf16.mxu0 %v1148
        %1250 = vmatmul.mubr.bf16.gmra.mxu0 %v1147
        %v1251 = vpop.f32.mrf.mxu0
        %v1252 = vadd.f32 0.0, %v1251
        %v1253 = vpop.f32.mrf.mxu0
        %v1254 = vpop.f32.mrf.mxu0
        %v1255 = vadd.f32 0.0, %v1254
        %v1256 = vpop.f32.mrf.mxu0
        %1257 = vmatprep.mubr.bf16.mxu0 %v1150
        %1258 = vmatmul.mubr.bf16.gmra.mxu0 %v1149
        %v1259 = vpop.f32.mrf.mxu0
        %v1260 = vadd.f32 0.0, %v1259
        %v1261 = vpop.f32.mrf.mxu0
        %v1262 = vpop.f32.mrf.mxu0
        %v1263 = vadd.f32 0.0, %v1262
        %v1264 = vpop.f32.mrf.mxu0
        %1265 = vmatprep.mubr.bf16.mxu0 %v1152
        %1266 = vmatmul.mubr.bf16.gmra.mxu0 %v1151
        %v1267 = vpop.f32.mrf.mxu0
        %v1268 = vadd.f32 0.0, %v1267
        %v1269 = vpop.f32.mrf.mxu0
        %v1270 = vpop.f32.mrf.mxu0
        %v1271 = vadd.f32 0.0, %v1270
        %v1272 = vpop.f32.mrf.mxu0
        %1273 = vmatprep.mubr.bf16.mxu0 %v1154
        %1274 = vmatmul.mubr.bf16.gmra.mxu0 %v1153
        %v1275 = vpop.f32.mrf.mxu0
        %v1276 = vadd.f32 0.0, %v1275
        %v1277 = vpop.f32.mrf.mxu0
        %v1278 = vpop.f32.mrf.mxu0
        %v1279 = vadd.f32 0.0, %v1278
        %v1280 = vpop.f32.mrf.mxu0
        %1281 = vmatprep.mubr.bf16.mxu0 %v1156
        %1282 = vmatmul.mubr.bf16.gmra.mxu0 %v1155
        %v1283 = vpop.f32.mrf.mxu0
        %v1284 = vadd.f32 0.0, %v1283
        %v1285 = vpop.f32.mrf.mxu0
        %v1286 = vpop.f32.mrf.mxu0
        %v1287 = vadd.f32 0.0, %v1286
        %v1288 = vpop.f32.mrf.mxu0
        %1289 = vmatprep.mubr.bf16.mxu0 %v1158
        %1290 = vmatmul.mubr.bf16.gmra.mxu0 %v1157
        %v1291 = vpop.f32.mrf.mxu0
        %v1292 = vadd.f32 0.0, %v1291
        %v1293 = vpop.f32.mrf.mxu0
        %v1294 = vpop.f32.mrf.mxu0
        %v1295 = vadd.f32 0.0, %v1294
        %v1296 = vpop.f32.mrf.mxu0
        %1297 = vmatprep.mubr.bf16.mxu0 %v1160
        %1298 = vmatmul.mubr.bf16.gmra.mxu0 %v1159
        %v1299 = vpop.f32.mrf.mxu0
        %v1300 = vadd.f32 0.0, %v1299
        %v1301 = vpop.f32.mrf.mxu0
        %v1302 = vpop.f32.mrf.mxu0
        %v1303 = vadd.f32 0.0, %v1302
        %v1304 = vpop.f32.mrf.mxu0
        %1305 = vmatprep.mubr.bf16.mxu0 %v1162
        %1306 = vmatmul.mubr.bf16.gmra.mxu0 %v1161
        %v1307 = vpop.f32.mrf.mxu0
        %v1308 = vadd.f32 0.0, %v1307
        %v1309 = vpop.f32.mrf.mxu0
        %v1310 = vpop.f32.mrf.mxu0
        %v1311 = vadd.f32 0.0, %v1310
        %v1312 = vpop.f32.mrf.mxu0
        %1313 = vmatprep.mubr.bf16.mxu0 %v1164
        %1314 = vmatmul.mubr.bf16.gmra.mxu0 %v1163
        %v1315 = vpop.f32.mrf.mxu0
        %v1316 = vadd.f32 0.0, %v1315
        %v1317 = vpop.f32.mrf.mxu0
        %v1318 = vpop.f32.mrf.mxu0
        %v1319 = vadd.f32 0.0, %v1318
        %v1320 = vpop.f32.mrf.mxu0
        %1321 = vmatprep.mubr.bf16.mxu0 %v1166
        %1322 = vmatmul.mubr.bf16.gmra.mxu0 %v1165
        %v1323 = vpop.f32.mrf.mxu0
        %v1324 = vadd.f32 0.0, %v1323
        %v1325 = vpop.f32.mrf.mxu0
        %v1326 = vpop.f32.mrf.mxu0
        %v1327 = vadd.f32 0.0, %v1326
        %v1328 = vpop.f32.mrf.mxu0
        %1329 = vmatprep.mubr.bf16.mxu0 %v1168
        %1330 = vmatmul.mubr.bf16.gmra.mxu0 %v1167
        %v1331 = vpop.f32.mrf.mxu0
        %v1332 = vadd.f32 0.0, %v1331
        %v1333 = vpop.f32.mrf.mxu0
        %v1334 = vpop.f32.mrf.mxu0
        %v1335 = vadd.f32 0.0, %v1334
        %v1336 = vpop.f32.mrf.mxu0
        %1337 = vmatprep.mubr.bf16.mxu0 %v1170
        %1338 = vmatmul.mubr.bf16.gmra.mxu0 %v1169
        %v1339 = vpop.f32.mrf.mxu0
        %v1340 = vadd.f32 0.0, %v1339
        %v1341 = vpop.f32.mrf.mxu0
        %v1342 = vpop.f32.mrf.mxu0
        %v1343 = vadd.f32 0.0, %v1342
        %v1344 = vpop.f32.mrf.mxu0
        %1345 = vmatprep.mubr.bf16.mxu0 %v1172
        %1346 = vmatmul.mubr.bf16.gmra.mxu0 %v1171
        %v1347 = vpop.f32.mrf.mxu0
        %v1348 = vadd.f32 0.0, %v1347
        %v1349 = vpop.f32.mrf.mxu0
        %v1350 = vpop.f32.mrf.mxu0
        %v1351 = vadd.f32 0.0, %v1350
        %v1352 = vpop.f32.mrf.mxu0
        %1353 = vmatprep.mubr.bf16.mxu0 %v1174
        %1354 = vmatmul.mubr.bf16.gmra.mxu0 %v1173
        %v1355 = vpop.f32.mrf.mxu0
        %v1356 = vadd.f32 0.0, %v1355
        %v1357 = vpop.f32.mrf.mxu0
        %v1358 = vpop.f32.mrf.mxu0
        %v1359 = vadd.f32 0.0, %v1358
        %v1360 = vpop.f32.mrf.mxu0
        %1361 = vmatprep.mubr.bf16.mxu0 %v1176
        %1362 = vmatmul.mubr.bf16.gmra.mxu0 %v1175
        %v1363 = vpop.f32.mrf.mxu0
        %v1364 = vadd.f32 0.0, %v1363
        %v1365 = vpop.f32.mrf.mxu0
        %v1366 = vpop.f32.mrf.mxu0
        %v1367 = vadd.f32 0.0, %v1366
        %v1368 = vpop.f32.mrf.mxu0
        %1369 = vdwg.mxu0
        %v1370 = vadd.f32 %v969, %v1244
        %v1371 = vadd.f32 %v970, %v1247
        %v1372 = vadd.f32 %v971, %v1252
        %v1373 = vadd.f32 %v972, %v1255
        %v1374 = vadd.f32 %v973, %v1260
        %v1375 = vadd.f32 %v974, %v1263
        %v1376 = vadd.f32 %v975, %v1268
        %v1377 = vadd.f32 %v976, %v1271
        %v1378 = vadd.f32 %v977, %v1276
        %v1379 = vadd.f32 %v978, %v1279
        %v1380 = vadd.f32 %v979, %v1284
        %v1381 = vadd.f32 %v980, %v1287
        %v1382 = vadd.f32 %v981, %v1292
        %v1383 = vadd.f32 %v982, %v1295
        %v1384 = vadd.f32 %v983, %v1300
        %v1385 = vadd.f32 %v984, %v1303
        %v1386 = vadd.f32 %v985, %v1308
        %v1387 = vadd.f32 %v986, %v1311
        %v1388 = vadd.f32 %v987, %v1316
        %v1389 = vadd.f32 %v988, %v1319
        %v1390 = vadd.f32 %v989, %v1324
        %v1391 = vadd.f32 %v990, %v1327
        %v1392 = vadd.f32 %v991, %v1332
        %v1393 = vadd.f32 %v992, %v1335
        %v1394 = vadd.f32 %v993, %v1340
        %v1395 = vadd.f32 %v994, %v1343
        %v1396 = vadd.f32 %v995, %v1348
        %v1397 = vadd.f32 %v996, %v1351
        %v1398 = vadd.f32 %v997, %v1356
        %v1399 = vadd.f32 %v998, %v1359
        %v1400 = vadd.f32 %v999, %v1364
        %v1401 = vadd.f32 %v1000, %v1367
        %1402 = vst [vmem:[#allocation2] sm:$0xff] %v1370
        %1403 = vst [vmem:[#allocation2 + $0x8] sm:$0xff] %v1371
        %1404 = vst [vmem:[#allocation2 + $0x10] sm:$0xff] %v1372
        %1405 = vst [vmem:[#allocation2 + $0x18] sm:$0xff] %v1373
        %1406 = vst [vmem:[#allocation2 + $0x20] sm:$0xff] %v1374
        %1407 = vst [vmem:[#allocation2 + $0x28] sm:$0xff] %v1375
        %1408 = vst [vmem:[#allocation2 + $0x30] sm:$0xff] %v1376
        %1409 = vst [vmem:[#allocation2 + $0x38] sm:$0xff] %v1377
        %1410 = vst [vmem:[#allocation2 + $0x40] sm:$0xff] %v1378
        %1411 = vst [vmem:[#allocation2 + $0x48] sm:$0xff] %v1379
        %1412 = vst [vmem:[#allocation2 + $0x50] sm:$0xff] %v1380
        %1413 = vst [vmem:[#allocation2 + $0x58] sm:$0xff] %v1381
        %1414 = vst [vmem:[#allocation2 + $0x60] sm:$0xff] %v1382
        %1415 = vst [vmem:[#allocation2 + $0x68] sm:$0xff] %v1383
        %1416 = vst [vmem:[#allocation2 + $0x70] sm:$0xff] %v1384
        %1417 = vst [vmem:[#allocation2 + $0x78] sm:$0xff] %v1385
        %1418 = vst [vmem:[#allocation2 + $0x80] sm:$0xff] %v1386
        %1419 = vst [vmem:[#allocation2 + $0x88] sm:$0xff] %v1387
        %1420 = vst [vmem:[#allocation2 + $0x90] sm:$0xff] %v1388
        %1421 = vst [vmem:[#allocation2 + $0x98] sm:$0xff] %v1389
        %1422 = vst [vmem:[#allocation2 + $0xa0] sm:$0xff] %v1390
        %1423 = vst [vmem:[#allocation2 + $0xa8] sm:$0xff] %v1391
        %1424 = vst [vmem:[#allocation2 + $0xb0] sm:$0xff] %v1392
        %1425 = vst [vmem:[#allocation2 + $0xb8] sm:$0xff] %v1393
        %1426 = vst [vmem:[#allocation2 + $0xc0] sm:$0xff] %v1394
        %1427 = vst [vmem:[#allocation2 + $0xc8] sm:$0xff] %v1395
        %1428 = vst [vmem:[#allocation2 + $0xd0] sm:$0xff] %v1396
        %1429 = vst [vmem:[#allocation2 + $0xd8] sm:$0xff] %v1397
        %1430 = vst [vmem:[#allocation2 + $0xe0] sm:$0xff] %v1398
        %1431 = vst [vmem:[#allocation2 + $0xe8] sm:$0xff] %v1399
        %1432 = vst [vmem:[#allocation2 + $0xf0] sm:$0xff] %v1400
        %1433 = vst [vmem:[#allocation2 + $0xf8] sm:$0xff] %v1401
        %p1434 = scmp.eq.s32.totalorder %s25, 1
        // Predicated region
        $region99: #{fwd.6} parent=89 // pred_check
          %p1435 = pneg %p1434
        $region100: #{fwd.6} parent=89 // pred_check_branch
          %1437 = sbr.rel (%p1435) target = $region102
        $region101: #{fwd.6} parent=89 // pred_region
          %v1438 = vld [vmem:[%s565] sm:$0xf]
          %v1439 = vld [vmem:[%s565 + $0x4] sm:$0xf]
          %v1440 = vld [vmem:[%s565 + $0x8] sm:$0xf]
          %v1441 = vld [vmem:[%s565 + $0xc] sm:$0xf]
          %v1442 = vld [vmem:[%s565 + $0x10] sm:$0xf]
          %v1443 = vld [vmem:[%s565 + $0x14] sm:$0xf]
          %v1444 = vld [vmem:[%s565 + $0x18] sm:$0xf]
          %v1445 = vld [vmem:[%s565 + $0x1c] sm:$0xf]
          %v1446 = vld [vmem:[%s565 + $0x20] sm:$0xf]
          %v1447 = vld [vmem:[%s565 + $0x24] sm:$0xf]
          %v1448 = vld [vmem:[%s565 + $0x28] sm:$0xf]
          %v1449 = vld [vmem:[%s565 + $0x2c] sm:$0xf]
          %v1450 = vld [vmem:[%s565 + $0x30] sm:$0xf]
          %v1451 = vld [vmem:[%s565 + $0x34] sm:$0xf]
          %v1452 = vld [vmem:[%s565 + $0x38] sm:$0xf]
          %v1453 = vld [vmem:[%s565 + $0x3c] sm:$0xf]
          %v1454 = vld [vmem:[%s565 + $0x40] sm:$0xf]
          %v1455 = vld [vmem:[%s565 + $0x44] sm:$0xf]
          %v1456 = vld [vmem:[%s565 + $0x48] sm:$0xf]
          %v1457 = vld [vmem:[%s565 + $0x4c] sm:$0xf]
          %v1458 = vld [vmem:[%s565 + $0x50] sm:$0xf]
          %v1459 = vld [vmem:[%s565 + $0x54] sm:$0xf]
          %v1460 = vld [vmem:[%s565 + $0x58] sm:$0xf]
          %v1461 = vld [vmem:[%s565 + $0x5c] sm:$0xf]
          %v1462 = vld [vmem:[%s565 + $0x60] sm:$0xf]
          %v1463 = vld [vmem:[%s565 + $0x64] sm:$0xf]
          %v1464 = vld [vmem:[%s565 + $0x68] sm:$0xf]
          %v1465 = vld [vmem:[%s565 + $0x6c] sm:$0xf]
          %v1466 = vld [vmem:[%s565 + $0x70] sm:$0xf]
          %v1467 = vld [vmem:[%s565 + $0x74] sm:$0xf]
          %v1468 = vld [vmem:[%s565 + $0x78] sm:$0xf]
          %v1469 = vld [vmem:[%s565 + $0x7c] sm:$0xf]
          %v1470 = vld [vmem:[%s4] sm:$0xf]
          %v1471 = vld [vmem:[%s4 + $0x4] sm:$0xf]
          %v1472 = vld [vmem:[%s4 + $0x8] sm:$0xf]
          %v1473 = vld [vmem:[%s4 + $0xc] sm:$0xf]
          %v1474 = vld [vmem:[%s4 + $0x10] sm:$0xf]
          %v1475 = vld [vmem:[%s4 + $0x14] sm:$0xf]
          %v1476 = vld [vmem:[%s4 + $0x18] sm:$0xf]
          %v1477 = vld [vmem:[%s4 + $0x1c] sm:$0xf]
          %v1478 = vld [vmem:[%s4 + $0x20] sm:$0xf]
          %v1479 = vld [vmem:[%s4 + $0x24] sm:$0xf]
          %v1480 = vld [vmem:[%s4 + $0x28] sm:$0xf]
          %v1481 = vld [vmem:[%s4 + $0x2c] sm:$0xf]
          %v1482 = vld [vmem:[%s4 + $0x30] sm:$0xf]
          %v1483 = vld [vmem:[%s4 + $0x34] sm:$0xf]
          %v1484 = vld [vmem:[%s4 + $0x38] sm:$0xf]
          %v1485 = vld [vmem:[%s4 + $0x3c] sm:$0xf]
          %v1486 = vld [vmem:[%s5] sm:$0x1]
          %v1488 = vlaneseq
          %v1489 = vshrl.u32 %v1488, 7
          %v1490 = vsub.s32 0, %v1489
          %v1491 = vrot.slane %v1486, %v1490
          %v1525 = vunpack.c.l.b16 %v1438
          %v1526 = vunpack.c.l.b16 %v1439
          %v1527 = vunpack.c.l.b16 %v1440
          %v1528 = vunpack.c.l.b16 %v1441
          %v1529 = vunpack.c.l.b16 %v1442
          %v1530 = vunpack.c.l.b16 %v1443
          %v1531 = vunpack.c.l.b16 %v1444
          %v1532 = vunpack.c.l.b16 %v1445
          %v1533 = vunpack.c.l.b16 %v1446
          %v1534 = vunpack.c.l.b16 %v1447
          %v1535 = vunpack.c.l.b16 %v1448
          %v1536 = vunpack.c.l.b16 %v1449
          %v1537 = vunpack.c.l.b16 %v1450
          %v1538 = vunpack.c.l.b16 %v1451
          %v1539 = vunpack.c.l.b16 %v1452
          %v1540 = vunpack.c.l.b16 %v1453
          %v1541 = vunpack.c.l.b16 %v1454
          %v1542 = vunpack.c.l.b16 %v1455
          %v1543 = vunpack.c.l.b16 %v1456
          %v1544 = vunpack.c.l.b16 %v1457
          %v1545 = vunpack.c.l.b16 %v1458
          %v1546 = vunpack.c.l.b16 %v1459
          %v1547 = vunpack.c.l.b16 %v1460
          %v1548 = vunpack.c.l.b16 %v1461
          %v1549 = vunpack.c.l.b16 %v1462
          %v1550 = vunpack.c.l.b16 %v1463
          %v1551 = vunpack.c.l.b16 %v1464
          %v1552 = vunpack.c.l.b16 %v1465
          %v1553 = vunpack.c.l.b16 %v1466
          %v1554 = vunpack.c.l.b16 %v1467
          %v1555 = vunpack.c.l.b16 %v1468
          %v1556 = vunpack.c.l.b16 %v1469
          %v1557 = vpack.c.b16 %v1526, %v1525
          %v1558 = vpack.c.b16 %v1528, %v1527
          %v1559 = vpack.c.b16 %v1530, %v1529
          %v1560 = vpack.c.b16 %v1532, %v1531
          %v1561 = vpack.c.b16 %v1534, %v1533
          %v1562 = vpack.c.b16 %v1536, %v1535
          %v1563 = vpack.c.b16 %v1538, %v1537
          %v1564 = vpack.c.b16 %v1540, %v1539
          %v1565 = vpack.c.b16 %v1542, %v1541
          %v1566 = vpack.c.b16 %v1544, %v1543
          %v1567 = vpack.c.b16 %v1546, %v1545
          %v1568 = vpack.c.b16 %v1548, %v1547
          %v1569 = vpack.c.b16 %v1550, %v1549
          %v1570 = vpack.c.b16 %v1552, %v1551
          %v1571 = vpack.c.b16 %v1554, %v1553
          %v1572 = vpack.c.b16 %v1556, %v1555
          %v1605 = vunpack.c.l.b16 %v1470
          %v1606 = vunpack.c.l.b16 %v1471
          %v1607 = vunpack.c.l.b16 %v1472
          %v1608 = vunpack.c.l.b16 %v1473
          %v1609 = vunpack.c.l.b16 %v1474
          %v1610 = vunpack.c.l.b16 %v1475
          %v1611 = vunpack.c.l.b16 %v1476
          %v1612 = vunpack.c.l.b16 %v1477
          %v1613 = vunpack.c.l.b16 %v1478
          %v1614 = vunpack.c.l.b16 %v1479
          %v1615 = vunpack.c.l.b16 %v1480
          %v1616 = vunpack.c.l.b16 %v1481
          %v1617 = vunpack.c.l.b16 %v1482
          %v1618 = vunpack.c.l.b16 %v1483
          %v1619 = vunpack.c.l.b16 %v1484
          %v1620 = vunpack.c.l.b16 %v1485
          %v1621 = vpack.c.b16 %v1606, %v1605
          %v1622 = vpack.c.b16 %v1608, %v1607
          %v1623 = vpack.c.b16 %v1610, %v1609
          %v1624 = vpack.c.b16 %v1612, %v1611
          %v1625 = vpack.c.b16 %v1614, %v1613
          %v1626 = vpack.c.b16 %v1616, %v1615
          %v1627 = vpack.c.b16 %v1618, %v1617
          %v1628 = vpack.c.b16 %v1620, %v1619
          %1637 = vmatprep.subr.bf16.mxu0 0
          %1638 = vmatpush1.bf16.msra.mxu0 %v1628
          %1639 = vmatprep.subr.bf16.mxu0 0
          %1640 = vmatpush1.bf16.msra.mxu0 %v1627
          %1641 = vmatprep.subr.bf16.mxu0 0
          %1642 = vmatpush1.bf16.msra.mxu0 %v1626
          %1643 = vmatprep.subr.bf16.mxu0 0
          %1644 = vmatpush1.bf16.msra.mxu0 %v1625
          %1645 = vmatprep.subr.bf16.mxu0 0
          %1646 = vmatpush1.bf16.msra.mxu0 %v1624
          %1647 = vmatprep.subr.bf16.mxu0 0
          %1648 = vmatpush1.bf16.msra.mxu0 %v1623
          %1649 = vmatprep.subr.bf16.mxu0 0
          %1650 = vmatpush1.bf16.msra.mxu0 %v1622
          %1651 = vmatprep.subr.bf16.mxu0 0
          %1652 = vmatpush1.bf16.msra.mxu0 %v1621
          %1653 = vmatprep.subr.bf16.mxu0 0
          %1654 = vmatpush2.bf16.msra.mxu0 0
          %1655 = vmatprep.subr.bf16.mxu0 0
          %1656 = vmatpush2.bf16.msra.mxu0 0
          %1657 = vmatprep.subr.bf16.mxu0 0
          %1658 = vmatpush2.bf16.msra.mxu0 0
          %1659 = vmatprep.subr.bf16.mxu0 0
          %1660 = vmatpush2.bf16.msra.mxu0 0
          %1661 = vmatprep.subr.bf16.mxu0 0
          %1662 = vmatpush2.bf16.msra.mxu0 0
          %1663 = vmatprep.subr.bf16.mxu0 0
          %1664 = vmatpush2.bf16.msra.mxu0 0
          %1665 = vmatprep.subr.bf16.mxu0 0
          %1666 = vmatpush2.bf16.msra.mxu0 0
          %1667 = vmatprep.subr.bf16.mxu0 0
          %1668 = vmatpush2.bf16.msra.mxu0 0
          %1669 = vmatprep.mubr.bf16.mxu0 0
          %1670 = vmatmul.mubr.bf16.gmra.mxu0 %v1557
          %v1671 = vpop.f32.mrf.mxu0
          %v1672 = vadd.f32 %v1491, %v1671
          %v1673 = vpop.f32.mrf.mxu0
          %v1674 = vpop.f32.mrf.mxu0
          %v1675 = vadd.f32 %v1491, %v1674
          %v1676 = vpop.f32.mrf.mxu0
          %1677 = vmatprep.mubr.bf16.mxu0 0
          %1678 = vmatmul.mubr.bf16.gmra.mxu0 %v1558
          %v1679 = vpop.f32.mrf.mxu0
          %v1680 = vadd.f32 %v1491, %v1679
          %v1681 = vpop.f32.mrf.mxu0
          %v1682 = vpop.f32.mrf.mxu0
          %v1683 = vadd.f32 %v1491, %v1682
          %v1684 = vpop.f32.mrf.mxu0
          %1685 = vmatprep.mubr.bf16.mxu0 0
          %1686 = vmatmul.mubr.bf16.gmra.mxu0 %v1559
          %v1687 = vpop.f32.mrf.mxu0
          %v1688 = vadd.f32 %v1491, %v1687
          %v1689 = vpop.f32.mrf.mxu0
          %v1690 = vpop.f32.mrf.mxu0
          %v1691 = vadd.f32 %v1491, %v1690
          %v1692 = vpop.f32.mrf.mxu0
          %1693 = vmatprep.mubr.bf16.mxu0 0
          %1694 = vmatmul.mubr.bf16.gmra.mxu0 %v1560
          %v1695 = vpop.f32.mrf.mxu0
          %v1696 = vadd.f32 %v1491, %v1695
          %v1697 = vpop.f32.mrf.mxu0
          %v1698 = vpop.f32.mrf.mxu0
          %v1699 = vadd.f32 %v1491, %v1698
          %v1700 = vpop.f32.mrf.mxu0
          %1701 = vmatprep.mubr.bf16.mxu0 0
          %1702 = vmatmul.mubr.bf16.gmra.mxu0 %v1561
          %v1703 = vpop.f32.mrf.mxu0
          %v1704 = vadd.f32 %v1491, %v1703
          %v1705 = vpop.f32.mrf.mxu0
          %v1706 = vpop.f32.mrf.mxu0
          %v1707 = vadd.f32 %v1491, %v1706
          %v1708 = vpop.f32.mrf.mxu0
          %1709 = vmatprep.mubr.bf16.mxu0 0
          %1710 = vmatmul.mubr.bf16.gmra.mxu0 %v1562
          %v1711 = vpop.f32.mrf.mxu0
          %v1712 = vadd.f32 %v1491, %v1711
          %v1713 = vpop.f32.mrf.mxu0
          %v1714 = vpop.f32.mrf.mxu0
          %v1715 = vadd.f32 %v1491, %v1714
          %v1716 = vpop.f32.mrf.mxu0
          %1717 = vmatprep.mubr.bf16.mxu0 0
          %1718 = vmatmul.mubr.bf16.gmra.mxu0 %v1563
          %v1719 = vpop.f32.mrf.mxu0
          %v1720 = vadd.f32 %v1491, %v1719
          %v1721 = vpop.f32.mrf.mxu0
          %v1722 = vpop.f32.mrf.mxu0
          %v1723 = vadd.f32 %v1491, %v1722
          %v1724 = vpop.f32.mrf.mxu0
          %1725 = vmatprep.mubr.bf16.mxu0 0
          %1726 = vmatmul.mubr.bf16.gmra.mxu0 %v1564
          %v1727 = vpop.f32.mrf.mxu0
          %v1728 = vadd.f32 %v1491, %v1727
          %v1729 = vpop.f32.mrf.mxu0
          %v1730 = vpop.f32.mrf.mxu0
          %v1731 = vadd.f32 %v1491, %v1730
          %v1732 = vpop.f32.mrf.mxu0
          %1733 = vmatprep.mubr.bf16.mxu0 0
          %1734 = vmatmul.mubr.bf16.gmra.mxu0 %v1565
          %v1735 = vpop.f32.mrf.mxu0
          %v1736 = vadd.f32 %v1491, %v1735
          %v1737 = vpop.f32.mrf.mxu0
          %v1738 = vpop.f32.mrf.mxu0
          %v1739 = vadd.f32 %v1491, %v1738
          %v1740 = vpop.f32.mrf.mxu0
          %1741 = vmatprep.mubr.bf16.mxu0 0
          %1742 = vmatmul.mubr.bf16.gmra.mxu0 %v1566
          %v1743 = vpop.f32.mrf.mxu0
          %v1744 = vadd.f32 %v1491, %v1743
          %v1745 = vpop.f32.mrf.mxu0
          %v1746 = vpop.f32.mrf.mxu0
          %v1747 = vadd.f32 %v1491, %v1746
          %v1748 = vpop.f32.mrf.mxu0
          %1749 = vmatprep.mubr.bf16.mxu0 0
          %1750 = vmatmul.mubr.bf16.gmra.mxu0 %v1567
          %v1751 = vpop.f32.mrf.mxu0
          %v1752 = vadd.f32 %v1491, %v1751
          %v1753 = vpop.f32.mrf.mxu0
          %v1754 = vpop.f32.mrf.mxu0
          %v1755 = vadd.f32 %v1491, %v1754
          %v1756 = vpop.f32.mrf.mxu0
          %1757 = vmatprep.mubr.bf16.mxu0 0
          %1758 = vmatmul.mubr.bf16.gmra.mxu0 %v1568
          %v1759 = vpop.f32.mrf.mxu0
          %v1760 = vadd.f32 %v1491, %v1759
          %v1761 = vpop.f32.mrf.mxu0
          %v1762 = vpop.f32.mrf.mxu0
          %v1763 = vadd.f32 %v1491, %v1762
          %v1764 = vpop.f32.mrf.mxu0
          %1765 = vmatprep.mubr.bf16.mxu0 0
          %1766 = vmatmul.mubr.bf16.gmra.mxu0 %v1569
          %v1767 = vpop.f32.mrf.mxu0
          %v1768 = vadd.f32 %v1491, %v1767
          %v1769 = vpop.f32.mrf.mxu0
          %v1770 = vpop.f32.mrf.mxu0
          %v1771 = vadd.f32 %v1491, %v1770
          %v1772 = vpop.f32.mrf.mxu0
          %1773 = vmatprep.mubr.bf16.mxu0 0
          %1774 = vmatmul.mubr.bf16.gmra.mxu0 %v1570
          %v1775 = vpop.f32.mrf.mxu0
          %v1776 = vadd.f32 %v1491, %v1775
          %v1777 = vpop.f32.mrf.mxu0
          %v1778 = vpop.f32.mrf.mxu0
          %v1779 = vadd.f32 %v1491, %v1778
          %v1780 = vpop.f32.mrf.mxu0
          %1781 = vmatprep.mubr.bf16.mxu0 0
          %1782 = vmatmul.mubr.bf16.gmra.mxu0 %v1571
          %v1783 = vpop.f32.mrf.mxu0
          %v1784 = vadd.f32 %v1491, %v1783
          %v1785 = vpop.f32.mrf.mxu0
          %v1786 = vpop.f32.mrf.mxu0
          %v1787 = vadd.f32 %v1491, %v1786
          %v1788 = vpop.f32.mrf.mxu0
          %1789 = vmatprep.mubr.bf16.mxu0 0
          %1790 = vmatmul.mubr.bf16.gmra.mxu0 %v1572
          %v1791 = vpop.f32.mrf.mxu0
          %v1792 = vadd.f32 %v1491, %v1791
          %v1793 = vpop.f32.mrf.mxu0
          %v1794 = vpop.f32.mrf.mxu0
          %v1795 = vadd.f32 %v1491, %v1794
          %v1796 = vpop.f32.mrf.mxu0
          %1797 = vdwg.mxu0
          %vm1798 = vcmp.ge.f32.partialorder %v1672, 0.0
          %vm1799 = vcmp.ge.f32.partialorder %v1675, 0.0
          %vm1800 = vcmp.ge.f32.partialorder %v1680, 0.0
          %vm1801 = vcmp.ge.f32.partialorder %v1683, 0.0
          %vm1802 = vcmp.ge.f32.partialorder %v1688, 0.0
          %vm1803 = vcmp.ge.f32.partialorder %v1691, 0.0
          %vm1804 = vcmp.ge.f32.partialorder %v1696, 0.0
          %vm1805 = vcmp.ge.f32.partialorder %v1699, 0.0
          %vm1806 = vcmp.ge.f32.partialorder %v1704, 0.0
          %vm1807 = vcmp.ge.f32.partialorder %v1707, 0.0
          %vm1808 = vcmp.ge.f32.partialorder %v1712, 0.0
          %vm1809 = vcmp.ge.f32.partialorder %v1715, 0.0
          %vm1810 = vcmp.ge.f32.partialorder %v1720, 0.0
          %vm1811 = vcmp.ge.f32.partialorder %v1723, 0.0
          %vm1812 = vcmp.ge.f32.partialorder %v1728, 0.0
          %vm1813 = vcmp.ge.f32.partialorder %v1731, 0.0
          %vm1814 = vcmp.ge.f32.partialorder %v1736, 0.0
          %vm1815 = vcmp.ge.f32.partialorder %v1739, 0.0
          %vm1816 = vcmp.ge.f32.partialorder %v1744, 0.0
          %vm1817 = vcmp.ge.f32.partialorder %v1747, 0.0
          %vm1818 = vcmp.ge.f32.partialorder %v1752, 0.0
          %vm1819 = vcmp.ge.f32.partialorder %v1755, 0.0
          %vm1820 = vcmp.ge.f32.partialorder %v1760, 0.0
          %vm1821 = vcmp.ge.f32.partialorder %v1763, 0.0
          %vm1822 = vcmp.ge.f32.partialorder %v1768, 0.0
          %vm1823 = vcmp.ge.f32.partialorder %v1771, 0.0
          %vm1824 = vcmp.ge.f32.partialorder %v1776, 0.0
          %vm1825 = vcmp.ge.f32.partialorder %v1779, 0.0
          %vm1826 = vcmp.ge.f32.partialorder %v1784, 0.0
          %vm1827 = vcmp.ge.f32.partialorder %v1787, 0.0
          %vm1828 = vcmp.ge.f32.partialorder %v1792, 0.0
          %vm1829 = vcmp.ge.f32.partialorder %v1795, 0.0
          %v1830 = vmul.f32 %v1672, 0.01
          %v1831 = vmul.f32 %v1675, 0.01
          %v1832 = vmul.f32 %v1680, 0.01
          %v1833 = vmul.f32 %v1683, 0.01
          %v1834 = vmul.f32 %v1688, 0.01
          %v1835 = vmul.f32 %v1691, 0.01
          %v1836 = vmul.f32 %v1696, 0.01
          %v1837 = vmul.f32 %v1699, 0.01
          %v1838 = vmul.f32 %v1704, 0.01
          %v1839 = vmul.f32 %v1707, 0.01
          %v1840 = vmul.f32 %v1712, 0.01
          %v1841 = vmul.f32 %v1715, 0.01
          %v1842 = vmul.f32 %v1720, 0.01
          %v1843 = vmul.f32 %v1723, 0.01
          %v1844 = vmul.f32 %v1728, 0.01
          %v1845 = vmul.f32 %v1731, 0.01
          %v1846 = vmul.f32 %v1736, 0.01
          %v1847 = vmul.f32 %v1739, 0.01
          %v1848 = vmul.f32 %v1744, 0.01
          %v1849 = vmul.f32 %v1747, 0.01
          %v1850 = vmul.f32 %v1752, 0.01
          %v1851 = vmul.f32 %v1755, 0.01
          %v1852 = vmul.f32 %v1760, 0.01
          %v1853 = vmul.f32 %v1763, 0.01
          %v1854 = vmul.f32 %v1768, 0.01
          %v1855 = vmul.f32 %v1771, 0.01
          %v1856 = vmul.f32 %v1776, 0.01
          %v1857 = vmul.f32 %v1779, 0.01
          %v1858 = vmul.f32 %v1784, 0.01
          %v1859 = vmul.f32 %v1787, 0.01
          %v1860 = vmul.f32 %v1792, 0.01
          %v1861 = vmul.f32 %v1795, 0.01
          %v1862 = vsel %vm1798, %v1672, %v1830
          %v1863 = vsel %vm1799, %v1675, %v1831
          %v1864 = vsel %vm1800, %v1680, %v1832
          %v1865 = vsel %vm1801, %v1683, %v1833
          %v1866 = vsel %vm1802, %v1688, %v1834
          %v1867 = vsel %vm1803, %v1691, %v1835
          %v1868 = vsel %vm1804, %v1696, %v1836
          %v1869 = vsel %vm1805, %v1699, %v1837
          %v1870 = vsel %vm1806, %v1704, %v1838
          %v1871 = vsel %vm1807, %v1707, %v1839
          %v1872 = vsel %vm1808, %v1712, %v1840
          %v1873 = vsel %vm1809, %v1715, %v1841
          %v1874 = vsel %vm1810, %v1720, %v1842
          %v1875 = vsel %vm1811, %v1723, %v1843
          %v1876 = vsel %vm1812, %v1728, %v1844
          %v1877 = vsel %vm1813, %v1731, %v1845
          %v1878 = vsel %vm1814, %v1736, %v1846
          %v1879 = vsel %vm1815, %v1739, %v1847
          %v1880 = vsel %vm1816, %v1744, %v1848
          %v1881 = vsel %vm1817, %v1747, %v1849
          %v1882 = vsel %vm1818, %v1752, %v1850
          %v1883 = vsel %vm1819, %v1755, %v1851
          %v1884 = vsel %vm1820, %v1760, %v1852
          %v1885 = vsel %vm1821, %v1763, %v1853
          %v1886 = vsel %vm1822, %v1768, %v1854
          %v1887 = vsel %vm1823, %v1771, %v1855
          %v1888 = vsel %vm1824, %v1776, %v1856
          %v1889 = vsel %vm1825, %v1779, %v1857
          %v1890 = vsel %vm1826, %v1784, %v1858
          %v1891 = vsel %vm1827, %v1787, %v1859
          %v1892 = vsel %vm1828, %v1792, %v1860
          %v1893 = vsel %vm1829, %v1795, %v1861
          %v1894 = vld [vmem:[%s571] sm:$0xff]
          %v1895 = vld [vmem:[%s571 + $0x8] sm:$0xff]
          %v1896 = vld [vmem:[%s571 + $0x10] sm:$0xff]
          %v1897 = vld [vmem:[%s571 + $0x18] sm:$0xff]
          %v1898 = vld [vmem:[%s571 + $0x20] sm:$0xff]
          %v1899 = vld [vmem:[%s571 + $0x28] sm:$0xff]
          %v1900 = vld [vmem:[%s571 + $0x30] sm:$0xff]
          %v1901 = vld [vmem:[%s571 + $0x38] sm:$0xff]
          %v1902 = vld [vmem:[%s571 + $0x40] sm:$0xff]
          %v1903 = vld [vmem:[%s571 + $0x48] sm:$0xff]
          %v1904 = vld [vmem:[%s571 + $0x50] sm:$0xff]
          %v1905 = vld [vmem:[%s571 + $0x58] sm:$0xff]
          %v1906 = vld [vmem:[%s571 + $0x60] sm:$0xff]
          %v1907 = vld [vmem:[%s571 + $0x68] sm:$0xff]
          %v1908 = vld [vmem:[%s571 + $0x70] sm:$0xff]
          %v1909 = vld [vmem:[%s571 + $0x78] sm:$0xff]
          %v1910 = vld [vmem:[%s571 + $0x80] sm:$0xff]
          %v1911 = vld [vmem:[%s571 + $0x88] sm:$0xff]
          %v1912 = vld [vmem:[%s571 + $0x90] sm:$0xff]
          %v1913 = vld [vmem:[%s571 + $0x98] sm:$0xff]
          %v1914 = vld [vmem:[%s571 + $0xa0] sm:$0xff]
          %v1915 = vld [vmem:[%s571 + $0xa8] sm:$0xff]
          %v1916 = vld [vmem:[%s571 + $0xb0] sm:$0xff]
          %v1917 = vld [vmem:[%s571 + $0xb8] sm:$0xff]
          %v1918 = vld [vmem:[%s571 + $0xc0] sm:$0xff]
          %v1919 = vld [vmem:[%s571 + $0xc8] sm:$0xff]
          %v1920 = vld [vmem:[%s571 + $0xd0] sm:$0xff]
          %v1921 = vld [vmem:[%s571 + $0xd8] sm:$0xff]
          %v1922 = vld [vmem:[%s571 + $0xe0] sm:$0xff]
          %v1923 = vld [vmem:[%s571 + $0xe8] sm:$0xff]
          %v1924 = vld [vmem:[%s571 + $0xf0] sm:$0xff]
          %v1925 = vld [vmem:[%s571 + $0xf8] sm:$0xff]
          %v1926 = vadd.f32 %v1862, %v1894
          %v1927 = vadd.f32 %v1863, %v1895
          %v1928 = vadd.f32 %v1864, %v1896
          %v1929 = vadd.f32 %v1865, %v1897
          %v1930 = vadd.f32 %v1866, %v1898
          %v1931 = vadd.f32 %v1867, %v1899
          %v1932 = vadd.f32 %v1868, %v1900
          %v1933 = vadd.f32 %v1869, %v1901
          %v1934 = vadd.f32 %v1870, %v1902
          %v1935 = vadd.f32 %v1871, %v1903
          %v1936 = vadd.f32 %v1872, %v1904
          %v1937 = vadd.f32 %v1873, %v1905
          %v1938 = vadd.f32 %v1874, %v1906
          %v1939 = vadd.f32 %v1875, %v1907
          %v1940 = vadd.f32 %v1876, %v1908
          %v1941 = vadd.f32 %v1877, %v1909
          %v1942 = vadd.f32 %v1878, %v1910
          %v1943 = vadd.f32 %v1879, %v1911
          %v1944 = vadd.f32 %v1880, %v1912
          %v1945 = vadd.f32 %v1881, %v1913
          %v1946 = vadd.f32 %v1882, %v1914
          %v1947 = vadd.f32 %v1883, %v1915
          %v1948 = vadd.f32 %v1884, %v1916
          %v1949 = vadd.f32 %v1885, %v1917
          %v1950 = vadd.f32 %v1886, %v1918
          %v1951 = vadd.f32 %v1887, %v1919
          %v1952 = vadd.f32 %v1888, %v1920
          %v1953 = vadd.f32 %v1889, %v1921
          %v1954 = vadd.f32 %v1890, %v1922
          %v1955 = vadd.f32 %v1891, %v1923
          %v1956 = vadd.f32 %v1892, %v1924
          %v1957 = vadd.f32 %v1893, %v1925
          %v1958 = vld [vmem:[#allocation2] sm:$0xff]
          %v1959 = vld [vmem:[#allocation2 + $0x8] sm:$0xff]
          %v1960 = vld [vmem:[#allocation2 + $0x10] sm:$0xff]
          %v1961 = vld [vmem:[#allocation2 + $0x18] sm:$0xff]
          %v1962 = vld [vmem:[#allocation2 + $0x20] sm:$0xff]
          %v1963 = vld [vmem:[#allocation2 + $0x28] sm:$0xff]
          %v1964 = vld [vmem:[#allocation2 + $0x30] sm:$0xff]
          %v1965 = vld [vmem:[#allocation2 + $0x38] sm:$0xff]
          %v1966 = vld [vmem:[#allocation2 + $0x40] sm:$0xff]
          %v1967 = vld [vmem:[#allocation2 + $0x48] sm:$0xff]
          %v1968 = vld [vmem:[#allocation2 + $0x50] sm:$0xff]
          %v1969 = vld [vmem:[#allocation2 + $0x58] sm:$0xff]
          %v1970 = vld [vmem:[#allocation2 + $0x60] sm:$0xff]
          %v1971 = vld [vmem:[#allocation2 + $0x68] sm:$0xff]
          %v1972 = vld [vmem:[#allocation2 + $0x70] sm:$0xff]
          %v1973 = vld [vmem:[#allocation2 + $0x78] sm:$0xff]
          %v1974 = vld [vmem:[#allocation2 + $0x80] sm:$0xff]
          %v1975 = vld [vmem:[#allocation2 + $0x88] sm:$0xff]
          %v1976 = vld [vmem:[#allocation2 + $0x90] sm:$0xff]
          %v1977 = vld [vmem:[#allocation2 + $0x98] sm:$0xff]
          %v1978 = vld [vmem:[#allocation2 + $0xa0] sm:$0xff]
          %v1979 = vld [vmem:[#allocation2 + $0xa8] sm:$0xff]
          %v1980 = vld [vmem:[#allocation2 + $0xb0] sm:$0xff]
          %v1981 = vld [vmem:[#allocation2 + $0xb8] sm:$0xff]
          %v1982 = vld [vmem:[#allocation2 + $0xc0] sm:$0xff]
          %v1983 = vld [vmem:[#allocation2 + $0xc8] sm:$0xff]
          %v1984 = vld [vmem:[#allocation2 + $0xd0] sm:$0xff]
          %v1985 = vld [vmem:[#allocation2 + $0xd8] sm:$0xff]
          %v1986 = vld [vmem:[#allocation2 + $0xe0] sm:$0xff]
          %v1987 = vld [vmem:[#allocation2 + $0xe8] sm:$0xff]
          %v1988 = vld [vmem:[#allocation2 + $0xf0] sm:$0xff]
          %v1989 = vld [vmem:[#allocation2 + $0xf8] sm:$0xff]
          %vm1990 = vcmp.ge.f32.partialorder %v1958, 0.0
          %vm1991 = vcmp.ge.f32.partialorder %v1959, 0.0
          %vm1992 = vcmp.ge.f32.partialorder %v1960, 0.0
          %vm1993 = vcmp.ge.f32.partialorder %v1961, 0.0
          %vm1994 = vcmp.ge.f32.partialorder %v1962, 0.0
          %vm1995 = vcmp.ge.f32.partialorder %v1963, 0.0
          %vm1996 = vcmp.ge.f32.partialorder %v1964, 0.0
          %vm1997 = vcmp.ge.f32.partialorder %v1965, 0.0
          %vm1998 = vcmp.ge.f32.partialorder %v1966, 0.0
          %vm1999 = vcmp.ge.f32.partialorder %v1967, 0.0
          %vm2000 = vcmp.ge.f32.partialorder %v1968, 0.0
          %vm2001 = vcmp.ge.f32.partialorder %v1969, 0.0
          %vm2002 = vcmp.ge.f32.partialorder %v1970, 0.0
          %vm2003 = vcmp.ge.f32.partialorder %v1971, 0.0
          %vm2004 = vcmp.ge.f32.partialorder %v1972, 0.0
          %vm2005 = vcmp.ge.f32.partialorder %v1973, 0.0
          %vm2006 = vcmp.ge.f32.partialorder %v1974, 0.0
          %vm2007 = vcmp.ge.f32.partialorder %v1975, 0.0
          %vm2008 = vcmp.ge.f32.partialorder %v1976, 0.0
          %vm2009 = vcmp.ge.f32.partialorder %v1977, 0.0
          %vm2010 = vcmp.ge.f32.partialorder %v1978, 0.0
          %vm2011 = vcmp.ge.f32.partialorder %v1979, 0.0
          %vm2012 = vcmp.ge.f32.partialorder %v1980, 0.0
          %vm2013 = vcmp.ge.f32.partialorder %v1981, 0.0
          %vm2014 = vcmp.ge.f32.partialorder %v1982, 0.0
          %vm2015 = vcmp.ge.f32.partialorder %v1983, 0.0
          %vm2016 = vcmp.ge.f32.partialorder %v1984, 0.0
          %vm2017 = vcmp.ge.f32.partialorder %v1985, 0.0
          %vm2018 = vcmp.ge.f32.partialorder %v1986, 0.0
          %vm2019 = vcmp.ge.f32.partialorder %v1987, 0.0
          %vm2020 = vcmp.ge.f32.partialorder %v1988, 0.0
          %vm2021 = vcmp.ge.f32.partialorder %v1989, 0.0
          %v2022 = vmul.f32 %v1958, 0.01
          %v2023 = vmul.f32 %v1959, 0.01
          %v2024 = vmul.f32 %v1960, 0.01
          %v2025 = vmul.f32 %v1961, 0.01
          %v2026 = vmul.f32 %v1962, 0.01
          %v2027 = vmul.f32 %v1963, 0.01
          %v2028 = vmul.f32 %v1964, 0.01
          %v2029 = vmul.f32 %v1965, 0.01
          %v2030 = vmul.f32 %v1966, 0.01
          %v2031 = vmul.f32 %v1967, 0.01
          %v2032 = vmul.f32 %v1968, 0.01
          %v2033 = vmul.f32 %v1969, 0.01
          %v2034 = vmul.f32 %v1970, 0.01
          %v2035 = vmul.f32 %v1971, 0.01
          %v2036 = vmul.f32 %v1972, 0.01
          %v2037 = vmul.f32 %v1973, 0.01
          %v2038 = vmul.f32 %v1974, 0.01
          %v2039 = vmul.f32 %v1975, 0.01
          %v2040 = vmul.f32 %v1976, 0.01
          %v2041 = vmul.f32 %v1977, 0.01
          %v2042 = vmul.f32 %v1978, 0.01
          %v2043 = vmul.f32 %v1979, 0.01
          %v2044 = vmul.f32 %v1980, 0.01
          %v2045 = vmul.f32 %v1981, 0.01
          %v2046 = vmul.f32 %v1982, 0.01
          %v2047 = vmul.f32 %v1983, 0.01
          %v2048 = vmul.f32 %v1984, 0.01
          %v2049 = vmul.f32 %v1985, 0.01
          %v2050 = vmul.f32 %v1986, 0.01
          %v2051 = vmul.f32 %v1987, 0.01
          %v2052 = vmul.f32 %v1988, 0.01
          %v2053 = vmul.f32 %v1989, 0.01
          %v2054 = vsel %vm1990, %v1958, %v2022
          %v2055 = vsel %vm1991, %v1959, %v2023
          %v2056 = vsel %vm1992, %v1960, %v2024
          %v2057 = vsel %vm1993, %v1961, %v2025
          %v2058 = vsel %vm1994, %v1962, %v2026
          %v2059 = vsel %vm1995, %v1963, %v2027
          %v2060 = vsel %vm1996, %v1964, %v2028
          %v2061 = vsel %vm1997, %v1965, %v2029
          %v2062 = vsel %vm1998, %v1966, %v2030
          %v2063 = vsel %vm1999, %v1967, %v2031
          %v2064 = vsel %vm2000, %v1968, %v2032
          %v2065 = vsel %vm2001, %v1969, %v2033
          %v2066 = vsel %vm2002, %v1970, %v2034
          %v2067 = vsel %vm2003, %v1971, %v2035
          %v2068 = vsel %vm2004, %v1972, %v2036
          %v2069 = vsel %vm2005, %v1973, %v2037
          %v2070 = vsel %vm2006, %v1974, %v2038
          %v2071 = vsel %vm2007, %v1975, %v2039
          %v2072 = vsel %vm2008, %v1976, %v2040
          %v2073 = vsel %vm2009, %v1977, %v2041
          %v2074 = vsel %vm2010, %v1978, %v2042
          %v2075 = vsel %vm2011, %v1979, %v2043
          %v2076 = vsel %vm2012, %v1980, %v2044
          %v2077 = vsel %vm2013, %v1981, %v2045
          %v2078 = vsel %vm2014, %v1982, %v2046
          %v2079 = vsel %vm2015, %v1983, %v2047
          %v2080 = vsel %vm2016, %v1984, %v2048
          %v2081 = vsel %vm2017, %v1985, %v2049
          %v2082 = vsel %vm2018, %v1986, %v2050
          %v2083 = vsel %vm2019, %v1987, %v2051
          %v2084 = vsel %vm2020, %v1988, %v2052
          %v2085 = vsel %vm2021, %v1989, %v2053
          %v2086 = vpack.c.bf16 %v2055, %v2054
          %v2087 = vpack.c.bf16 %v2057, %v2056
          %v2088 = vpack.c.bf16 %v2059, %v2058
          %v2089 = vpack.c.bf16 %v2061, %v2060
          %v2090 = vpack.c.bf16 %v2063, %v2062
          %v2091 = vpack.c.bf16 %v2065, %v2064
          %v2092 = vpack.c.bf16 %v2067, %v2066
          %v2093 = vpack.c.bf16 %v2069, %v2068
          %v2094 = vpack.c.bf16 %v2071, %v2070
          %v2095 = vpack.c.bf16 %v2073, %v2072
          %v2096 = vpack.c.bf16 %v2075, %v2074
          %v2097 = vpack.c.bf16 %v2077, %v2076
          %v2098 = vpack.c.bf16 %v2079, %v2078
          %v2099 = vpack.c.bf16 %v2081, %v2080
          %v2100 = vpack.c.bf16 %v2083, %v2082
          %v2101 = vpack.c.bf16 %v2085, %v2084
          %v2102 = vld [vmem:[%s6] sm:$0xf]
          %v2103 = vld [vmem:[%s6 + $0x4] sm:$0xf]
          %v2104 = vld [vmem:[%s6 + $0x8] sm:$0xf]
          %v2105 = vld [vmem:[%s6 + $0xc] sm:$0xf]
          %v2106 = vld [vmem:[%s6 + $0x10] sm:$0xf]
          %v2107 = vld [vmem:[%s6 + $0x14] sm:$0xf]
          %v2108 = vld [vmem:[%s6 + $0x18] sm:$0xf]
          %v2109 = vld [vmem:[%s6 + $0x1c] sm:$0xf]
          %v2110 = vld [vmem:[%s6 + $0x20] sm:$0xf]
          %v2111 = vld [vmem:[%s6 + $0x24] sm:$0xf]
          %v2112 = vld [vmem:[%s6 + $0x28] sm:$0xf]
          %v2113 = vld [vmem:[%s6 + $0x2c] sm:$0xf]
          %v2114 = vld [vmem:[%s6 + $0x30] sm:$0xf]
          %v2115 = vld [vmem:[%s6 + $0x34] sm:$0xf]
          %v2116 = vld [vmem:[%s6 + $0x38] sm:$0xf]
          %v2117 = vld [vmem:[%s6 + $0x3c] sm:$0xf]
          %v2118 = vld [vmem:[%s7] sm:$0x1]
          %v2120 = vlaneseq
          %v2121 = vshrl.u32 %v2120, 7
          %v2122 = vsub.s32 0, %v2121
          %v2123 = vrot.slane %v2118, %v2122
          %v2141 = vunpack.c.l.b16 %v2102
          %v2142 = vunpack.c.l.b16 %v2103
          %v2143 = vunpack.c.l.b16 %v2104
          %v2144 = vunpack.c.l.b16 %v2105
          %v2145 = vunpack.c.l.b16 %v2106
          %v2146 = vunpack.c.l.b16 %v2107
          %v2147 = vunpack.c.l.b16 %v2108
          %v2148 = vunpack.c.l.b16 %v2109
          %v2149 = vunpack.c.l.b16 %v2110
          %v2150 = vunpack.c.l.b16 %v2111
          %v2151 = vunpack.c.l.b16 %v2112
          %v2152 = vunpack.c.l.b16 %v2113
          %v2153 = vunpack.c.l.b16 %v2114
          %v2154 = vunpack.c.l.b16 %v2115
          %v2155 = vunpack.c.l.b16 %v2116
          %v2156 = vunpack.c.l.b16 %v2117
          %v2157 = vpack.c.b16 %v2142, %v2141
          %v2158 = vpack.c.b16 %v2144, %v2143
          %v2159 = vpack.c.b16 %v2146, %v2145
          %v2160 = vpack.c.b16 %v2148, %v2147
          %v2161 = vpack.c.b16 %v2150, %v2149
          %v2162 = vpack.c.b16 %v2152, %v2151
          %v2163 = vpack.c.b16 %v2154, %v2153
          %v2164 = vpack.c.b16 %v2156, %v2155
          %2173 = vmatprep.subr.bf16.mxu0 0
          %2174 = vmatpush1.bf16.msra.mxu0 %v2164
          %2175 = vmatprep.subr.bf16.mxu0 0
          %2176 = vmatpush1.bf16.msra.mxu0 %v2163
          %2177 = vmatprep.subr.bf16.mxu0 0
          %2178 = vmatpush1.bf16.msra.mxu0 %v2162
          %2179 = vmatprep.subr.bf16.mxu0 0
          %2180 = vmatpush1.bf16.msra.mxu0 %v2161
          %2181 = vmatprep.subr.bf16.mxu0 0
          %2182 = vmatpush1.bf16.msra.mxu0 %v2160
          %2183 = vmatprep.subr.bf16.mxu0 0
          %2184 = vmatpush1.bf16.msra.mxu0 %v2159
          %2185 = vmatprep.subr.bf16.mxu0 0
          %2186 = vmatpush1.bf16.msra.mxu0 %v2158
          %2187 = vmatprep.subr.bf16.mxu0 0
          %2188 = vmatpush1.bf16.msra.mxu0 %v2157
          %2189 = vmatprep.subr.bf16.mxu0 0
          %2190 = vmatpush2.bf16.msra.mxu0 0
          %2191 = vmatprep.subr.bf16.mxu0 0
          %2192 = vmatpush2.bf16.msra.mxu0 0
          %2193 = vmatprep.subr.bf16.mxu0 0
          %2194 = vmatpush2.bf16.msra.mxu0 0
          %2195 = vmatprep.subr.bf16.mxu0 0
          %2196 = vmatpush2.bf16.msra.mxu0 0
          %2197 = vmatprep.subr.bf16.mxu0 0
          %2198 = vmatpush2.bf16.msra.mxu0 0
          %2199 = vmatprep.subr.bf16.mxu0 0
          %2200 = vmatpush2.bf16.msra.mxu0 0
          %2201 = vmatprep.subr.bf16.mxu0 0
          %2202 = vmatpush2.bf16.msra.mxu0 0
          %2203 = vmatprep.subr.bf16.mxu0 0
          %2204 = vmatpush2.bf16.msra.mxu0 0
          %2205 = vmatprep.mubr.bf16.mxu0 0
          %2206 = vmatmul.mubr.bf16.gmra.mxu0 %v2086
          %v2207 = vpop.f32.mrf.mxu0
          %v2208 = vadd.f32 %v2123, %v2207
          %v2209 = vpop.f32.mrf.mxu0
          %v2210 = vpop.f32.mrf.mxu0
          %v2211 = vadd.f32 %v2123, %v2210
          %v2212 = vpop.f32.mrf.mxu0
          %2213 = vmatprep.mubr.bf16.mxu0 0
          %2214 = vmatmul.mubr.bf16.gmra.mxu0 %v2087
          %v2215 = vpop.f32.mrf.mxu0
          %v2216 = vadd.f32 %v2123, %v2215
          %v2217 = vpop.f32.mrf.mxu0
          %v2218 = vpop.f32.mrf.mxu0
          %v2219 = vadd.f32 %v2123, %v2218
          %v2220 = vpop.f32.mrf.mxu0
          %2221 = vmatprep.mubr.bf16.mxu0 0
          %2222 = vmatmul.mubr.bf16.gmra.mxu0 %v2088
          %v2223 = vpop.f32.mrf.mxu0
          %v2224 = vadd.f32 %v2123, %v2223
          %v2225 = vpop.f32.mrf.mxu0
          %v2226 = vpop.f32.mrf.mxu0
          %v2227 = vadd.f32 %v2123, %v2226
          %v2228 = vpop.f32.mrf.mxu0
          %2229 = vmatprep.mubr.bf16.mxu0 0
          %2230 = vmatmul.mubr.bf16.gmra.mxu0 %v2089
          %v2231 = vpop.f32.mrf.mxu0
          %v2232 = vadd.f32 %v2123, %v2231
          %v2233 = vpop.f32.mrf.mxu0
          %v2234 = vpop.f32.mrf.mxu0
          %v2235 = vadd.f32 %v2123, %v2234
          %v2236 = vpop.f32.mrf.mxu0
          %2237 = vmatprep.mubr.bf16.mxu0 0
          %2238 = vmatmul.mubr.bf16.gmra.mxu0 %v2090
          %v2239 = vpop.f32.mrf.mxu0
          %v2240 = vadd.f32 %v2123, %v2239
          %v2241 = vpop.f32.mrf.mxu0
          %v2242 = vpop.f32.mrf.mxu0
          %v2243 = vadd.f32 %v2123, %v2242
          %v2244 = vpop.f32.mrf.mxu0
          %2245 = vmatprep.mubr.bf16.mxu0 0
          %2246 = vmatmul.mubr.bf16.gmra.mxu0 %v2091
          %v2247 = vpop.f32.mrf.mxu0
          %v2248 = vadd.f32 %v2123, %v2247
          %v2249 = vpop.f32.mrf.mxu0
          %v2250 = vpop.f32.mrf.mxu0
          %v2251 = vadd.f32 %v2123, %v2250
          %v2252 = vpop.f32.mrf.mxu0
          %2253 = vmatprep.mubr.bf16.mxu0 0
          %2254 = vmatmul.mubr.bf16.gmra.mxu0 %v2092
          %v2255 = vpop.f32.mrf.mxu0
          %v2256 = vadd.f32 %v2123, %v2255
          %v2257 = vpop.f32.mrf.mxu0
          %v2258 = vpop.f32.mrf.mxu0
          %v2259 = vadd.f32 %v2123, %v2258
          %v2260 = vpop.f32.mrf.mxu0
          %2261 = vmatprep.mubr.bf16.mxu0 0
          %2262 = vmatmul.mubr.bf16.gmra.mxu0 %v2093
          %v2263 = vpop.f32.mrf.mxu0
          %v2264 = vadd.f32 %v2123, %v2263
          %v2265 = vpop.f32.mrf.mxu0
          %v2266 = vpop.f32.mrf.mxu0
          %v2267 = vadd.f32 %v2123, %v2266
          %v2268 = vpop.f32.mrf.mxu0
          %2269 = vmatprep.mubr.bf16.mxu0 0
          %2270 = vmatmul.mubr.bf16.gmra.mxu0 %v2094
          %v2271 = vpop.f32.mrf.mxu0
          %v2272 = vadd.f32 %v2123, %v2271
          %v2273 = vpop.f32.mrf.mxu0
          %v2274 = vpop.f32.mrf.mxu0
          %v2275 = vadd.f32 %v2123, %v2274
          %v2276 = vpop.f32.mrf.mxu0
          %2277 = vmatprep.mubr.bf16.mxu0 0
          %2278 = vmatmul.mubr.bf16.gmra.mxu0 %v2095
          %v2279 = vpop.f32.mrf.mxu0
          %v2280 = vadd.f32 %v2123, %v2279
          %v2281 = vpop.f32.mrf.mxu0
          %v2282 = vpop.f32.mrf.mxu0
          %v2283 = vadd.f32 %v2123, %v2282
          %v2284 = vpop.f32.mrf.mxu0
          %2285 = vmatprep.mubr.bf16.mxu0 0
          %2286 = vmatmul.mubr.bf16.gmra.mxu0 %v2096
          %v2287 = vpop.f32.mrf.mxu0
          %v2288 = vadd.f32 %v2123, %v2287
          %v2289 = vpop.f32.mrf.mxu0
          %v2290 = vpop.f32.mrf.mxu0
          %v2291 = vadd.f32 %v2123, %v2290
          %v2292 = vpop.f32.mrf.mxu0
          %2293 = vmatprep.mubr.bf16.mxu0 0
          %2294 = vmatmul.mubr.bf16.gmra.mxu0 %v2097
          %v2295 = vpop.f32.mrf.mxu0
          %v2296 = vadd.f32 %v2123, %v2295
          %v2297 = vpop.f32.mrf.mxu0
          %v2298 = vpop.f32.mrf.mxu0
          %v2299 = vadd.f32 %v2123, %v2298
          %v2300 = vpop.f32.mrf.mxu0
          %2301 = vmatprep.mubr.bf16.mxu0 0
          %2302 = vmatmul.mubr.bf16.gmra.mxu0 %v2098
          %v2303 = vpop.f32.mrf.mxu0
          %v2304 = vadd.f32 %v2123, %v2303
          %v2305 = vpop.f32.mrf.mxu0
          %v2306 = vpop.f32.mrf.mxu0
          %v2307 = vadd.f32 %v2123, %v2306
          %v2308 = vpop.f32.mrf.mxu0
          %2309 = vmatprep.mubr.bf16.mxu0 0
          %2310 = vmatmul.mubr.bf16.gmra.mxu0 %v2099
          %v2311 = vpop.f32.mrf.mxu0
          %v2312 = vadd.f32 %v2123, %v2311
          %v2313 = vpop.f32.mrf.mxu0
          %v2314 = vpop.f32.mrf.mxu0
          %v2315 = vadd.f32 %v2123, %v2314
          %v2316 = vpop.f32.mrf.mxu0
          %2317 = vmatprep.mubr.bf16.mxu0 0
          %2318 = vmatmul.mubr.bf16.gmra.mxu0 %v2100
          %v2319 = vpop.f32.mrf.mxu0
          %v2320 = vadd.f32 %v2123, %v2319
          %v2321 = vpop.f32.mrf.mxu0
          %v2322 = vpop.f32.mrf.mxu0
          %v2323 = vadd.f32 %v2123, %v2322
          %v2324 = vpop.f32.mrf.mxu0
          %2325 = vmatprep.mubr.bf16.mxu0 0
          %2326 = vmatmul.mubr.bf16.gmra.mxu0 %v2101
          %v2327 = vpop.f32.mrf.mxu0
          %v2328 = vadd.f32 %v2123, %v2327
          %v2329 = vpop.f32.mrf.mxu0
          %v2330 = vpop.f32.mrf.mxu0
          %v2331 = vadd.f32 %v2123, %v2330
          %v2332 = vpop.f32.mrf.mxu0
          %2333 = vdwg.mxu0
          %v2334 = vadd.f32 %v2208, %v1926
          %v2335 = vadd.f32 %v2211, %v1927
          %v2336 = vadd.f32 %v2216, %v1928
          %v2337 = vadd.f32 %v2219, %v1929
          %v2338 = vadd.f32 %v2224, %v1930
          %v2339 = vadd.f32 %v2227, %v1931
          %v2340 = vadd.f32 %v2232, %v1932
          %v2341 = vadd.f32 %v2235, %v1933
          %v2342 = vadd.f32 %v2240, %v1934
          %v2343 = vadd.f32 %v2243, %v1935
          %v2344 = vadd.f32 %v2248, %v1936
          %v2345 = vadd.f32 %v2251, %v1937
          %v2346 = vadd.f32 %v2256, %v1938
          %v2347 = vadd.f32 %v2259, %v1939
          %v2348 = vadd.f32 %v2264, %v1940
          %v2349 = vadd.f32 %v2267, %v1941
          %v2350 = vadd.f32 %v2272, %v1942
          %v2351 = vadd.f32 %v2275, %v1943
          %v2352 = vadd.f32 %v2280, %v1944
          %v2353 = vadd.f32 %v2283, %v1945
          %v2354 = vadd.f32 %v2288, %v1946
          %v2355 = vadd.f32 %v2291, %v1947
          %v2356 = vadd.f32 %v2296, %v1948
          %v2357 = vadd.f32 %v2299, %v1949
          %v2358 = vadd.f32 %v2304, %v1950
          %v2359 = vadd.f32 %v2307, %v1951
          %v2360 = vadd.f32 %v2312, %v1952
          %v2361 = vadd.f32 %v2315, %v1953
          %v2362 = vadd.f32 %v2320, %v1954
          %v2363 = vadd.f32 %v2323, %v1955
          %v2364 = vadd.f32 %v2328, %v1956
          %v2365 = vadd.f32 %v2331, %v1957
          %vm2366 = vcmp.ge.f32.partialorder %v2334, 0.0
          %vm2367 = vcmp.ge.f32.partialorder %v2335, 0.0
          %vm2368 = vcmp.ge.f32.partialorder %v2336, 0.0
          %vm2369 = vcmp.ge.f32.partialorder %v2337, 0.0
          %vm2370 = vcmp.ge.f32.partialorder %v2338, 0.0
          %vm2371 = vcmp.ge.f32.partialorder %v2339, 0.0
          %vm2372 = vcmp.ge.f32.partialorder %v2340, 0.0
          %vm2373 = vcmp.ge.f32.partialorder %v2341, 0.0
          %vm2374 = vcmp.ge.f32.partialorder %v2342, 0.0
          %vm2375 = vcmp.ge.f32.partialorder %v2343, 0.0
          %vm2376 = vcmp.ge.f32.partialorder %v2344, 0.0
          %vm2377 = vcmp.ge.f32.partialorder %v2345, 0.0
          %vm2378 = vcmp.ge.f32.partialorder %v2346, 0.0
          %vm2379 = vcmp.ge.f32.partialorder %v2347, 0.0
          %vm2380 = vcmp.ge.f32.partialorder %v2348, 0.0
          %vm2381 = vcmp.ge.f32.partialorder %v2349, 0.0
          %vm2382 = vcmp.ge.f32.partialorder %v2350, 0.0
          %vm2383 = vcmp.ge.f32.partialorder %v2351, 0.0
          %vm2384 = vcmp.ge.f32.partialorder %v2352, 0.0
          %vm2385 = vcmp.ge.f32.partialorder %v2353, 0.0
          %vm2386 = vcmp.ge.f32.partialorder %v2354, 0.0
          %vm2387 = vcmp.ge.f32.partialorder %v2355, 0.0
          %vm2388 = vcmp.ge.f32.partialorder %v2356, 0.0
          %vm2389 = vcmp.ge.f32.partialorder %v2357, 0.0
          %vm2390 = vcmp.ge.f32.partialorder %v2358, 0.0
          %vm2391 = vcmp.ge.f32.partialorder %v2359, 0.0
          %vm2392 = vcmp.ge.f32.partialorder %v2360, 0.0
          %vm2393 = vcmp.ge.f32.partialorder %v2361, 0.0
          %vm2394 = vcmp.ge.f32.partialorder %v2362, 0.0
          %vm2395 = vcmp.ge.f32.partialorder %v2363, 0.0
          %vm2396 = vcmp.ge.f32.partialorder %v2364, 0.0
          %vm2397 = vcmp.ge.f32.partialorder %v2365, 0.0
          %v2398 = vmul.f32 %v2334, 0.01
          %v2399 = vmul.f32 %v2335, 0.01
          %v2400 = vmul.f32 %v2336, 0.01
          %v2401 = vmul.f32 %v2337, 0.01
          %v2402 = vmul.f32 %v2338, 0.01
          %v2403 = vmul.f32 %v2339, 0.01
          %v2404 = vmul.f32 %v2340, 0.01
          %v2405 = vmul.f32 %v2341, 0.01
          %v2406 = vmul.f32 %v2342, 0.01
          %v2407 = vmul.f32 %v2343, 0.01
          %v2408 = vmul.f32 %v2344, 0.01
          %v2409 = vmul.f32 %v2345, 0.01
          %v2410 = vmul.f32 %v2346, 0.01
          %v2411 = vmul.f32 %v2347, 0.01
          %v2412 = vmul.f32 %v2348, 0.01
          %v2413 = vmul.f32 %v2349, 0.01
          %v2414 = vmul.f32 %v2350, 0.01
          %v2415 = vmul.f32 %v2351, 0.01
          %v2416 = vmul.f32 %v2352, 0.01
          %v2417 = vmul.f32 %v2353, 0.01
          %v2418 = vmul.f32 %v2354, 0.01
          %v2419 = vmul.f32 %v2355, 0.01
          %v2420 = vmul.f32 %v2356, 0.01
          %v2421 = vmul.f32 %v2357, 0.01
          %v2422 = vmul.f32 %v2358, 0.01
          %v2423 = vmul.f32 %v2359, 0.01
          %v2424 = vmul.f32 %v2360, 0.01
          %v2425 = vmul.f32 %v2361, 0.01
          %v2426 = vmul.f32 %v2362, 0.01
          %v2427 = vmul.f32 %v2363, 0.01
          %v2428 = vmul.f32 %v2364, 0.01
          %v2429 = vmul.f32 %v2365, 0.01
          %v2430 = vsel %vm2366, %v2334, %v2398
          %v2431 = vsel %vm2367, %v2335, %v2399
          %v2432 = vsel %vm2368, %v2336, %v2400
          %v2433 = vsel %vm2369, %v2337, %v2401
          %v2434 = vsel %vm2370, %v2338, %v2402
          %v2435 = vsel %vm2371, %v2339, %v2403
          %v2436 = vsel %vm2372, %v2340, %v2404
          %v2437 = vsel %vm2373, %v2341, %v2405
          %v2438 = vsel %vm2374, %v2342, %v2406
          %v2439 = vsel %vm2375, %v2343, %v2407
          %v2440 = vsel %vm2376, %v2344, %v2408
          %v2441 = vsel %vm2377, %v2345, %v2409
          %v2442 = vsel %vm2378, %v2346, %v2410
          %v2443 = vsel %vm2379, %v2347, %v2411
          %v2444 = vsel %vm2380, %v2348, %v2412
          %v2445 = vsel %vm2381, %v2349, %v2413
          %v2446 = vsel %vm2382, %v2350, %v2414
          %v2447 = vsel %vm2383, %v2351, %v2415
          %v2448 = vsel %vm2384, %v2352, %v2416
          %v2449 = vsel %vm2385, %v2353, %v2417
          %v2450 = vsel %vm2386, %v2354, %v2418
          %v2451 = vsel %vm2387, %v2355, %v2419
          %v2452 = vsel %vm2388, %v2356, %v2420
          %v2453 = vsel %vm2389, %v2357, %v2421
          %v2454 = vsel %vm2390, %v2358, %v2422
          %v2455 = vsel %vm2391, %v2359, %v2423
          %v2456 = vsel %vm2392, %v2360, %v2424
          %v2457 = vsel %vm2393, %v2361, %v2425
          %v2458 = vsel %vm2394, %v2362, %v2426
          %v2459 = vsel %vm2395, %v2363, %v2427
          %v2460 = vsel %vm2396, %v2364, %v2428
          %v2461 = vsel %vm2397, %v2365, %v2429
          %v2462 = vpack.c.bf16 %v2431, %v2430
          %v2463 = vpack.c.bf16 %v2433, %v2432
          %v2464 = vpack.c.bf16 %v2435, %v2434
          %v2465 = vpack.c.bf16 %v2437, %v2436
          %v2466 = vpack.c.bf16 %v2439, %v2438
          %v2467 = vpack.c.bf16 %v2441, %v2440
          %v2468 = vpack.c.bf16 %v2443, %v2442
          %v2469 = vpack.c.bf16 %v2445, %v2444
          %v2470 = vpack.c.bf16 %v2447, %v2446
          %v2471 = vpack.c.bf16 %v2449, %v2448
          %v2472 = vpack.c.bf16 %v2451, %v2450
          %v2473 = vpack.c.bf16 %v2453, %v2452
          %v2474 = vpack.c.bf16 %v2455, %v2454
          %v2475 = vpack.c.bf16 %v2457, %v2456
          %v2476 = vpack.c.bf16 %v2459, %v2458
          %v2477 = vpack.c.bf16 %v2461, %v2460
          %v2494 = vunpack.c.l.b16 %v2462
          %v2495 = vunpack.c.h.b16 %v2462
          %v2496 = vunpack.c.l.b16 %v2463
          %v2497 = vunpack.c.h.b16 %v2463
          %v2498 = vunpack.c.l.b16 %v2464
          %v2499 = vunpack.c.h.b16 %v2464
          %v2500 = vunpack.c.l.b16 %v2465
          %v2501 = vunpack.c.h.b16 %v2465
          %v2502 = vunpack.c.l.b16 %v2466
          %v2503 = vunpack.c.h.b16 %v2466
          %v2504 = vunpack.c.l.b16 %v2467
          %v2505 = vunpack.c.h.b16 %v2467
          %v2506 = vunpack.c.l.b16 %v2468
          %v2507 = vunpack.c.h.b16 %v2468
          %v2508 = vunpack.c.l.b16 %v2469
          %v2509 = vunpack.c.h.b16 %v2469
          %v2510 = vunpack.c.l.b16 %v2470
          %v2511 = vunpack.c.h.b16 %v2470
          %v2512 = vunpack.c.l.b16 %v2471
          %v2513 = vunpack.c.h.b16 %v2471
          %v2514 = vunpack.c.l.b16 %v2472
          %v2515 = vunpack.c.h.b16 %v2472
          %v2516 = vunpack.c.l.b16 %v2473
          %v2517 = vunpack.c.h.b16 %v2473
          %v2518 = vunpack.c.l.b16 %v2474
          %v2519 = vunpack.c.h.b16 %v2474
          %v2520 = vunpack.c.l.b16 %v2475
          %v2521 = vunpack.c.h.b16 %v2475
          %v2522 = vunpack.c.l.b16 %v2476
          %v2523 = vunpack.c.h.b16 %v2476
          %v2524 = vunpack.c.l.b16 %v2477
          %v2525 = vunpack.c.h.b16 %v2477
          %v2526 = vpack.c.b16 %v2494, %v2494
          %v2527 = vpack.c.b16 %v2495, %v2495
          %v2528 = vpack.c.b16 %v2496, %v2496
          %v2529 = vpack.c.b16 %v2497, %v2497
          %v2530 = vpack.c.b16 %v2498, %v2498
          %v2531 = vpack.c.b16 %v2499, %v2499
          %v2532 = vpack.c.b16 %v2500, %v2500
          %v2533 = vpack.c.b16 %v2501, %v2501
          %v2534 = vpack.c.b16 %v2502, %v2502
          %v2535 = vpack.c.b16 %v2503, %v2503
          %v2536 = vpack.c.b16 %v2504, %v2504
          %v2537 = vpack.c.b16 %v2505, %v2505
          %v2538 = vpack.c.b16 %v2506, %v2506
          %v2539 = vpack.c.b16 %v2507, %v2507
          %v2540 = vpack.c.b16 %v2508, %v2508
          %v2541 = vpack.c.b16 %v2509, %v2509
          %v2542 = vpack.c.b16 %v2510, %v2510
          %v2543 = vpack.c.b16 %v2511, %v2511
          %v2544 = vpack.c.b16 %v2512, %v2512
          %v2545 = vpack.c.b16 %v2513, %v2513
          %v2546 = vpack.c.b16 %v2514, %v2514
          %v2547 = vpack.c.b16 %v2515, %v2515
          %v2548 = vpack.c.b16 %v2516, %v2516
          %v2549 = vpack.c.b16 %v2517, %v2517
          %v2550 = vpack.c.b16 %v2518, %v2518
          %v2551 = vpack.c.b16 %v2519, %v2519
          %v2552 = vpack.c.b16 %v2520, %v2520
          %v2553 = vpack.c.b16 %v2521, %v2521
          %v2554 = vpack.c.b16 %v2522, %v2522
          %v2555 = vpack.c.b16 %v2523, %v2523
          %v2556 = vpack.c.b16 %v2524, %v2524
          %v2557 = vpack.c.b16 %v2525, %v2525
          %2590 = vst [vmem:[%s577] sm:$0xf] %v2526
          %2591 = vst [vmem:[%s577 + $0x4] sm:$0xf] %v2527
          %2592 = vst [vmem:[%s577 + $0x8] sm:$0xf] %v2528
          %2593 = vst [vmem:[%s577 + $0xc] sm:$0xf] %v2529
          %2594 = vst [vmem:[%s577 + $0x10] sm:$0xf] %v2530
          %2595 = vst [vmem:[%s577 + $0x14] sm:$0xf] %v2531
          %2596 = vst [vmem:[%s577 + $0x18] sm:$0xf] %v2532
          %2597 = vst [vmem:[%s577 + $0x1c] sm:$0xf] %v2533
          %2598 = vst [vmem:[%s577 + $0x20] sm:$0xf] %v2534
          %2599 = vst [vmem:[%s577 + $0x24] sm:$0xf] %v2535
          %2600 = vst [vmem:[%s577 + $0x28] sm:$0xf] %v2536
          %2601 = vst [vmem:[%s577 + $0x2c] sm:$0xf] %v2537
          %2602 = vst [vmem:[%s577 + $0x30] sm:$0xf] %v2538
          %2603 = vst [vmem:[%s577 + $0x34] sm:$0xf] %v2539
          %2604 = vst [vmem:[%s577 + $0x38] sm:$0xf] %v2540
          %2605 = vst [vmem:[%s577 + $0x3c] sm:$0xf] %v2541
          %2606 = vst [vmem:[%s577 + $0x40] sm:$0xf] %v2542
          %2607 = vst [vmem:[%s577 + $0x44] sm:$0xf] %v2543
          %2608 = vst [vmem:[%s577 + $0x48] sm:$0xf] %v2544
          %2609 = vst [vmem:[%s577 + $0x4c] sm:$0xf] %v2545
          %2610 = vst [vmem:[%s577 + $0x50] sm:$0xf] %v2546
          %2611 = vst [vmem:[%s577 + $0x54] sm:$0xf] %v2547
          %2612 = vst [vmem:[%s577 + $0x58] sm:$0xf] %v2548
          %2613 = vst [vmem:[%s577 + $0x5c] sm:$0xf] %v2549
          %2614 = vst [vmem:[%s577 + $0x60] sm:$0xf] %v2550
          %2615 = vst [vmem:[%s577 + $0x64] sm:$0xf] %v2551
          %2616 = vst [vmem:[%s577 + $0x68] sm:$0xf] %v2552
          %2617 = vst [vmem:[%s577 + $0x6c] sm:$0xf] %v2553
          %2618 = vst [vmem:[%s577 + $0x70] sm:$0xf] %v2554
          %2619 = vst [vmem:[%s577 + $0x74] sm:$0xf] %v2555
          %2620 = vst [vmem:[%s577 + $0x78] sm:$0xf] %v2556
          %2621 = vst [vmem:[%s577 + $0x7c] sm:$0xf] %v2557
        $region102: #{fwd.6} parent=89 // pred_fallthru
          _
        %s2622 = smul.u32 32, %s24
        %p2623 = scmp.lt.s32.totalorder %s2622, 63
        %s2624 = scalar_select %p2623, %s2622, 63
        %s2625 = smul.addr %s2624, 4
        %s2626 = scalar_lea.vmem %s9, %s2625
        // Predicated region
        $region103: #{fwd.6} parent=89 // pred_check
          %p2627 = pneg %p261
        $region104: #{fwd.6} parent=89 // pred_check_branch
          %2629 = sbr.rel (%p2627) target = $region106
        $region105: #{fwd.6} parent=89 // pred_region
          %s2630 = smul.u32 32, %s24
        $region106: #{fwd.6} parent=89 // pred_fallthru
          _
      $region90: #{fwd.6} parent=5 // pred_fallthru
        _
      %p2631 = scmp.le.s32.totalorder 2, %s15
      // Predicated region
      $region107: #{fwd.6} parent=5 // pred_check
        %p2632 = pneg %p2631
      $region108: #{fwd.6} parent=5 // pred_check_branch
        %2634 = sbr.rel (%p2632) target = $region110
      $region109: #{fwd.6} parent=5 // pred_region
        %s2635 = ssub.s32 %s15, 2
        // Predicated region
        $region111: #{fwd.6} parent=109 // pred_check
          %p2636 = pneg %p267
        $region112: #{fwd.6} parent=109 // pred_check_branch
          %2638 = sbr.rel (%p2636) target = $region114
        $region113: #{fwd.6} parent=109 // pred_region
          %s2639 = smul.u32 32, %s26
          %p2640 = scmp.lt.s32.totalorder %s2639, 63
          %s2641 = scalar_select %p2640, %s2639, 63
          %s2642 = smul.addr %s2641, 4
          %s2643 = scalar_lea.vmem %s9, %s2642
        $region114: #{fwd.6} parent=109 // pred_fallthru
          _
      $region110: #{fwd.6} parent=5 // pred_fallthru
        _
    $region6: #{fwd.6} parent=1 // loop_footer
      %s19 = sadd.s32 1, %s15
    $region7: #{fwd.6} parent=1 // loop_footer_branch
      %14 = sbr.rel target = $region3
    $region8: #{fwd.6} parent=1 // loop_exit
      _

</llo_original>
